<compile_context>
chip_gen: v6e
topology: v6e:2x2x1
jax: 0.10.0
libtpu: 0.0.40
codegen_flags: <defaults>
</compile_context>

<pallas_src>
from math import sqrt

import jax
import jax.numpy as jnp
from jax.experimental import pallas as pl
from jax.experimental.pallas import tpu as pltpu


def get_groups(channels: int) -> int:
    divisors = []
    for i in range(1, int(sqrt(channels)) + 1):
        if channels % i == 0:
            divisors.append(i)
            other = channels // i
            if i != other:
                divisors.append(other)
    return sorted(divisors)[len(divisors) // 2]


def standardize_weight(w):
    # w: (Cout, Cin, kh, kw) — matches WNConv2d.forward (unbiased std, eps added after sqrt).
    mean = jnp.mean(w, axis=(1, 2, 3), keepdims=True)
    w = w - mean
    std = jnp.std(w.reshape(w.shape[0], -1), axis=1, ddof=1).reshape(-1, 1, 1, 1) + 1e-5
    return w / std


def _weight_slab(w):
    # (Cout, Cin, 3, 3) -> standardized -> (9*Cin, Cout) bf16, rows ordered (dy, dx, ci).
    w = standardize_weight(w.astype(jnp.float32))
    cout, cin = w.shape[0], w.shape[1]
    return jnp.transpose(w, (2, 3, 1, 0)).reshape(9 * cin, cout).astype(jnp.bfloat16)


def _group_mean_matrix(cout, groups, hw):
    # Pm[i, j] = 1/(Cpg*H*W) if channels i, j share a group; folds gmat, gmat.T and 1/n.
    cpg = cout // groups
    gid = jnp.arange(cout) // cpg
    same = (gid[:, None] == gid[None, :]).astype(jnp.float32)
    return same / float(cpg * hw)


# ----------------------------- kernel ------------------------------------------------------


def _reflect_pad_into(pad_ref, x, C):
    # x: (H, W, C) bf16 value; pad_ref: (H+2, W+2, Cmax) bf16 VMEM scratch (channels :C used).
    H, W = x.shape[0], x.shape[1]
    pad_ref[1:H + 1, 1:W + 1, 0:C] = x
    pad_ref[0:1, 1:W + 1, 0:C] = x[1:2, :, :]                  # top row  = x row 1
    pad_ref[H + 1:H + 2, 1:W + 1, 0:C] = x[H - 2:H - 1, :, :]  # bot row  = x row H-2
    pad_ref[:, 0:1, 0:C] = pad_ref[:, 2:3, 0:C]                # left col (incl. corners)
    pad_ref[:, W + 1:W + 2, 0:C] = pad_ref[:, W - 1:W, 0:C]    # right col (incl. corners)


def _conv_swish_groupnorm(pad_ref, col_ref, w_ref, aff_ref, pm_ref, C, H, W, out_dtype):
    # pad_ref: (H+2, W+2, Cmax) bf16   reflection-padded input (channels :C valid)
    # col_ref: (H+2, W, 3*Cmax) bf16   dx-concatenated im2col slab (channels :3*C valid)
    # w_ref:   (9*C, Cout)      bf16   standardized conv weights, rows ordered (dy, dx, ci)
    # aff_ref: (3, Cout)        f32    rows = [bias, gamma, beta]
    # pm_ref:  (Cout, Cout)     f32    group-averaging matrix (includes 1/n)
    # returns: (H*W, Cout) cast to out_dtype
    cout = w_ref.shape[1]
    HW = H * W

    # --- im2col: 3 dx-shifted copies (dy handled for free by major-dim slices below) ---
    for dx in range(3):
        col_ref[:, :, dx * C:(dx + 1) * C] = pad_ref[:, dx:dx + W, 0:C]

    # --- 3x3 conv as 3 accumulating bf16 MXU matmuls (K = 3*C), f32 accumulation, + bias ---
    acc = None
    for dy in range(3):
        lhs = col_ref[dy:dy + H, :, 0:3 * C].reshape(HW, 3 * C)
        part = jnp.dot(lhs, w_ref[dy * 3 * C:(dy + 1) * 3 * C, :],
                       preferred_element_type=jnp.float32)
        acc = part if acc is None else acc + part
    acc = acc + aff_ref[0:1, :]

    # --- Swish: x * sigmoid(x) ---
    y = acc * jax.nn.sigmoid(acc)

    # --- GroupNorm (biased variance, matches torch.nn.GroupNorm) ---
    s = jnp.sum(y, axis=0, keepdims=True)          # (1, Cout) per-channel sum
    sq = jnp.sum(y * y, axis=0, keepdims=True)     # (1, Cout) per-channel sum of squares
    mean_c = jnp.dot(s, pm_ref[...], preferred_element_type=jnp.float32)
    meansq_c = jnp.dot(sq, pm_ref[...], preferred_element_type=jnp.float32)
    var_c = jnp.maximum(meansq_c - mean_c * mean_c, 0.0)   # clamp: cancellation guard
    inv_c = jax.lax.rsqrt(var_c + 1e-5)
    gamma = aff_ref[1:2, :]
    beta = aff_ref[2:3, :]
    return ((y - mean_c) * (inv_c * gamma) + beta).astype(out_dtype)


def _block_kernel(x_ref, w1_ref, aff1_ref, pm1_ref, w2_ref, aff2_ref, pm2_ref,
                  o_ref, pad_ref, col_ref):
    # One batch element per grid step; both stages fused, intermediate stays in VMEM.
    # pad_ref / col_ref are shared (max-channel-sized) between the two stages.
    _, H, W, C2 = o_ref.shape
    Cin = x_ref.shape[-1]
    C1 = w1_ref.shape[1]

    # ---- stage 1: reflect-pad -> WNConv3x3 -> Swish -> GroupNorm (result kept bf16) ----
    _reflect_pad_into(pad_ref, x_ref[0], Cin)
    y1 = _conv_swish_groupnorm(pad_ref, col_ref, w1_ref, aff1_ref, pm1_ref,
                               Cin, H, W, out_dtype=jnp.bfloat16)      # (H*W, C1) bf16

    # ---- stage 2: re-pad the stage-1 result in VMEM (same scratch) and repeat ----
    _reflect_pad_into(pad_ref, y1.reshape(H, W, C1), C1)
    y2 = _conv_swish_groupnorm(pad_ref, col_ref, w2_ref, aff2_ref, pm2_ref,
                               C1, H, W, out_dtype=jnp.float32)        # (H*W, C2) f32

    o_ref[...] = y2.reshape(1, H, W, C2)


# ----------------------------- wrapper -----------------------------------------------------


def unet_conv_block(x_nchw, params):
    """UNetConvBlock(in_size, out_size, padding=True, batch_norm=False, bias=True)."""
    N, Cin, H, W = x_nchw.shape
    assert H >= 2 and W >= 2, "ReflectionPad2d(1) requires spatial dims >= 2"
    C1 = params["w1"].shape[0]
    C2 = params["w2"].shape[0]
    HW = H * W
    Cmax = max(Cin, C1)

    # parameter preprocessing (glue)
    w1 = _weight_slab(params["w1"])                                        # (9*Cin, C1) bf16
    w2 = _weight_slab(params["w2"])                                        # (9*C1,  C2) bf16
    aff1 = jnp.stack([params["b1"], params["g1"], params["be1"]]).astype(jnp.float32)
    aff2 = jnp.stack([params["b2"], params["g2"], params["be2"]]).astype(jnp.float32)
    pm1 = _group_mean_matrix(C1, get_groups(C1), HW)                       # (C1, C1) f32
    pm2 = _group_mean_matrix(C2, get_groups(C2), HW)                       # (C2, C2) f32

    # bf16 NHWC input: activations are consumed in bf16 anyway; halves input HBM + VMEM.
    # TODO(synk): keep the surrounding model NHWC end-to-end to drop this transpose pass.
    x_nhwc = jnp.transpose(x_nchw, (0, 2, 3, 1)).astype(jnp.bfloat16)

    # VMEM budget: double-buffered in/out blocks + params + shared scratch + live f32 temps.
    need = (2 * HW * Cin * 2 + 2 * HW * C2 * 4
            + 2 * (w1.size + w2.size) * 2
            + 2 * (aff1.size + aff2.size + pm1.size + pm2.size) * 4
            + (H + 2) * (W + 2) * Cmax * 2          # shared pad scratch (bf16)
            + (H + 2) * W * 3 * Cmax * 2            # shared im2col scratch (bf16)
            + 5 * HW * max(C1, C2) * 4)             # live f32 temporaries (acc, y, norm)
    try:
        vmem_cap = int(pltpu.get_tpu_info().vmem_capacity_bytes)
    except Exception:
        vmem_cap = 64 * 2**20                       # conservative (v7x per-TC) fallback
    vmem_limit = int(min(int(0.85 * vmem_cap), max(16 * 2**20, int(1.4 * need))))

    cost = pl.CostEstimate(
        flops=2 * N * HW * 9 * (Cin * C1 + C1 * C2),
        transcendentals=N * HW * (C1 + C2),
        bytes_accessed=(N * HW * (Cin * 2 + C2 * 4) + (w1.size + w2.size) * 2
                        + (aff1.size + aff2.size + pm1.size + pm2.size) * 4),
    )

    out_nhwc = pl.pallas_call(
        _block_kernel,
        out_shape=jax.ShapeDtypeStruct((N, H, W, C2), jnp.float32),
        grid_spec=pltpu.PrefetchScalarGridSpec(
            num_scalar_prefetch=0,
            grid=(N,),
            in_specs=[
                pl.BlockSpec((1, H, W, Cin), lambda n: (n, 0, 0, 0)),
                pl.BlockSpec((9 * Cin, C1), lambda n: (0, 0)),
                pl.BlockSpec((3, C1), lambda n: (0, 0)),
                pl.BlockSpec((C1, C1), lambda n: (0, 0)),
                pl.BlockSpec((9 * C1, C2), lambda n: (0, 0)),
                pl.BlockSpec((3, C2), lambda n: (0, 0)),
                pl.BlockSpec((C2, C2), lambda n: (0, 0)),
            ],
            out_specs=pl.BlockSpec((1, H, W, C2), lambda n: (n, 0, 0, 0)),
            scratch_shapes=[
                pltpu.VMEM((H + 2, W + 2, Cmax), jnp.bfloat16),     # shared reflection halo
                pltpu.VMEM((H + 2, W, 3 * Cmax), jnp.bfloat16),     # shared im2col slab
            ],
        ),
        compiler_params=pltpu.CompilerParams(
            dimension_semantics=("parallel",),
            vmem_limit_bytes=vmem_limit,
        ),
        cost_estimate=cost,
    )(x_nhwc, w1, aff1, pm1, w2, aff2, pm2)

    return jnp.transpose(out_nhwc, (0, 3, 1, 2))  # NHWC -> NCHW


if __name__ == "__main__":
    # small shapes: batch=2, in_size=4, out_size=8, spatial=16x16
    N, Cin, Cout, H, W = 2, 4, 8, 16, 16
    groups = get_groups(Cout)  # = 4

    key = jax.random.PRNGKey(0)
    ks = jax.random.split(key, 9)
    params = {
        "w1": 0.1 * jax.random.normal(ks[0], (Cout, Cin, 3, 3), jnp.float32),
        "b1": 0.05 * jax.random.normal(ks[1], (Cout,), jnp.float32),
        "g1": 1.0 + 0.1 * jax.random.normal(ks[2], (Cout,), jnp.float32),
        "be1": 0.1 * jax.random.normal(ks[3], (Cout,), jnp.float32),
        "w2": 0.1 * jax.random.normal(ks[4], (Cout, Cout, 3, 3), jnp.float32),
        "b2": 0.05 * jax.random.normal(ks[5], (Cout,), jnp.float32),
        "g2": 1.0 + 0.1 * jax.random.normal(ks[6], (Cout,), jnp.float32),
        "be2": 0.1 * jax.random.normal(ks[7], (Cout,), jnp.float32),
        "groups": groups,
    }
    x = jax.random.normal(ks[8], (N, Cin, H, W), jnp.float32)  # PyTorch-style NCHW input

    out = unet_conv_block(x, params)
    out = jax.block_until_ready(out)
    assert out.shape == (N, Cout, H, W), out.shape
    assert bool(jnp.all(jnp.isfinite(out))), "non-finite output"
    print("KERNEL_OK")
</pallas_src>

<mosaic_0001>
module attributes {stable_mosaic.version = 11 : i64} {
  func.func @_block_kernel(%arg0: i32, %arg1: memref<1x16x16x4xbf16, #tpu.memory_space<vmem>>, %arg2: memref<36x8xbf16, #tpu.memory_space<vmem>>, %arg3: memref<3x8xf32, #tpu.memory_space<vmem>>, %arg4: memref<8x8xf32, #tpu.memory_space<vmem>>, %arg5: memref<72x8xbf16, #tpu.memory_space<vmem>>, %arg6: memref<3x8xf32, #tpu.memory_space<vmem>>, %arg7: memref<8x8xf32, #tpu.memory_space<vmem>>, %arg8: memref<1x16x16x8xf32, #tpu.memory_space<vmem>>, %arg9: memref<18x18x8xbf16, #tpu.memory_space<vmem>>, %arg10: memref<18x16x24xbf16, #tpu.memory_space<vmem>>) attributes {dimension_semantics = [#tpu.dimension_semantics<parallel>], iteration_bounds = array<i64: 2>, scalar_prefetch = 0 : i64, scratch_operands = 2 : i64, tpu.core_type = #tpu.core_type<tc>, window_params = [{transform_indices = @transform_0, window_bounds = array<i64: 1, 16, 16, 4>}, {pipeline_mode = #tpu.pipeline_mode<synchronous>, transform_indices = @transform_1, window_bounds = array<i64: 36, 8>}, {pipeline_mode = #tpu.pipeline_mode<synchronous>, transform_indices = @transform_2, window_bounds = array<i64: 3, 8>}, {pipeline_mode = #tpu.pipeline_mode<synchronous>, transform_indices = @transform_3, window_bounds = array<i64: 8, 8>}, {pipeline_mode = #tpu.pipeline_mode<synchronous>, transform_indices = @transform_4, window_bounds = array<i64: 72, 8>}, {pipeline_mode = #tpu.pipeline_mode<synchronous>, transform_indices = @transform_5, window_bounds = array<i64: 3, 8>}, {pipeline_mode = #tpu.pipeline_mode<synchronous>, transform_indices = @transform_6, window_bounds = array<i64: 8, 8>}, {transform_indices = @transform_7, window_bounds = array<i64: 1, 16, 16, 8>}]} {
    %c0 = arith.constant 0 : index
    %c0_0 = arith.constant 0 : index
    %c0_1 = arith.constant 0 : index
    %c0_2 = arith.constant 0 : index
    %0 = vector.load %arg1[%c0, %c0_0, %c0_1, %c0_2] : memref<1x16x16x4xbf16, #tpu.memory_space<vmem>>, vector<1x16x16x4xbf16>
    %1 = vector.shape_cast %0 : vector<1x16x16x4xbf16> to vector<16x16x4xbf16>
    %c1 = arith.constant 1 : index
    %c1_3 = arith.constant 1 : index
    %c0_4 = arith.constant 0 : index
    %2 = vector.load %arg9[%c1, %c1_3, %c0_4] : memref<18x18x8xbf16, #tpu.memory_space<vmem>>, vector<16x16x4xbf16>
    tpu.vector_store %arg9[%c1, %c1_3, %c0_4], %1 {strides = array<i32>} : memref<18x18x8xbf16, #tpu.memory_space<vmem>>, vector<16x16x4xbf16>,
    %3 = vector.extract_strided_slice %1 {offsets = [1, 0, 0], sizes = [1, 16, 4], strides = [1, 1, 1]} : vector<16x16x4xbf16> to vector<1x16x4xbf16>
    %c0_5 = arith.constant 0 : index
    %c1_6 = arith.constant 1 : index
    %c0_7 = arith.constant 0 : index
    %4 = vector.load %arg9[%c0_5, %c1_6, %c0_7] : memref<18x18x8xbf16, #tpu.memory_space<vmem>>, vector<1x16x4xbf16>
    tpu.vector_store %arg9[%c0_5, %c1_6, %c0_7], %3 {strides = array<i32>} : memref<18x18x8xbf16, #tpu.memory_space<vmem>>, vector<1x16x4xbf16>,
    %5 = vector.extract_strided_slice %1 {offsets = [14, 0, 0], sizes = [1, 16, 4], strides = [1, 1, 1]} : vector<16x16x4xbf16> to vector<1x16x4xbf16>
    %c17 = arith.constant 17 : index
    %c1_8 = arith.constant 1 : index
    %c0_9 = arith.constant 0 : index
    %6 = vector.load %arg9[%c17, %c1_8, %c0_9] : memref<18x18x8xbf16, #tpu.memory_space<vmem>>, vector<1x16x4xbf16>
    tpu.vector_store %arg9[%c17, %c1_8, %c0_9], %5 {strides = array<i32>} : memref<18x18x8xbf16, #tpu.memory_space<vmem>>, vector<1x16x4xbf16>,
    %c0_10 = arith.constant 0 : index
    %c2 = arith.constant 2 : index
    %c0_11 = arith.constant 0 : index
    %7 = vector.load %arg9[%c0_10, %c2, %c0_11] : memref<18x18x8xbf16, #tpu.memory_space<vmem>>, vector<18x1x4xbf16>
    %c0_12 = arith.constant 0 : index
    %c0_13 = arith.constant 0 : index
    %c0_14 = arith.constant 0 : index
    %8 = vector.load %arg9[%c0_12, %c0_13, %c0_14] : memref<18x18x8xbf16, #tpu.memory_space<vmem>>, vector<18x1x4xbf16>
    tpu.vector_store %arg9[%c0_12, %c0_13, %c0_14], %7 {strides = array<i32>} : memref<18x18x8xbf16, #tpu.memory_space<vmem>>, vector<18x1x4xbf16>,
    %c0_15 = arith.constant 0 : index
    %c15 = arith.constant 15 : index
    %c0_16 = arith.constant 0 : index
    %9 = vector.load %arg9[%c0_15, %c15, %c0_16] : memref<18x18x8xbf16, #tpu.memory_space<vmem>>, vector<18x1x4xbf16>
    %c0_17 = arith.constant 0 : index
    %c17_18 = arith.constant 17 : index
    %c0_19 = arith.constant 0 : index
    %10 = vector.load %arg9[%c0_17, %c17_18, %c0_19] : memref<18x18x8xbf16, #tpu.memory_space<vmem>>, vector<18x1x4xbf16>
    tpu.vector_store %arg9[%c0_17, %c17_18, %c0_19], %9 {strides = array<i32>} : memref<18x18x8xbf16, #tpu.memory_space<vmem>>, vector<18x1x4xbf16>,
    %c0_20 = arith.constant 0 : index
    %c0_21 = arith.constant 0 : index
    %c0_22 = arith.constant 0 : index
    %11 = vector.load %arg9[%c0_20, %c0_21, %c0_22] : memref<18x18x8xbf16, #tpu.memory_space<vmem>>, vector<18x16x4xbf16>
    %c0_23 = arith.constant 0 : index
    %c0_24 = arith.constant 0 : index
    %c0_25 = arith.constant 0 : index
    %12 = vector.load %arg10[%c0_23, %c0_24, %c0_25] : memref<18x16x24xbf16, #tpu.memory_space<vmem>>, vector<18x16x4xbf16>
    tpu.vector_store %arg10[%c0_23, %c0_24, %c0_25], %11 {strides = array<i32>} : memref<18x16x24xbf16, #tpu.memory_space<vmem>>, vector<18x16x4xbf16>,
    %c0_26 = arith.constant 0 : index
    %c1_27 = arith.constant 1 : index
    %c0_28 = arith.constant 0 : index
    %13 = vector.load %arg9[%c0_26, %c1_27, %c0_28] : memref<18x18x8xbf16, #tpu.memory_space<vmem>>, vector<18x16x4xbf16>
    %c0_29 = arith.constant 0 : index
    %c0_30 = arith.constant 0 : index
    %c4 = arith.constant 4 : index
    %14 = vector.load %arg10[%c0_29, %c0_30, %c4] : memref<18x16x24xbf16, #tpu.memory_space<vmem>>, vector<18x16x4xbf16>
    tpu.vector_store %arg10[%c0_29, %c0_30, %c4], %13 {strides = array<i32>} : memref<18x16x24xbf16, #tpu.memory_space<vmem>>, vector<18x16x4xbf16>,
    %c0_31 = arith.constant 0 : index
    %c2_32 = arith.constant 2 : index
    %c0_33 = arith.constant 0 : index
    %15 = vector.load %arg9[%c0_31, %c2_32, %c0_33] : memref<18x18x8xbf16, #tpu.memory_space<vmem>>, vector<18x16x4xbf16>
    %c0_34 = arith.constant 0 : index
    %c0_35 = arith.constant 0 : index
    %c8 = arith.constant 8 : index
    %16 = vector.load %arg10[%c0_34, %c0_35, %c8] : memref<18x16x24xbf16, #tpu.memory_space<vmem>>, vector<18x16x4xbf16>
    tpu.vector_store %arg10[%c0_34, %c0_35, %c8], %15 {strides = array<i32>} : memref<18x16x24xbf16, #tpu.memory_space<vmem>>, vector<18x16x4xbf16>,
    %c0_36 = arith.constant 0 : index
    %c0_37 = arith.constant 0 : index
    %c0_38 = arith.constant 0 : index
    %17 = vector.load %arg10[%c0_36, %c0_37, %c0_38] : memref<18x16x24xbf16, #tpu.memory_space<vmem>>, vector<16x16x12xbf16>
    %18 = vector.shape_cast %17 : vector<16x16x12xbf16> to vector<256x12xbf16>
    %c0_39 = arith.constant 0 : index
    %c0_40 = arith.constant 0 : index
    %19 = vector.load %arg2[%c0_39, %c0_40] : memref<36x8xbf16, #tpu.memory_space<vmem>>, vector<12x8xbf16>
    %cst = arith.constant dense<0.000000e+00> : vector<256x8xf32>
    %20 = tpu.matmul %18, %19, %cst {dimension_numbers = #tpu.dot_dimension_numbers<[1], [0], [0], [1], [0, 0, 1, 1], [], []>} : vector<256x12xbf16>, vector<12x8xbf16>, vector<256x8xf32> -> vector<256x8xf32>
    %c1_41 = arith.constant 1 : index
    %c0_42 = arith.constant 0 : index
    %c0_43 = arith.constant 0 : index
    %21 = vector.load %arg10[%c1_41, %c0_42, %c0_43] : memref<18x16x24xbf16, #tpu.memory_space<vmem>>, vector<16x16x12xbf16>
    %22 = vector.shape_cast %21 : vector<16x16x12xbf16> to vector<256x12xbf16>
    %c12 = arith.constant 12 : index
    %c0_44 = arith.constant 0 : index
    %23 = vector.load %arg2[%c12, %c0_44] : memref<36x8xbf16, #tpu.memory_space<vmem>>, vector<12x8xbf16>
    %cst_45 = arith.constant dense<0.000000e+00> : vector<256x8xf32>
    %24 = tpu.matmul %22, %23, %cst_45 {dimension_numbers = #tpu.dot_dimension_numbers<[1], [0], [0], [1], [0, 0, 1, 1], [], []>} : vector<256x12xbf16>, vector<12x8xbf16>, vector<256x8xf32> -> vector<256x8xf32>
    %25 = arith.addf %20, %24 : vector<256x8xf32>
    %c2_46 = arith.constant 2 : index
    %c0_47 = arith.constant 0 : index
    %c0_48 = arith.constant 0 : index
    %26 = vector.load %arg10[%c2_46, %c0_47, %c0_48] : memref<18x16x24xbf16, #tpu.memory_space<vmem>>, vector<16x16x12xbf16>
    %27 = vector.shape_cast %26 : vector<16x16x12xbf16> to vector<256x12xbf16>
    %c24 = arith.constant 24 : index
    %c0_49 = arith.constant 0 : index
    %28 = vector.load %arg2[%c24, %c0_49] : memref<36x8xbf16, #tpu.memory_space<vmem>>, vector<12x8xbf16>
    %cst_50 = arith.constant dense<0.000000e+00> : vector<256x8xf32>
    %29 = tpu.matmul %27, %28, %cst_50 {dimension_numbers = #tpu.dot_dimension_numbers<[1], [0], [0], [1], [0, 0, 1, 1], [], []>} : vector<256x12xbf16>, vector<12x8xbf16>, vector<256x8xf32> -> vector<256x8xf32>
    %30 = arith.addf %25, %29 : vector<256x8xf32>
    %c0_51 = arith.constant 0 : index
    %c0_52 = arith.constant 0 : index
    %31 = vector.load %arg3[%c0_51, %c0_52] : memref<3x8xf32, #tpu.memory_space<vmem>>, vector<1x8xf32>
    %32 = vector.broadcast %31 : vector<1x8xf32> to vector<256x8xf32>
    %33 = arith.addf %30, %32 : vector<256x8xf32>
    %34 = arith.negf %33 : vector<256x8xf32>
    %35 = math.exp %34 : vector<256x8xf32>
    %cst_53 = arith.constant 1.000000e+00 : f32
    %36 = vector.broadcast %cst_53 : f32 to vector<256x8xf32>
    %37 = arith.addf %36, %35 : vector<256x8xf32>
    %38 = arith.divf %36, %37 : vector<256x8xf32>
    %39 = arith.mulf %33, %38 : vector<256x8xf32>
    %cst_54 = arith.constant dense<0.000000e+00> : vector<8xf32>
    %40 = vector.multi_reduction <add>, %39, %cst_54 [0] : vector<256x8xf32> to vector<8xf32>
    %41 = vector.shape_cast %40 : vector<8xf32> to vector<1x8xf32>
    %42 = arith.mulf %39, %39 : vector<256x8xf32>
    %cst_55 = arith.constant dense<0.000000e+00> : vector<8xf32>
    %43 = vector.multi_reduction <add>, %42, %cst_55 [0] : vector<256x8xf32> to vector<8xf32>
    %44 = vector.shape_cast %43 : vector<8xf32> to vector<1x8xf32>
    %c0_56 = arith.constant 0 : index
    %c0_57 = arith.constant 0 : index
    %45 = vector.load %arg4[%c0_56, %c0_57] : memref<8x8xf32, #tpu.memory_space<vmem>>, vector<8x8xf32>
    %cst_58 = arith.constant dense<0.000000e+00> : vector<1x8xf32>
    %46 = tpu.matmul %41, %45, %cst_58 {dimension_numbers = #tpu.dot_dimension_numbers<[1], [0], [0], [1], [0, 0, 1, 1], [], []>} : vector<1x8xf32>, vector<8x8xf32>, vector<1x8xf32> -> vector<1x8xf32>
    %c0_59 = arith.constant 0 : index
    %c0_60 = arith.constant 0 : index
    %47 = vector.load %arg4[%c0_59, %c0_60] : memref<8x8xf32, #tpu.memory_space<vmem>>, vector<8x8xf32>
    %cst_61 = arith.constant dense<0.000000e+00> : vector<1x8xf32>
    %48 = tpu.matmul %44, %47, %cst_61 {dimension_numbers = #tpu.dot_dimension_numbers<[1], [0], [0], [1], [0, 0, 1, 1], [], []>} : vector<1x8xf32>, vector<8x8xf32>, vector<1x8xf32> -> vector<1x8xf32>
    %49 = arith.mulf %46, %46 : vector<1x8xf32>
    %50 = arith.subf %48, %49 : vector<1x8xf32>
    %cst_62 = arith.constant 0.000000e+00 : f32
    %51 = vector.broadcast %cst_62 : f32 to vector<1x8xf32>
    %52 = arith.maximumf %50, %51 : vector<1x8xf32>
    %cst_63 = arith.constant 9.99999974E-6 : f32
    %53 = vector.broadcast %cst_63 : f32 to vector<1x8xf32>
    %54 = arith.addf %52, %53 : vector<1x8xf32>
    %55 = math.rsqrt %54 : vector<1x8xf32>
    %c1_64 = arith.constant 1 : index
    %c0_65 = arith.constant 0 : index
    %56 = vector.load %arg3[%c1_64, %c0_65] : memref<3x8xf32, #tpu.memory_space<vmem>>, vector<1x8xf32>
    %c2_66 = arith.constant 2 : index
    %c0_67 = arith.constant 0 : index
    %57 = vector.load %arg3[%c2_66, %c0_67] : memref<3x8xf32, #tpu.memory_space<vmem>>, vector<1x8xf32>
    %58 = vector.broadcast %46 : vector<1x8xf32> to vector<256x8xf32>
    %59 = arith.subf %39, %58 : vector<256x8xf32>
    %60 = arith.mulf %55, %56 : vector<1x8xf32>
    %61 = vector.broadcast %60 : vector<1x8xf32> to vector<256x8xf32>
    %62 = arith.mulf %59, %61 : vector<256x8xf32>
    %63 = vector.broadcast %57 : vector<1x8xf32> to vector<256x8xf32>
    %64 = arith.addf %62, %63 : vector<256x8xf32>
    %65 = arith.truncf %64 : vector<256x8xf32> to vector<256x8xbf16>
    %66 = vector.shape_cast %65 : vector<256x8xbf16> to vector<16x16x8xbf16>
    %c1_68 = arith.constant 1 : index
    %c1_69 = arith.constant 1 : index
    %c0_70 = arith.constant 0 : index
    %67 = vector.load %arg9[%c1_68, %c1_69, %c0_70] : memref<18x18x8xbf16, #tpu.memory_space<vmem>>, vector<16x16x8xbf16>
    tpu.vector_store %arg9[%c1_68, %c1_69, %c0_70], %66 {strides = array<i32>} : memref<18x18x8xbf16, #tpu.memory_space<vmem>>, vector<16x16x8xbf16>,
    %68 = vector.extract_strided_slice %66 {offsets = [1, 0, 0], sizes = [1, 16, 8], strides = [1, 1, 1]} : vector<16x16x8xbf16> to vector<1x16x8xbf16>
    %c0_71 = arith.constant 0 : index
    %c1_72 = arith.constant 1 : index
    %c0_73 = arith.constant 0 : index
    %69 = vector.load %arg9[%c0_71, %c1_72, %c0_73] : memref<18x18x8xbf16, #tpu.memory_space<vmem>>, vector<1x16x8xbf16>
    tpu.vector_store %arg9[%c0_71, %c1_72, %c0_73], %68 {strides = array<i32>} : memref<18x18x8xbf16, #tpu.memory_space<vmem>>, vector<1x16x8xbf16>,
    %70 = vector.extract_strided_slice %66 {offsets = [14, 0, 0], sizes = [1, 16, 8], strides = [1, 1, 1]} : vector<16x16x8xbf16> to vector<1x16x8xbf16>
    %c17_74 = arith.constant 17 : index
    %c1_75 = arith.constant 1 : index
    %c0_76 = arith.constant 0 : index
    %71 = vector.load %arg9[%c17_74, %c1_75, %c0_76] : memref<18x18x8xbf16, #tpu.memory_space<vmem>>, vector<1x16x8xbf16>
    tpu.vector_store %arg9[%c17_74, %c1_75, %c0_76], %70 {strides = array<i32>} : memref<18x18x8xbf16, #tpu.memory_space<vmem>>, vector<1x16x8xbf16>,
    %c0_77 = arith.constant 0 : index
    %c2_78 = arith.constant 2 : index
    %c0_79 = arith.constant 0 : index
    %72 = vector.load %arg9[%c0_77, %c2_78, %c0_79] : memref<18x18x8xbf16, #tpu.memory_space<vmem>>, vector<18x1x8xbf16>
    %c0_80 = arith.constant 0 : index
    %c0_81 = arith.constant 0 : index
    %c0_82 = arith.constant 0 : index
    %73 = vector.load %arg9[%c0_80, %c0_81, %c0_82] : memref<18x18x8xbf16, #tpu.memory_space<vmem>>, vector<18x1x8xbf16>
    tpu.vector_store %arg9[%c0_80, %c0_81, %c0_82], %72 {strides = array<i32>} : memref<18x18x8xbf16, #tpu.memory_space<vmem>>, vector<18x1x8xbf16>,
    %c0_83 = arith.constant 0 : index
    %c15_84 = arith.constant 15 : index
    %c0_85 = arith.constant 0 : index
    %74 = vector.load %arg9[%c0_83, %c15_84, %c0_85] : memref<18x18x8xbf16, #tpu.memory_space<vmem>>, vector<18x1x8xbf16>
    %c0_86 = arith.constant 0 : index
    %c17_87 = arith.constant 17 : index
    %c0_88 = arith.constant 0 : index
    %75 = vector.load %arg9[%c0_86, %c17_87, %c0_88] : memref<18x18x8xbf16, #tpu.memory_space<vmem>>, vector<18x1x8xbf16>
    tpu.vector_store %arg9[%c0_86, %c17_87, %c0_88], %74 {strides = array<i32>} : memref<18x18x8xbf16, #tpu.memory_space<vmem>>, vector<18x1x8xbf16>,
    %c0_89 = arith.constant 0 : index
    %c0_90 = arith.constant 0 : index
    %c0_91 = arith.constant 0 : index
    %76 = vector.load %arg9[%c0_89, %c0_90, %c0_91] : memref<18x18x8xbf16, #tpu.memory_space<vmem>>, vector<18x16x8xbf16>
    %c0_92 = arith.constant 0 : index
    %c0_93 = arith.constant 0 : index
    %c0_94 = arith.constant 0 : index
    %77 = vector.load %arg10[%c0_92, %c0_93, %c0_94] : memref<18x16x24xbf16, #tpu.memory_space<vmem>>, vector<18x16x8xbf16>
    tpu.vector_store %arg10[%c0_92, %c0_93, %c0_94], %76 {strides = array<i32>} : memref<18x16x24xbf16, #tpu.memory_space<vmem>>, vector<18x16x8xbf16>,
    %c0_95 = arith.constant 0 : index
    %c1_96 = arith.constant 1 : index
    %c0_97 = arith.constant 0 : index
    %78 = vector.load %arg9[%c0_95, %c1_96, %c0_97] : memref<18x18x8xbf16, #tpu.memory_space<vmem>>, vector<18x16x8xbf16>
    %c0_98 = arith.constant 0 : index
    %c0_99 = arith.constant 0 : index
    %c8_100 = arith.constant 8 : index
    %79 = vector.load %arg10[%c0_98, %c0_99, %c8_100] : memref<18x16x24xbf16, #tpu.memory_space<vmem>>, vector<18x16x8xbf16>
    tpu.vector_store %arg10[%c0_98, %c0_99, %c8_100], %78 {strides = array<i32>} : memref<18x16x24xbf16, #tpu.memory_space<vmem>>, vector<18x16x8xbf16>,
    %c0_101 = arith.constant 0 : index
    %c2_102 = arith.constant 2 : index
    %c0_103 = arith.constant 0 : index
    %80 = vector.load %arg9[%c0_101, %c2_102, %c0_103] : memref<18x18x8xbf16, #tpu.memory_space<vmem>>, vector<18x16x8xbf16>
    %c0_104 = arith.constant 0 : index
    %c0_105 = arith.constant 0 : index
    %c16 = arith.constant 16 : index
    %81 = vector.load %arg10[%c0_104, %c0_105, %c16] : memref<18x16x24xbf16, #tpu.memory_space<vmem>>, vector<18x16x8xbf16>
    tpu.vector_store %arg10[%c0_104, %c0_105, %c16], %80 {strides = array<i32>} : memref<18x16x24xbf16, #tpu.memory_space<vmem>>, vector<18x16x8xbf16>,
    %c0_106 = arith.constant 0 : index
    %c0_107 = arith.constant 0 : index
    %c0_108 = arith.constant 0 : index
    %82 = vector.load %arg10[%c0_106, %c0_107, %c0_108] : memref<18x16x24xbf16, #tpu.memory_space<vmem>>, vector<16x16x24xbf16>
    %83 = vector.shape_cast %82 : vector<16x16x24xbf16> to vector<256x24xbf16>
    %c0_109 = arith.constant 0 : index
    %c0_110 = arith.constant 0 : index
    %84 = vector.load %arg5[%c0_109, %c0_110] : memref<72x8xbf16, #tpu.memory_space<vmem>>, vector<24x8xbf16>
    %cst_111 = arith.constant dense<0.000000e+00> : vector<256x8xf32>
    %85 = tpu.matmul %83, %84, %cst_111 {dimension_numbers = #tpu.dot_dimension_numbers<[1], [0], [0], [1], [0, 0, 1, 1], [], []>} : vector<256x24xbf16>, vector<24x8xbf16>, vector<256x8xf32> -> vector<256x8xf32>
    %c1_112 = arith.constant 1 : index
    %c0_113 = arith.constant 0 : index
    %c0_114 = arith.constant 0 : index
    %86 = vector.load %arg10[%c1_112, %c0_113, %c0_114] : memref<18x16x24xbf16, #tpu.memory_space<vmem>>, vector<16x16x24xbf16>
    %87 = vector.shape_cast %86 : vector<16x16x24xbf16> to vector<256x24xbf16>
    %c24_115 = arith.constant 24 : index
    %c0_116 = arith.constant 0 : index
    %88 = vector.load %arg5[%c24_115, %c0_116] : memref<72x8xbf16, #tpu.memory_space<vmem>>, vector<24x8xbf16>
    %cst_117 = arith.constant dense<0.000000e+00> : vector<256x8xf32>
    %89 = tpu.matmul %87, %88, %cst_117 {dimension_numbers = #tpu.dot_dimension_numbers<[1], [0], [0], [1], [0, 0, 1, 1], [], []>} : vector<256x24xbf16>, vector<24x8xbf16>, vector<256x8xf32> -> vector<256x8xf32>
    %90 = arith.addf %85, %89 : vector<256x8xf32>
    %c2_118 = arith.constant 2 : index
    %c0_119 = arith.constant 0 : index
    %c0_120 = arith.constant 0 : index
    %91 = vector.load %arg10[%c2_118, %c0_119, %c0_120] : memref<18x16x24xbf16, #tpu.memory_space<vmem>>, vector<16x16x24xbf16>
    %92 = vector.shape_cast %91 : vector<16x16x24xbf16> to vector<256x24xbf16>
    %c48 = arith.constant 48 : index
    %c0_121 = arith.constant 0 : index
    %93 = vector.load %arg5[%c48, %c0_121] : memref<72x8xbf16, #tpu.memory_space<vmem>>, vector<24x8xbf16>
    %cst_122 = arith.constant dense<0.000000e+00> : vector<256x8xf32>
    %94 = tpu.matmul %92, %93, %cst_122 {dimension_numbers = #tpu.dot_dimension_numbers<[1], [0], [0], [1], [0, 0, 1, 1], [], []>} : vector<256x24xbf16>, vector<24x8xbf16>, vector<256x8xf32> -> vector<256x8xf32>
    %95 = arith.addf %90, %94 : vector<256x8xf32>
    %c0_123 = arith.constant 0 : index
    %c0_124 = arith.constant 0 : index
    %96 = vector.load %arg6[%c0_123, %c0_124] : memref<3x8xf32, #tpu.memory_space<vmem>>, vector<1x8xf32>
    %97 = vector.broadcast %96 : vector<1x8xf32> to vector<256x8xf32>
    %98 = arith.addf %95, %97 : vector<256x8xf32>
    %99 = arith.negf %98 : vector<256x8xf32>
    %100 = math.exp %99 : vector<256x8xf32>
    %cst_125 = arith.constant 1.000000e+00 : f32
    %101 = vector.broadcast %cst_125 : f32 to vector<256x8xf32>
    %102 = arith.addf %101, %100 : vector<256x8xf32>
    %103 = arith.divf %101, %102 : vector<256x8xf32>
    %104 = arith.mulf %98, %103 : vector<256x8xf32>
    %cst_126 = arith.constant dense<0.000000e+00> : vector<8xf32>
    %105 = vector.multi_reduction <add>, %104, %cst_126 [0] : vector<256x8xf32> to vector<8xf32>
    %106 = vector.shape_cast %105 : vector<8xf32> to vector<1x8xf32>
    %107 = arith.mulf %104, %104 : vector<256x8xf32>
    %cst_127 = arith.constant dense<0.000000e+00> : vector<8xf32>
    %108 = vector.multi_reduction <add>, %107, %cst_127 [0] : vector<256x8xf32> to vector<8xf32>
    %109 = vector.shape_cast %108 : vector<8xf32> to vector<1x8xf32>
    %c0_128 = arith.constant 0 : index
    %c0_129 = arith.constant 0 : index
    %110 = vector.load %arg7[%c0_128, %c0_129] : memref<8x8xf32, #tpu.memory_space<vmem>>, vector<8x8xf32>
    %cst_130 = arith.constant dense<0.000000e+00> : vector<1x8xf32>
    %111 = tpu.matmul %106, %110, %cst_130 {dimension_numbers = #tpu.dot_dimension_numbers<[1], [0], [0], [1], [0, 0, 1, 1], [], []>} : vector<1x8xf32>, vector<8x8xf32>, vector<1x8xf32> -> vector<1x8xf32>
    %c0_131 = arith.constant 0 : index
    %c0_132 = arith.constant 0 : index
    %112 = vector.load %arg7[%c0_131, %c0_132] : memref<8x8xf32, #tpu.memory_space<vmem>>, vector<8x8xf32>
    %cst_133 = arith.constant dense<0.000000e+00> : vector<1x8xf32>
    %113 = tpu.matmul %109, %112, %cst_133 {dimension_numbers = #tpu.dot_dimension_numbers<[1], [0], [0], [1], [0, 0, 1, 1], [], []>} : vector<1x8xf32>, vector<8x8xf32>, vector<1x8xf32> -> vector<1x8xf32>
    %114 = arith.mulf %111, %111 : vector<1x8xf32>
    %115 = arith.subf %113, %114 : vector<1x8xf32>
    %cst_134 = arith.constant 0.000000e+00 : f32
    %116 = vector.broadcast %cst_134 : f32 to vector<1x8xf32>
    %117 = arith.maximumf %115, %116 : vector<1x8xf32>
    %cst_135 = arith.constant 9.99999974E-6 : f32
    %118 = vector.broadcast %cst_135 : f32 to vector<1x8xf32>
    %119 = arith.addf %117, %118 : vector<1x8xf32>
    %120 = math.rsqrt %119 : vector<1x8xf32>
    %c1_136 = arith.constant 1 : index
    %c0_137 = arith.constant 0 : index
    %121 = vector.load %arg6[%c1_136, %c0_137] : memref<3x8xf32, #tpu.memory_space<vmem>>, vector<1x8xf32>
    %c2_138 = arith.constant 2 : index
    %c0_139 = arith.constant 0 : index
    %122 = vector.load %arg6[%c2_138, %c0_139] : memref<3x8xf32, #tpu.memory_space<vmem>>, vector<1x8xf32>
    %123 = vector.broadcast %111 : vector<1x8xf32> to vector<256x8xf32>
    %124 = arith.subf %104, %123 : vector<256x8xf32>
    %125 = arith.mulf %120, %121 : vector<1x8xf32>
    %126 = vector.broadcast %125 : vector<1x8xf32> to vector<256x8xf32>
    %127 = arith.mulf %124, %126 : vector<256x8xf32>
    %128 = vector.broadcast %122 : vector<1x8xf32> to vector<256x8xf32>
    %129 = arith.addf %127, %128 : vector<256x8xf32>
    %130 = vector.shape_cast %129 : vector<256x8xf32> to vector<1x16x16x8xf32>
    %c0_140 = arith.constant 0 : index
    %c0_141 = arith.constant 0 : index
    %c0_142 = arith.constant 0 : index
    %c0_143 = arith.constant 0 : index
    %131 = vector.load %arg8[%c0_140, %c0_141, %c0_142, %c0_143] : memref<1x16x16x8xf32, #tpu.memory_space<vmem>>, vector<1x16x16x8xf32>
    tpu.vector_store %arg8[%c0_140, %c0_141, %c0_142, %c0_143], %130 {strides = array<i32>} : memref<1x16x16x8xf32, #tpu.memory_space<vmem>>, vector<1x16x16x8xf32>,
    return
  }
  func.func @transform_0(%arg0: i32) -> (i32, i32, i32, i32) {
    %c0_i32 = arith.constant 0 : i32
    %c0_i32_0 = arith.constant 0 : i32
    %c0_i32_1 = arith.constant 0 : i32
    %c0_i32_2 = arith.constant 0 : i32
    return %arg0, %c0_i32, %c0_i32_0, %c0_i32_1 : i32, i32, i32, i32
  }
  func.func @transform_1(%arg0: i32) -> (i32, i32) {
    %c0_i32 = arith.constant 0 : i32
    %c0_i32_0 = arith.constant 0 : i32
    %c0_i32_1 = arith.constant 0 : i32
    return %c0_i32, %c0_i32_0 : i32, i32
  }
  func.func @transform_2(%arg0: i32) -> (i32, i32) {
    %c0_i32 = arith.constant 0 : i32
    %c0_i32_0 = arith.constant 0 : i32
    %c0_i32_1 = arith.constant 0 : i32
    return %c0_i32, %c0_i32_0 : i32, i32
  }
  func.func @transform_3(%arg0: i32) -> (i32, i32) {
    %c0_i32 = arith.constant 0 : i32
    %c0_i32_0 = arith.constant 0 : i32
    %c0_i32_1 = arith.constant 0 : i32
    return %c0_i32, %c0_i32_0 : i32, i32
  }
  func.func @transform_4(%arg0: i32) -> (i32, i32) {
    %c0_i32 = arith.constant 0 : i32
    %c0_i32_0 = arith.constant 0 : i32
    %c0_i32_1 = arith.constant 0 : i32
    return %c0_i32, %c0_i32_0 : i32, i32
  }
  func.func @transform_5(%arg0: i32) -> (i32, i32) {
    %c0_i32 = arith.constant 0 : i32
    %c0_i32_0 = arith.constant 0 : i32
    %c0_i32_1 = arith.constant 0 : i32
    return %c0_i32, %c0_i32_0 : i32, i32
  }
  func.func @transform_6(%arg0: i32) -> (i32, i32) {
    %c0_i32 = arith.constant 0 : i32
    %c0_i32_0 = arith.constant 0 : i32
    %c0_i32_1 = arith.constant 0 : i32
    return %c0_i32, %c0_i32_0 : i32, i32
  }
  func.func @transform_7(%arg0: i32) -> (i32, i32, i32, i32) {
    %c0_i32 = arith.constant 0 : i32
    %c0_i32_0 = arith.constant 0 : i32
    %c0_i32_1 = arith.constant 0 : i32
    %c0_i32_2 = arith.constant 0 : i32
    return %arg0, %c0_i32, %c0_i32_0, %c0_i32_1 : i32, i32, i32, i32
  }
}

</mosaic_0001>

<llo_original>
// kernel: tpu_custom_call.1
$region0: #{tpu_custom_call.1}
  #allocation0 [shape = 'u32[]', space=smem, size = 0x4, offset = 0x4, fixed_abs, tag = 'smem constant byte address 0x4 - core index']
  #allocation1 [shape = 'u32[144,128]{1,0:T(1,128)}', space=vmem, size = 0x12000, scoped, tag = 'internal scratch']
  #allocation2 [shape = 'bf16[18,18,8]{2,1,0:T(8,128)(2,1)}', space=vmem, size = 0x1b000, scoped, tag = 'scratch operand']
  #allocation3 [shape = 'bf16[18,16,24]{2,1,0:T(8,128)(2,1)}', space=vmem, size = 0x12000, scoped, tag = 'scratch operand']
  %s0 = inlined_call_operand.vmem [shape: bf16[2,16,16,4], index: 0, kind: input, shape index: {}]
  %s1 = inlined_call_operand.vmem [shape: bf16[36,8], index: 1, kind: input, shape index: {}]
  %s2 = inlined_call_operand.vmem [shape: f32[3,8], index: 2, kind: input, shape index: {}]
  %s3 = inlined_call_operand.vmem [shape: f32[8,8], index: 3, kind: input, shape index: {}]
  %s4 = inlined_call_operand.vmem [shape: bf16[72,8], index: 4, kind: input, shape index: {}]
  %s5 = inlined_call_operand.vmem [shape: f32[3,8], index: 5, kind: input, shape index: {}]
  %s6 = inlined_call_operand.vmem [shape: f32[8,8], index: 6, kind: input, shape index: {}]
  %s7 = inlined_call_operand.vmem [shape: f32[2,16,16,8], index: 7, kind: output, shape index: {}]
  %s8 = sld [smem:[#allocation0]]
  $region61: #{tpu_custom_call.1} parent=0
    _
  %s10 = ssub.s32 1, %s8
  %s11 = scalar_select 0, %s10, %s8
  loop: start=0, step=1, limit=4
  $region2: #{tpu_custom_call.1} parent=0 // loop_pre_header
    _
  $region3: #{tpu_custom_call.1} parent=0 // loop_header
    %s13 = sphi 0, %s17
    %p14 = scmp.ge.s32.totalorder %s13, 4
    %s23 = sphi 0, %s25
    %s26 = sphi 0, %s23
    %s27 = sphi 0, %s26
    %s43 = sphi 0, %s27
    %s47 = sphi 0, %s47
    %s49 = sphi 0, %s47
    %s50 = sphi 0, %s49
    %s64 = sphi 0, %s50
    %s68 = sphi 0, %s68
    %s70 = sphi 0, %s68
    %s71 = sphi 0, %s70
    %s85 = sphi 0, %s71
    %s89 = sphi 0, %s89
    %s91 = sphi 0, %s89
    %s92 = sphi 0, %s91
    %s106 = sphi 0, %s92
    %s110 = sphi 0, %s110
    %s112 = sphi 0, %s110
    %s113 = sphi 0, %s112
    %s127 = sphi 0, %s113
    %s131 = sphi 0, %s131
    %s133 = sphi 0, %s131
    %s134 = sphi 0, %s133
    %s148 = sphi 0, %s134
    %s152 = sphi 0, %s152
    %s154 = sphi 0, %s152
    %s155 = sphi 0, %s154
    %s169 = sphi 0, %s155
    %s175 = sphi 0, %s177
    %s178 = sphi 0, %s175
    %s179 = sphi 0, %s178
    %s195 = sphi 0, %s179
  $region4: #{tpu_custom_call.1} parent=0 // loop_header_branch
    %16 = sbr.rel (%p14) target = $region8
  $region5: #{tpu_custom_call.1} parent=0 // loop_body
    %s18 = ssub.s32 %s13, 1
    %s19 = ssub.s32 %s13, 2
    %s20 = sadd.s32 %s13, 1
    %s21 = ssub.s32 %s13, %s20
    %p22 = scmp.eq.s32.totalorder %s21, 0
    %s24 = sadd.s32 %s23, 1
    %s25 = scalar_select %p22, %s23, %s24
    %p28 = pneg %p22
    %p29 = scmp.eq.s32.totalorder %s13, 1
    %p30 = por %p28, %p29
    %p31 = scmp.ne.s32.totalorder %s23, %s26
    %p32 = scmp.eq.s32.totalorder %s13, 0
    %p33 = por %p31, %p32
    %p34 = scmp.ne.s32.totalorder %s23, %s26
    %p35 = scmp.eq.s32.totalorder %s18, 1
    %p36 = por %p34, %p35
    %p37 = scmp.ne.s32.totalorder %s26, %s27
    %p38 = scmp.eq.s32.totalorder %s18, 0
    %p39 = por %p37, %p38
    %p40 = scmp.ne.s32.totalorder %s26, %s27
    %p41 = scmp.eq.s32.totalorder %s19, 1
    %p42 = por %p40, %p41
    %p44 = scmp.ne.s32.totalorder %s27, %s43
    %p45 = scmp.eq.s32.totalorder %s19, 0
    %p46 = por %p44, %p45
    %s48 = sadd.s32 %s47, 1
    %p51 = scmp.eq.s32.totalorder %s13, 1
    %p52 = scmp.ne.s32.totalorder %s47, %s49
    %p53 = scmp.eq.s32.totalorder %s13, 0
    %p54 = por %p52, %p53
    %p55 = scmp.ne.s32.totalorder %s47, %s49
    %p56 = scmp.eq.s32.totalorder %s18, 1
    %p57 = por %p55, %p56
    %p58 = scmp.ne.s32.totalorder %s49, %s50
    %p59 = scmp.eq.s32.totalorder %s18, 0
    %p60 = por %p58, %p59
    %p61 = scmp.ne.s32.totalorder %s49, %s50
    %p62 = scmp.eq.s32.totalorder %s19, 1
    %p63 = por %p61, %p62
    %p65 = scmp.ne.s32.totalorder %s50, %s64
    %p66 = scmp.eq.s32.totalorder %s19, 0
    %p67 = por %p65, %p66
    %s69 = sadd.s32 %s68, 1
    %p72 = scmp.eq.s32.totalorder %s13, 1
    %p73 = scmp.ne.s32.totalorder %s68, %s70
    %p74 = scmp.eq.s32.totalorder %s13, 0
    %p75 = por %p73, %p74
    %p76 = scmp.ne.s32.totalorder %s68, %s70
    %p77 = scmp.eq.s32.totalorder %s18, 1
    %p78 = por %p76, %p77
    %p79 = scmp.ne.s32.totalorder %s70, %s71
    %p80 = scmp.eq.s32.totalorder %s18, 0
    %p81 = por %p79, %p80
    %p82 = scmp.ne.s32.totalorder %s70, %s71
    %p83 = scmp.eq.s32.totalorder %s19, 1
    %p84 = por %p82, %p83
    %p86 = scmp.ne.s32.totalorder %s71, %s85
    %p87 = scmp.eq.s32.totalorder %s19, 0
    %p88 = por %p86, %p87
    %s90 = sadd.s32 %s89, 1
    %p93 = scmp.eq.s32.totalorder %s13, 1
    %p94 = scmp.ne.s32.totalorder %s89, %s91
    %p95 = scmp.eq.s32.totalorder %s13, 0
    %p96 = por %p94, %p95
    %p97 = scmp.ne.s32.totalorder %s89, %s91
    %p98 = scmp.eq.s32.totalorder %s18, 1
    %p99 = por %p97, %p98
    %p100 = scmp.ne.s32.totalorder %s91, %s92
    %p101 = scmp.eq.s32.totalorder %s18, 0
    %p102 = por %p100, %p101
    %p103 = scmp.ne.s32.totalorder %s91, %s92
    %p104 = scmp.eq.s32.totalorder %s19, 1
    %p105 = por %p103, %p104
    %p107 = scmp.ne.s32.totalorder %s92, %s106
    %p108 = scmp.eq.s32.totalorder %s19, 0
    %p109 = por %p107, %p108
    %s111 = sadd.s32 %s110, 1
    %p114 = scmp.eq.s32.totalorder %s13, 1
    %p115 = scmp.ne.s32.totalorder %s110, %s112
    %p116 = scmp.eq.s32.totalorder %s13, 0
    %p117 = por %p115, %p116
    %p118 = scmp.ne.s32.totalorder %s110, %s112
    %p119 = scmp.eq.s32.totalorder %s18, 1
    %p120 = por %p118, %p119
    %p121 = scmp.ne.s32.totalorder %s112, %s113
    %p122 = scmp.eq.s32.totalorder %s18, 0
    %p123 = por %p121, %p122
    %p124 = scmp.ne.s32.totalorder %s112, %s113
    %p125 = scmp.eq.s32.totalorder %s19, 1
    %p126 = por %p124, %p125
    %p128 = scmp.ne.s32.totalorder %s113, %s127
    %p129 = scmp.eq.s32.totalorder %s19, 0
    %p130 = por %p128, %p129
    %s132 = sadd.s32 %s131, 1
    %p135 = scmp.eq.s32.totalorder %s13, 1
    %p136 = scmp.ne.s32.totalorder %s131, %s133
    %p137 = scmp.eq.s32.totalorder %s13, 0
    %p138 = por %p136, %p137
    %p139 = scmp.ne.s32.totalorder %s131, %s133
    %p140 = scmp.eq.s32.totalorder %s18, 1
    %p141 = por %p139, %p140
    %p142 = scmp.ne.s32.totalorder %s133, %s134
    %p143 = scmp.eq.s32.totalorder %s18, 0
    %p144 = por %p142, %p143
    %p145 = scmp.ne.s32.totalorder %s133, %s134
    %p146 = scmp.eq.s32.totalorder %s19, 1
    %p147 = por %p145, %p146
    %p149 = scmp.ne.s32.totalorder %s134, %s148
    %p150 = scmp.eq.s32.totalorder %s19, 0
    %p151 = por %p149, %p150
    %s153 = sadd.s32 %s152, 1
    %p156 = scmp.eq.s32.totalorder %s13, 1
    %p157 = scmp.ne.s32.totalorder %s152, %s154
    %p158 = scmp.eq.s32.totalorder %s13, 0
    %p159 = por %p157, %p158
    %p160 = scmp.ne.s32.totalorder %s152, %s154
    %p161 = scmp.eq.s32.totalorder %s18, 1
    %p162 = por %p160, %p161
    %p163 = scmp.ne.s32.totalorder %s154, %s155
    %p164 = scmp.eq.s32.totalorder %s18, 0
    %p165 = por %p163, %p164
    %p166 = scmp.ne.s32.totalorder %s154, %s155
    %p167 = scmp.eq.s32.totalorder %s19, 1
    %p168 = por %p166, %p167
    %p170 = scmp.ne.s32.totalorder %s155, %s169
    %p171 = scmp.eq.s32.totalorder %s19, 0
    %p172 = por %p170, %p171
    %s173 = ssub.s32 %s13, %s20
    %p174 = scmp.eq.s32.totalorder %s173, 0
    %s176 = sadd.s32 %s175, 1
    %s177 = scalar_select %p174, %s175, %s176
    %p180 = pneg %p174
    %p181 = scmp.eq.s32.totalorder %s13, 1
    %p182 = por %p180, %p181
    %p183 = scmp.ne.s32.totalorder %s175, %s178
    %p184 = scmp.eq.s32.totalorder %s13, 0
    %p185 = por %p183, %p184
    %p186 = scmp.ne.s32.totalorder %s175, %s178
    %p187 = scmp.eq.s32.totalorder %s18, 1
    %p188 = por %p186, %p187
    %p189 = scmp.ne.s32.totalorder %s178, %s179
    %p190 = scmp.eq.s32.totalorder %s18, 0
    %p191 = por %p189, %p190
    %p192 = scmp.ne.s32.totalorder %s178, %s179
    %p193 = scmp.eq.s32.totalorder %s19, 1
    %p194 = por %p192, %p193
    %p196 = scmp.ne.s32.totalorder %s179, %s195
    %p197 = scmp.eq.s32.totalorder %s19, 0
    %p198 = por %p196, %p197
    %p199 = scmp.le.s32.totalorder 1, %s13
    %p200 = scmp.lt.s32.totalorder %s13, 3
    %p201 = pnand %p199, %p200
    %p202 = pneg %p201
    // Predicated region
    $region9: #{tpu_custom_call.1} parent=5 // pred_check
      _
    $region10: #{tpu_custom_call.1} parent=5 // pred_check_branch
      %204 = sbr.rel (%p201) target = $region12
    $region11: #{tpu_custom_call.1} parent=5 // pred_region
      %s205 = ssub.s32 %s13, 1
      // Predicated region
      $region13: #{tpu_custom_call.1} parent=11 // pred_check
        %p206 = pneg %p60
      $region14: #{tpu_custom_call.1} parent=11 // pred_check_branch
        %208 = sbr.rel (%p206) target = $region16
      $region15: #{tpu_custom_call.1} parent=11 // pred_region
        _
      $region16: #{tpu_custom_call.1} parent=11 // pred_fallthru
        _
      // Predicated region
      $region17: #{tpu_custom_call.1} parent=11 // pred_check
        %p209 = pneg %p81
      $region18: #{tpu_custom_call.1} parent=11 // pred_check_branch
        %211 = sbr.rel (%p209) target = $region20
      $region19: #{tpu_custom_call.1} parent=11 // pred_region
        _
      $region20: #{tpu_custom_call.1} parent=11 // pred_fallthru
        _
      // Predicated region
      $region21: #{tpu_custom_call.1} parent=11 // pred_check
        %p212 = pneg %p102
      $region22: #{tpu_custom_call.1} parent=11 // pred_check_branch
        %214 = sbr.rel (%p212) target = $region24
      $region23: #{tpu_custom_call.1} parent=11 // pred_region
        _
      $region24: #{tpu_custom_call.1} parent=11 // pred_fallthru
        _
      // Predicated region
      $region25: #{tpu_custom_call.1} parent=11 // pred_check
        %p215 = pneg %p123
      $region26: #{tpu_custom_call.1} parent=11 // pred_check_branch
        %217 = sbr.rel (%p215) target = $region28
      $region27: #{tpu_custom_call.1} parent=11 // pred_region
        _
      $region28: #{tpu_custom_call.1} parent=11 // pred_fallthru
        _
      // Predicated region
      $region29: #{tpu_custom_call.1} parent=11 // pred_check
        %p218 = pneg %p144
      $region30: #{tpu_custom_call.1} parent=11 // pred_check_branch
        %220 = sbr.rel (%p218) target = $region32
      $region31: #{tpu_custom_call.1} parent=11 // pred_region
        _
      $region32: #{tpu_custom_call.1} parent=11 // pred_fallthru
        _
      // Predicated region
      $region33: #{tpu_custom_call.1} parent=11 // pred_check
        %p221 = pneg %p165
      $region34: #{tpu_custom_call.1} parent=11 // pred_check_branch
        %223 = sbr.rel (%p221) target = $region36
      $region35: #{tpu_custom_call.1} parent=11 // pred_region
        _
      $region36: #{tpu_custom_call.1} parent=11 // pred_fallthru
        _
    $region12: #{tpu_custom_call.1} parent=5 // pred_fallthru
      _
    %p224 = scmp.lt.s32.totalorder %s13, 2
    // Predicated region
    $region37: #{tpu_custom_call.1} parent=5 // pred_check
      %p225 = pneg %p224
    $region38: #{tpu_custom_call.1} parent=5 // pred_check_branch
      %227 = sbr.rel (%p225) target = $region40
    $region39: #{tpu_custom_call.1} parent=5 // pred_region
      // Predicated region
      $region41: #{tpu_custom_call.1} parent=39 // pred_check
        %p228 = pneg %p33
      $region42: #{tpu_custom_call.1} parent=39 // pred_check_branch
        %230 = sbr.rel (%p228) target = $region44
      $region43: #{tpu_custom_call.1} parent=39 // pred_region
        %p231 = scmp.lt.s32.totalorder %s13, 1
        %s232 = scalar_select %p231, %s13, 1
        %s233 = smul.addr %s232, 32
        %s234 = smul.addr %s233, 4
        %s235 = scalar_lea.vmem %s0, %s234
      $region44: #{tpu_custom_call.1} parent=39 // pred_fallthru
        _
    $region40: #{tpu_custom_call.1} parent=5 // pred_fallthru
      _
    %p236 = scmp.le.s32.totalorder 1, %s13
    %p237 = scmp.lt.s32.totalorder %s13, 3
    %p238 = pnand %p236, %p237
    %p239 = pneg %p238
    // Predicated region
    $region45: #{tpu_custom_call.1} parent=5 // pred_check
      _
    $region46: #{tpu_custom_call.1} parent=5 // pred_check_branch
      %241 = sbr.rel (%p238) target = $region48
    $region47: #{tpu_custom_call.1} parent=5 // pred_region
      %s242 = ssub.s32 %s13, 1
      %p243 = scmp.lt.s32.totalorder %s18, 1
      %s244 = scalar_select %p243, %s18, 1
      %s245 = smul.addr %s244, 32
      %s246 = smul.addr %s245, 4
      %s247 = scalar_lea.vmem %s0, %s246
      %p248 = pneg %p39
      %p249 = pneg %p36
      %p250 = pneg %p60
      %p251 = pneg %p57
      %p252 = pneg %p81
      %p253 = pneg %p78
      %p254 = pneg %p102
      %p255 = pneg %p99
      %p256 = pneg %p123
      %p257 = pneg %p120
      %p258 = pneg %p144
      %p259 = pneg %p141
      %p260 = pneg %p165
      %p261 = pneg %p162
      %p262 = pneg %p191
      %p263 = pneg %p188
      %p264 = scmp.lt.s32.totalorder %s18, 1
      %s265 = scalar_select %p264, %s18, 1
      %s266 = smul.addr %s265, 32
      %s267 = smul.addr %s266, 8
      %s268 = scalar_lea.vmem %s7, %s267
      %p269 = scmp.lt.s32.totalorder %s18, 1
      %s270 = scalar_select %p269, %s18, 1
      %s271 = smul.addr %s270, 32
      %s272 = smul.addr %s271, 4
      %s273 = scalar_lea.vmem %s0, %s272
      %p274 = scmp.lt.s32.totalorder %s18, 1
      %s275 = scalar_select %p274, %s18, 1
      %s276 = smul.addr %s275, 32
      %s277 = smul.addr %s276, 8
      %s278 = scalar_lea.vmem %s7, %s277
      %v280 = vld [vmem:[%s273] sm:$0xf]
      %v281 = vld [vmem:[%s273 + $0x4] sm:$0xf]
      %v282 = vld [vmem:[%s273 + $0x8] sm:$0xf]
      %v283 = vld [vmem:[%s273 + $0xc] sm:$0xf]
      %v284 = vld [vmem:[%s273 + $0x10] sm:$0xf]
      %v285 = vld [vmem:[%s273 + $0x14] sm:$0xf]
      %v286 = vld [vmem:[%s273 + $0x18] sm:$0xf]
      %v287 = vld [vmem:[%s273 + $0x1c] sm:$0xf]
      %v288 = vld [vmem:[%s273 + $0x20] sm:$0xf]
      %v289 = vld [vmem:[%s273 + $0x24] sm:$0xf]
      %v290 = vld [vmem:[%s273 + $0x28] sm:$0xf]
      %v291 = vld [vmem:[%s273 + $0x2c] sm:$0xf]
      %v292 = vld [vmem:[%s273 + $0x30] sm:$0xf]
      %v293 = vld [vmem:[%s273 + $0x34] sm:$0xf]
      %v294 = vld [vmem:[%s273 + $0x38] sm:$0xf]
      %v295 = vld [vmem:[%s273 + $0x3c] sm:$0xf]
      %v296 = vld [vmem:[%s273 + $0x40] sm:$0xf]
      %v297 = vld [vmem:[%s273 + $0x44] sm:$0xf]
      %v298 = vld [vmem:[%s273 + $0x48] sm:$0xf]
      %v299 = vld [vmem:[%s273 + $0x4c] sm:$0xf]
      %v300 = vld [vmem:[%s273 + $0x50] sm:$0xf]
      %v301 = vld [vmem:[%s273 + $0x54] sm:$0xf]
      %v302 = vld [vmem:[%s273 + $0x58] sm:$0xf]
      %v303 = vld [vmem:[%s273 + $0x5c] sm:$0xf]
      %v304 = vld [vmem:[%s273 + $0x60] sm:$0xf]
      %v305 = vld [vmem:[%s273 + $0x64] sm:$0xf]
      %v306 = vld [vmem:[%s273 + $0x68] sm:$0xf]
      %v307 = vld [vmem:[%s273 + $0x6c] sm:$0xf]
      %v308 = vld [vmem:[%s273 + $0x70] sm:$0xf]
      %v309 = vld [vmem:[%s273 + $0x74] sm:$0xf]
      %v310 = vld [vmem:[%s273 + $0x78] sm:$0xf]
      %v311 = vld [vmem:[%s273 + $0x7c] sm:$0xf]
      %vm312 = vsmask.f32 256
      %vm313 = vsmask.f32 4368
      %vm314 = vmor %vm312, %vm313
      %v316 = vshrl.u32 %v280, 16
      %v318 = vrot.slane %v316, 7
      %v319 = vshll.u32 %v280, 16
      %v321 = vor.u32 %v318, %v319
      %v322 = vrot.slane %v318, 4
      %v324 = vshrl.u32 %v281, 16
      %v326 = vrot.slane %v324, 7
      %v327 = vshll.u32 %v281, 16
      %v329 = vor.u32 %v326, %v327
      %v330 = vsel %vm314, %v322, %v329
      %v331 = vrot.slane %v326, 4
      %v333 = vshrl.u32 %v282, 16
      %v335 = vrot.slane %v333, 7
      %v336 = vshll.u32 %v282, 16
      %v338 = vor.u32 %v335, %v336
      %v339 = vrot.slane %v335, 4
      %v341 = vshrl.u32 %v283, 16
      %v343 = vrot.slane %v341, 7
      %v344 = vshll.u32 %v283, 16
      %v346 = vor.u32 %v343, %v344
      %v347 = vsel %vm314, %v339, %v346
      %v348 = vrot.slane %v343, 4
      %v350 = vshrl.u32 %v284, 16
      %v352 = vrot.slane %v350, 7
      %v353 = vshll.u32 %v284, 16
      %v355 = vor.u32 %v352, %v353
      %v356 = vrot.slane %v352, 4
      %v358 = vshrl.u32 %v285, 16
      %v360 = vrot.slane %v358, 7
      %v361 = vshll.u32 %v285, 16
      %v363 = vor.u32 %v360, %v361
      %v364 = vsel %vm314, %v356, %v363
      %v365 = vrot.slane %v360, 4
      %v367 = vshrl.u32 %v286, 16
      %v369 = vrot.slane %v367, 7
      %v370 = vshll.u32 %v286, 16
      %v372 = vor.u32 %v369, %v370
      %v373 = vrot.slane %v369, 4
      %v375 = vshrl.u32 %v287, 16
      %v377 = vrot.slane %v375, 7
      %v378 = vshll.u32 %v287, 16
      %v380 = vor.u32 %v377, %v378
      %v381 = vsel %vm314, %v373, %v380
      %v382 = vrot.slane %v377, 4
      %v384 = vshrl.u32 %v288, 16
      %v386 = vrot.slane %v384, 7
      %v387 = vshll.u32 %v288, 16
      %v389 = vor.u32 %v386, %v387
      %v390 = vrot.slane %v386, 4
      %v392 = vshrl.u32 %v289, 16
      %v394 = vrot.slane %v392, 7
      %v395 = vshll.u32 %v289, 16
      %v397 = vor.u32 %v394, %v395
      %v398 = vsel %vm314, %v390, %v397
      %v399 = vrot.slane %v394, 4
      %v401 = vshrl.u32 %v290, 16
      %v403 = vrot.slane %v401, 7
      %v404 = vshll.u32 %v290, 16
      %v406 = vor.u32 %v403, %v404
      %v407 = vrot.slane %v403, 4
      %v409 = vshrl.u32 %v291, 16
      %v411 = vrot.slane %v409, 7
      %v412 = vshll.u32 %v291, 16
      %v414 = vor.u32 %v411, %v412
      %v415 = vsel %vm314, %v407, %v414
      %v416 = vrot.slane %v411, 4
      %v418 = vshrl.u32 %v292, 16
      %v420 = vrot.slane %v418, 7
      %v421 = vshll.u32 %v292, 16
      %v423 = vor.u32 %v420, %v421
      %v424 = vrot.slane %v420, 4
      %v426 = vshrl.u32 %v293, 16
      %v428 = vrot.slane %v426, 7
      %v429 = vshll.u32 %v293, 16
      %v431 = vor.u32 %v428, %v429
      %v432 = vsel %vm314, %v424, %v431
      %v433 = vrot.slane %v428, 4
      %v435 = vshrl.u32 %v294, 16
      %v437 = vrot.slane %v435, 7
      %v438 = vshll.u32 %v294, 16
      %v440 = vor.u32 %v437, %v438
      %v441 = vrot.slane %v437, 4
      %v443 = vshrl.u32 %v295, 16
      %v445 = vrot.slane %v443, 7
      %v446 = vshll.u32 %v295, 16
      %v448 = vor.u32 %v445, %v446
      %v449 = vsel %vm314, %v441, %v448
      %v450 = vrot.slane %v445, 4
      %v452 = vshrl.u32 %v296, 16
      %v454 = vrot.slane %v452, 7
      %v455 = vshll.u32 %v296, 16
      %v457 = vor.u32 %v454, %v455
      %v458 = vrot.slane %v454, 4
      %v460 = vshrl.u32 %v297, 16
      %v462 = vrot.slane %v460, 7
      %v463 = vshll.u32 %v297, 16
      %v465 = vor.u32 %v462, %v463
      %v466 = vsel %vm314, %v458, %v465
      %v467 = vrot.slane %v462, 4
      %v469 = vshrl.u32 %v298, 16
      %v471 = vrot.slane %v469, 7
      %v472 = vshll.u32 %v298, 16
      %v474 = vor.u32 %v471, %v472
      %v475 = vrot.slane %v471, 4
      %v477 = vshrl.u32 %v299, 16
      %v479 = vrot.slane %v477, 7
      %v480 = vshll.u32 %v299, 16
      %v482 = vor.u32 %v479, %v480
      %v483 = vsel %vm314, %v475, %v482
      %v484 = vrot.slane %v479, 4
      %v486 = vshrl.u32 %v300, 16
      %v488 = vrot.slane %v486, 7
      %v489 = vshll.u32 %v300, 16
      %v491 = vor.u32 %v488, %v489
      %v492 = vrot.slane %v488, 4
      %v494 = vshrl.u32 %v301, 16
      %v496 = vrot.slane %v494, 7
      %v497 = vshll.u32 %v301, 16
      %v499 = vor.u32 %v496, %v497
      %v500 = vsel %vm314, %v492, %v499
      %v501 = vrot.slane %v496, 4
      %v503 = vshrl.u32 %v302, 16
      %v505 = vrot.slane %v503, 7
      %v506 = vshll.u32 %v302, 16
      %v508 = vor.u32 %v505, %v506
      %v509 = vrot.slane %v505, 4
      %v511 = vshrl.u32 %v303, 16
      %v513 = vrot.slane %v511, 7
      %v514 = vshll.u32 %v303, 16
      %v516 = vor.u32 %v513, %v514
      %v517 = vsel %vm314, %v509, %v516
      %v518 = vrot.slane %v513, 4
      %v520 = vshrl.u32 %v304, 16
      %v522 = vrot.slane %v520, 7
      %v523 = vshll.u32 %v304, 16
      %v525 = vor.u32 %v522, %v523
      %v526 = vrot.slane %v522, 4
      %v528 = vshrl.u32 %v305, 16
      %v530 = vrot.slane %v528, 7
      %v531 = vshll.u32 %v305, 16
      %v533 = vor.u32 %v530, %v531
      %v534 = vsel %vm314, %v526, %v533
      %v535 = vrot.slane %v530, 4
      %v537 = vshrl.u32 %v306, 16
      %v539 = vrot.slane %v537, 7
      %v540 = vshll.u32 %v306, 16
      %v542 = vor.u32 %v539, %v540
      %v543 = vrot.slane %v539, 4
      %v545 = vshrl.u32 %v307, 16
      %v547 = vrot.slane %v545, 7
      %v548 = vshll.u32 %v307, 16
      %v550 = vor.u32 %v547, %v548
      %v551 = vsel %vm314, %v543, %v550
      %v552 = vrot.slane %v547, 4
      %v554 = vshrl.u32 %v308, 16
      %v556 = vrot.slane %v554, 7
      %v557 = vshll.u32 %v308, 16
      %v559 = vor.u32 %v556, %v557
      %v560 = vrot.slane %v556, 4
      %v562 = vshrl.u32 %v309, 16
      %v564 = vrot.slane %v562, 7
      %v565 = vshll.u32 %v309, 16
      %v567 = vor.u32 %v564, %v565
      %v568 = vsel %vm314, %v560, %v567
      %v569 = vrot.slane %v564, 4
      %v571 = vshrl.u32 %v310, 16
      %v573 = vrot.slane %v571, 7
      %v574 = vshll.u32 %v310, 16
      %v576 = vor.u32 %v573, %v574
      %v577 = vrot.slane %v573, 4
      %v579 = vshrl.u32 %v311, 16
      %v581 = vrot.slane %v579, 7
      %v582 = vshll.u32 %v311, 16
      %v584 = vor.u32 %v581, %v582
      %v585 = vsel %vm314, %v577, %v584
      %v586 = vrot.slane %v581, 4
      %s635 = scalar_lea.vmem [#allocation2], 12
      %vm636 = vcmask 27648
      %vm637 = vsmask.f32 7938
      %vm638 = vmand %vm636, %vm637
      %v639 = vld [vmem:[%s635] sm:$0xf]
      %v640 = vsel %vm638, %v321, %v639
      %641 = vst [vmem:[%s635] sm:$0xf] %v640
      %vm642 = vcmask 27648
      %643 = vst.msk [vmem:[%s635 + $0x4] sm:$0xf] %vm642, %v330
      %vm644 = vcmask 24576
      %vm645 = vmand %vm644, %vm312
      %v646 = vld [vmem:[%s635 + $0x8] sm:$0x1]
      %v647 = vsel %vm645, %v331, %v646
      %648 = vst [vmem:[%s635 + $0x8] sm:$0x1] %v647
      %v649 = vld [vmem:[%s635 + $0xc] sm:$0xf]
      %v650 = vsel %vm638, %v338, %v649
      %651 = vst [vmem:[%s635 + $0xc] sm:$0xf] %v650
      %652 = vst.msk [vmem:[%s635 + $0x10] sm:$0xf] %vm642, %v347
      %v653 = vld [vmem:[%s635 + $0x14] sm:$0x1]
      %v654 = vsel %vm645, %v348, %v653
      %655 = vst [vmem:[%s635 + $0x14] sm:$0x1] %v654
      %v656 = vld [vmem:[%s635 + $0x18] sm:$0xf]
      %v657 = vsel %vm638, %v355, %v656
      %658 = vst [vmem:[%s635 + $0x18] sm:$0xf] %v657
      %659 = vst.msk [vmem:[%s635 + $0x1c] sm:$0xf] %vm642, %v364
      %v660 = vld [vmem:[%s635 + $0x20] sm:$0x1]
      %v661 = vsel %vm645, %v365, %v660
      %662 = vst [vmem:[%s635 + $0x20] sm:$0x1] %v661
      %v663 = vld [vmem:[%s635 + $0x24] sm:$0xf]
      %v664 = vsel %vm638, %v372, %v663
      %665 = vst [vmem:[%s635 + $0x24] sm:$0xf] %v664
      %666 = vst.msk [vmem:[%s635 + $0x28] sm:$0xf] %vm642, %v381
      %v667 = vld [vmem:[%s635 + $0x2c] sm:$0x1]
      %v668 = vsel %vm645, %v382, %v667
      %669 = vst [vmem:[%s635 + $0x2c] sm:$0x1] %v668
      %v670 = vld [vmem:[%s635 + $0x30] sm:$0xf]
      %v671 = vsel %vm638, %v389, %v670
      %672 = vst [vmem:[%s635 + $0x30] sm:$0xf] %v671
      %673 = vst.msk [vmem:[%s635 + $0x34] sm:$0xf] %vm642, %v398
      %v674 = vld [vmem:[%s635 + $0x38] sm:$0x1]
      %v675 = vsel %vm645, %v399, %v674
      %676 = vst [vmem:[%s635 + $0x38] sm:$0x1] %v675
      %v677 = vld [vmem:[%s635 + $0x3c] sm:$0xf]
      %v678 = vsel %vm638, %v406, %v677
      %679 = vst [vmem:[%s635 + $0x3c] sm:$0xf] %v678
      %680 = vst.msk [vmem:[%s635 + $0x40] sm:$0xf] %vm642, %v415
      %v681 = vld [vmem:[%s635 + $0x44] sm:$0x1]
      %v682 = vsel %vm645, %v416, %v681
      %683 = vst [vmem:[%s635 + $0x44] sm:$0x1] %v682
      %v684 = vld [vmem:[%s635 + $0x48] sm:$0xf]
      %v685 = vsel %vm638, %v423, %v684
      %686 = vst [vmem:[%s635 + $0x48] sm:$0xf] %v685
      %687 = vst.msk [vmem:[%s635 + $0x4c] sm:$0xf] %vm642, %v432
      %v688 = vld [vmem:[%s635 + $0x50] sm:$0x1]
      %v689 = vsel %vm645, %v433, %v688
      %690 = vst [vmem:[%s635 + $0x50] sm:$0x1] %v689
      %v691 = vld [vmem:[%s635 + $0x54] sm:$0xf]
      %v692 = vsel %vm638, %v440, %v691
      %693 = vst [vmem:[%s635 + $0x54] sm:$0xf] %v692
      %694 = vst.msk [vmem:[%s635 + $0x58] sm:$0xf] %vm642, %v449
      %v695 = vld [vmem:[%s635 + $0x5c] sm:$0x1]
      %v696 = vsel %vm645, %v450, %v695
      %697 = vst [vmem:[%s635 + $0x5c] sm:$0x1] %v696
      %v698 = vld [vmem:[%s635 + $0x60] sm:$0xf]
      %v699 = vsel %vm638, %v457, %v698
      %700 = vst [vmem:[%s635 + $0x60] sm:$0xf] %v699
      %701 = vst.msk [vmem:[%s635 + $0x64] sm:$0xf] %vm642, %v466
      %v702 = vld [vmem:[%s635 + $0x68] sm:$0x1]
      %v703 = vsel %vm645, %v467, %v702
      %704 = vst [vmem:[%s635 + $0x68] sm:$0x1] %v703
      %v705 = vld [vmem:[%s635 + $0x6c] sm:$0xf]
      %v706 = vsel %vm638, %v474, %v705
      %707 = vst [vmem:[%s635 + $0x6c] sm:$0xf] %v706
      %708 = vst.msk [vmem:[%s635 + $0x70] sm:$0xf] %vm642, %v483
      %v709 = vld [vmem:[%s635 + $0x74] sm:$0x1]
      %v710 = vsel %vm645, %v484, %v709
      %711 = vst [vmem:[%s635 + $0x74] sm:$0x1] %v710
      %v712 = vld [vmem:[%s635 + $0x78] sm:$0xf]
      %v713 = vsel %vm638, %v491, %v712
      %714 = vst [vmem:[%s635 + $0x78] sm:$0xf] %v713
      %715 = vst.msk [vmem:[%s635 + $0x7c] sm:$0xf] %vm642, %v500
      %v716 = vld [vmem:[%s635 + $0x80] sm:$0x1]
      %v717 = vsel %vm645, %v501, %v716
      %718 = vst [vmem:[%s635 + $0x80] sm:$0x1] %v717
      %v719 = vld [vmem:[%s635 + $0x84] sm:$0xf]
      %v720 = vsel %vm638, %v508, %v719
      %721 = vst [vmem:[%s635 + $0x84] sm:$0xf] %v720
      %722 = vst.msk [vmem:[%s635 + $0x88] sm:$0xf] %vm642, %v517
      %v723 = vld [vmem:[%s635 + $0x8c] sm:$0x1]
      %v724 = vsel %vm645, %v518, %v723
      %725 = vst [vmem:[%s635 + $0x8c] sm:$0x1] %v724
      %v726 = vld [vmem:[%s635 + $0x90] sm:$0xf]
      %v727 = vsel %vm638, %v525, %v726
      %728 = vst [vmem:[%s635 + $0x90] sm:$0xf] %v727
      %729 = vst.msk [vmem:[%s635 + $0x94] sm:$0xf] %vm642, %v534
      %v730 = vld [vmem:[%s635 + $0x98] sm:$0x1]
      %v731 = vsel %vm645, %v535, %v730
      %732 = vst [vmem:[%s635 + $0x98] sm:$0x1] %v731
      %v733 = vld [vmem:[%s635 + $0x9c] sm:$0xf]
      %v734 = vsel %vm638, %v542, %v733
      %735 = vst [vmem:[%s635 + $0x9c] sm:$0xf] %v734
      %736 = vst.msk [vmem:[%s635 + $0xa0] sm:$0xf] %vm642, %v551
      %v737 = vld [vmem:[%s635 + $0xa4] sm:$0x1]
      %v738 = vsel %vm645, %v552, %v737
      %739 = vst [vmem:[%s635 + $0xa4] sm:$0x1] %v738
      %v740 = vld [vmem:[%s635 + $0xa8] sm:$0xf]
      %v741 = vsel %vm638, %v559, %v740
      %742 = vst [vmem:[%s635 + $0xa8] sm:$0xf] %v741
      %743 = vst.msk [vmem:[%s635 + $0xac] sm:$0xf] %vm642, %v568
      %v744 = vld [vmem:[%s635 + $0xb0] sm:$0x1]
      %v745 = vsel %vm645, %v569, %v744
      %746 = vst [vmem:[%s635 + $0xb0] sm:$0x1] %v745
      %v747 = vld [vmem:[%s635 + $0xb4] sm:$0xf]
      %v748 = vsel %vm638, %v576, %v747
      %749 = vst [vmem:[%s635 + $0xb4] sm:$0xf] %v748
      %750 = vst.msk [vmem:[%s635 + $0xb8] sm:$0xf] %vm642, %v585
      %v751 = vld [vmem:[%s635 + $0xbc] sm:$0x1]
      %v752 = vsel %vm645, %v586, %v751
      %753 = vst [vmem:[%s635 + $0xbc] sm:$0x1] %v752
      %v754 = vld [vmem:[#allocation2] sm:$0xf]
      %v755 = vsel %vm638, %v338, %v754
      %756 = vst [vmem:[#allocation2] sm:$0xf] %v755
      %757 = vst.msk [vmem:[#allocation2 + $0x4] sm:$0xf] %vm642, %v347
      %v758 = vld [vmem:[#allocation2 + $0x8] sm:$0x1]
      %v759 = vsel %vm645, %v348, %v758
      %760 = vst [vmem:[#allocation2 + $0x8] sm:$0x1] %v759
      %s761 = scalar_lea.vmem [#allocation2], 204
      %v762 = vld [vmem:[%s761] sm:$0xf]
      %v763 = vsel %vm638, %v559, %v762
      %764 = vst [vmem:[%s761] sm:$0xf] %v763
      %765 = vst.msk [vmem:[%s761 + $0x4] sm:$0xf] %vm642, %v568
      %v766 = vld [vmem:[%s761 + $0x8] sm:$0x1]
      %v767 = vsel %vm645, %v569, %v766
      %768 = vst [vmem:[%s761 + $0x8] sm:$0x1] %v767
      %v769 = vld [vmem:[#allocation2] sm:$0x2]
      %v770 = vld [vmem:[#allocation2 + $0xc] sm:$0x2]
      %v771 = vld [vmem:[#allocation2 + $0x18] sm:$0x2]
      %v772 = vld [vmem:[#allocation2 + $0x24] sm:$0x2]
      %v773 = vld [vmem:[#allocation2 + $0x30] sm:$0x2]
      %v774 = vld [vmem:[#allocation2 + $0x3c] sm:$0x2]
      %v775 = vld [vmem:[#allocation2 + $0x48] sm:$0x2]
      %v776 = vld [vmem:[#allocation2 + $0x54] sm:$0x2]
      %v777 = vld [vmem:[#allocation2 + $0x60] sm:$0x2]
      %v778 = vld [vmem:[#allocation2 + $0x6c] sm:$0x2]
      %v779 = vld [vmem:[#allocation2 + $0x78] sm:$0x2]
      %v780 = vld [vmem:[#allocation2 + $0x84] sm:$0x2]
      %v781 = vld [vmem:[#allocation2 + $0x90] sm:$0x2]
      %v782 = vld [vmem:[#allocation2 + $0x9c] sm:$0x2]
      %v783 = vld [vmem:[#allocation2 + $0xa8] sm:$0x2]
      %v784 = vld [vmem:[#allocation2 + $0xb4] sm:$0x2]
      %v785 = vld [vmem:[#allocation2 + $0xc0] sm:$0x2]
      %v786 = vld [vmem:[#allocation2 + $0xcc] sm:$0x2]
      %v805 = vrot.slane %v769, 5
      %v806 = vrot.slane %v805, 4
      %v807 = vrot.slane %v770, 5
      %v808 = vrot.slane %v807, 4
      %v809 = vrot.slane %v771, 5
      %v810 = vrot.slane %v809, 4
      %v811 = vrot.slane %v772, 5
      %v812 = vrot.slane %v811, 4
      %v813 = vrot.slane %v773, 5
      %v814 = vrot.slane %v813, 4
      %v815 = vrot.slane %v774, 5
      %v816 = vrot.slane %v815, 4
      %v817 = vrot.slane %v775, 5
      %v818 = vrot.slane %v817, 4
      %v819 = vrot.slane %v776, 5
      %v820 = vrot.slane %v819, 4
      %v821 = vrot.slane %v777, 5
      %v822 = vrot.slane %v821, 4
      %v823 = vrot.slane %v778, 5
      %v824 = vrot.slane %v823, 4
      %v825 = vrot.slane %v779, 5
      %v826 = vrot.slane %v825, 4
      %v827 = vrot.slane %v780, 5
      %v828 = vrot.slane %v827, 4
      %v829 = vrot.slane %v781, 5
      %v830 = vrot.slane %v829, 4
      %v831 = vrot.slane %v782, 5
      %v832 = vrot.slane %v831, 4
      %v833 = vrot.slane %v783, 5
      %v834 = vrot.slane %v833, 4
      %v835 = vrot.slane %v784, 5
      %v836 = vrot.slane %v835, 4
      %v837 = vrot.slane %v785, 5
      %v838 = vrot.slane %v837, 4
      %v839 = vrot.slane %v786, 5
      %v840 = vrot.slane %v839, 4
      %v859 = vld [vmem:[#allocation2] sm:$0x1]
      %v860 = vsel %vm645, %v806, %v859
      %861 = vst [vmem:[#allocation2] sm:$0x1] %v860
      %v862 = vld [vmem:[#allocation2 + $0xc] sm:$0x1]
      %v863 = vsel %vm645, %v808, %v862
      %864 = vst [vmem:[#allocation2 + $0xc] sm:$0x1] %v863
      %v865 = vld [vmem:[#allocation2 + $0x18] sm:$0x1]
      %v866 = vsel %vm645, %v810, %v865
      %867 = vst [vmem:[#allocation2 + $0x18] sm:$0x1] %v866
      %v868 = vld [vmem:[#allocation2 + $0x24] sm:$0x1]
      %v869 = vsel %vm645, %v812, %v868
      %870 = vst [vmem:[#allocation2 + $0x24] sm:$0x1] %v869
      %v871 = vld [vmem:[#allocation2 + $0x30] sm:$0x1]
      %v872 = vsel %vm645, %v814, %v871
      %873 = vst [vmem:[#allocation2 + $0x30] sm:$0x1] %v872
      %v874 = vld [vmem:[#allocation2 + $0x3c] sm:$0x1]
      %v875 = vsel %vm645, %v816, %v874
      %876 = vst [vmem:[#allocation2 + $0x3c] sm:$0x1] %v875
      %v877 = vld [vmem:[#allocation2 + $0x48] sm:$0x1]
      %v878 = vsel %vm645, %v818, %v877
      %879 = vst [vmem:[#allocation2 + $0x48] sm:$0x1] %v878
      %v880 = vld [vmem:[#allocation2 + $0x54] sm:$0x1]
      %v881 = vsel %vm645, %v820, %v880
      %882 = vst [vmem:[#allocation2 + $0x54] sm:$0x1] %v881
      %v883 = vld [vmem:[#allocation2 + $0x60] sm:$0x1]
      %v884 = vsel %vm645, %v822, %v883
      %885 = vst [vmem:[#allocation2 + $0x60] sm:$0x1] %v884
      %v886 = vld [vmem:[#allocation2 + $0x6c] sm:$0x1]
      %v887 = vsel %vm645, %v824, %v886
      %888 = vst [vmem:[#allocation2 + $0x6c] sm:$0x1] %v887
      %v889 = vld [vmem:[#allocation2 + $0x78] sm:$0x1]
      %v890 = vsel %vm645, %v826, %v889
      %891 = vst [vmem:[#allocation2 + $0x78] sm:$0x1] %v890
      %v892 = vld [vmem:[#allocation2 + $0x84] sm:$0x1]
      %v893 = vsel %vm645, %v828, %v892
      %894 = vst [vmem:[#allocation2 + $0x84] sm:$0x1] %v893
      %v895 = vld [vmem:[#allocation2 + $0x90] sm:$0x1]
      %v896 = vsel %vm645, %v830, %v895
      %897 = vst [vmem:[#allocation2 + $0x90] sm:$0x1] %v896
      %v898 = vld [vmem:[#allocation2 + $0x9c] sm:$0x1]
      %v899 = vsel %vm645, %v832, %v898
      %900 = vst [vmem:[#allocation2 + $0x9c] sm:$0x1] %v899
      %v901 = vld [vmem:[#allocation2 + $0xa8] sm:$0x1]
      %v902 = vsel %vm645, %v834, %v901
      %903 = vst [vmem:[#allocation2 + $0xa8] sm:$0x1] %v902
      %v904 = vld [vmem:[#allocation2 + $0xb4] sm:$0x1]
      %v905 = vsel %vm645, %v836, %v904
      %906 = vst [vmem:[#allocation2 + $0xb4] sm:$0x1] %v905
      %v907 = vld [vmem:[#allocation2 + $0xc0] sm:$0x1]
      %v908 = vsel %vm645, %v838, %v907
      %909 = vst [vmem:[#allocation2 + $0xc0] sm:$0x1] %v908
      %v910 = vld [vmem:[#allocation2 + $0xcc] sm:$0x1]
      %v911 = vsel %vm645, %v840, %v910
      %912 = vst [vmem:[#allocation2 + $0xcc] sm:$0x1] %v911
      %v913 = vld [vmem:[#allocation2 + $0x4] sm:$0x8]
      %v914 = vld [vmem:[#allocation2 + $0x10] sm:$0x8]
      %v915 = vld [vmem:[#allocation2 + $0x1c] sm:$0x8]
      %v916 = vld [vmem:[#allocation2 + $0x28] sm:$0x8]
      %v917 = vld [vmem:[#allocation2 + $0x34] sm:$0x8]
      %v918 = vld [vmem:[#allocation2 + $0x40] sm:$0x8]
      %v919 = vld [vmem:[#allocation2 + $0x4c] sm:$0x8]
      %v920 = vld [vmem:[#allocation2 + $0x58] sm:$0x8]
      %v921 = vld [vmem:[#allocation2 + $0x64] sm:$0x8]
      %v922 = vld [vmem:[#allocation2 + $0x70] sm:$0x8]
      %v923 = vld [vmem:[#allocation2 + $0x7c] sm:$0x8]
      %v924 = vld [vmem:[#allocation2 + $0x88] sm:$0x8]
      %v925 = vld [vmem:[#allocation2 + $0x94] sm:$0x8]
      %v926 = vld [vmem:[#allocation2 + $0xa0] sm:$0x8]
      %v927 = vld [vmem:[#allocation2 + $0xac] sm:$0x8]
      %v928 = vld [vmem:[#allocation2 + $0xb8] sm:$0x8]
      %v929 = vld [vmem:[#allocation2 + $0xc4] sm:$0x8]
      %v930 = vld [vmem:[#allocation2 + $0xd0] sm:$0x8]
      %v949 = vrot.slane %v913, 7
      %v950 = vrot.slane %v949, 4
      %v951 = vrot.slane %v914, 7
      %v952 = vrot.slane %v951, 4
      %v953 = vrot.slane %v915, 7
      %v954 = vrot.slane %v953, 4
      %v955 = vrot.slane %v916, 7
      %v956 = vrot.slane %v955, 4
      %v957 = vrot.slane %v917, 7
      %v958 = vrot.slane %v957, 4
      %v959 = vrot.slane %v918, 7
      %v960 = vrot.slane %v959, 4
      %v961 = vrot.slane %v919, 7
      %v962 = vrot.slane %v961, 4
      %v963 = vrot.slane %v920, 7
      %v964 = vrot.slane %v963, 4
      %v965 = vrot.slane %v921, 7
      %v966 = vrot.slane %v965, 4
      %v967 = vrot.slane %v922, 7
      %v968 = vrot.slane %v967, 4
      %v969 = vrot.slane %v923, 7
      %v970 = vrot.slane %v969, 4
      %v971 = vrot.slane %v924, 7
      %v972 = vrot.slane %v971, 4
      %v973 = vrot.slane %v925, 7
      %v974 = vrot.slane %v973, 4
      %v975 = vrot.slane %v926, 7
      %v976 = vrot.slane %v975, 4
      %v977 = vrot.slane %v927, 7
      %v978 = vrot.slane %v977, 4
      %v979 = vrot.slane %v928, 7
      %v980 = vrot.slane %v979, 4
      %v981 = vrot.slane %v929, 7
      %v982 = vrot.slane %v981, 4
      %v983 = vrot.slane %v930, 7
      %v984 = vrot.slane %v983, 4
      %vm1003 = vmand %vm644, %vm637
      %v1004 = vld [vmem:[#allocation2 + $0x8] sm:$0x1]
      %v1005 = vsel %vm1003, %v950, %v1004
      %1006 = vst [vmem:[#allocation2 + $0x8] sm:$0x1] %v1005
      %v1007 = vld [vmem:[#allocation2 + $0x14] sm:$0x1]
      %v1008 = vsel %vm1003, %v952, %v1007
      %1009 = vst [vmem:[#allocation2 + $0x14] sm:$0x1] %v1008
      %v1010 = vld [vmem:[#allocation2 + $0x20] sm:$0x1]
      %v1011 = vsel %vm1003, %v954, %v1010
      %1012 = vst [vmem:[#allocation2 + $0x20] sm:$0x1] %v1011
      %v1013 = vld [vmem:[#allocation2 + $0x2c] sm:$0x1]
      %v1014 = vsel %vm1003, %v956, %v1013
      %1015 = vst [vmem:[#allocation2 + $0x2c] sm:$0x1] %v1014
      %v1016 = vld [vmem:[#allocation2 + $0x38] sm:$0x1]
      %v1017 = vsel %vm1003, %v958, %v1016
      %1018 = vst [vmem:[#allocation2 + $0x38] sm:$0x1] %v1017
      %v1019 = vld [vmem:[#allocation2 + $0x44] sm:$0x1]
      %v1020 = vsel %vm1003, %v960, %v1019
      %1021 = vst [vmem:[#allocation2 + $0x44] sm:$0x1] %v1020
      %v1022 = vld [vmem:[#allocation2 + $0x50] sm:$0x1]
      %v1023 = vsel %vm1003, %v962, %v1022
      %1024 = vst [vmem:[#allocation2 + $0x50] sm:$0x1] %v1023
      %v1025 = vld [vmem:[#allocation2 + $0x5c] sm:$0x1]
      %v1026 = vsel %vm1003, %v964, %v1025
      %1027 = vst [vmem:[#allocation2 + $0x5c] sm:$0x1] %v1026
      %v1028 = vld [vmem:[#allocation2 + $0x68] sm:$0x1]
      %v1029 = vsel %vm1003, %v966, %v1028
      %1030 = vst [vmem:[#allocation2 + $0x68] sm:$0x1] %v1029
      %v1031 = vld [vmem:[#allocation2 + $0x74] sm:$0x1]
      %v1032 = vsel %vm1003, %v968, %v1031
      %1033 = vst [vmem:[#allocation2 + $0x74] sm:$0x1] %v1032
      %v1034 = vld [vmem:[#allocation2 + $0x80] sm:$0x1]
      %v1035 = vsel %vm1003, %v970, %v1034
      %1036 = vst [vmem:[#allocation2 + $0x80] sm:$0x1] %v1035
      %v1037 = vld [vmem:[#allocation2 + $0x8c] sm:$0x1]
      %v1038 = vsel %vm1003, %v972, %v1037
      %1039 = vst [vmem:[#allocation2 + $0x8c] sm:$0x1] %v1038
      %v1040 = vld [vmem:[#allocation2 + $0x98] sm:$0x1]
      %v1041 = vsel %vm1003, %v974, %v1040
      %1042 = vst [vmem:[#allocation2 + $0x98] sm:$0x1] %v1041
      %v1043 = vld [vmem:[#allocation2 + $0xa4] sm:$0x1]
      %v1044 = vsel %vm1003, %v976, %v1043
      %1045 = vst [vmem:[#allocation2 + $0xa4] sm:$0x1] %v1044
      %v1046 = vld [vmem:[#allocation2 + $0xb0] sm:$0x1]
      %v1047 = vsel %vm1003, %v978, %v1046
      %1048 = vst [vmem:[#allocation2 + $0xb0] sm:$0x1] %v1047
      %v1049 = vld [vmem:[#allocation2 + $0xbc] sm:$0x1]
      %v1050 = vsel %vm1003, %v980, %v1049
      %1051 = vst [vmem:[#allocation2 + $0xbc] sm:$0x1] %v1050
      %v1052 = vld [vmem:[#allocation2 + $0xc8] sm:$0x1]
      %v1053 = vsel %vm1003, %v982, %v1052
      %1054 = vst [vmem:[#allocation2 + $0xc8] sm:$0x1] %v1053
      %v1055 = vld [vmem:[#allocation2 + $0xd4] sm:$0x1]
      %v1056 = vsel %vm1003, %v984, %v1055
      %1057 = vst [vmem:[#allocation2 + $0xd4] sm:$0x1] %v1056
      %v1058 = vld [vmem:[#allocation2] sm:$0xf]
      %v1059 = vld [vmem:[#allocation2 + $0x4] sm:$0xf]
      %v1060 = vld [vmem:[#allocation2 + $0xc] sm:$0xf]
      %v1061 = vld [vmem:[#allocation2 + $0x10] sm:$0xf]
      %v1062 = vld [vmem:[#allocation2 + $0x18] sm:$0xf]
      %v1063 = vld [vmem:[#allocation2 + $0x1c] sm:$0xf]
      %v1064 = vld [vmem:[#allocation2 + $0x24] sm:$0xf]
      %v1065 = vld [vmem:[#allocation2 + $0x28] sm:$0xf]
      %v1066 = vld [vmem:[#allocation2 + $0x30] sm:$0xf]
      %v1067 = vld [vmem:[#allocation2 + $0x34] sm:$0xf]
      %v1068 = vld [vmem:[#allocation2 + $0x3c] sm:$0xf]
      %v1069 = vld [vmem:[#allocation2 + $0x40] sm:$0xf]
      %v1070 = vld [vmem:[#allocation2 + $0x48] sm:$0xf]
      %v1071 = vld [vmem:[#allocation2 + $0x4c] sm:$0xf]
      %v1072 = vld [vmem:[#allocation2 + $0x54] sm:$0xf]
      %v1073 = vld [vmem:[#allocation2 + $0x58] sm:$0xf]
      %v1074 = vld [vmem:[#allocation2 + $0x60] sm:$0xf]
      %v1075 = vld [vmem:[#allocation2 + $0x64] sm:$0xf]
      %v1076 = vld [vmem:[#allocation2 + $0x6c] sm:$0xf]
      %v1077 = vld [vmem:[#allocation2 + $0x70] sm:$0xf]
      %v1078 = vld [vmem:[#allocation2 + $0x78] sm:$0xf]
      %v1079 = vld [vmem:[#allocation2 + $0x7c] sm:$0xf]
      %v1080 = vld [vmem:[#allocation2 + $0x84] sm:$0xf]
      %v1081 = vld [vmem:[#allocation2 + $0x88] sm:$0xf]
      %v1082 = vld [vmem:[#allocation2 + $0x90] sm:$0xf]
      %v1083 = vld [vmem:[#allocation2 + $0x94] sm:$0xf]
      %v1084 = vld [vmem:[#allocation2 + $0x9c] sm:$0xf]
      %v1085 = vld [vmem:[#allocation2 + $0xa0] sm:$0xf]
      %v1086 = vld [vmem:[#allocation2 + $0xa8] sm:$0xf]
      %v1087 = vld [vmem:[#allocation2 + $0xac] sm:$0xf]
      %v1088 = vld [vmem:[#allocation2 + $0xb4] sm:$0xf]
      %v1089 = vld [vmem:[#allocation2 + $0xb8] sm:$0xf]
      %v1090 = vld [vmem:[#allocation2 + $0xc0] sm:$0xf]
      %v1091 = vld [vmem:[#allocation2 + $0xc4] sm:$0xf]
      %v1092 = vld [vmem:[#allocation2 + $0xcc] sm:$0xf]
      %v1093 = vld [vmem:[#allocation2 + $0xd0] sm:$0xf]
      %1094 = vst.msk [vmem:[#allocation3] sm:$0xf] %vm642, %v1058
      %1095 = vst.msk [vmem:[#allocation3 + $0x4] sm:$0xf] %vm642, %v1059
      %1096 = vst.msk [vmem:[#allocation3 + $0x8] sm:$0xf] %vm642, %v1060
      %1097 = vst.msk [vmem:[#allocation3 + $0xc] sm:$0xf] %vm642, %v1061
      %1098 = vst.msk [vmem:[#allocation3 + $0x10] sm:$0xf] %vm642, %v1062
      %1099 = vst.msk [vmem:[#allocation3 + $0x14] sm:$0xf] %vm642, %v1063
      %1100 = vst.msk [vmem:[#allocation3 + $0x18] sm:$0xf] %vm642, %v1064
      %1101 = vst.msk [vmem:[#allocation3 + $0x1c] sm:$0xf] %vm642, %v1065
      %1102 = vst.msk [vmem:[#allocation3 + $0x20] sm:$0xf] %vm642, %v1066
      %1103 = vst.msk [vmem:[#allocation3 + $0x24] sm:$0xf] %vm642, %v1067
      %1104 = vst.msk [vmem:[#allocation3 + $0x28] sm:$0xf] %vm642, %v1068
      %1105 = vst.msk [vmem:[#allocation3 + $0x2c] sm:$0xf] %vm642, %v1069
      %1106 = vst.msk [vmem:[#allocation3 + $0x30] sm:$0xf] %vm642, %v1070
      %1107 = vst.msk [vmem:[#allocation3 + $0x34] sm:$0xf] %vm642, %v1071
      %1108 = vst.msk [vmem:[#allocation3 + $0x38] sm:$0xf] %vm642, %v1072
      %1109 = vst.msk [vmem:[#allocation3 + $0x3c] sm:$0xf] %vm642, %v1073
      %1110 = vst.msk [vmem:[#allocation3 + $0x40] sm:$0xf] %vm642, %v1074
      %1111 = vst.msk [vmem:[#allocation3 + $0x44] sm:$0xf] %vm642, %v1075
      %1112 = vst.msk [vmem:[#allocation3 + $0x48] sm:$0xf] %vm642, %v1076
      %1113 = vst.msk [vmem:[#allocation3 + $0x4c] sm:$0xf] %vm642, %v1077
      %1114 = vst.msk [vmem:[#allocation3 + $0x50] sm:$0xf] %vm642, %v1078
      %1115 = vst.msk [vmem:[#allocation3 + $0x54] sm:$0xf] %vm642, %v1079
      %1116 = vst.msk [vmem:[#allocation3 + $0x58] sm:$0xf] %vm642, %v1080
      %1117 = vst.msk [vmem:[#allocation3 + $0x5c] sm:$0xf] %vm642, %v1081
      %1118 = vst.msk [vmem:[#allocation3 + $0x60] sm:$0xf] %vm642, %v1082
      %1119 = vst.msk [vmem:[#allocation3 + $0x64] sm:$0xf] %vm642, %v1083
      %1120 = vst.msk [vmem:[#allocation3 + $0x68] sm:$0xf] %vm642, %v1084
      %1121 = vst.msk [vmem:[#allocation3 + $0x6c] sm:$0xf] %vm642, %v1085
      %1122 = vst.msk [vmem:[#allocation3 + $0x70] sm:$0xf] %vm642, %v1086
      %1123 = vst.msk [vmem:[#allocation3 + $0x74] sm:$0xf] %vm642, %v1087
      %1124 = vst.msk [vmem:[#allocation3 + $0x78] sm:$0xf] %vm642, %v1088
      %1125 = vst.msk [vmem:[#allocation3 + $0x7c] sm:$0xf] %vm642, %v1089
      %1126 = vst.msk [vmem:[#allocation3 + $0x80] sm:$0xf] %vm642, %v1090
      %1127 = vst.msk [vmem:[#allocation3 + $0x84] sm:$0xf] %vm642, %v1091
      %1128 = vst.msk [vmem:[#allocation3 + $0x88] sm:$0xf] %vm642, %v1092
      %1129 = vst.msk [vmem:[#allocation3 + $0x8c] sm:$0xf] %vm642, %v1093
      %v1130 = vld [vmem:[#allocation2] sm:$0xf]
      %v1131 = vld [vmem:[#allocation2 + $0x4] sm:$0xf]
      %v1132 = vld [vmem:[#allocation2 + $0x8] sm:$0x1]
      %v1133 = vld [vmem:[#allocation2 + $0xc] sm:$0xf]
      %v1134 = vld [vmem:[#allocation2 + $0x10] sm:$0xf]
      %v1135 = vld [vmem:[#allocation2 + $0x14] sm:$0x1]
      %v1136 = vld [vmem:[#allocation2 + $0x18] sm:$0xf]
      %v1137 = vld [vmem:[#allocation2 + $0x1c] sm:$0xf]
      %v1138 = vld [vmem:[#allocation2 + $0x20] sm:$0x1]
      %v1139 = vld [vmem:[#allocation2 + $0x24] sm:$0xf]
      %v1140 = vld [vmem:[#allocation2 + $0x28] sm:$0xf]
      %v1141 = vld [vmem:[#allocation2 + $0x2c] sm:$0x1]
      %v1142 = vld [vmem:[#allocation2 + $0x30] sm:$0xf]
      %v1143 = vld [vmem:[#allocation2 + $0x34] sm:$0xf]
      %v1144 = vld [vmem:[#allocation2 + $0x38] sm:$0x1]
      %v1145 = vld [vmem:[#allocation2 + $0x3c] sm:$0xf]
      %v1146 = vld [vmem:[#allocation2 + $0x40] sm:$0xf]
      %v1147 = vld [vmem:[#allocation2 + $0x44] sm:$0x1]
      %v1148 = vld [vmem:[#allocation2 + $0x48] sm:$0xf]
      %v1149 = vld [vmem:[#allocation2 + $0x4c] sm:$0xf]
      %v1150 = vld [vmem:[#allocation2 + $0x50] sm:$0x1]
      %v1151 = vld [vmem:[#allocation2 + $0x54] sm:$0xf]
      %v1152 = vld [vmem:[#allocation2 + $0x58] sm:$0xf]
      %v1153 = vld [vmem:[#allocation2 + $0x5c] sm:$0x1]
      %v1154 = vld [vmem:[#allocation2 + $0x60] sm:$0xf]
      %v1155 = vld [vmem:[#allocation2 + $0x64] sm:$0xf]
      %v1156 = vld [vmem:[#allocation2 + $0x68] sm:$0x1]
      %v1157 = vld [vmem:[#allocation2 + $0x6c] sm:$0xf]
      %v1158 = vld [vmem:[#allocation2 + $0x70] sm:$0xf]
      %v1159 = vld [vmem:[#allocation2 + $0x74] sm:$0x1]
      %v1160 = vld [vmem:[#allocation2 + $0x78] sm:$0xf]
      %v1161 = vld [vmem:[#allocation2 + $0x7c] sm:$0xf]
      %v1162 = vld [vmem:[#allocation2 + $0x80] sm:$0x1]
      %v1163 = vld [vmem:[#allocation2 + $0x84] sm:$0xf]
      %v1164 = vld [vmem:[#allocation2 + $0x88] sm:$0xf]
      %v1165 = vld [vmem:[#allocation2 + $0x8c] sm:$0x1]
      %v1166 = vld [vmem:[#allocation2 + $0x90] sm:$0xf]
      %v1167 = vld [vmem:[#allocation2 + $0x94] sm:$0xf]
      %v1168 = vld [vmem:[#allocation2 + $0x98] sm:$0x1]
      %v1169 = vld [vmem:[#allocation2 + $0x9c] sm:$0xf]
      %v1170 = vld [vmem:[#allocation2 + $0xa0] sm:$0xf]
      %v1171 = vld [vmem:[#allocation2 + $0xa4] sm:$0x1]
      %v1172 = vld [vmem:[#allocation2 + $0xa8] sm:$0xf]
      %v1173 = vld [vmem:[#allocation2 + $0xac] sm:$0xf]
      %v1174 = vld [vmem:[#allocation2 + $0xb0] sm:$0x1]
      %v1175 = vld [vmem:[#allocation2 + $0xb4] sm:$0xf]
      %v1176 = vld [vmem:[#allocation2 + $0xb8] sm:$0xf]
      %v1177 = vld [vmem:[#allocation2 + $0xbc] sm:$0x1]
      %v1178 = vld [vmem:[#allocation2 + $0xc0] sm:$0xf]
      %v1179 = vld [vmem:[#allocation2 + $0xc4] sm:$0xf]
      %v1180 = vld [vmem:[#allocation2 + $0xc8] sm:$0x1]
      %v1181 = vld [vmem:[#allocation2 + $0xcc] sm:$0xf]
      %v1182 = vld [vmem:[#allocation2 + $0xd0] sm:$0xf]
      %v1183 = vld [vmem:[#allocation2 + $0xd4] sm:$0x1]
      %vm1184 = vsmask.f32 3328
      %vm1185 = vsmask.f32 7440
      %vm1186 = vmor %vm1184, %vm1185
      %v1188 = vshrl.u32 %v1130, 16
      %v1190 = vrot.slane %v1188, 4
      %v1191 = vshll.u32 %v1130, 16
      %v1193 = vrot.slane %v1191, 5
      %v1194 = vor.u32 %v1190, %v1193
      %v1195 = vrot.slane %v1194, 4
      %v1197 = vshll.u32 %v1131, 16
      %v1199 = vrot.slane %v1197, 5
      %v1200 = vsel %vm1186, %v1195, %v1199
      %v1201 = vshrl.u32 %v1131, 16
      %v1203 = vrot.slane %v1201, 4
      %v1204 = vor.u32 %v1203, %v1199
      %v1205 = vrot.slane %v1204, 4
      %v1207 = vshll.u32 %v1132, 16
      %v1209 = vrot.slane %v1207, 5
      %v1210 = vsel %vm1186, %v1205, %v1209
      %v1212 = vshrl.u32 %v1133, 16
      %v1214 = vrot.slane %v1212, 4
      %v1215 = vshll.u32 %v1133, 16
      %v1217 = vrot.slane %v1215, 5
      %v1218 = vor.u32 %v1214, %v1217
      %v1219 = vrot.slane %v1218, 4
      %v1221 = vshll.u32 %v1134, 16
      %v1223 = vrot.slane %v1221, 5
      %v1224 = vsel %vm1186, %v1219, %v1223
      %v1225 = vshrl.u32 %v1134, 16
      %v1227 = vrot.slane %v1225, 4
      %v1228 = vor.u32 %v1227, %v1223
      %v1229 = vrot.slane %v1228, 4
      %v1231 = vshll.u32 %v1135, 16
      %v1233 = vrot.slane %v1231, 5
      %v1234 = vsel %vm1186, %v1229, %v1233
      %v1236 = vshrl.u32 %v1136, 16
      %v1238 = vrot.slane %v1236, 4
      %v1239 = vshll.u32 %v1136, 16
      %v1241 = vrot.slane %v1239, 5
      %v1242 = vor.u32 %v1238, %v1241
      %v1243 = vrot.slane %v1242, 4
      %v1245 = vshll.u32 %v1137, 16
      %v1247 = vrot.slane %v1245, 5
      %v1248 = vsel %vm1186, %v1243, %v1247
      %v1249 = vshrl.u32 %v1137, 16
      %v1251 = vrot.slane %v1249, 4
      %v1252 = vor.u32 %v1251, %v1247
      %v1253 = vrot.slane %v1252, 4
      %v1255 = vshll.u32 %v1138, 16
      %v1257 = vrot.slane %v1255, 5
      %v1258 = vsel %vm1186, %v1253, %v1257
      %v1260 = vshrl.u32 %v1139, 16
      %v1262 = vrot.slane %v1260, 4
      %v1263 = vshll.u32 %v1139, 16
      %v1265 = vrot.slane %v1263, 5
      %v1266 = vor.u32 %v1262, %v1265
      %v1267 = vrot.slane %v1266, 4
      %v1269 = vshll.u32 %v1140, 16
      %v1271 = vrot.slane %v1269, 5
      %v1272 = vsel %vm1186, %v1267, %v1271
      %v1273 = vshrl.u32 %v1140, 16
      %v1275 = vrot.slane %v1273, 4
      %v1276 = vor.u32 %v1275, %v1271
      %v1277 = vrot.slane %v1276, 4
      %v1279 = vshll.u32 %v1141, 16
      %v1281 = vrot.slane %v1279, 5
      %v1282 = vsel %vm1186, %v1277, %v1281
      %v1284 = vshrl.u32 %v1142, 16
      %v1286 = vrot.slane %v1284, 4
      %v1287 = vshll.u32 %v1142, 16
      %v1289 = vrot.slane %v1287, 5
      %v1290 = vor.u32 %v1286, %v1289
      %v1291 = vrot.slane %v1290, 4
      %v1293 = vshll.u32 %v1143, 16
      %v1295 = vrot.slane %v1293, 5
      %v1296 = vsel %vm1186, %v1291, %v1295
      %v1297 = vshrl.u32 %v1143, 16
      %v1299 = vrot.slane %v1297, 4
      %v1300 = vor.u32 %v1299, %v1295
      %v1301 = vrot.slane %v1300, 4
      %v1303 = vshll.u32 %v1144, 16
      %v1305 = vrot.slane %v1303, 5
      %v1306 = vsel %vm1186, %v1301, %v1305
      %v1308 = vshrl.u32 %v1145, 16
      %v1310 = vrot.slane %v1308, 4
      %v1311 = vshll.u32 %v1145, 16
      %v1313 = vrot.slane %v1311, 5
      %v1314 = vor.u32 %v1310, %v1313
      %v1315 = vrot.slane %v1314, 4
      %v1317 = vshll.u32 %v1146, 16
      %v1319 = vrot.slane %v1317, 5
      %v1320 = vsel %vm1186, %v1315, %v1319
      %v1321 = vshrl.u32 %v1146, 16
      %v1323 = vrot.slane %v1321, 4
      %v1324 = vor.u32 %v1323, %v1319
      %v1325 = vrot.slane %v1324, 4
      %v1327 = vshll.u32 %v1147, 16
      %v1329 = vrot.slane %v1327, 5
      %v1330 = vsel %vm1186, %v1325, %v1329
      %v1332 = vshrl.u32 %v1148, 16
      %v1334 = vrot.slane %v1332, 4
      %v1335 = vshll.u32 %v1148, 16
      %v1337 = vrot.slane %v1335, 5
      %v1338 = vor.u32 %v1334, %v1337
      %v1339 = vrot.slane %v1338, 4
      %v1341 = vshll.u32 %v1149, 16
      %v1343 = vrot.slane %v1341, 5
      %v1344 = vsel %vm1186, %v1339, %v1343
      %v1345 = vshrl.u32 %v1149, 16
      %v1347 = vrot.slane %v1345, 4
      %v1348 = vor.u32 %v1347, %v1343
      %v1349 = vrot.slane %v1348, 4
      %v1351 = vshll.u32 %v1150, 16
      %v1353 = vrot.slane %v1351, 5
      %v1354 = vsel %vm1186, %v1349, %v1353
      %v1356 = vshrl.u32 %v1151, 16
      %v1358 = vrot.slane %v1356, 4
      %v1359 = vshll.u32 %v1151, 16
      %v1361 = vrot.slane %v1359, 5
      %v1362 = vor.u32 %v1358, %v1361
      %v1363 = vrot.slane %v1362, 4
      %v1365 = vshll.u32 %v1152, 16
      %v1367 = vrot.slane %v1365, 5
      %v1368 = vsel %vm1186, %v1363, %v1367
      %v1369 = vshrl.u32 %v1152, 16
      %v1371 = vrot.slane %v1369, 4
      %v1372 = vor.u32 %v1371, %v1367
      %v1373 = vrot.slane %v1372, 4
      %v1375 = vshll.u32 %v1153, 16
      %v1377 = vrot.slane %v1375, 5
      %v1378 = vsel %vm1186, %v1373, %v1377
      %v1380 = vshrl.u32 %v1154, 16
      %v1382 = vrot.slane %v1380, 4
      %v1383 = vshll.u32 %v1154, 16
      %v1385 = vrot.slane %v1383, 5
      %v1386 = vor.u32 %v1382, %v1385
      %v1387 = vrot.slane %v1386, 4
      %v1389 = vshll.u32 %v1155, 16
      %v1391 = vrot.slane %v1389, 5
      %v1392 = vsel %vm1186, %v1387, %v1391
      %v1393 = vshrl.u32 %v1155, 16
      %v1395 = vrot.slane %v1393, 4
      %v1396 = vor.u32 %v1395, %v1391
      %v1397 = vrot.slane %v1396, 4
      %v1399 = vshll.u32 %v1156, 16
      %v1401 = vrot.slane %v1399, 5
      %v1402 = vsel %vm1186, %v1397, %v1401
      %v1404 = vshrl.u32 %v1157, 16
      %v1406 = vrot.slane %v1404, 4
      %v1407 = vshll.u32 %v1157, 16
      %v1409 = vrot.slane %v1407, 5
      %v1410 = vor.u32 %v1406, %v1409
      %v1411 = vrot.slane %v1410, 4
      %v1413 = vshll.u32 %v1158, 16
      %v1415 = vrot.slane %v1413, 5
      %v1416 = vsel %vm1186, %v1411, %v1415
      %v1417 = vshrl.u32 %v1158, 16
      %v1419 = vrot.slane %v1417, 4
      %v1420 = vor.u32 %v1419, %v1415
      %v1421 = vrot.slane %v1420, 4
      %v1423 = vshll.u32 %v1159, 16
      %v1425 = vrot.slane %v1423, 5
      %v1426 = vsel %vm1186, %v1421, %v1425
      %v1428 = vshrl.u32 %v1160, 16
      %v1430 = vrot.slane %v1428, 4
      %v1431 = vshll.u32 %v1160, 16
      %v1433 = vrot.slane %v1431, 5
      %v1434 = vor.u32 %v1430, %v1433
      %v1435 = vrot.slane %v1434, 4
      %v1437 = vshll.u32 %v1161, 16
      %v1439 = vrot.slane %v1437, 5
      %v1440 = vsel %vm1186, %v1435, %v1439
      %v1441 = vshrl.u32 %v1161, 16
      %v1443 = vrot.slane %v1441, 4
      %v1444 = vor.u32 %v1443, %v1439
      %v1445 = vrot.slane %v1444, 4
      %v1447 = vshll.u32 %v1162, 16
      %v1449 = vrot.slane %v1447, 5
      %v1450 = vsel %vm1186, %v1445, %v1449
      %v1452 = vshrl.u32 %v1163, 16
      %v1454 = vrot.slane %v1452, 4
      %v1455 = vshll.u32 %v1163, 16
      %v1457 = vrot.slane %v1455, 5
      %v1458 = vor.u32 %v1454, %v1457
      %v1459 = vrot.slane %v1458, 4
      %v1461 = vshll.u32 %v1164, 16
      %v1463 = vrot.slane %v1461, 5
      %v1464 = vsel %vm1186, %v1459, %v1463
      %v1465 = vshrl.u32 %v1164, 16
      %v1467 = vrot.slane %v1465, 4
      %v1468 = vor.u32 %v1467, %v1463
      %v1469 = vrot.slane %v1468, 4
      %v1471 = vshll.u32 %v1165, 16
      %v1473 = vrot.slane %v1471, 5
      %v1474 = vsel %vm1186, %v1469, %v1473
      %v1476 = vshrl.u32 %v1166, 16
      %v1478 = vrot.slane %v1476, 4
      %v1479 = vshll.u32 %v1166, 16
      %v1481 = vrot.slane %v1479, 5
      %v1482 = vor.u32 %v1478, %v1481
      %v1483 = vrot.slane %v1482, 4
      %v1485 = vshll.u32 %v1167, 16
      %v1487 = vrot.slane %v1485, 5
      %v1488 = vsel %vm1186, %v1483, %v1487
      %v1489 = vshrl.u32 %v1167, 16
      %v1491 = vrot.slane %v1489, 4
      %v1492 = vor.u32 %v1491, %v1487
      %v1493 = vrot.slane %v1492, 4
      %v1495 = vshll.u32 %v1168, 16
      %v1497 = vrot.slane %v1495, 5
      %v1498 = vsel %vm1186, %v1493, %v1497
      %v1500 = vshrl.u32 %v1169, 16
      %v1502 = vrot.slane %v1500, 4
      %v1503 = vshll.u32 %v1169, 16
      %v1505 = vrot.slane %v1503, 5
      %v1506 = vor.u32 %v1502, %v1505
      %v1507 = vrot.slane %v1506, 4
      %v1509 = vshll.u32 %v1170, 16
      %v1511 = vrot.slane %v1509, 5
      %v1512 = vsel %vm1186, %v1507, %v1511
      %v1513 = vshrl.u32 %v1170, 16
      %v1515 = vrot.slane %v1513, 4
      %v1516 = vor.u32 %v1515, %v1511
      %v1517 = vrot.slane %v1516, 4
      %v1519 = vshll.u32 %v1171, 16
      %v1521 = vrot.slane %v1519, 5
      %v1522 = vsel %vm1186, %v1517, %v1521
      %v1524 = vshrl.u32 %v1172, 16
      %v1526 = vrot.slane %v1524, 4
      %v1527 = vshll.u32 %v1172, 16
      %v1529 = vrot.slane %v1527, 5
      %v1530 = vor.u32 %v1526, %v1529
      %v1531 = vrot.slane %v1530, 4
      %v1533 = vshll.u32 %v1173, 16
      %v1535 = vrot.slane %v1533, 5
      %v1536 = vsel %vm1186, %v1531, %v1535
      %v1537 = vshrl.u32 %v1173, 16
      %v1539 = vrot.slane %v1537, 4
      %v1540 = vor.u32 %v1539, %v1535
      %v1541 = vrot.slane %v1540, 4
      %v1543 = vshll.u32 %v1174, 16
      %v1545 = vrot.slane %v1543, 5
      %v1546 = vsel %vm1186, %v1541, %v1545
      %v1548 = vshrl.u32 %v1175, 16
      %v1550 = vrot.slane %v1548, 4
      %v1551 = vshll.u32 %v1175, 16
      %v1553 = vrot.slane %v1551, 5
      %v1554 = vor.u32 %v1550, %v1553
      %v1555 = vrot.slane %v1554, 4
      %v1557 = vshll.u32 %v1176, 16
      %v1559 = vrot.slane %v1557, 5
      %v1560 = vsel %vm1186, %v1555, %v1559
      %v1561 = vshrl.u32 %v1176, 16
      %v1563 = vrot.slane %v1561, 4
      %v1564 = vor.u32 %v1563, %v1559
      %v1565 = vrot.slane %v1564, 4
      %v1567 = vshll.u32 %v1177, 16
      %v1569 = vrot.slane %v1567, 5
      %v1570 = vsel %vm1186, %v1565, %v1569
      %v1572 = vshrl.u32 %v1178, 16
      %v1574 = vrot.slane %v1572, 4
      %v1575 = vshll.u32 %v1178, 16
      %v1577 = vrot.slane %v1575, 5
      %v1578 = vor.u32 %v1574, %v1577
      %v1579 = vrot.slane %v1578, 4
      %v1581 = vshll.u32 %v1179, 16
      %v1583 = vrot.slane %v1581, 5
      %v1584 = vsel %vm1186, %v1579, %v1583
      %v1585 = vshrl.u32 %v1179, 16
      %v1587 = vrot.slane %v1585, 4
      %v1588 = vor.u32 %v1587, %v1583
      %v1589 = vrot.slane %v1588, 4
      %v1591 = vshll.u32 %v1180, 16
      %v1593 = vrot.slane %v1591, 5
      %v1594 = vsel %vm1186, %v1589, %v1593
      %v1596 = vshrl.u32 %v1181, 16
      %v1598 = vrot.slane %v1596, 4
      %v1599 = vshll.u32 %v1181, 16
      %v1601 = vrot.slane %v1599, 5
      %v1602 = vor.u32 %v1598, %v1601
      %v1603 = vrot.slane %v1602, 4
      %v1605 = vshll.u32 %v1182, 16
      %v1607 = vrot.slane %v1605, 5
      %v1608 = vsel %vm1186, %v1603, %v1607
      %v1609 = vshrl.u32 %v1182, 16
      %v1611 = vrot.slane %v1609, 4
      %v1612 = vor.u32 %v1611, %v1607
      %v1613 = vrot.slane %v1612, 4
      %v1615 = vshll.u32 %v1183, 16
      %v1617 = vrot.slane %v1615, 5
      %v1618 = vsel %vm1186, %v1613, %v1617
      %1619 = vrot.lane.b32.xlu0 %v1200, 4
      %v1620 = vpop.permute.xlu0 %1619
      %1621 = vrot.lane.b32.xlu0 %v1210, 4
      %v1622 = vpop.permute.xlu0 %1621
      %1623 = vrot.lane.b32.xlu0 %v1224, 4
      %v1624 = vpop.permute.xlu0 %1623
      %1625 = vrot.lane.b32.xlu0 %v1234, 4
      %v1626 = vpop.permute.xlu0 %1625
      %1627 = vrot.lane.b32.xlu0 %v1248, 4
      %v1628 = vpop.permute.xlu0 %1627
      %1629 = vrot.lane.b32.xlu0 %v1258, 4
      %v1630 = vpop.permute.xlu0 %1629
      %1631 = vrot.lane.b32.xlu0 %v1272, 4
      %v1632 = vpop.permute.xlu0 %1631
      %1633 = vrot.lane.b32.xlu0 %v1282, 4
      %v1634 = vpop.permute.xlu0 %1633
      %1635 = vrot.lane.b32.xlu0 %v1296, 4
      %v1636 = vpop.permute.xlu0 %1635
      %1637 = vrot.lane.b32.xlu0 %v1306, 4
      %v1638 = vpop.permute.xlu0 %1637
      %1639 = vrot.lane.b32.xlu0 %v1320, 4
      %v1640 = vpop.permute.xlu0 %1639
      %1641 = vrot.lane.b32.xlu0 %v1330, 4
      %v1642 = vpop.permute.xlu0 %1641
      %1643 = vrot.lane.b32.xlu0 %v1344, 4
      %v1644 = vpop.permute.xlu0 %1643
      %1645 = vrot.lane.b32.xlu0 %v1354, 4
      %v1646 = vpop.permute.xlu0 %1645
      %1647 = vrot.lane.b32.xlu0 %v1368, 4
      %v1648 = vpop.permute.xlu0 %1647
      %1649 = vrot.lane.b32.xlu0 %v1378, 4
      %v1650 = vpop.permute.xlu0 %1649
      %1651 = vrot.lane.b32.xlu0 %v1392, 4
      %v1652 = vpop.permute.xlu0 %1651
      %1653 = vrot.lane.b32.xlu0 %v1402, 4
      %v1654 = vpop.permute.xlu0 %1653
      %1655 = vrot.lane.b32.xlu0 %v1416, 4
      %v1656 = vpop.permute.xlu0 %1655
      %1657 = vrot.lane.b32.xlu0 %v1426, 4
      %v1658 = vpop.permute.xlu0 %1657
      %1659 = vrot.lane.b32.xlu0 %v1440, 4
      %v1660 = vpop.permute.xlu0 %1659
      %1661 = vrot.lane.b32.xlu0 %v1450, 4
      %v1662 = vpop.permute.xlu0 %1661
      %1663 = vrot.lane.b32.xlu0 %v1464, 4
      %v1664 = vpop.permute.xlu0 %1663
      %1665 = vrot.lane.b32.xlu0 %v1474, 4
      %v1666 = vpop.permute.xlu0 %1665
      %1667 = vrot.lane.b32.xlu0 %v1488, 4
      %v1668 = vpop.permute.xlu0 %1667
      %1669 = vrot.lane.b32.xlu0 %v1498, 4
      %v1670 = vpop.permute.xlu0 %1669
      %1671 = vrot.lane.b32.xlu0 %v1512, 4
      %v1672 = vpop.permute.xlu0 %1671
      %1673 = vrot.lane.b32.xlu0 %v1522, 4
      %v1674 = vpop.permute.xlu0 %1673
      %1675 = vrot.lane.b32.xlu0 %v1536, 4
      %v1676 = vpop.permute.xlu0 %1675
      %1677 = vrot.lane.b32.xlu0 %v1546, 4
      %v1678 = vpop.permute.xlu0 %1677
      %1679 = vrot.lane.b32.xlu0 %v1560, 4
      %v1680 = vpop.permute.xlu0 %1679
      %1681 = vrot.lane.b32.xlu0 %v1570, 4
      %v1682 = vpop.permute.xlu0 %1681
      %1683 = vrot.lane.b32.xlu0 %v1584, 4
      %v1684 = vpop.permute.xlu0 %1683
      %1685 = vrot.lane.b32.xlu0 %v1594, 4
      %v1686 = vpop.permute.xlu0 %1685
      %1687 = vrot.lane.b32.xlu0 %v1608, 4
      %v1688 = vpop.permute.xlu0 %1687
      %1689 = vrot.lane.b32.xlu0 %v1618, 4
      %v1690 = vpop.permute.xlu0 %1689
      %vm1727 = vcmask 60448
      %1728 = vst.msk [vmem:[#allocation3] sm:$0xf] %vm1727, %v1620
      %1729 = vst.msk [vmem:[#allocation3 + $0x4] sm:$0xf] %vm1727, %v1622
      %1730 = vst.msk [vmem:[#allocation3 + $0x8] sm:$0xf] %vm1727, %v1624
      %1731 = vst.msk [vmem:[#allocation3 + $0xc] sm:$0xf] %vm1727, %v1626
      %1732 = vst.msk [vmem:[#allocation3 + $0x10] sm:$0xf] %vm1727, %v1628
      %1733 = vst.msk [vmem:[#allocation3 + $0x14] sm:$0xf] %vm1727, %v1630
      %1734 = vst.msk [vmem:[#allocation3 + $0x18] sm:$0xf] %vm1727, %v1632
      %1735 = vst.msk [vmem:[#allocation3 + $0x1c] sm:$0xf] %vm1727, %v1634
      %1736 = vst.msk [vmem:[#allocation3 + $0x20] sm:$0xf] %vm1727, %v1636
      %1737 = vst.msk [vmem:[#allocation3 + $0x24] sm:$0xf] %vm1727, %v1638
      %1738 = vst.msk [vmem:[#allocation3 + $0x28] sm:$0xf] %vm1727, %v1640
      %1739 = vst.msk [vmem:[#allocation3 + $0x2c] sm:$0xf] %vm1727, %v1642
      %1740 = vst.msk [vmem:[#allocation3 + $0x30] sm:$0xf] %vm1727, %v1644
      %1741 = vst.msk [vmem:[#allocation3 + $0x34] sm:$0xf] %vm1727, %v1646
      %1742 = vst.msk [vmem:[#allocation3 + $0x38] sm:$0xf] %vm1727, %v1648
      %1743 = vst.msk [vmem:[#allocation3 + $0x3c] sm:$0xf] %vm1727, %v1650
      %1744 = vst.msk [vmem:[#allocation3 + $0x40] sm:$0xf] %vm1727, %v1652
      %1745 = vst.msk [vmem:[#allocation3 + $0x44] sm:$0xf] %vm1727, %v1654
      %1746 = vst.msk [vmem:[#allocation3 + $0x48] sm:$0xf] %vm1727, %v1656
      %1747 = vst.msk [vmem:[#allocation3 + $0x4c] sm:$0xf] %vm1727, %v1658
      %1748 = vst.msk [vmem:[#allocation3 + $0x50] sm:$0xf] %vm1727, %v1660
      %1749 = vst.msk [vmem:[#allocation3 + $0x54] sm:$0xf] %vm1727, %v1662
      %1750 = vst.msk [vmem:[#allocation3 + $0x58] sm:$0xf] %vm1727, %v1664
      %1751 = vst.msk [vmem:[#allocation3 + $0x5c] sm:$0xf] %vm1727, %v1666
      %1752 = vst.msk [vmem:[#allocation3 + $0x60] sm:$0xf] %vm1727, %v1668
      %1753 = vst.msk [vmem:[#allocation3 + $0x64] sm:$0xf] %vm1727, %v1670
      %1754 = vst.msk [vmem:[#allocation3 + $0x68] sm:$0xf] %vm1727, %v1672
      %1755 = vst.msk [vmem:[#allocation3 + $0x6c] sm:$0xf] %vm1727, %v1674
      %1756 = vst.msk [vmem:[#allocation3 + $0x70] sm:$0xf] %vm1727, %v1676
      %1757 = vst.msk [vmem:[#allocation3 + $0x74] sm:$0xf] %vm1727, %v1678
      %1758 = vst.msk [vmem:[#allocation3 + $0x78] sm:$0xf] %vm1727, %v1680
      %1759 = vst.msk [vmem:[#allocation3 + $0x7c] sm:$0xf] %vm1727, %v1682
      %1760 = vst.msk [vmem:[#allocation3 + $0x80] sm:$0xf] %vm1727, %v1684
      %1761 = vst.msk [vmem:[#allocation3 + $0x84] sm:$0xf] %vm1727, %v1686
      %1762 = vst.msk [vmem:[#allocation3 + $0x88] sm:$0xf] %vm1727, %v1688
      %1763 = vst.msk [vmem:[#allocation3 + $0x8c] sm:$0xf] %vm1727, %v1690
      %v1764 = vld [vmem:[#allocation2] sm:$0xe]
      %v1765 = vld [vmem:[#allocation2 + $0x4] sm:$0xf]
      %v1766 = vld [vmem:[#allocation2 + $0x8] sm:$0x1]
      %v1767 = vld [vmem:[#allocation2 + $0xc] sm:$0xe]
      %v1768 = vld [vmem:[#allocation2 + $0x10] sm:$0xf]
      %v1769 = vld [vmem:[#allocation2 + $0x14] sm:$0x1]
      %v1770 = vld [vmem:[#allocation2 + $0x18] sm:$0xe]
      %v1771 = vld [vmem:[#allocation2 + $0x1c] sm:$0xf]
      %v1772 = vld [vmem:[#allocation2 + $0x20] sm:$0x1]
      %v1773 = vld [vmem:[#allocation2 + $0x24] sm:$0xe]
      %v1774 = vld [vmem:[#allocation2 + $0x28] sm:$0xf]
      %v1775 = vld [vmem:[#allocation2 + $0x2c] sm:$0x1]
      %v1776 = vld [vmem:[#allocation2 + $0x30] sm:$0xe]
      %v1777 = vld [vmem:[#allocation2 + $0x34] sm:$0xf]
      %v1778 = vld [vmem:[#allocation2 + $0x38] sm:$0x1]
      %v1779 = vld [vmem:[#allocation2 + $0x3c] sm:$0xe]
      %v1780 = vld [vmem:[#allocation2 + $0x40] sm:$0xf]
      %v1781 = vld [vmem:[#allocation2 + $0x44] sm:$0x1]
      %v1782 = vld [vmem:[#allocation2 + $0x48] sm:$0xe]
      %v1783 = vld [vmem:[#allocation2 + $0x4c] sm:$0xf]
      %v1784 = vld [vmem:[#allocation2 + $0x50] sm:$0x1]
      %v1785 = vld [vmem:[#allocation2 + $0x54] sm:$0xe]
      %v1786 = vld [vmem:[#allocation2 + $0x58] sm:$0xf]
      %v1787 = vld [vmem:[#allocation2 + $0x5c] sm:$0x1]
      %v1788 = vld [vmem:[#allocation2 + $0x60] sm:$0xe]
      %v1789 = vld [vmem:[#allocation2 + $0x64] sm:$0xf]
      %v1790 = vld [vmem:[#allocation2 + $0x68] sm:$0x1]
      %v1791 = vld [vmem:[#allocation2 + $0x6c] sm:$0xe]
      %v1792 = vld [vmem:[#allocation2 + $0x70] sm:$0xf]
      %v1793 = vld [vmem:[#allocation2 + $0x74] sm:$0x1]
      %v1794 = vld [vmem:[#allocation2 + $0x78] sm:$0xe]
      %v1795 = vld [vmem:[#allocation2 + $0x7c] sm:$0xf]
      %v1796 = vld [vmem:[#allocation2 + $0x80] sm:$0x1]
      %v1797 = vld [vmem:[#allocation2 + $0x84] sm:$0xe]
      %v1798 = vld [vmem:[#allocation2 + $0x88] sm:$0xf]
      %v1799 = vld [vmem:[#allocation2 + $0x8c] sm:$0x1]
      %v1800 = vld [vmem:[#allocation2 + $0x90] sm:$0xe]
      %v1801 = vld [vmem:[#allocation2 + $0x94] sm:$0xf]
      %v1802 = vld [vmem:[#allocation2 + $0x98] sm:$0x1]
      %v1803 = vld [vmem:[#allocation2 + $0x9c] sm:$0xe]
      %v1804 = vld [vmem:[#allocation2 + $0xa0] sm:$0xf]
      %v1805 = vld [vmem:[#allocation2 + $0xa4] sm:$0x1]
      %v1806 = vld [vmem:[#allocation2 + $0xa8] sm:$0xe]
      %v1807 = vld [vmem:[#allocation2 + $0xac] sm:$0xf]
      %v1808 = vld [vmem:[#allocation2 + $0xb0] sm:$0x1]
      %v1809 = vld [vmem:[#allocation2 + $0xb4] sm:$0xe]
      %v1810 = vld [vmem:[#allocation2 + $0xb8] sm:$0xf]
      %v1811 = vld [vmem:[#allocation2 + $0xbc] sm:$0x1]
      %v1812 = vld [vmem:[#allocation2 + $0xc0] sm:$0xe]
      %v1813 = vld [vmem:[#allocation2 + $0xc4] sm:$0xf]
      %v1814 = vld [vmem:[#allocation2 + $0xc8] sm:$0x1]
      %v1815 = vld [vmem:[#allocation2 + $0xcc] sm:$0xe]
      %v1816 = vld [vmem:[#allocation2 + $0xd0] sm:$0xf]
      %v1817 = vld [vmem:[#allocation2 + $0xd4] sm:$0x1]
      %vm1872 = vcmask 1042432
      %vm1873 = vcmask 1046532
      %vm1874 = vmor %vm1872, %vm1873
      %v1875 = vrot.slane %v1764, 5
      %v1876 = vrot.slane %v1875, 4
      %v1877 = vrot.slane %v1765, 5
      %v1878 = vsel %vm1874, %v1876, %v1877
      %v1879 = vrot.slane %v1877, 4
      %v1880 = vrot.slane %v1766, 5
      %v1881 = vsel %vm1874, %v1879, %v1880
      %v1882 = vrot.slane %v1767, 5
      %v1883 = vrot.slane %v1882, 4
      %v1884 = vrot.slane %v1768, 5
      %v1885 = vsel %vm1874, %v1883, %v1884
      %v1886 = vrot.slane %v1884, 4
      %v1887 = vrot.slane %v1769, 5
      %v1888 = vsel %vm1874, %v1886, %v1887
      %v1889 = vrot.slane %v1770, 5
      %v1890 = vrot.slane %v1889, 4
      %v1891 = vrot.slane %v1771, 5
      %v1892 = vsel %vm1874, %v1890, %v1891
      %v1893 = vrot.slane %v1891, 4
      %v1894 = vrot.slane %v1772, 5
      %v1895 = vsel %vm1874, %v1893, %v1894
      %v1896 = vrot.slane %v1773, 5
      %v1897 = vrot.slane %v1896, 4
      %v1898 = vrot.slane %v1774, 5
      %v1899 = vsel %vm1874, %v1897, %v1898
      %v1900 = vrot.slane %v1898, 4
      %v1901 = vrot.slane %v1775, 5
      %v1902 = vsel %vm1874, %v1900, %v1901
      %v1903 = vrot.slane %v1776, 5
      %v1904 = vrot.slane %v1903, 4
      %v1905 = vrot.slane %v1777, 5
      %v1906 = vsel %vm1874, %v1904, %v1905
      %v1907 = vrot.slane %v1905, 4
      %v1908 = vrot.slane %v1778, 5
      %v1909 = vsel %vm1874, %v1907, %v1908
      %v1910 = vrot.slane %v1779, 5
      %v1911 = vrot.slane %v1910, 4
      %v1912 = vrot.slane %v1780, 5
      %v1913 = vsel %vm1874, %v1911, %v1912
      %v1914 = vrot.slane %v1912, 4
      %v1915 = vrot.slane %v1781, 5
      %v1916 = vsel %vm1874, %v1914, %v1915
      %v1917 = vrot.slane %v1782, 5
      %v1918 = vrot.slane %v1917, 4
      %v1919 = vrot.slane %v1783, 5
      %v1920 = vsel %vm1874, %v1918, %v1919
      %v1921 = vrot.slane %v1919, 4
      %v1922 = vrot.slane %v1784, 5
      %v1923 = vsel %vm1874, %v1921, %v1922
      %v1924 = vrot.slane %v1785, 5
      %v1925 = vrot.slane %v1924, 4
      %v1926 = vrot.slane %v1786, 5
      %v1927 = vsel %vm1874, %v1925, %v1926
      %v1928 = vrot.slane %v1926, 4
      %v1929 = vrot.slane %v1787, 5
      %v1930 = vsel %vm1874, %v1928, %v1929
      %v1931 = vrot.slane %v1788, 5
      %v1932 = vrot.slane %v1931, 4
      %v1933 = vrot.slane %v1789, 5
      %v1934 = vsel %vm1874, %v1932, %v1933
      %v1935 = vrot.slane %v1933, 4
      %v1936 = vrot.slane %v1790, 5
      %v1937 = vsel %vm1874, %v1935, %v1936
      %v1938 = vrot.slane %v1791, 5
      %v1939 = vrot.slane %v1938, 4
      %v1940 = vrot.slane %v1792, 5
      %v1941 = vsel %vm1874, %v1939, %v1940
      %v1942 = vrot.slane %v1940, 4
      %v1943 = vrot.slane %v1793, 5
      %v1944 = vsel %vm1874, %v1942, %v1943
      %v1945 = vrot.slane %v1794, 5
      %v1946 = vrot.slane %v1945, 4
      %v1947 = vrot.slane %v1795, 5
      %v1948 = vsel %vm1874, %v1946, %v1947
      %v1949 = vrot.slane %v1947, 4
      %v1950 = vrot.slane %v1796, 5
      %v1951 = vsel %vm1874, %v1949, %v1950
      %v1952 = vrot.slane %v1797, 5
      %v1953 = vrot.slane %v1952, 4
      %v1954 = vrot.slane %v1798, 5
      %v1955 = vsel %vm1874, %v1953, %v1954
      %v1956 = vrot.slane %v1954, 4
      %v1957 = vrot.slane %v1799, 5
      %v1958 = vsel %vm1874, %v1956, %v1957
      %v1959 = vrot.slane %v1800, 5
      %v1960 = vrot.slane %v1959, 4
      %v1961 = vrot.slane %v1801, 5
      %v1962 = vsel %vm1874, %v1960, %v1961
      %v1963 = vrot.slane %v1961, 4
      %v1964 = vrot.slane %v1802, 5
      %v1965 = vsel %vm1874, %v1963, %v1964
      %v1966 = vrot.slane %v1803, 5
      %v1967 = vrot.slane %v1966, 4
      %v1968 = vrot.slane %v1804, 5
      %v1969 = vsel %vm1874, %v1967, %v1968
      %v1970 = vrot.slane %v1968, 4
      %v1971 = vrot.slane %v1805, 5
      %v1972 = vsel %vm1874, %v1970, %v1971
      %v1973 = vrot.slane %v1806, 5
      %v1974 = vrot.slane %v1973, 4
      %v1975 = vrot.slane %v1807, 5
      %v1976 = vsel %vm1874, %v1974, %v1975
      %v1977 = vrot.slane %v1975, 4
      %v1978 = vrot.slane %v1808, 5
      %v1979 = vsel %vm1874, %v1977, %v1978
      %v1980 = vrot.slane %v1809, 5
      %v1981 = vrot.slane %v1980, 4
      %v1982 = vrot.slane %v1810, 5
      %v1983 = vsel %vm1874, %v1981, %v1982
      %v1984 = vrot.slane %v1982, 4
      %v1985 = vrot.slane %v1811, 5
      %v1986 = vsel %vm1874, %v1984, %v1985
      %v1987 = vrot.slane %v1812, 5
      %v1988 = vrot.slane %v1987, 4
      %v1989 = vrot.slane %v1813, 5
      %v1990 = vsel %vm1874, %v1988, %v1989
      %v1991 = vrot.slane %v1989, 4
      %v1992 = vrot.slane %v1814, 5
      %v1993 = vsel %vm1874, %v1991, %v1992
      %v1994 = vrot.slane %v1815, 5
      %v1995 = vrot.slane %v1994, 4
      %v1996 = vrot.slane %v1816, 5
      %v1997 = vsel %vm1874, %v1995, %v1996
      %v1998 = vrot.slane %v1996, 4
      %v1999 = vrot.slane %v1817, 5
      %v2000 = vsel %vm1874, %v1998, %v1999
      %2001 = vrot.lane.b32.xlu0 %v1878, 8
      %v2002 = vpop.permute.xlu0 %2001
      %2003 = vrot.lane.b32.xlu0 %v1881, 8
      %v2004 = vpop.permute.xlu0 %2003
      %2005 = vrot.lane.b32.xlu0 %v1885, 8
      %v2006 = vpop.permute.xlu0 %2005
      %2007 = vrot.lane.b32.xlu0 %v1888, 8
      %v2008 = vpop.permute.xlu0 %2007
      %2009 = vrot.lane.b32.xlu0 %v1892, 8
      %v2010 = vpop.permute.xlu0 %2009
      %2011 = vrot.lane.b32.xlu0 %v1895, 8
      %v2012 = vpop.permute.xlu0 %2011
      %2013 = vrot.lane.b32.xlu0 %v1899, 8
      %v2014 = vpop.permute.xlu0 %2013
      %2015 = vrot.lane.b32.xlu0 %v1902, 8
      %v2016 = vpop.permute.xlu0 %2015
      %2017 = vrot.lane.b32.xlu0 %v1906, 8
      %v2018 = vpop.permute.xlu0 %2017
      %2019 = vrot.lane.b32.xlu0 %v1909, 8
      %v2020 = vpop.permute.xlu0 %2019
      %2021 = vrot.lane.b32.xlu0 %v1913, 8
      %v2022 = vpop.permute.xlu0 %2021
      %2023 = vrot.lane.b32.xlu0 %v1916, 8
      %v2024 = vpop.permute.xlu0 %2023
      %2025 = vrot.lane.b32.xlu0 %v1920, 8
      %v2026 = vpop.permute.xlu0 %2025
      %2027 = vrot.lane.b32.xlu0 %v1923, 8
      %v2028 = vpop.permute.xlu0 %2027
      %2029 = vrot.lane.b32.xlu0 %v1927, 8
      %v2030 = vpop.permute.xlu0 %2029
      %2031 = vrot.lane.b32.xlu0 %v1930, 8
      %v2032 = vpop.permute.xlu0 %2031
      %2033 = vrot.lane.b32.xlu0 %v1934, 8
      %v2034 = vpop.permute.xlu0 %2033
      %2035 = vrot.lane.b32.xlu0 %v1937, 8
      %v2036 = vpop.permute.xlu0 %2035
      %2037 = vrot.lane.b32.xlu0 %v1941, 8
      %v2038 = vpop.permute.xlu0 %2037
      %2039 = vrot.lane.b32.xlu0 %v1944, 8
      %v2040 = vpop.permute.xlu0 %2039
      %2041 = vrot.lane.b32.xlu0 %v1948, 8
      %v2042 = vpop.permute.xlu0 %2041
      %2043 = vrot.lane.b32.xlu0 %v1951, 8
      %v2044 = vpop.permute.xlu0 %2043
      %2045 = vrot.lane.b32.xlu0 %v1955, 8
      %v2046 = vpop.permute.xlu0 %2045
      %2047 = vrot.lane.b32.xlu0 %v1958, 8
      %v2048 = vpop.permute.xlu0 %2047
      %2049 = vrot.lane.b32.xlu0 %v1962, 8
      %v2050 = vpop.permute.xlu0 %2049
      %2051 = vrot.lane.b32.xlu0 %v1965, 8
      %v2052 = vpop.permute.xlu0 %2051
      %2053 = vrot.lane.b32.xlu0 %v1969, 8
      %v2054 = vpop.permute.xlu0 %2053
      %2055 = vrot.lane.b32.xlu0 %v1972, 8
      %v2056 = vpop.permute.xlu0 %2055
      %2057 = vrot.lane.b32.xlu0 %v1976, 8
      %v2058 = vpop.permute.xlu0 %2057
      %2059 = vrot.lane.b32.xlu0 %v1979, 8
      %v2060 = vpop.permute.xlu0 %2059
      %2061 = vrot.lane.b32.xlu0 %v1983, 8
      %v2062 = vpop.permute.xlu0 %2061
      %2063 = vrot.lane.b32.xlu0 %v1986, 8
      %v2064 = vpop.permute.xlu0 %2063
      %2065 = vrot.lane.b32.xlu0 %v1990, 8
      %v2066 = vpop.permute.xlu0 %2065
      %2067 = vrot.lane.b32.xlu0 %v1993, 8
      %v2068 = vpop.permute.xlu0 %2067
      %2069 = vrot.lane.b32.xlu0 %v1997, 8
      %v2070 = vpop.permute.xlu0 %2069
      %2071 = vrot.lane.b32.xlu0 %v2000, 8
      %v2072 = vpop.permute.xlu0 %2071
      %vm2109 = vcmask 93248
      %2110 = vst.msk [vmem:[#allocation3] sm:$0xf] %vm2109, %v2002
      %2111 = vst.msk [vmem:[#allocation3 + $0x4] sm:$0xf] %vm2109, %v2004
      %2112 = vst.msk [vmem:[#allocation3 + $0x8] sm:$0xf] %vm2109, %v2006
      %2113 = vst.msk [vmem:[#allocation3 + $0xc] sm:$0xf] %vm2109, %v2008
      %2114 = vst.msk [vmem:[#allocation3 + $0x10] sm:$0xf] %vm2109, %v2010
      %2115 = vst.msk [vmem:[#allocation3 + $0x14] sm:$0xf] %vm2109, %v2012
      %2116 = vst.msk [vmem:[#allocation3 + $0x18] sm:$0xf] %vm2109, %v2014
      %2117 = vst.msk [vmem:[#allocation3 + $0x1c] sm:$0xf] %vm2109, %v2016
      %2118 = vst.msk [vmem:[#allocation3 + $0x20] sm:$0xf] %vm2109, %v2018
      %2119 = vst.msk [vmem:[#allocation3 + $0x24] sm:$0xf] %vm2109, %v2020
      %2120 = vst.msk [vmem:[#allocation3 + $0x28] sm:$0xf] %vm2109, %v2022
      %2121 = vst.msk [vmem:[#allocation3 + $0x2c] sm:$0xf] %vm2109, %v2024
      %2122 = vst.msk [vmem:[#allocation3 + $0x30] sm:$0xf] %vm2109, %v2026
      %2123 = vst.msk [vmem:[#allocation3 + $0x34] sm:$0xf] %vm2109, %v2028
      %2124 = vst.msk [vmem:[#allocation3 + $0x38] sm:$0xf] %vm2109, %v2030
      %2125 = vst.msk [vmem:[#allocation3 + $0x3c] sm:$0xf] %vm2109, %v2032
      %2126 = vst.msk [vmem:[#allocation3 + $0x40] sm:$0xf] %vm2109, %v2034
      %2127 = vst.msk [vmem:[#allocation3 + $0x44] sm:$0xf] %vm2109, %v2036
      %2128 = vst.msk [vmem:[#allocation3 + $0x48] sm:$0xf] %vm2109, %v2038
      %2129 = vst.msk [vmem:[#allocation3 + $0x4c] sm:$0xf] %vm2109, %v2040
      %2130 = vst.msk [vmem:[#allocation3 + $0x50] sm:$0xf] %vm2109, %v2042
      %2131 = vst.msk [vmem:[#allocation3 + $0x54] sm:$0xf] %vm2109, %v2044
      %2132 = vst.msk [vmem:[#allocation3 + $0x58] sm:$0xf] %vm2109, %v2046
      %2133 = vst.msk [vmem:[#allocation3 + $0x5c] sm:$0xf] %vm2109, %v2048
      %2134 = vst.msk [vmem:[#allocation3 + $0x60] sm:$0xf] %vm2109, %v2050
      %2135 = vst.msk [vmem:[#allocation3 + $0x64] sm:$0xf] %vm2109, %v2052
      %2136 = vst.msk [vmem:[#allocation3 + $0x68] sm:$0xf] %vm2109, %v2054
      %2137 = vst.msk [vmem:[#allocation3 + $0x6c] sm:$0xf] %vm2109, %v2056
      %2138 = vst.msk [vmem:[#allocation3 + $0x70] sm:$0xf] %vm2109, %v2058
      %2139 = vst.msk [vmem:[#allocation3 + $0x74] sm:$0xf] %vm2109, %v2060
      %2140 = vst.msk [vmem:[#allocation3 + $0x78] sm:$0xf] %vm2109, %v2062
      %2141 = vst.msk [vmem:[#allocation3 + $0x7c] sm:$0xf] %vm2109, %v2064
      %2142 = vst.msk [vmem:[#allocation3 + $0x80] sm:$0xf] %vm2109, %v2066
      %2143 = vst.msk [vmem:[#allocation3 + $0x84] sm:$0xf] %vm2109, %v2068
      %2144 = vst.msk [vmem:[#allocation3 + $0x88] sm:$0xf] %vm2109, %v2070
      %2145 = vst.msk [vmem:[#allocation3 + $0x8c] sm:$0xf] %vm2109, %v2072
      %v2146 = vld [vmem:[#allocation3] sm:$0xf]
      %v2147 = vld [vmem:[#allocation3 + $0x4] sm:$0xf]
      %v2148 = vld [vmem:[#allocation3 + $0x8] sm:$0xf]
      %v2149 = vld [vmem:[#allocation3 + $0xc] sm:$0xf]
      %v2150 = vld [vmem:[#allocation3 + $0x10] sm:$0xf]
      %v2151 = vld [vmem:[#allocation3 + $0x14] sm:$0xf]
      %v2152 = vld [vmem:[#allocation3 + $0x18] sm:$0xf]
      %v2153 = vld [vmem:[#allocation3 + $0x1c] sm:$0xf]
      %v2154 = vld [vmem:[#allocation3 + $0x20] sm:$0xf]
      %v2155 = vld [vmem:[#allocation3 + $0x24] sm:$0xf]
      %v2156 = vld [vmem:[#allocation3 + $0x28] sm:$0xf]
      %v2157 = vld [vmem:[#allocation3 + $0x2c] sm:$0xf]
      %v2158 = vld [vmem:[#allocation3 + $0x30] sm:$0xf]
      %v2159 = vld [vmem:[#allocation3 + $0x34] sm:$0xf]
      %v2160 = vld [vmem:[#allocation3 + $0x38] sm:$0xf]
      %v2161 = vld [vmem:[#allocation3 + $0x3c] sm:$0xf]
      %v2162 = vld [vmem:[#allocation3 + $0x40] sm:$0xf]
      %v2163 = vld [vmem:[#allocation3 + $0x44] sm:$0xf]
      %v2164 = vld [vmem:[#allocation3 + $0x48] sm:$0xf]
      %v2165 = vld [vmem:[#allocation3 + $0x4c] sm:$0xf]
      %v2166 = vld [vmem:[#allocation3 + $0x50] sm:$0xf]
      %v2167 = vld [vmem:[#allocation3 + $0x54] sm:$0xf]
      %v2168 = vld [vmem:[#allocation3 + $0x58] sm:$0xf]
      %v2169 = vld [vmem:[#allocation3 + $0x5c] sm:$0xf]
      %v2170 = vld [vmem:[#allocation3 + $0x60] sm:$0xf]
      %v2171 = vld [vmem:[#allocation3 + $0x64] sm:$0xf]
      %v2172 = vld [vmem:[#allocation3 + $0x68] sm:$0xf]
      %v2173 = vld [vmem:[#allocation3 + $0x6c] sm:$0xf]
      %v2174 = vld [vmem:[#allocation3 + $0x70] sm:$0xf]
      %v2175 = vld [vmem:[#allocation3 + $0x74] sm:$0xf]
      %v2176 = vld [vmem:[#allocation3 + $0x78] sm:$0xf]
      %v2177 = vld [vmem:[#allocation3 + $0x7c] sm:$0xf]
      %v2178 = vld [vmem:[%s1] sm:$0xf]
      %v2179 = vld [vmem:[%s1 + $0x4] sm:$0x3]
      %s2180 = scalar_lea.vmem [#allocation3], 8
      %v2181 = vld [vmem:[%s2180] sm:$0xf]
      %v2182 = vld [vmem:[%s2180 + $0x4] sm:$0xf]
      %v2183 = vld [vmem:[%s2180 + $0x8] sm:$0xf]
      %v2184 = vld [vmem:[%s2180 + $0xc] sm:$0xf]
      %v2185 = vld [vmem:[%s2180 + $0x10] sm:$0xf]
      %v2186 = vld [vmem:[%s2180 + $0x14] sm:$0xf]
      %v2187 = vld [vmem:[%s2180 + $0x18] sm:$0xf]
      %v2188 = vld [vmem:[%s2180 + $0x1c] sm:$0xf]
      %v2189 = vld [vmem:[%s2180 + $0x20] sm:$0xf]
      %v2190 = vld [vmem:[%s2180 + $0x24] sm:$0xf]
      %v2191 = vld [vmem:[%s2180 + $0x28] sm:$0xf]
      %v2192 = vld [vmem:[%s2180 + $0x2c] sm:$0xf]
      %v2193 = vld [vmem:[%s2180 + $0x30] sm:$0xf]
      %v2194 = vld [vmem:[%s2180 + $0x34] sm:$0xf]
      %v2195 = vld [vmem:[%s2180 + $0x38] sm:$0xf]
      %v2196 = vld [vmem:[%s2180 + $0x3c] sm:$0xf]
      %v2197 = vld [vmem:[%s2180 + $0x40] sm:$0xf]
      %v2198 = vld [vmem:[%s2180 + $0x44] sm:$0xf]
      %v2199 = vld [vmem:[%s2180 + $0x48] sm:$0xf]
      %v2200 = vld [vmem:[%s2180 + $0x4c] sm:$0xf]
      %v2201 = vld [vmem:[%s2180 + $0x50] sm:$0xf]
      %v2202 = vld [vmem:[%s2180 + $0x54] sm:$0xf]
      %v2203 = vld [vmem:[%s2180 + $0x58] sm:$0xf]
      %v2204 = vld [vmem:[%s2180 + $0x5c] sm:$0xf]
      %v2205 = vld [vmem:[%s2180 + $0x60] sm:$0xf]
      %v2206 = vld [vmem:[%s2180 + $0x64] sm:$0xf]
      %v2207 = vld [vmem:[%s2180 + $0x68] sm:$0xf]
      %v2208 = vld [vmem:[%s2180 + $0x6c] sm:$0xf]
      %v2209 = vld [vmem:[%s2180 + $0x70] sm:$0xf]
      %v2210 = vld [vmem:[%s2180 + $0x74] sm:$0xf]
      %v2211 = vld [vmem:[%s2180 + $0x78] sm:$0xf]
      %v2212 = vld [vmem:[%s2180 + $0x7c] sm:$0xf]
      %v2213 = vld [vmem:[%s1 + $0x4] sm:$0xc]
      %v2214 = vld [vmem:[%s1 + $0x8] sm:$0xf]
      %v2247 = vunpack.c.l.b16 %v2181
      %v2248 = vunpack.c.l.b16 %v2182
      %v2249 = vunpack.c.l.b16 %v2183
      %v2250 = vunpack.c.l.b16 %v2184
      %v2251 = vunpack.c.l.b16 %v2185
      %v2252 = vunpack.c.l.b16 %v2186
      %v2253 = vunpack.c.l.b16 %v2187
      %v2254 = vunpack.c.l.b16 %v2188
      %v2255 = vunpack.c.l.b16 %v2189
      %v2256 = vunpack.c.l.b16 %v2190
      %v2257 = vunpack.c.l.b16 %v2191
      %v2258 = vunpack.c.l.b16 %v2192
      %v2259 = vunpack.c.l.b16 %v2193
      %v2260 = vunpack.c.l.b16 %v2194
      %v2261 = vunpack.c.l.b16 %v2195
      %v2262 = vunpack.c.l.b16 %v2196
      %v2263 = vunpack.c.l.b16 %v2197
      %v2264 = vunpack.c.l.b16 %v2198
      %v2265 = vunpack.c.l.b16 %v2199
      %v2266 = vunpack.c.l.b16 %v2200
      %v2267 = vunpack.c.l.b16 %v2201
      %v2268 = vunpack.c.l.b16 %v2202
      %v2269 = vunpack.c.l.b16 %v2203
      %v2270 = vunpack.c.l.b16 %v2204
      %v2271 = vunpack.c.l.b16 %v2205
      %v2272 = vunpack.c.l.b16 %v2206
      %v2273 = vunpack.c.l.b16 %v2207
      %v2274 = vunpack.c.l.b16 %v2208
      %v2275 = vunpack.c.l.b16 %v2209
      %v2276 = vunpack.c.l.b16 %v2210
      %v2277 = vunpack.c.l.b16 %v2211
      %v2278 = vunpack.c.l.b16 %v2212
      %v2279 = vpack.c.b16 %v2248, %v2247
      %v2280 = vpack.c.b16 %v2250, %v2249
      %v2281 = vpack.c.b16 %v2252, %v2251
      %v2282 = vpack.c.b16 %v2254, %v2253
      %v2283 = vpack.c.b16 %v2256, %v2255
      %v2284 = vpack.c.b16 %v2258, %v2257
      %v2285 = vpack.c.b16 %v2260, %v2259
      %v2286 = vpack.c.b16 %v2262, %v2261
      %v2287 = vpack.c.b16 %v2264, %v2263
      %v2288 = vpack.c.b16 %v2266, %v2265
      %v2289 = vpack.c.b16 %v2268, %v2267
      %v2290 = vpack.c.b16 %v2270, %v2269
      %v2291 = vpack.c.b16 %v2272, %v2271
      %v2292 = vpack.c.b16 %v2274, %v2273
      %v2293 = vpack.c.b16 %v2276, %v2275
      %v2294 = vpack.c.b16 %v2278, %v2277
      %v2297 = vunpack.c.l.b16 %v2213
      %v2298 = vunpack.c.l.b16 %v2214
      %v2299 = vpack.c.b16 %v2298, %v2297
      %v2300 = vrot.slane %v2299, 2
      %vm2301 = vcmask 97280
      %v2303 = vsel %vm2301, %v2279, 0
      %v2306 = vsel %vm2301, %v2280, 0
      %v2309 = vsel %vm2301, %v2281, 0
      %v2312 = vsel %vm2301, %v2282, 0
      %v2315 = vsel %vm2301, %v2283, 0
      %v2318 = vsel %vm2301, %v2284, 0
      %v2321 = vsel %vm2301, %v2285, 0
      %v2324 = vsel %vm2301, %v2286, 0
      %v2327 = vsel %vm2301, %v2287, 0
      %v2330 = vsel %vm2301, %v2288, 0
      %v2333 = vsel %vm2301, %v2289, 0
      %v2336 = vsel %vm2301, %v2290, 0
      %v2339 = vsel %vm2301, %v2291, 0
      %v2342 = vsel %vm2301, %v2292, 0
      %v2345 = vsel %vm2301, %v2293, 0
      %v2348 = vsel %vm2301, %v2294, 0
      %vm2350 = vcmask 1045504
      %v2352 = vsel %vm2350, %v2300, 0
      %2354 = vmatprep.subr.bf16.mxu0 0
      %2355 = vmatpush1.bf16.msra.mxu0 0
      %2356 = vmatprep.subr.bf16.mxu0 0
      %2357 = vmatpush1.bf16.msra.mxu0 0
      %2358 = vmatprep.subr.bf16.mxu0 0
      %2359 = vmatpush1.bf16.msra.mxu0 0
      %2360 = vmatprep.subr.bf16.mxu0 0
      %2361 = vmatpush1.bf16.msra.mxu0 0
      %2362 = vmatprep.subr.bf16.mxu0 0
      %2363 = vmatpush1.bf16.msra.mxu0 0
      %2364 = vmatprep.subr.bf16.mxu0 0
      %2365 = vmatpush1.bf16.msra.mxu0 0
      %2366 = vmatprep.subr.bf16.mxu0 0
      %2367 = vmatpush1.bf16.msra.mxu0 0
      %2368 = vmatprep.subr.bf16.mxu0 0
      %2369 = vmatpush1.bf16.msra.mxu0 %v2352
      %2370 = vmatprep.subr.bf16.mxu0 0
      %2371 = vmatpush2.bf16.msra.mxu0 0
      %2372 = vmatprep.subr.bf16.mxu0 0
      %2373 = vmatpush2.bf16.msra.mxu0 0
      %2374 = vmatprep.subr.bf16.mxu0 0
      %2375 = vmatpush2.bf16.msra.mxu0 0
      %2376 = vmatprep.subr.bf16.mxu0 0
      %2377 = vmatpush2.bf16.msra.mxu0 0
      %2378 = vmatprep.subr.bf16.mxu0 0
      %2379 = vmatpush2.bf16.msra.mxu0 0
      %2380 = vmatprep.subr.bf16.mxu0 0
      %2381 = vmatpush2.bf16.msra.mxu0 0
      %2382 = vmatprep.subr.bf16.mxu0 0
      %2383 = vmatpush2.bf16.msra.mxu0 0
      %2384 = vmatprep.subr.bf16.mxu0 0
      %2385 = vmatpush2.bf16.msra.mxu0 0
      %2386 = vmatprep.mubr.bf16.mxu0 0
      %2387 = vmatmul.mubr.bf16.gmra.mxu0 %v2303
      %v2388 = vpop.f32.mrf.mxu0
      %v2389 = vadd.f32 0.0, %v2388
      %v2390 = vpop.f32.mrf.mxu0
      %v2391 = vpop.f32.mrf.mxu0
      %v2392 = vadd.f32 0.0, %v2391
      %v2393 = vpop.f32.mrf.mxu0
      %2394 = vmatprep.mubr.bf16.mxu0 0
      %2395 = vmatmul.mubr.bf16.gmra.mxu0 %v2306
      %v2396 = vpop.f32.mrf.mxu0
      %v2397 = vadd.f32 0.0, %v2396
      %v2398 = vpop.f32.mrf.mxu0
      %v2399 = vpop.f32.mrf.mxu0
      %v2400 = vadd.f32 0.0, %v2399
      %v2401 = vpop.f32.mrf.mxu0
      %2402 = vmatprep.mubr.bf16.mxu0 0
      %2403 = vmatmul.mubr.bf16.gmra.mxu0 %v2309
      %v2404 = vpop.f32.mrf.mxu0
      %v2405 = vadd.f32 0.0, %v2404
      %v2406 = vpop.f32.mrf.mxu0
      %v2407 = vpop.f32.mrf.mxu0
      %v2408 = vadd.f32 0.0, %v2407
      %v2409 = vpop.f32.mrf.mxu0
      %2410 = vmatprep.mubr.bf16.mxu0 0
      %2411 = vmatmul.mubr.bf16.gmra.mxu0 %v2312
      %v2412 = vpop.f32.mrf.mxu0
      %v2413 = vadd.f32 0.0, %v2412
      %v2414 = vpop.f32.mrf.mxu0
      %v2415 = vpop.f32.mrf.mxu0
      %v2416 = vadd.f32 0.0, %v2415
      %v2417 = vpop.f32.mrf.mxu0
      %2418 = vmatprep.mubr.bf16.mxu0 0
      %2419 = vmatmul.mubr.bf16.gmra.mxu0 %v2315
      %v2420 = vpop.f32.mrf.mxu0
      %v2421 = vadd.f32 0.0, %v2420
      %v2422 = vpop.f32.mrf.mxu0
      %v2423 = vpop.f32.mrf.mxu0
      %v2424 = vadd.f32 0.0, %v2423
      %v2425 = vpop.f32.mrf.mxu0
      %2426 = vmatprep.mubr.bf16.mxu0 0
      %2427 = vmatmul.mubr.bf16.gmra.mxu0 %v2318
      %v2428 = vpop.f32.mrf.mxu0
      %v2429 = vadd.f32 0.0, %v2428
      %v2430 = vpop.f32.mrf.mxu0
      %v2431 = vpop.f32.mrf.mxu0
      %v2432 = vadd.f32 0.0, %v2431
      %v2433 = vpop.f32.mrf.mxu0
      %2434 = vmatprep.mubr.bf16.mxu0 0
      %2435 = vmatmul.mubr.bf16.gmra.mxu0 %v2321
      %v2436 = vpop.f32.mrf.mxu0
      %v2437 = vadd.f32 0.0, %v2436
      %v2438 = vpop.f32.mrf.mxu0
      %v2439 = vpop.f32.mrf.mxu0
      %v2440 = vadd.f32 0.0, %v2439
      %v2441 = vpop.f32.mrf.mxu0
      %2442 = vmatprep.mubr.bf16.mxu0 0
      %2443 = vmatmul.mubr.bf16.gmra.mxu0 %v2324
      %v2444 = vpop.f32.mrf.mxu0
      %v2445 = vadd.f32 0.0, %v2444
      %v2446 = vpop.f32.mrf.mxu0
      %v2447 = vpop.f32.mrf.mxu0
      %v2448 = vadd.f32 0.0, %v2447
      %v2449 = vpop.f32.mrf.mxu0
      %2450 = vmatprep.mubr.bf16.mxu0 0
      %2451 = vmatmul.mubr.bf16.gmra.mxu0 %v2327
      %v2452 = vpop.f32.mrf.mxu0
      %v2453 = vadd.f32 0.0, %v2452
      %v2454 = vpop.f32.mrf.mxu0
      %v2455 = vpop.f32.mrf.mxu0
      %v2456 = vadd.f32 0.0, %v2455
      %v2457 = vpop.f32.mrf.mxu0
      %2458 = vmatprep.mubr.bf16.mxu0 0
      %2459 = vmatmul.mubr.bf16.gmra.mxu0 %v2330
      %v2460 = vpop.f32.mrf.mxu0
      %v2461 = vadd.f32 0.0, %v2460
      %v2462 = vpop.f32.mrf.mxu0
      %v2463 = vpop.f32.mrf.mxu0
      %v2464 = vadd.f32 0.0, %v2463
      %v2465 = vpop.f32.mrf.mxu0
      %2466 = vmatprep.mubr.bf16.mxu0 0
      %2467 = vmatmul.mubr.bf16.gmra.mxu0 %v2333
      %v2468 = vpop.f32.mrf.mxu0
      %v2469 = vadd.f32 0.0, %v2468
      %v2470 = vpop.f32.mrf.mxu0
      %v2471 = vpop.f32.mrf.mxu0
      %v2472 = vadd.f32 0.0, %v2471
      %v2473 = vpop.f32.mrf.mxu0
      %2474 = vmatprep.mubr.bf16.mxu0 0
      %2475 = vmatmul.mubr.bf16.gmra.mxu0 %v2336
      %v2476 = vpop.f32.mrf.mxu0
      %v2477 = vadd.f32 0.0, %v2476
      %v2478 = vpop.f32.mrf.mxu0
      %v2479 = vpop.f32.mrf.mxu0
      %v2480 = vadd.f32 0.0, %v2479
      %v2481 = vpop.f32.mrf.mxu0
      %2482 = vmatprep.mubr.bf16.mxu0 0
      %2483 = vmatmul.mubr.bf16.gmra.mxu0 %v2339
      %v2484 = vpop.f32.mrf.mxu0
      %v2485 = vadd.f32 0.0, %v2484
      %v2486 = vpop.f32.mrf.mxu0
      %v2487 = vpop.f32.mrf.mxu0
      %v2488 = vadd.f32 0.0, %v2487
      %v2489 = vpop.f32.mrf.mxu0
      %2490 = vmatprep.mubr.bf16.mxu0 0
      %2491 = vmatmul.mubr.bf16.gmra.mxu0 %v2342
      %v2492 = vpop.f32.mrf.mxu0
      %v2493 = vadd.f32 0.0, %v2492
      %v2494 = vpop.f32.mrf.mxu0
      %v2495 = vpop.f32.mrf.mxu0
      %v2496 = vadd.f32 0.0, %v2495
      %v2497 = vpop.f32.mrf.mxu0
      %2498 = vmatprep.mubr.bf16.mxu0 0
      %2499 = vmatmul.mubr.bf16.gmra.mxu0 %v2345
      %v2500 = vpop.f32.mrf.mxu0
      %v2501 = vadd.f32 0.0, %v2500
      %v2502 = vpop.f32.mrf.mxu0
      %v2503 = vpop.f32.mrf.mxu0
      %v2504 = vadd.f32 0.0, %v2503
      %v2505 = vpop.f32.mrf.mxu0
      %2506 = vmatprep.mubr.bf16.mxu0 0
      %2507 = vmatmul.mubr.bf16.gmra.mxu0 %v2348
      %v2508 = vpop.f32.mrf.mxu0
      %v2509 = vadd.f32 0.0, %v2508
      %v2510 = vpop.f32.mrf.mxu0
      %v2511 = vpop.f32.mrf.mxu0
      %v2512 = vadd.f32 0.0, %v2511
      %v2513 = vpop.f32.mrf.mxu0
      %2514 = vdwg.mxu0
      %v2547 = vunpack.c.l.b16 %v2146
      %v2548 = vunpack.c.l.b16 %v2147
      %v2549 = vunpack.c.l.b16 %v2148
      %v2550 = vunpack.c.l.b16 %v2149
      %v2551 = vunpack.c.l.b16 %v2150
      %v2552 = vunpack.c.l.b16 %v2151
      %v2553 = vunpack.c.l.b16 %v2152
      %v2554 = vunpack.c.l.b16 %v2153
      %v2555 = vunpack.c.l.b16 %v2154
      %v2556 = vunpack.c.l.b16 %v2155
      %v2557 = vunpack.c.l.b16 %v2156
      %v2558 = vunpack.c.l.b16 %v2157
      %v2559 = vunpack.c.l.b16 %v2158
      %v2560 = vunpack.c.l.b16 %v2159
      %v2561 = vunpack.c.l.b16 %v2160
      %v2562 = vunpack.c.l.b16 %v2161
      %v2563 = vunpack.c.l.b16 %v2162
      %v2564 = vunpack.c.l.b16 %v2163
      %v2565 = vunpack.c.l.b16 %v2164
      %v2566 = vunpack.c.l.b16 %v2165
      %v2567 = vunpack.c.l.b16 %v2166
      %v2568 = vunpack.c.l.b16 %v2167
      %v2569 = vunpack.c.l.b16 %v2168
      %v2570 = vunpack.c.l.b16 %v2169
      %v2571 = vunpack.c.l.b16 %v2170
      %v2572 = vunpack.c.l.b16 %v2171
      %v2573 = vunpack.c.l.b16 %v2172
      %v2574 = vunpack.c.l.b16 %v2173
      %v2575 = vunpack.c.l.b16 %v2174
      %v2576 = vunpack.c.l.b16 %v2175
      %v2577 = vunpack.c.l.b16 %v2176
      %v2578 = vunpack.c.l.b16 %v2177
      %v2579 = vpack.c.b16 %v2548, %v2547
      %v2580 = vpack.c.b16 %v2550, %v2549
      %v2581 = vpack.c.b16 %v2552, %v2551
      %v2582 = vpack.c.b16 %v2554, %v2553
      %v2583 = vpack.c.b16 %v2556, %v2555
      %v2584 = vpack.c.b16 %v2558, %v2557
      %v2585 = vpack.c.b16 %v2560, %v2559
      %v2586 = vpack.c.b16 %v2562, %v2561
      %v2587 = vpack.c.b16 %v2564, %v2563
      %v2588 = vpack.c.b16 %v2566, %v2565
      %v2589 = vpack.c.b16 %v2568, %v2567
      %v2590 = vpack.c.b16 %v2570, %v2569
      %v2591 = vpack.c.b16 %v2572, %v2571
      %v2592 = vpack.c.b16 %v2574, %v2573
      %v2593 = vpack.c.b16 %v2576, %v2575
      %v2594 = vpack.c.b16 %v2578, %v2577
      %v2597 = vunpack.c.l.b16 %v2178
      %v2598 = vunpack.c.l.b16 %v2179
      %v2599 = vpack.c.b16 %v2598, %v2597
      %v2601 = vsel %vm2301, %v2579, 0
      %v2604 = vsel %vm2301, %v2580, 0
      %v2607 = vsel %vm2301, %v2581, 0
      %v2610 = vsel %vm2301, %v2582, 0
      %v2613 = vsel %vm2301, %v2583, 0
      %v2616 = vsel %vm2301, %v2584, 0
      %v2619 = vsel %vm2301, %v2585, 0
      %v2622 = vsel %vm2301, %v2586, 0
      %v2625 = vsel %vm2301, %v2587, 0
      %v2628 = vsel %vm2301, %v2588, 0
      %v2631 = vsel %vm2301, %v2589, 0
      %v2634 = vsel %vm2301, %v2590, 0
      %v2637 = vsel %vm2301, %v2591, 0
      %v2640 = vsel %vm2301, %v2592, 0
      %v2643 = vsel %vm2301, %v2593, 0
      %v2646 = vsel %vm2301, %v2594, 0
      %v2649 = vsel %vm2350, %v2599, 0
      %2651 = vmatprep.subr.bf16.mxu0 0
      %2652 = vmatpush1.bf16.msra.mxu0 0
      %2653 = vmatprep.subr.bf16.mxu0 0
      %2654 = vmatpush1.bf16.msra.mxu0 0
      %2655 = vmatprep.subr.bf16.mxu0 0
      %2656 = vmatpush1.bf16.msra.mxu0 0
      %2657 = vmatprep.subr.bf16.mxu0 0
      %2658 = vmatpush1.bf16.msra.mxu0 0
      %2659 = vmatprep.subr.bf16.mxu0 0
      %2660 = vmatpush1.bf16.msra.mxu0 0
      %2661 = vmatprep.subr.bf16.mxu0 0
      %2662 = vmatpush1.bf16.msra.mxu0 0
      %2663 = vmatprep.subr.bf16.mxu0 0
      %2664 = vmatpush1.bf16.msra.mxu0 0
      %2665 = vmatprep.subr.bf16.mxu0 0
      %2666 = vmatpush1.bf16.msra.mxu0 %v2649
      %2667 = vmatprep.subr.bf16.mxu0 0
      %2668 = vmatpush2.bf16.msra.mxu0 0
      %2669 = vmatprep.subr.bf16.mxu0 0
      %2670 = vmatpush2.bf16.msra.mxu0 0
      %2671 = vmatprep.subr.bf16.mxu0 0
      %2672 = vmatpush2.bf16.msra.mxu0 0
      %2673 = vmatprep.subr.bf16.mxu0 0
      %2674 = vmatpush2.bf16.msra.mxu0 0
      %2675 = vmatprep.subr.bf16.mxu0 0
      %2676 = vmatpush2.bf16.msra.mxu0 0
      %2677 = vmatprep.subr.bf16.mxu0 0
      %2678 = vmatpush2.bf16.msra.mxu0 0
      %2679 = vmatprep.subr.bf16.mxu0 0
      %2680 = vmatpush2.bf16.msra.mxu0 0
      %2681 = vmatprep.subr.bf16.mxu0 0
      %2682 = vmatpush2.bf16.msra.mxu0 0
      %2683 = vmatprep.mubr.bf16.mxu0 0
      %2684 = vmatmul.mubr.bf16.gmra.mxu0 %v2601
      %v2685 = vpop.f32.mrf.mxu0
      %v2686 = vadd.f32 %v2389, %v2685
      %v2687 = vpop.f32.mrf.mxu0
      %v2688 = vpop.f32.mrf.mxu0
      %v2689 = vadd.f32 %v2392, %v2688
      %v2690 = vpop.f32.mrf.mxu0
      %2691 = vmatprep.mubr.bf16.mxu0 0
      %2692 = vmatmul.mubr.bf16.gmra.mxu0 %v2604
      %v2693 = vpop.f32.mrf.mxu0
      %v2694 = vadd.f32 %v2397, %v2693
      %v2695 = vpop.f32.mrf.mxu0
      %v2696 = vpop.f32.mrf.mxu0
      %v2697 = vadd.f32 %v2400, %v2696
      %v2698 = vpop.f32.mrf.mxu0
      %2699 = vmatprep.mubr.bf16.mxu0 0
      %2700 = vmatmul.mubr.bf16.gmra.mxu0 %v2607
      %v2701 = vpop.f32.mrf.mxu0
      %v2702 = vadd.f32 %v2405, %v2701
      %v2703 = vpop.f32.mrf.mxu0
      %v2704 = vpop.f32.mrf.mxu0
      %v2705 = vadd.f32 %v2408, %v2704
      %v2706 = vpop.f32.mrf.mxu0
      %2707 = vmatprep.mubr.bf16.mxu0 0
      %2708 = vmatmul.mubr.bf16.gmra.mxu0 %v2610
      %v2709 = vpop.f32.mrf.mxu0
      %v2710 = vadd.f32 %v2413, %v2709
      %v2711 = vpop.f32.mrf.mxu0
      %v2712 = vpop.f32.mrf.mxu0
      %v2713 = vadd.f32 %v2416, %v2712
      %v2714 = vpop.f32.mrf.mxu0
      %2715 = vmatprep.mubr.bf16.mxu0 0
      %2716 = vmatmul.mubr.bf16.gmra.mxu0 %v2613
      %v2717 = vpop.f32.mrf.mxu0
      %v2718 = vadd.f32 %v2421, %v2717
      %v2719 = vpop.f32.mrf.mxu0
      %v2720 = vpop.f32.mrf.mxu0
      %v2721 = vadd.f32 %v2424, %v2720
      %v2722 = vpop.f32.mrf.mxu0
      %2723 = vmatprep.mubr.bf16.mxu0 0
      %2724 = vmatmul.mubr.bf16.gmra.mxu0 %v2616
      %v2725 = vpop.f32.mrf.mxu0
      %v2726 = vadd.f32 %v2429, %v2725
      %v2727 = vpop.f32.mrf.mxu0
      %v2728 = vpop.f32.mrf.mxu0
      %v2729 = vadd.f32 %v2432, %v2728
      %v2730 = vpop.f32.mrf.mxu0
      %2731 = vmatprep.mubr.bf16.mxu0 0
      %2732 = vmatmul.mubr.bf16.gmra.mxu0 %v2619
      %v2733 = vpop.f32.mrf.mxu0
      %v2734 = vadd.f32 %v2437, %v2733
      %v2735 = vpop.f32.mrf.mxu0
      %v2736 = vpop.f32.mrf.mxu0
      %v2737 = vadd.f32 %v2440, %v2736
      %v2738 = vpop.f32.mrf.mxu0
      %2739 = vmatprep.mubr.bf16.mxu0 0
      %2740 = vmatmul.mubr.bf16.gmra.mxu0 %v2622
      %v2741 = vpop.f32.mrf.mxu0
      %v2742 = vadd.f32 %v2445, %v2741
      %v2743 = vpop.f32.mrf.mxu0
      %v2744 = vpop.f32.mrf.mxu0
      %v2745 = vadd.f32 %v2448, %v2744
      %v2746 = vpop.f32.mrf.mxu0
      %2747 = vmatprep.mubr.bf16.mxu0 0
      %2748 = vmatmul.mubr.bf16.gmra.mxu0 %v2625
      %v2749 = vpop.f32.mrf.mxu0
      %v2750 = vadd.f32 %v2453, %v2749
      %v2751 = vpop.f32.mrf.mxu0
      %v2752 = vpop.f32.mrf.mxu0
      %v2753 = vadd.f32 %v2456, %v2752
      %v2754 = vpop.f32.mrf.mxu0
      %2755 = vmatprep.mubr.bf16.mxu0 0
      %2756 = vmatmul.mubr.bf16.gmra.mxu0 %v2628
      %v2757 = vpop.f32.mrf.mxu0
      %v2758 = vadd.f32 %v2461, %v2757
      %v2759 = vpop.f32.mrf.mxu0
      %v2760 = vpop.f32.mrf.mxu0
      %v2761 = vadd.f32 %v2464, %v2760
      %v2762 = vpop.f32.mrf.mxu0
      %2763 = vmatprep.mubr.bf16.mxu0 0
      %2764 = vmatmul.mubr.bf16.gmra.mxu0 %v2631
      %v2765 = vpop.f32.mrf.mxu0
      %v2766 = vadd.f32 %v2469, %v2765
      %v2767 = vpop.f32.mrf.mxu0
      %v2768 = vpop.f32.mrf.mxu0
      %v2769 = vadd.f32 %v2472, %v2768
      %v2770 = vpop.f32.mrf.mxu0
      %2771 = vmatprep.mubr.bf16.mxu0 0
      %2772 = vmatmul.mubr.bf16.gmra.mxu0 %v2634
      %v2773 = vpop.f32.mrf.mxu0
      %v2774 = vadd.f32 %v2477, %v2773
      %v2775 = vpop.f32.mrf.mxu0
      %v2776 = vpop.f32.mrf.mxu0
      %v2777 = vadd.f32 %v2480, %v2776
      %v2778 = vpop.f32.mrf.mxu0
      %2779 = vmatprep.mubr.bf16.mxu0 0
      %2780 = vmatmul.mubr.bf16.gmra.mxu0 %v2637
      %v2781 = vpop.f32.mrf.mxu0
      %v2782 = vadd.f32 %v2485, %v2781
      %v2783 = vpop.f32.mrf.mxu0
      %v2784 = vpop.f32.mrf.mxu0
      %v2785 = vadd.f32 %v2488, %v2784
      %v2786 = vpop.f32.mrf.mxu0
      %2787 = vmatprep.mubr.bf16.mxu0 0
      %2788 = vmatmul.mubr.bf16.gmra.mxu0 %v2640
      %v2789 = vpop.f32.mrf.mxu0
      %v2790 = vadd.f32 %v2493, %v2789
      %v2791 = vpop.f32.mrf.mxu0
      %v2792 = vpop.f32.mrf.mxu0
      %v2793 = vadd.f32 %v2496, %v2792
      %v2794 = vpop.f32.mrf.mxu0
      %2795 = vmatprep.mubr.bf16.mxu0 0
      %2796 = vmatmul.mubr.bf16.gmra.mxu0 %v2643
      %v2797 = vpop.f32.mrf.mxu0
      %v2798 = vadd.f32 %v2501, %v2797
      %v2799 = vpop.f32.mrf.mxu0
      %v2800 = vpop.f32.mrf.mxu0
      %v2801 = vadd.f32 %v2504, %v2800
      %v2802 = vpop.f32.mrf.mxu0
      %2803 = vmatprep.mubr.bf16.mxu0 0
      %2804 = vmatmul.mubr.bf16.gmra.mxu0 %v2646
      %v2805 = vpop.f32.mrf.mxu0
      %v2806 = vadd.f32 %v2509, %v2805
      %v2807 = vpop.f32.mrf.mxu0
      %v2808 = vpop.f32.mrf.mxu0
      %v2809 = vadd.f32 %v2512, %v2808
      %v2810 = vpop.f32.mrf.mxu0
      %2811 = vdwg.mxu0
      %s2812 = scalar_lea.vmem [#allocation3], 16
      %v2813 = vld [vmem:[%s2812] sm:$0xf]
      %v2814 = vld [vmem:[%s2812 + $0x4] sm:$0xf]
      %v2815 = vld [vmem:[%s2812 + $0x8] sm:$0xf]
      %v2816 = vld [vmem:[%s2812 + $0xc] sm:$0xf]
      %v2817 = vld [vmem:[%s2812 + $0x10] sm:$0xf]
      %v2818 = vld [vmem:[%s2812 + $0x14] sm:$0xf]
      %v2819 = vld [vmem:[%s2812 + $0x18] sm:$0xf]
      %v2820 = vld [vmem:[%s2812 + $0x1c] sm:$0xf]
      %v2821 = vld [vmem:[%s2812 + $0x20] sm:$0xf]
      %v2822 = vld [vmem:[%s2812 + $0x24] sm:$0xf]
      %v2823 = vld [vmem:[%s2812 + $0x28] sm:$0xf]
      %v2824 = vld [vmem:[%s2812 + $0x2c] sm:$0xf]
      %v2825 = vld [vmem:[%s2812 + $0x30] sm:$0xf]
      %v2826 = vld [vmem:[%s2812 + $0x34] sm:$0xf]
      %v2827 = vld [vmem:[%s2812 + $0x38] sm:$0xf]
      %v2828 = vld [vmem:[%s2812 + $0x3c] sm:$0xf]
      %v2829 = vld [vmem:[%s2812 + $0x40] sm:$0xf]
      %v2830 = vld [vmem:[%s2812 + $0x44] sm:$0xf]
      %v2831 = vld [vmem:[%s2812 + $0x48] sm:$0xf]
      %v2832 = vld [vmem:[%s2812 + $0x4c] sm:$0xf]
      %v2833 = vld [vmem:[%s2812 + $0x50] sm:$0xf]
      %v2834 = vld [vmem:[%s2812 + $0x54] sm:$0xf]
      %v2835 = vld [vmem:[%s2812 + $0x58] sm:$0xf]
      %v2836 = vld [vmem:[%s2812 + $0x5c] sm:$0xf]
      %v2837 = vld [vmem:[%s2812 + $0x60] sm:$0xf]
      %v2838 = vld [vmem:[%s2812 + $0x64] sm:$0xf]
      %v2839 = vld [vmem:[%s2812 + $0x68] sm:$0xf]
      %v2840 = vld [vmem:[%s2812 + $0x6c] sm:$0xf]
      %v2841 = vld [vmem:[%s2812 + $0x70] sm:$0xf]
      %v2842 = vld [vmem:[%s2812 + $0x74] sm:$0xf]
      %v2843 = vld [vmem:[%s2812 + $0x78] sm:$0xf]
      %v2844 = vld [vmem:[%s2812 + $0x7c] sm:$0xf]
      %v2845 = vld [vmem:[%s1 + $0xc] sm:$0xf]
      %v2846 = vld [vmem:[%s1 + $0x10] sm:$0x3]
      %v2879 = vunpack.c.l.b16 %v2813
      %v2880 = vunpack.c.l.b16 %v2814
      %v2881 = vunpack.c.l.b16 %v2815
      %v2882 = vunpack.c.l.b16 %v2816
      %v2883 = vunpack.c.l.b16 %v2817
      %v2884 = vunpack.c.l.b16 %v2818
      %v2885 = vunpack.c.l.b16 %v2819
      %v2886 = vunpack.c.l.b16 %v2820
      %v2887 = vunpack.c.l.b16 %v2821
      %v2888 = vunpack.c.l.b16 %v2822
      %v2889 = vunpack.c.l.b16 %v2823
      %v2890 = vunpack.c.l.b16 %v2824
      %v2891 = vunpack.c.l.b16 %v2825
      %v2892 = vunpack.c.l.b16 %v2826
      %v2893 = vunpack.c.l.b16 %v2827
      %v2894 = vunpack.c.l.b16 %v2828
      %v2895 = vunpack.c.l.b16 %v2829
      %v2896 = vunpack.c.l.b16 %v2830
      %v2897 = vunpack.c.l.b16 %v2831
      %v2898 = vunpack.c.l.b16 %v2832
      %v2899 = vunpack.c.l.b16 %v2833
      %v2900 = vunpack.c.l.b16 %v2834
      %v2901 = vunpack.c.l.b16 %v2835
      %v2902 = vunpack.c.l.b16 %v2836
      %v2903 = vunpack.c.l.b16 %v2837
      %v2904 = vunpack.c.l.b16 %v2838
      %v2905 = vunpack.c.l.b16 %v2839
      %v2906 = vunpack.c.l.b16 %v2840
      %v2907 = vunpack.c.l.b16 %v2841
      %v2908 = vunpack.c.l.b16 %v2842
      %v2909 = vunpack.c.l.b16 %v2843
      %v2910 = vunpack.c.l.b16 %v2844
      %v2911 = vpack.c.b16 %v2880, %v2879
      %v2912 = vpack.c.b16 %v2882, %v2881
      %v2913 = vpack.c.b16 %v2884, %v2883
      %v2914 = vpack.c.b16 %v2886, %v2885
      %v2915 = vpack.c.b16 %v2888, %v2887
      %v2916 = vpack.c.b16 %v2890, %v2889
      %v2917 = vpack.c.b16 %v2892, %v2891
      %v2918 = vpack.c.b16 %v2894, %v2893
      %v2919 = vpack.c.b16 %v2896, %v2895
      %v2920 = vpack.c.b16 %v2898, %v2897
      %v2921 = vpack.c.b16 %v2900, %v2899
      %v2922 = vpack.c.b16 %v2902, %v2901
      %v2923 = vpack.c.b16 %v2904, %v2903
      %v2924 = vpack.c.b16 %v2906, %v2905
      %v2925 = vpack.c.b16 %v2908, %v2907
      %v2926 = vpack.c.b16 %v2910, %v2909
      %v2929 = vunpack.c.l.b16 %v2845
      %v2930 = vunpack.c.l.b16 %v2846
      %v2931 = vpack.c.b16 %v2930, %v2929
      %v2933 = vsel %vm2301, %v2911, 0
      %v2936 = vsel %vm2301, %v2912, 0
      %v2939 = vsel %vm2301, %v2913, 0
      %v2942 = vsel %vm2301, %v2914, 0
      %v2945 = vsel %vm2301, %v2915, 0
      %v2948 = vsel %vm2301, %v2916, 0
      %v2951 = vsel %vm2301, %v2917, 0
      %v2954 = vsel %vm2301, %v2918, 0
      %v2957 = vsel %vm2301, %v2919, 0
      %v2960 = vsel %vm2301, %v2920, 0
      %v2963 = vsel %vm2301, %v2921, 0
      %v2966 = vsel %vm2301, %v2922, 0
      %v2969 = vsel %vm2301, %v2923, 0
      %v2972 = vsel %vm2301, %v2924, 0
      %v2975 = vsel %vm2301, %v2925, 0
      %v2978 = vsel %vm2301, %v2926, 0
      %v2981 = vsel %vm2350, %v2931, 0
      %2983 = vmatprep.subr.bf16.mxu0 0
      %2984 = vmatpush1.bf16.msra.mxu0 0
      %2985 = vmatprep.subr.bf16.mxu0 0
      %2986 = vmatpush1.bf16.msra.mxu0 0
      %2987 = vmatprep.subr.bf16.mxu0 0
      %2988 = vmatpush1.bf16.msra.mxu0 0
      %2989 = vmatprep.subr.bf16.mxu0 0
      %2990 = vmatpush1.bf16.msra.mxu0 0
      %2991 = vmatprep.subr.bf16.mxu0 0
      %2992 = vmatpush1.bf16.msra.mxu0 0
      %2993 = vmatprep.subr.bf16.mxu0 0
      %2994 = vmatpush1.bf16.msra.mxu0 0
      %2995 = vmatprep.subr.bf16.mxu0 0
      %2996 = vmatpush1.bf16.msra.mxu0 0
      %2997 = vmatprep.subr.bf16.mxu0 0
      %2998 = vmatpush1.bf16.msra.mxu0 %v2981
      %2999 = vmatprep.subr.bf16.mxu0 0
      %3000 = vmatpush2.bf16.msra.mxu0 0
      %3001 = vmatprep.subr.bf16.mxu0 0
      %3002 = vmatpush2.bf16.msra.mxu0 0
      %3003 = vmatprep.subr.bf16.mxu0 0
      %3004 = vmatpush2.bf16.msra.mxu0 0
      %3005 = vmatprep.subr.bf16.mxu0 0
      %3006 = vmatpush2.bf16.msra.mxu0 0
      %3007 = vmatprep.subr.bf16.mxu0 0
      %3008 = vmatpush2.bf16.msra.mxu0 0
      %3009 = vmatprep.subr.bf16.mxu0 0
      %3010 = vmatpush2.bf16.msra.mxu0 0
      %3011 = vmatprep.subr.bf16.mxu0 0
      %3012 = vmatpush2.bf16.msra.mxu0 0
      %3013 = vmatprep.subr.bf16.mxu0 0
      %3014 = vmatpush2.bf16.msra.mxu0 0
      %3015 = vmatprep.mubr.bf16.mxu0 0
      %3016 = vmatmul.mubr.bf16.gmra.mxu0 %v2933
      %v3017 = vpop.f32.mrf.mxu0
      %v3018 = vadd.f32 0.0, %v3017
      %v3019 = vpop.f32.mrf.mxu0
      %v3020 = vpop.f32.mrf.mxu0
      %v3021 = vadd.f32 0.0, %v3020
      %v3022 = vpop.f32.mrf.mxu0
      %3023 = vmatprep.mubr.bf16.mxu0 0
      %3024 = vmatmul.mubr.bf16.gmra.mxu0 %v2936
      %v3025 = vpop.f32.mrf.mxu0
      %v3026 = vadd.f32 0.0, %v3025
      %v3027 = vpop.f32.mrf.mxu0
      %v3028 = vpop.f32.mrf.mxu0
      %v3029 = vadd.f32 0.0, %v3028
      %v3030 = vpop.f32.mrf.mxu0
      %3031 = vmatprep.mubr.bf16.mxu0 0
      %3032 = vmatmul.mubr.bf16.gmra.mxu0 %v2939
      %v3033 = vpop.f32.mrf.mxu0
      %v3034 = vadd.f32 0.0, %v3033
      %v3035 = vpop.f32.mrf.mxu0
      %v3036 = vpop.f32.mrf.mxu0
      %v3037 = vadd.f32 0.0, %v3036
      %v3038 = vpop.f32.mrf.mxu0
      %3039 = vmatprep.mubr.bf16.mxu0 0
      %3040 = vmatmul.mubr.bf16.gmra.mxu0 %v2942
      %v3041 = vpop.f32.mrf.mxu0
      %v3042 = vadd.f32 0.0, %v3041
      %v3043 = vpop.f32.mrf.mxu0
      %v3044 = vpop.f32.mrf.mxu0
      %v3045 = vadd.f32 0.0, %v3044
      %v3046 = vpop.f32.mrf.mxu0
      %3047 = vmatprep.mubr.bf16.mxu0 0
      %3048 = vmatmul.mubr.bf16.gmra.mxu0 %v2945
      %v3049 = vpop.f32.mrf.mxu0
      %v3050 = vadd.f32 0.0, %v3049
      %v3051 = vpop.f32.mrf.mxu0
      %v3052 = vpop.f32.mrf.mxu0
      %v3053 = vadd.f32 0.0, %v3052
      %v3054 = vpop.f32.mrf.mxu0
      %3055 = vmatprep.mubr.bf16.mxu0 0
      %3056 = vmatmul.mubr.bf16.gmra.mxu0 %v2948
      %v3057 = vpop.f32.mrf.mxu0
      %v3058 = vadd.f32 0.0, %v3057
      %v3059 = vpop.f32.mrf.mxu0
      %v3060 = vpop.f32.mrf.mxu0
      %v3061 = vadd.f32 0.0, %v3060
      %v3062 = vpop.f32.mrf.mxu0
      %3063 = vmatprep.mubr.bf16.mxu0 0
      %3064 = vmatmul.mubr.bf16.gmra.mxu0 %v2951
      %v3065 = vpop.f32.mrf.mxu0
      %v3066 = vadd.f32 0.0, %v3065
      %v3067 = vpop.f32.mrf.mxu0
      %v3068 = vpop.f32.mrf.mxu0
      %v3069 = vadd.f32 0.0, %v3068
      %v3070 = vpop.f32.mrf.mxu0
      %3071 = vmatprep.mubr.bf16.mxu0 0
      %3072 = vmatmul.mubr.bf16.gmra.mxu0 %v2954
      %v3073 = vpop.f32.mrf.mxu0
      %v3074 = vadd.f32 0.0, %v3073
      %v3075 = vpop.f32.mrf.mxu0
      %v3076 = vpop.f32.mrf.mxu0
      %v3077 = vadd.f32 0.0, %v3076
      %v3078 = vpop.f32.mrf.mxu0
      %3079 = vmatprep.mubr.bf16.mxu0 0
      %3080 = vmatmul.mubr.bf16.gmra.mxu0 %v2957
      %v3081 = vpop.f32.mrf.mxu0
      %v3082 = vadd.f32 0.0, %v3081
      %v3083 = vpop.f32.mrf.mxu0
      %v3084 = vpop.f32.mrf.mxu0
      %v3085 = vadd.f32 0.0, %v3084
      %v3086 = vpop.f32.mrf.mxu0
      %3087 = vmatprep.mubr.bf16.mxu0 0
      %3088 = vmatmul.mubr.bf16.gmra.mxu0 %v2960
      %v3089 = vpop.f32.mrf.mxu0
      %v3090 = vadd.f32 0.0, %v3089
      %v3091 = vpop.f32.mrf.mxu0
      %v3092 = vpop.f32.mrf.mxu0
      %v3093 = vadd.f32 0.0, %v3092
      %v3094 = vpop.f32.mrf.mxu0
      %3095 = vmatprep.mubr.bf16.mxu0 0
      %3096 = vmatmul.mubr.bf16.gmra.mxu0 %v2963
      %v3097 = vpop.f32.mrf.mxu0
      %v3098 = vadd.f32 0.0, %v3097
      %v3099 = vpop.f32.mrf.mxu0
      %v3100 = vpop.f32.mrf.mxu0
      %v3101 = vadd.f32 0.0, %v3100
      %v3102 = vpop.f32.mrf.mxu0
      %3103 = vmatprep.mubr.bf16.mxu0 0
      %3104 = vmatmul.mubr.bf16.gmra.mxu0 %v2966
      %v3105 = vpop.f32.mrf.mxu0
      %v3106 = vadd.f32 0.0, %v3105
      %v3107 = vpop.f32.mrf.mxu0
      %v3108 = vpop.f32.mrf.mxu0
      %v3109 = vadd.f32 0.0, %v3108
      %v3110 = vpop.f32.mrf.mxu0
      %3111 = vmatprep.mubr.bf16.mxu0 0
      %3112 = vmatmul.mubr.bf16.gmra.mxu0 %v2969
      %v3113 = vpop.f32.mrf.mxu0
      %v3114 = vadd.f32 0.0, %v3113
      %v3115 = vpop.f32.mrf.mxu0
      %v3116 = vpop.f32.mrf.mxu0
      %v3117 = vadd.f32 0.0, %v3116
      %v3118 = vpop.f32.mrf.mxu0
      %3119 = vmatprep.mubr.bf16.mxu0 0
      %3120 = vmatmul.mubr.bf16.gmra.mxu0 %v2972
      %v3121 = vpop.f32.mrf.mxu0
      %v3122 = vadd.f32 0.0, %v3121
      %v3123 = vpop.f32.mrf.mxu0
      %v3124 = vpop.f32.mrf.mxu0
      %v3125 = vadd.f32 0.0, %v3124
      %v3126 = vpop.f32.mrf.mxu0
      %3127 = vmatprep.mubr.bf16.mxu0 0
      %3128 = vmatmul.mubr.bf16.gmra.mxu0 %v2975
      %v3129 = vpop.f32.mrf.mxu0
      %v3130 = vadd.f32 0.0, %v3129
      %v3131 = vpop.f32.mrf.mxu0
      %v3132 = vpop.f32.mrf.mxu0
      %v3133 = vadd.f32 0.0, %v3132
      %v3134 = vpop.f32.mrf.mxu0
      %3135 = vmatprep.mubr.bf16.mxu0 0
      %3136 = vmatmul.mubr.bf16.gmra.mxu0 %v2978
      %v3137 = vpop.f32.mrf.mxu0
      %v3138 = vadd.f32 0.0, %v3137
      %v3139 = vpop.f32.mrf.mxu0
      %v3140 = vpop.f32.mrf.mxu0
      %v3141 = vadd.f32 0.0, %v3140
      %v3142 = vpop.f32.mrf.mxu0
      %3143 = vdwg.mxu0
      %v3144 = vadd.f32 %v2686, %v3018
      %v3145 = vadd.f32 %v2689, %v3021
      %v3146 = vadd.f32 %v2694, %v3026
      %v3147 = vadd.f32 %v2697, %v3029
      %v3148 = vadd.f32 %v2702, %v3034
      %v3149 = vadd.f32 %v2705, %v3037
      %v3150 = vadd.f32 %v2710, %v3042
      %v3151 = vadd.f32 %v2713, %v3045
      %v3152 = vadd.f32 %v2718, %v3050
      %v3153 = vadd.f32 %v2721, %v3053
      %v3154 = vadd.f32 %v2726, %v3058
      %v3155 = vadd.f32 %v2729, %v3061
      %v3156 = vadd.f32 %v2734, %v3066
      %v3157 = vadd.f32 %v2737, %v3069
      %v3158 = vadd.f32 %v2742, %v3074
      %v3159 = vadd.f32 %v2745, %v3077
      %v3160 = vadd.f32 %v2750, %v3082
      %v3161 = vadd.f32 %v2753, %v3085
      %v3162 = vadd.f32 %v2758, %v3090
      %v3163 = vadd.f32 %v2761, %v3093
      %v3164 = vadd.f32 %v2766, %v3098
      %v3165 = vadd.f32 %v2769, %v3101
      %v3166 = vadd.f32 %v2774, %v3106
      %v3167 = vadd.f32 %v2777, %v3109
      %v3168 = vadd.f32 %v2782, %v3114
      %v3169 = vadd.f32 %v2785, %v3117
      %v3170 = vadd.f32 %v2790, %v3122
      %v3171 = vadd.f32 %v2793, %v3125
      %v3172 = vadd.f32 %v2798, %v3130
      %v3173 = vadd.f32 %v2801, %v3133
      %v3174 = vadd.f32 %v2806, %v3138
      %v3175 = vadd.f32 %v2809, %v3141
      %v3176 = vld [vmem:[%s2] sm:$0x1]
      %v3177 = vlaneseq
      %v3178 = vshrl.u32 %v3177, 7
      %v3179 = vsub.s32 0, %v3178
      %v3180 = vrot.slane %v3176, %v3179
      %v3181 = vadd.f32 %v3144, %v3180
      %v3182 = vadd.f32 %v3145, %v3180
      %v3183 = vadd.f32 %v3146, %v3180
      %v3184 = vadd.f32 %v3147, %v3180
      %v3185 = vadd.f32 %v3148, %v3180
      %v3186 = vadd.f32 %v3149, %v3180
      %v3187 = vadd.f32 %v3150, %v3180
      %v3188 = vadd.f32 %v3151, %v3180
      %v3189 = vadd.f32 %v3152, %v3180
      %v3190 = vadd.f32 %v3153, %v3180
      %v3191 = vadd.f32 %v3154, %v3180
      %v3192 = vadd.f32 %v3155, %v3180
      %v3193 = vadd.f32 %v3156, %v3180
      %v3194 = vadd.f32 %v3157, %v3180
      %v3195 = vadd.f32 %v3158, %v3180
      %v3196 = vadd.f32 %v3159, %v3180
      %v3197 = vadd.f32 %v3160, %v3180
      %v3198 = vadd.f32 %v3161, %v3180
      %v3199 = vadd.f32 %v3162, %v3180
      %v3200 = vadd.f32 %v3163, %v3180
      %v3201 = vadd.f32 %v3164, %v3180
      %v3202 = vadd.f32 %v3165, %v3180
      %v3203 = vadd.f32 %v3166, %v3180
      %v3204 = vadd.f32 %v3167, %v3180
      %v3205 = vadd.f32 %v3168, %v3180
      %v3206 = vadd.f32 %v3169, %v3180
      %v3207 = vadd.f32 %v3170, %v3180
      %v3208 = vadd.f32 %v3171, %v3180
      %v3209 = vadd.f32 %v3172, %v3180
      %v3210 = vadd.f32 %v3173, %v3180
      %v3211 = vadd.f32 %v3174, %v3180
      %v3212 = vadd.f32 %v3175, %v3180
      %v3213 = vxor.u32 %v3181, 2147483648
      %v3214 = vxor.u32 %v3182, 2147483648
      %v3215 = vxor.u32 %v3183, 2147483648
      %v3216 = vxor.u32 %v3184, 2147483648
      %v3217 = vxor.u32 %v3185, 2147483648
      %v3218 = vxor.u32 %v3186, 2147483648
      %v3219 = vxor.u32 %v3187, 2147483648
      %v3220 = vxor.u32 %v3188, 2147483648
      %v3221 = vxor.u32 %v3189, 2147483648
      %v3222 = vxor.u32 %v3190, 2147483648
      %v3223 = vxor.u32 %v3191, 2147483648
      %v3224 = vxor.u32 %v3192, 2147483648
      %v3225 = vxor.u32 %v3193, 2147483648
      %v3226 = vxor.u32 %v3194, 2147483648
      %v3227 = vxor.u32 %v3195, 2147483648
      %v3228 = vxor.u32 %v3196, 2147483648
      %v3229 = vxor.u32 %v3197, 2147483648
      %v3230 = vxor.u32 %v3198, 2147483648
      %v3231 = vxor.u32 %v3199, 2147483648
      %v3232 = vxor.u32 %v3200, 2147483648
      %v3233 = vxor.u32 %v3201, 2147483648
      %v3234 = vxor.u32 %v3202, 2147483648
      %v3235 = vxor.u32 %v3203, 2147483648
      %v3236 = vxor.u32 %v3204, 2147483648
      %v3237 = vxor.u32 %v3205, 2147483648
      %v3238 = vxor.u32 %v3206, 2147483648
      %v3239 = vxor.u32 %v3207, 2147483648
      %v3240 = vxor.u32 %v3208, 2147483648
      %v3241 = vxor.u32 %v3209, 2147483648
      %v3242 = vxor.u32 %v3210, 2147483648
      %v3243 = vxor.u32 %v3211, 2147483648
      %v3244 = vxor.u32 %v3212, 2147483648
      %v3245 = vmul.f32 %v3213, 1.442695
      %v3246 = vpow.pop %v3245
      %v3247 = vmul.f32 %v3214, 1.442695
      %v3248 = vpow.pop %v3247
      %v3249 = vmul.f32 %v3215, 1.442695
      %v3250 = vpow.pop %v3249
      %v3251 = vmul.f32 %v3216, 1.442695
      %v3252 = vpow.pop %v3251
      %v3253 = vmul.f32 %v3217, 1.442695
      %v3254 = vpow.pop %v3253
      %v3255 = vmul.f32 %v3218, 1.442695
      %v3256 = vpow.pop %v3255
      %v3257 = vmul.f32 %v3219, 1.442695
      %v3258 = vpow.pop %v3257
      %v3259 = vmul.f32 %v3220, 1.442695
      %v3260 = vpow.pop %v3259
      %v3261 = vmul.f32 %v3221, 1.442695
      %v3262 = vpow.pop %v3261
      %v3263 = vmul.f32 %v3222, 1.442695
      %v3264 = vpow.pop %v3263
      %v3265 = vmul.f32 %v3223, 1.442695
      %v3266 = vpow.pop %v3265
      %v3267 = vmul.f32 %v3224, 1.442695
      %v3268 = vpow.pop %v3267
      %v3269 = vmul.f32 %v3225, 1.442695
      %v3270 = vpow.pop %v3269
      %v3271 = vmul.f32 %v3226, 1.442695
      %v3272 = vpow.pop %v3271
      %v3273 = vmul.f32 %v3227, 1.442695
      %v3274 = vpow.pop %v3273
      %v3275 = vmul.f32 %v3228, 1.442695
      %v3276 = vpow.pop %v3275
      %v3277 = vmul.f32 %v3229, 1.442695
      %v3278 = vpow.pop %v3277
      %v3279 = vmul.f32 %v3230, 1.442695
      %v3280 = vpow.pop %v3279
      %v3281 = vmul.f32 %v3231, 1.442695
      %v3282 = vpow.pop %v3281
      %v3283 = vmul.f32 %v3232, 1.442695
      %v3284 = vpow.pop %v3283
      %v3285 = vmul.f32 %v3233, 1.442695
      %v3286 = vpow.pop %v3285
      %v3287 = vmul.f32 %v3234, 1.442695
      %v3288 = vpow.pop %v3287
      %v3289 = vmul.f32 %v3235, 1.442695
      %v3290 = vpow.pop %v3289
      %v3291 = vmul.f32 %v3236, 1.442695
      %v3292 = vpow.pop %v3291
      %v3293 = vmul.f32 %v3237, 1.442695
      %v3294 = vpow.pop %v3293
      %v3295 = vmul.f32 %v3238, 1.442695
      %v3296 = vpow.pop %v3295
      %v3297 = vmul.f32 %v3239, 1.442695
      %v3298 = vpow.pop %v3297
      %v3299 = vmul.f32 %v3240, 1.442695
      %v3300 = vpow.pop %v3299
      %v3301 = vmul.f32 %v3241, 1.442695
      %v3302 = vpow.pop %v3301
      %v3303 = vmul.f32 %v3242, 1.442695
      %v3304 = vpow.pop %v3303
      %v3305 = vmul.f32 %v3243, 1.442695
      %v3306 = vpow.pop %v3305
      %v3307 = vmul.f32 %v3244, 1.442695
      %v3308 = vpow.pop %v3307
      %v3309 = vadd.f32 %v3246, 1.0
      %v3310 = vadd.f32 %v3248, 1.0
      %v3311 = vadd.f32 %v3250, 1.0
      %v3312 = vadd.f32 %v3252, 1.0
      %v3313 = vadd.f32 %v3254, 1.0
      %v3314 = vadd.f32 %v3256, 1.0
      %v3315 = vadd.f32 %v3258, 1.0
      %v3316 = vadd.f32 %v3260, 1.0
      %v3317 = vadd.f32 %v3262, 1.0
      %v3318 = vadd.f32 %v3264, 1.0
      %v3319 = vadd.f32 %v3266, 1.0
      %v3320 = vadd.f32 %v3268, 1.0
      %v3321 = vadd.f32 %v3270, 1.0
      %v3322 = vadd.f32 %v3272, 1.0
      %v3323 = vadd.f32 %v3274, 1.0
      %v3324 = vadd.f32 %v3276, 1.0
      %v3325 = vadd.f32 %v3278, 1.0
      %v3326 = vadd.f32 %v3280, 1.0
      %v3327 = vadd.f32 %v3282, 1.0
      %v3328 = vadd.f32 %v3284, 1.0
      %v3329 = vadd.f32 %v3286, 1.0
      %v3330 = vadd.f32 %v3288, 1.0
      %v3331 = vadd.f32 %v3290, 1.0
      %v3332 = vadd.f32 %v3292, 1.0
      %v3333 = vadd.f32 %v3294, 1.0
      %v3334 = vadd.f32 %v3296, 1.0
      %v3335 = vadd.f32 %v3298, 1.0
      %v3336 = vadd.f32 %v3300, 1.0
      %v3337 = vadd.f32 %v3302, 1.0
      %v3338 = vadd.f32 %v3304, 1.0
      %v3339 = vadd.f32 %v3306, 1.0
      %v3340 = vadd.f32 %v3308, 1.0
      %v3341 = vrcp.pop %v3309
      %v3342 = vmul.f32 1.0, %v3341
      %v3343 = vrcp.pop %v3310
      %v3344 = vmul.f32 1.0, %v3343
      %v3345 = vrcp.pop %v3311
      %v3346 = vmul.f32 1.0, %v3345
      %v3347 = vrcp.pop %v3312
      %v3348 = vmul.f32 1.0, %v3347
      %v3349 = vrcp.pop %v3313
      %v3350 = vmul.f32 1.0, %v3349
      %v3351 = vrcp.pop %v3314
      %v3352 = vmul.f32 1.0, %v3351
      %v3353 = vrcp.pop %v3315
      %v3354 = vmul.f32 1.0, %v3353
      %v3355 = vrcp.pop %v3316
      %v3356 = vmul.f32 1.0, %v3355
      %v3357 = vrcp.pop %v3317
      %v3358 = vmul.f32 1.0, %v3357
      %v3359 = vrcp.pop %v3318
      %v3360 = vmul.f32 1.0, %v3359
      %v3361 = vrcp.pop %v3319
      %v3362 = vmul.f32 1.0, %v3361
      %v3363 = vrcp.pop %v3320
      %v3364 = vmul.f32 1.0, %v3363
      %v3365 = vrcp.pop %v3321
      %v3366 = vmul.f32 1.0, %v3365
      %v3367 = vrcp.pop %v3322
      %v3368 = vmul.f32 1.0, %v3367
      %v3369 = vrcp.pop %v3323
      %v3370 = vmul.f32 1.0, %v3369
      %v3371 = vrcp.pop %v3324
      %v3372 = vmul.f32 1.0, %v3371
      %v3373 = vrcp.pop %v3325
      %v3374 = vmul.f32 1.0, %v3373
      %v3375 = vrcp.pop %v3326
      %v3376 = vmul.f32 1.0, %v3375
      %v3377 = vrcp.pop %v3327
      %v3378 = vmul.f32 1.0, %v3377
      %v3379 = vrcp.pop %v3328
      %v3380 = vmul.f32 1.0, %v3379
      %v3381 = vrcp.pop %v3329
      %v3382 = vmul.f32 1.0, %v3381
      %v3383 = vrcp.pop %v3330
      %v3384 = vmul.f32 1.0, %v3383
      %v3385 = vrcp.pop %v3331
      %v3386 = vmul.f32 1.0, %v3385
      %v3387 = vrcp.pop %v3332
      %v3388 = vmul.f32 1.0, %v3387
      %v3389 = vrcp.pop %v3333
      %v3390 = vmul.f32 1.0, %v3389
      %v3391 = vrcp.pop %v3334
      %v3392 = vmul.f32 1.0, %v3391
      %v3393 = vrcp.pop %v3335
      %v3394 = vmul.f32 1.0, %v3393
      %v3395 = vrcp.pop %v3336
      %v3396 = vmul.f32 1.0, %v3395
      %v3397 = vrcp.pop %v3337
      %v3398 = vmul.f32 1.0, %v3397
      %v3399 = vrcp.pop %v3338
      %v3400 = vmul.f32 1.0, %v3399
      %v3401 = vrcp.pop %v3339
      %v3402 = vmul.f32 1.0, %v3401
      %v3403 = vrcp.pop %v3340
      %v3404 = vmul.f32 1.0, %v3403
      %v3405 = vmul.f32 %v3181, %v3342
      %v3406 = vmul.f32 %v3182, %v3344
      %v3407 = vmul.f32 %v3183, %v3346
      %v3408 = vmul.f32 %v3184, %v3348
      %v3409 = vmul.f32 %v3185, %v3350
      %v3410 = vmul.f32 %v3186, %v3352
      %v3411 = vmul.f32 %v3187, %v3354
      %v3412 = vmul.f32 %v3188, %v3356
      %v3413 = vmul.f32 %v3189, %v3358
      %v3414 = vmul.f32 %v3190, %v3360
      %v3415 = vmul.f32 %v3191, %v3362
      %v3416 = vmul.f32 %v3192, %v3364
      %v3417 = vmul.f32 %v3193, %v3366
      %v3418 = vmul.f32 %v3194, %v3368
      %v3419 = vmul.f32 %v3195, %v3370
      %v3420 = vmul.f32 %v3196, %v3372
      %v3421 = vmul.f32 %v3197, %v3374
      %v3422 = vmul.f32 %v3198, %v3376
      %v3423 = vmul.f32 %v3199, %v3378
      %v3424 = vmul.f32 %v3200, %v3380
      %v3425 = vmul.f32 %v3201, %v3382
      %v3426 = vmul.f32 %v3202, %v3384
      %v3427 = vmul.f32 %v3203, %v3386
      %v3428 = vmul.f32 %v3204, %v3388
      %v3429 = vmul.f32 %v3205, %v3390
      %v3430 = vmul.f32 %v3206, %v3392
      %v3431 = vmul.f32 %v3207, %v3394
      %v3432 = vmul.f32 %v3208, %v3396
      %v3433 = vmul.f32 %v3209, %v3398
      %v3434 = vmul.f32 %v3210, %v3400
      %v3435 = vmul.f32 %v3211, %v3402
      %v3436 = vmul.f32 %v3212, %v3404
      %vm3437 = vcmask 64512
      %v3438 = vsel %vm3437, %v3405, 0.0
      %v3439 = vsel %vm3437, %v3406, 0.0
      %v3440 = vadd.f32 %v3438, %v3439
      %v3441 = vsel %vm3437, %v3407, 0.0
      %v3442 = vadd.f32 %v3440, %v3441
      %v3443 = vsel %vm3437, %v3408, 0.0
      %v3444 = vadd.f32 %v3442, %v3443
      %v3445 = vsel %vm3437, %v3409, 0.0
      %v3446 = vadd.f32 %v3444, %v3445
      %v3447 = vsel %vm3437, %v3410, 0.0
      %v3448 = vadd.f32 %v3446, %v3447
      %v3449 = vsel %vm3437, %v3411, 0.0
      %v3450 = vadd.f32 %v3448, %v3449
      %v3451 = vsel %vm3437, %v3412, 0.0
      %v3452 = vadd.f32 %v3450, %v3451
      %v3453 = vsel %vm3437, %v3413, 0.0
      %v3454 = vadd.f32 %v3452, %v3453
      %v3455 = vsel %vm3437, %v3414, 0.0
      %v3456 = vadd.f32 %v3454, %v3455
      %v3457 = vsel %vm3437, %v3415, 0.0
      %v3458 = vadd.f32 %v3456, %v3457
      %v3459 = vsel %vm3437, %v3416, 0.0
      %v3460 = vadd.f32 %v3458, %v3459
      %v3461 = vsel %vm3437, %v3417, 0.0
      %v3462 = vadd.f32 %v3460, %v3461
      %v3463 = vsel %vm3437, %v3418, 0.0
      %v3464 = vadd.f32 %v3462, %v3463
      %v3465 = vsel %vm3437, %v3419, 0.0
      %v3466 = vadd.f32 %v3464, %v3465
      %v3467 = vsel %vm3437, %v3420, 0.0
      %v3468 = vadd.f32 %v3466, %v3467
      %v3469 = vsel %vm3437, %v3421, 0.0
      %v3470 = vadd.f32 %v3468, %v3469
      %v3471 = vsel %vm3437, %v3422, 0.0
      %v3472 = vadd.f32 %v3470, %v3471
      %v3473 = vsel %vm3437, %v3423, 0.0
      %v3474 = vadd.f32 %v3472, %v3473
      %v3475 = vsel %vm3437, %v3424, 0.0
      %v3476 = vadd.f32 %v3474, %v3475
      %v3477 = vsel %vm3437, %v3425, 0.0
      %v3478 = vadd.f32 %v3476, %v3477
      %v3479 = vsel %vm3437, %v3426, 0.0
      %v3480 = vadd.f32 %v3478, %v3479
      %v3481 = vsel %vm3437, %v3427, 0.0
      %v3482 = vadd.f32 %v3480, %v3481
      %v3483 = vsel %vm3437, %v3428, 0.0
      %v3484 = vadd.f32 %v3482, %v3483
      %v3485 = vsel %vm3437, %v3429, 0.0
      %v3486 = vadd.f32 %v3484, %v3485
      %v3487 = vsel %vm3437, %v3430, 0.0
      %v3488 = vadd.f32 %v3486, %v3487
      %v3489 = vsel %vm3437, %v3431, 0.0
      %v3490 = vadd.f32 %v3488, %v3489
      %v3491 = vsel %vm3437, %v3432, 0.0
      %v3492 = vadd.f32 %v3490, %v3491
      %v3493 = vsel %vm3437, %v3433, 0.0
      %v3494 = vadd.f32 %v3492, %v3493
      %v3495 = vsel %vm3437, %v3434, 0.0
      %v3496 = vadd.f32 %v3494, %v3495
      %v3497 = vsel %vm3437, %v3435, 0.0
      %v3498 = vadd.f32 %v3496, %v3497
      %v3499 = vsel %vm3437, %v3436, 0.0
      %v3500 = vadd.f32 %v3498, %v3499
      %v3501 = vrot.slane %v3500, 4
      %v3502 = vadd.f32 %v3500, %v3501
      %v3503 = vrot.slane %v3502, 2
      %v3504 = vadd.f32 %v3502, %v3503
      %v3505 = vrot.slane %v3504, 1
      %v3506 = vadd.f32 %v3504, %v3505
      %v3507 = vmul.f32 %v3405, %v3405
      %v3508 = vmul.f32 %v3406, %v3406
      %v3509 = vmul.f32 %v3407, %v3407
      %v3510 = vmul.f32 %v3408, %v3408
      %v3511 = vmul.f32 %v3409, %v3409
      %v3512 = vmul.f32 %v3410, %v3410
      %v3513 = vmul.f32 %v3411, %v3411
      %v3514 = vmul.f32 %v3412, %v3412
      %v3515 = vmul.f32 %v3413, %v3413
      %v3516 = vmul.f32 %v3414, %v3414
      %v3517 = vmul.f32 %v3415, %v3415
      %v3518 = vmul.f32 %v3416, %v3416
      %v3519 = vmul.f32 %v3417, %v3417
      %v3520 = vmul.f32 %v3418, %v3418
      %v3521 = vmul.f32 %v3419, %v3419
      %v3522 = vmul.f32 %v3420, %v3420
      %v3523 = vmul.f32 %v3421, %v3421
      %v3524 = vmul.f32 %v3422, %v3422
      %v3525 = vmul.f32 %v3423, %v3423
      %v3526 = vmul.f32 %v3424, %v3424
      %v3527 = vmul.f32 %v3425, %v3425
      %v3528 = vmul.f32 %v3426, %v3426
      %v3529 = vmul.f32 %v3427, %v3427
      %v3530 = vmul.f32 %v3428, %v3428
      %v3531 = vmul.f32 %v3429, %v3429
      %v3532 = vmul.f32 %v3430, %v3430
      %v3533 = vmul.f32 %v3431, %v3431
      %v3534 = vmul.f32 %v3432, %v3432
      %v3535 = vmul.f32 %v3433, %v3433
      %v3536 = vmul.f32 %v3434, %v3434
      %v3537 = vmul.f32 %v3435, %v3435
      %v3538 = vmul.f32 %v3436, %v3436
      %v3539 = vsel %vm3437, %v3507, 0.0
      %v3540 = vsel %vm3437, %v3508, 0.0
      %v3541 = vadd.f32 %v3539, %v3540
      %v3542 = vsel %vm3437, %v3509, 0.0
      %v3543 = vadd.f32 %v3541, %v3542
      %v3544 = vsel %vm3437, %v3510, 0.0
      %v3545 = vadd.f32 %v3543, %v3544
      %v3546 = vsel %vm3437, %v3511, 0.0
      %v3547 = vadd.f32 %v3545, %v3546
      %v3548 = vsel %vm3437, %v3512, 0.0
      %v3549 = vadd.f32 %v3547, %v3548
      %v3550 = vsel %vm3437, %v3513, 0.0
      %v3551 = vadd.f32 %v3549, %v3550
      %v3552 = vsel %vm3437, %v3514, 0.0
      %v3553 = vadd.f32 %v3551, %v3552
      %v3554 = vsel %vm3437, %v3515, 0.0
      %v3555 = vadd.f32 %v3553, %v3554
      %v3556 = vsel %vm3437, %v3516, 0.0
      %v3557 = vadd.f32 %v3555, %v3556
      %v3558 = vsel %vm3437, %v3517, 0.0
      %v3559 = vadd.f32 %v3557, %v3558
      %v3560 = vsel %vm3437, %v3518, 0.0
      %v3561 = vadd.f32 %v3559, %v3560
      %v3562 = vsel %vm3437, %v3519, 0.0
      %v3563 = vadd.f32 %v3561, %v3562
      %v3564 = vsel %vm3437, %v3520, 0.0
      %v3565 = vadd.f32 %v3563, %v3564
      %v3566 = vsel %vm3437, %v3521, 0.0
      %v3567 = vadd.f32 %v3565, %v3566
      %v3568 = vsel %vm3437, %v3522, 0.0
      %v3569 = vadd.f32 %v3567, %v3568
      %v3570 = vsel %vm3437, %v3523, 0.0
      %v3571 = vadd.f32 %v3569, %v3570
      %v3572 = vsel %vm3437, %v3524, 0.0
      %v3573 = vadd.f32 %v3571, %v3572
      %v3574 = vsel %vm3437, %v3525, 0.0
      %v3575 = vadd.f32 %v3573, %v3574
      %v3576 = vsel %vm3437, %v3526, 0.0
      %v3577 = vadd.f32 %v3575, %v3576
      %v3578 = vsel %vm3437, %v3527, 0.0
      %v3579 = vadd.f32 %v3577, %v3578
      %v3580 = vsel %vm3437, %v3528, 0.0
      %v3581 = vadd.f32 %v3579, %v3580
      %v3582 = vsel %vm3437, %v3529, 0.0
      %v3583 = vadd.f32 %v3581, %v3582
      %v3584 = vsel %vm3437, %v3530, 0.0
      %v3585 = vadd.f32 %v3583, %v3584
      %v3586 = vsel %vm3437, %v3531, 0.0
      %v3587 = vadd.f32 %v3585, %v3586
      %v3588 = vsel %vm3437, %v3532, 0.0
      %v3589 = vadd.f32 %v3587, %v3588
      %v3590 = vsel %vm3437, %v3533, 0.0
      %v3591 = vadd.f32 %v3589, %v3590
      %v3592 = vsel %vm3437, %v3534, 0.0
      %v3593 = vadd.f32 %v3591, %v3592
      %v3594 = vsel %vm3437, %v3535, 0.0
      %v3595 = vadd.f32 %v3593, %v3594
      %v3596 = vsel %vm3437, %v3536, 0.0
      %v3597 = vadd.f32 %v3595, %v3596
      %v3598 = vsel %vm3437, %v3537, 0.0
      %v3599 = vadd.f32 %v3597, %v3598
      %v3600 = vsel %vm3437, %v3538, 0.0
      %v3601 = vadd.f32 %v3599, %v3600
      %v3602 = vrot.slane %v3601, 4
      %v3603 = vadd.f32 %v3601, %v3602
      %v3604 = vrot.slane %v3603, 2
      %v3605 = vadd.f32 %v3603, %v3604
      %v3606 = vrot.slane %v3605, 1
      %v3607 = vadd.f32 %v3605, %v3606
      %v3608 = vld [vmem:[%s3] sm:$0xff]
      %v3610 = vsel %vm3437, %v3506, 0
      %3612 = vmatprep.subr.mxu0 0.0
      %3613 = vmatpush1.msra.mxu0 0.0
      %3614 = vmatprep.subr.mxu0 0.0
      %3615 = vmatpush1.msra.mxu0 0.0
      %3616 = vmatprep.subr.mxu0 0.0
      %3617 = vmatpush1.msra.mxu0 0.0
      %3618 = vmatprep.subr.mxu0 0.0
      %3619 = vmatpush1.msra.mxu0 0.0
      %3620 = vmatprep.subr.mxu0 0.0
      %3621 = vmatpush1.msra.mxu0 0.0
      %3622 = vmatprep.subr.mxu0 0.0
      %3623 = vmatpush1.msra.mxu0 0.0
      %3624 = vmatprep.subr.mxu0 0.0
      %3625 = vmatpush1.msra.mxu0 0.0
      %3626 = vmatprep.subr.mxu0 0.0
      %3627 = vmatpush1.msra.mxu0 0.0
      %3628 = vmatprep.subr.mxu0 0.0
      %3629 = vmatpush1.msra.mxu0 0.0
      %3630 = vmatprep.subr.mxu0 0.0
      %3631 = vmatpush1.msra.mxu0 0.0
      %3632 = vmatprep.subr.mxu0 0.0
      %3633 = vmatpush1.msra.mxu0 0.0
      %3634 = vmatprep.subr.mxu0 0.0
      %3635 = vmatpush1.msra.mxu0 0.0
      %3636 = vmatprep.subr.mxu0 0.0
      %3637 = vmatpush1.msra.mxu0 0.0
      %3638 = vmatprep.subr.mxu0 0.0
      %3639 = vmatpush1.msra.mxu0 0.0
      %3640 = vmatprep.subr.mxu0 0.0
      %3641 = vmatpush1.msra.mxu0 0.0
      %3642 = vmatprep.subr.mxu0 0.0
      %3643 = vmatpush1.msra.mxu0 %v3608
      %3644 = vmatprep.subr.mxu0 0.0
      %3645 = vmatpush2.msra.mxu0 0.0
      %3646 = vmatprep.subr.mxu0 0.0
      %3647 = vmatpush2.msra.mxu0 0.0
      %3648 = vmatprep.subr.mxu0 0.0
      %3649 = vmatpush2.msra.mxu0 0.0
      %3650 = vmatprep.subr.mxu0 0.0
      %3651 = vmatpush2.msra.mxu0 0.0
      %3652 = vmatprep.subr.mxu0 0.0
      %3653 = vmatpush2.msra.mxu0 0.0
      %3654 = vmatprep.subr.mxu0 0.0
      %3655 = vmatpush2.msra.mxu0 0.0
      %3656 = vmatprep.subr.mxu0 0.0
      %3657 = vmatpush2.msra.mxu0 0.0
      %3658 = vmatprep.subr.mxu0 0.0
      %3659 = vmatpush2.msra.mxu0 0.0
      %3660 = vmatprep.subr.mxu0 0.0
      %3661 = vmatpush2.msra.mxu0 0.0
      %3662 = vmatprep.subr.mxu0 0.0
      %3663 = vmatpush2.msra.mxu0 0.0
      %3664 = vmatprep.subr.mxu0 0.0
      %3665 = vmatpush2.msra.mxu0 0.0
      %3666 = vmatprep.subr.mxu0 0.0
      %3667 = vmatpush2.msra.mxu0 0.0
      %3668 = vmatprep.subr.mxu0 0.0
      %3669 = vmatpush2.msra.mxu0 0.0
      %3670 = vmatprep.subr.mxu0 0.0
      %3671 = vmatpush2.msra.mxu0 0.0
      %3672 = vmatprep.subr.mxu0 0.0
      %3673 = vmatpush2.msra.mxu0 0.0
      %3674 = vmatprep.subr.mxu0 0.0
      %3675 = vmatpush2.msra.mxu0 0.0
      %3676 = vmatprep.mubr.f32.mxu0 0.0
      %3677 = vmatmul.mubr.f32.gmra.mxu0 %v3610
      %v3678 = vpop.f32.mrf.mxu0
      %v3679 = vadd.f32 0.0, %v3678
      %v3680 = vpop.f32.mrf.mxu0
      %3681 = vdwg.mxu0
      %v3683 = vsel %vm3437, %v3607, 0
      %3685 = vmatprep.subr.mxu0 0.0
      %3686 = vmatpush1.msra.mxu0 0.0
      %3687 = vmatprep.subr.mxu0 0.0
      %3688 = vmatpush1.msra.mxu0 0.0
      %3689 = vmatprep.subr.mxu0 0.0
      %3690 = vmatpush1.msra.mxu0 0.0
      %3691 = vmatprep.subr.mxu0 0.0
      %3692 = vmatpush1.msra.mxu0 0.0
      %3693 = vmatprep.subr.mxu0 0.0
      %3694 = vmatpush1.msra.mxu0 0.0
      %3695 = vmatprep.subr.mxu0 0.0
      %3696 = vmatpush1.msra.mxu0 0.0
      %3697 = vmatprep.subr.mxu0 0.0
      %3698 = vmatpush1.msra.mxu0 0.0
      %3699 = vmatprep.subr.mxu0 0.0
      %3700 = vmatpush1.msra.mxu0 0.0
      %3701 = vmatprep.subr.mxu0 0.0
      %3702 = vmatpush1.msra.mxu0 0.0
      %3703 = vmatprep.subr.mxu0 0.0
      %3704 = vmatpush1.msra.mxu0 0.0
      %3705 = vmatprep.subr.mxu0 0.0
      %3706 = vmatpush1.msra.mxu0 0.0
      %3707 = vmatprep.subr.mxu0 0.0
      %3708 = vmatpush1.msra.mxu0 0.0
      %3709 = vmatprep.subr.mxu0 0.0
      %3710 = vmatpush1.msra.mxu0 0.0
      %3711 = vmatprep.subr.mxu0 0.0
      %3712 = vmatpush1.msra.mxu0 0.0
      %3713 = vmatprep.subr.mxu0 0.0
      %3714 = vmatpush1.msra.mxu0 0.0
      %3715 = vmatprep.subr.mxu0 0.0
      %3716 = vmatpush1.msra.mxu0 %v3608
      %3717 = vmatprep.subr.mxu0 0.0
      %3718 = vmatpush2.msra.mxu0 0.0
      %3719 = vmatprep.subr.mxu0 0.0
      %3720 = vmatpush2.msra.mxu0 0.0
      %3721 = vmatprep.subr.mxu0 0.0
      %3722 = vmatpush2.msra.mxu0 0.0
      %3723 = vmatprep.subr.mxu0 0.0
      %3724 = vmatpush2.msra.mxu0 0.0
      %3725 = vmatprep.subr.mxu0 0.0
      %3726 = vmatpush2.msra.mxu0 0.0
      %3727 = vmatprep.subr.mxu0 0.0
      %3728 = vmatpush2.msra.mxu0 0.0
      %3729 = vmatprep.subr.mxu0 0.0
      %3730 = vmatpush2.msra.mxu0 0.0
      %3731 = vmatprep.subr.mxu0 0.0
      %3732 = vmatpush2.msra.mxu0 0.0
      %3733 = vmatprep.subr.mxu0 0.0
      %3734 = vmatpush2.msra.mxu0 0.0
      %3735 = vmatprep.subr.mxu0 0.0
      %3736 = vmatpush2.msra.mxu0 0.0
      %3737 = vmatprep.subr.mxu0 0.0
      %3738 = vmatpush2.msra.mxu0 0.0
      %3739 = vmatprep.subr.mxu0 0.0
      %3740 = vmatpush2.msra.mxu0 0.0
      %3741 = vmatprep.subr.mxu0 0.0
      %3742 = vmatpush2.msra.mxu0 0.0
      %3743 = vmatprep.subr.mxu0 0.0
      %3744 = vmatpush2.msra.mxu0 0.0
      %3745 = vmatprep.subr.mxu0 0.0
      %3746 = vmatpush2.msra.mxu0 0.0
      %3747 = vmatprep.subr.mxu0 0.0
      %3748 = vmatpush2.msra.mxu0 0.0
      %3749 = vmatprep.mubr.f32.mxu0 0.0
      %3750 = vmatmul.mubr.f32.gmra.mxu0 %v3683
      %v3751 = vpop.f32.mrf.mxu0
      %v3752 = vadd.f32 0.0, %v3751
      %v3753 = vpop.f32.mrf.mxu0
      %3754 = vdwg.mxu0
      %v3755 = vmul.f32 %v3679, %v3679
      %v3756 = vsub.f32 %v3752, %v3755
      %v3757 = vmax.f32 %v3756, 0.0
      %v3758 = vadd.f32 %v3757, 1e-05
      %v3759 = vrsqrt.pop %v3758
      %v3760 = vld [vmem:[%s2 + $0x1] sm:$0x1]
      %v3761 = vld [vmem:[%s2 + $0x2] sm:$0x1]
      %v3762 = vlaneseq
      %v3763 = vshrl.u32 %v3762, 7
      %v3764 = vsub.s32 0, %v3763
      %v3765 = vrot.slane %v3679, %v3764
      %v3766 = vsub.f32 %v3405, %v3765
      %v3767 = vsub.f32 %v3406, %v3765
      %v3768 = vsub.f32 %v3407, %v3765
      %v3769 = vsub.f32 %v3408, %v3765
      %v3770 = vsub.f32 %v3409, %v3765
      %v3771 = vsub.f32 %v3410, %v3765
      %v3772 = vsub.f32 %v3411, %v3765
      %v3773 = vsub.f32 %v3412, %v3765
      %v3774 = vsub.f32 %v3413, %v3765
      %v3775 = vsub.f32 %v3414, %v3765
      %v3776 = vsub.f32 %v3415, %v3765
      %v3777 = vsub.f32 %v3416, %v3765
      %v3778 = vsub.f32 %v3417, %v3765
      %v3779 = vsub.f32 %v3418, %v3765
      %v3780 = vsub.f32 %v3419, %v3765
      %v3781 = vsub.f32 %v3420, %v3765
      %v3782 = vsub.f32 %v3421, %v3765
      %v3783 = vsub.f32 %v3422, %v3765
      %v3784 = vsub.f32 %v3423, %v3765
      %v3785 = vsub.f32 %v3424, %v3765
      %v3786 = vsub.f32 %v3425, %v3765
      %v3787 = vsub.f32 %v3426, %v3765
      %v3788 = vsub.f32 %v3427, %v3765
      %v3789 = vsub.f32 %v3428, %v3765
      %v3790 = vsub.f32 %v3429, %v3765
      %v3791 = vsub.f32 %v3430, %v3765
      %v3792 = vsub.f32 %v3431, %v3765
      %v3793 = vsub.f32 %v3432, %v3765
      %v3794 = vsub.f32 %v3433, %v3765
      %v3795 = vsub.f32 %v3434, %v3765
      %v3796 = vsub.f32 %v3435, %v3765
      %v3797 = vsub.f32 %v3436, %v3765
      %v3798 = vmul.f32 %v3759, %v3760
      %v3799 = vlaneseq
      %v3800 = vshrl.u32 %v3799, 7
      %v3801 = vsub.s32 0, %v3800
      %v3802 = vrot.slane %v3798, %v3801
      %v3803 = vmul.f32 %v3766, %v3802
      %v3804 = vmul.f32 %v3767, %v3802
      %v3805 = vmul.f32 %v3768, %v3802
      %v3806 = vmul.f32 %v3769, %v3802
      %v3807 = vmul.f32 %v3770, %v3802
      %v3808 = vmul.f32 %v3771, %v3802
      %v3809 = vmul.f32 %v3772, %v3802
      %v3810 = vmul.f32 %v3773, %v3802
      %v3811 = vmul.f32 %v3774, %v3802
      %v3812 = vmul.f32 %v3775, %v3802
      %v3813 = vmul.f32 %v3776, %v3802
      %v3814 = vmul.f32 %v3777, %v3802
      %v3815 = vmul.f32 %v3778, %v3802
      %v3816 = vmul.f32 %v3779, %v3802
      %v3817 = vmul.f32 %v3780, %v3802
      %v3818 = vmul.f32 %v3781, %v3802
      %v3819 = vmul.f32 %v3782, %v3802
      %v3820 = vmul.f32 %v3783, %v3802
      %v3821 = vmul.f32 %v3784, %v3802
      %v3822 = vmul.f32 %v3785, %v3802
      %v3823 = vmul.f32 %v3786, %v3802
      %v3824 = vmul.f32 %v3787, %v3802
      %v3825 = vmul.f32 %v3788, %v3802
      %v3826 = vmul.f32 %v3789, %v3802
      %v3827 = vmul.f32 %v3790, %v3802
      %v3828 = vmul.f32 %v3791, %v3802
      %v3829 = vmul.f32 %v3792, %v3802
      %v3830 = vmul.f32 %v3793, %v3802
      %v3831 = vmul.f32 %v3794, %v3802
      %v3832 = vmul.f32 %v3795, %v3802
      %v3833 = vmul.f32 %v3796, %v3802
      %v3834 = vmul.f32 %v3797, %v3802
      %v3835 = vlaneseq
      %v3836 = vshrl.u32 %v3835, 7
      %v3837 = vsub.s32 0, %v3836
      %v3838 = vrot.slane %v3761, %v3837
      %v3839 = vadd.f32 %v3803, %v3838
      %v3840 = vadd.f32 %v3804, %v3838
      %v3841 = vadd.f32 %v3805, %v3838
      %v3842 = vadd.f32 %v3806, %v3838
      %v3843 = vadd.f32 %v3807, %v3838
      %v3844 = vadd.f32 %v3808, %v3838
      %v3845 = vadd.f32 %v3809, %v3838
      %v3846 = vadd.f32 %v3810, %v3838
      %v3847 = vadd.f32 %v3811, %v3838
      %v3848 = vadd.f32 %v3812, %v3838
      %v3849 = vadd.f32 %v3813, %v3838
      %v3850 = vadd.f32 %v3814, %v3838
      %v3851 = vadd.f32 %v3815, %v3838
      %v3852 = vadd.f32 %v3816, %v3838
      %v3853 = vadd.f32 %v3817, %v3838
      %v3854 = vadd.f32 %v3818, %v3838
      %v3855 = vadd.f32 %v3819, %v3838
      %v3856 = vadd.f32 %v3820, %v3838
      %v3857 = vadd.f32 %v3821, %v3838
      %v3858 = vadd.f32 %v3822, %v3838
      %v3859 = vadd.f32 %v3823, %v3838
      %v3860 = vadd.f32 %v3824, %v3838
      %v3861 = vadd.f32 %v3825, %v3838
      %v3862 = vadd.f32 %v3826, %v3838
      %v3863 = vadd.f32 %v3827, %v3838
      %v3864 = vadd.f32 %v3828, %v3838
      %v3865 = vadd.f32 %v3829, %v3838
      %v3866 = vadd.f32 %v3830, %v3838
      %v3867 = vadd.f32 %v3831, %v3838
      %v3868 = vadd.f32 %v3832, %v3838
      %v3869 = vadd.f32 %v3833, %v3838
      %v3870 = vadd.f32 %v3834, %v3838
      %v3871 = vpack.c.bf16 %v3840, %v3839
      %v3872 = vpack.c.bf16 %v3842, %v3841
      %v3873 = vpack.c.bf16 %v3844, %v3843
      %v3874 = vpack.c.bf16 %v3846, %v3845
      %v3875 = vpack.c.bf16 %v3848, %v3847
      %v3876 = vpack.c.bf16 %v3850, %v3849
      %v3877 = vpack.c.bf16 %v3852, %v3851
      %v3878 = vpack.c.bf16 %v3854, %v3853
      %v3879 = vpack.c.bf16 %v3856, %v3855
      %v3880 = vpack.c.bf16 %v3858, %v3857
      %v3881 = vpack.c.bf16 %v3860, %v3859
      %v3882 = vpack.c.bf16 %v3862, %v3861
      %v3883 = vpack.c.bf16 %v3864, %v3863
      %v3884 = vpack.c.bf16 %v3866, %v3865
      %v3885 = vpack.c.bf16 %v3868, %v3867
      %v3886 = vpack.c.bf16 %v3870, %v3869
      %v3903 = vunpack.c.l.b16 %v3871
      %v3904 = vunpack.c.h.b16 %v3871
      %v3905 = vunpack.c.l.b16 %v3872
      %v3906 = vunpack.c.h.b16 %v3872
      %v3907 = vunpack.c.l.b16 %v3873
      %v3908 = vunpack.c.h.b16 %v3873
      %v3909 = vunpack.c.l.b16 %v3874
      %v3910 = vunpack.c.h.b16 %v3874
      %v3911 = vunpack.c.l.b16 %v3875
      %v3912 = vunpack.c.h.b16 %v3875
      %v3913 = vunpack.c.l.b16 %v3876
      %v3914 = vunpack.c.h.b16 %v3876
      %v3915 = vunpack.c.l.b16 %v3877
      %v3916 = vunpack.c.h.b16 %v3877
      %v3917 = vunpack.c.l.b16 %v3878
      %v3918 = vunpack.c.h.b16 %v3878
      %v3919 = vunpack.c.l.b16 %v3879
      %v3920 = vunpack.c.h.b16 %v3879
      %v3921 = vunpack.c.l.b16 %v3880
      %v3922 = vunpack.c.h.b16 %v3880
      %v3923 = vunpack.c.l.b16 %v3881
      %v3924 = vunpack.c.h.b16 %v3881
      %v3925 = vunpack.c.l.b16 %v3882
      %v3926 = vunpack.c.h.b16 %v3882
      %v3927 = vunpack.c.l.b16 %v3883
      %v3928 = vunpack.c.h.b16 %v3883
      %v3929 = vunpack.c.l.b16 %v3884
      %v3930 = vunpack.c.h.b16 %v3884
      %v3931 = vunpack.c.l.b16 %v3885
      %v3932 = vunpack.c.h.b16 %v3885
      %v3933 = vunpack.c.l.b16 %v3886
      %v3934 = vunpack.c.h.b16 %v3886
      %v3935 = vpack.c.b16 %v3903, %v3903
      %v3936 = vpack.c.b16 %v3904, %v3904
      %v3937 = vpack.c.b16 %v3905, %v3905
      %v3938 = vpack.c.b16 %v3906, %v3906
      %v3939 = vpack.c.b16 %v3907, %v3907
      %v3940 = vpack.c.b16 %v3908, %v3908
      %v3941 = vpack.c.b16 %v3909, %v3909
      %v3942 = vpack.c.b16 %v3910, %v3910
      %v3943 = vpack.c.b16 %v3911, %v3911
      %v3944 = vpack.c.b16 %v3912, %v3912
      %v3945 = vpack.c.b16 %v3913, %v3913
      %v3946 = vpack.c.b16 %v3914, %v3914
      %v3947 = vpack.c.b16 %v3915, %v3915
      %v3948 = vpack.c.b16 %v3916, %v3916
      %v3949 = vpack.c.b16 %v3917, %v3917
      %v3950 = vpack.c.b16 %v3918, %v3918
      %v3951 = vpack.c.b16 %v3919, %v3919
      %v3952 = vpack.c.b16 %v3920, %v3920
      %v3953 = vpack.c.b16 %v3921, %v3921
      %v3954 = vpack.c.b16 %v3922, %v3922
      %v3955 = vpack.c.b16 %v3923, %v3923
      %v3956 = vpack.c.b16 %v3924, %v3924
      %v3957 = vpack.c.b16 %v3925, %v3925
      %v3958 = vpack.c.b16 %v3926, %v3926
      %v3959 = vpack.c.b16 %v3927, %v3927
      %v3960 = vpack.c.b16 %v3928, %v3928
      %v3961 = vpack.c.b16 %v3929, %v3929
      %v3962 = vpack.c.b16 %v3930, %v3930
      %v3963 = vpack.c.b16 %v3931, %v3931
      %v3964 = vpack.c.b16 %v3932, %v3932
      %v3965 = vpack.c.b16 %v3933, %v3933
      %v3966 = vpack.c.b16 %v3934, %v3934
      %v3968 = vshrl.u32 %v3935, 16
      %v3970 = vrot.slane %v3968, 7
      %v3971 = vshll.u32 %v3935, 16
      %v3973 = vor.u32 %v3970, %v3971
      %v3974 = vrot.slane %v3970, 4
      %v3976 = vshrl.u32 %v3936, 16
      %v3978 = vrot.slane %v3976, 7
      %v3979 = vshll.u32 %v3936, 16
      %v3981 = vor.u32 %v3978, %v3979
      %v3982 = vsel %vm314, %v3974, %v3981
      %v3983 = vrot.slane %v3978, 4
      %v3985 = vshrl.u32 %v3937, 16
      %v3987 = vrot.slane %v3985, 7
      %v3988 = vshll.u32 %v3937, 16
      %v3990 = vor.u32 %v3987, %v3988
      %v3991 = vrot.slane %v3987, 4
      %v3993 = vshrl.u32 %v3938, 16
      %v3995 = vrot.slane %v3993, 7
      %v3996 = vshll.u32 %v3938, 16
      %v3998 = vor.u32 %v3995, %v3996
      %v3999 = vsel %vm314, %v3991, %v3998
      %v4000 = vrot.slane %v3995, 4
      %v4002 = vshrl.u32 %v3939, 16
      %v4004 = vrot.slane %v4002, 7
      %v4005 = vshll.u32 %v3939, 16
      %v4007 = vor.u32 %v4004, %v4005
      %v4008 = vrot.slane %v4004, 4
      %v4010 = vshrl.u32 %v3940, 16
      %v4012 = vrot.slane %v4010, 7
      %v4013 = vshll.u32 %v3940, 16
      %v4015 = vor.u32 %v4012, %v4013
      %v4016 = vsel %vm314, %v4008, %v4015
      %v4017 = vrot.slane %v4012, 4
      %v4019 = vshrl.u32 %v3941, 16
      %v4021 = vrot.slane %v4019, 7
      %v4022 = vshll.u32 %v3941, 16
      %v4024 = vor.u32 %v4021, %v4022
      %v4025 = vrot.slane %v4021, 4
      %v4027 = vshrl.u32 %v3942, 16
      %v4029 = vrot.slane %v4027, 7
      %v4030 = vshll.u32 %v3942, 16
      %v4032 = vor.u32 %v4029, %v4030
      %v4033 = vsel %vm314, %v4025, %v4032
      %v4034 = vrot.slane %v4029, 4
      %v4036 = vshrl.u32 %v3943, 16
      %v4038 = vrot.slane %v4036, 7
      %v4039 = vshll.u32 %v3943, 16
      %v4041 = vor.u32 %v4038, %v4039
      %v4042 = vrot.slane %v4038, 4
      %v4044 = vshrl.u32 %v3944, 16
      %v4046 = vrot.slane %v4044, 7
      %v4047 = vshll.u32 %v3944, 16
      %v4049 = vor.u32 %v4046, %v4047
      %v4050 = vsel %vm314, %v4042, %v4049
      %v4051 = vrot.slane %v4046, 4
      %v4053 = vshrl.u32 %v3945, 16
      %v4055 = vrot.slane %v4053, 7
      %v4056 = vshll.u32 %v3945, 16
      %v4058 = vor.u32 %v4055, %v4056
      %v4059 = vrot.slane %v4055, 4
      %v4061 = vshrl.u32 %v3946, 16
      %v4063 = vrot.slane %v4061, 7
      %v4064 = vshll.u32 %v3946, 16
      %v4066 = vor.u32 %v4063, %v4064
      %v4067 = vsel %vm314, %v4059, %v4066
      %v4068 = vrot.slane %v4063, 4
      %v4070 = vshrl.u32 %v3947, 16
      %v4072 = vrot.slane %v4070, 7
      %v4073 = vshll.u32 %v3947, 16
      %v4075 = vor.u32 %v4072, %v4073
      %v4076 = vrot.slane %v4072, 4
      %v4078 = vshrl.u32 %v3948, 16
      %v4080 = vrot.slane %v4078, 7
      %v4081 = vshll.u32 %v3948, 16
      %v4083 = vor.u32 %v4080, %v4081
      %v4084 = vsel %vm314, %v4076, %v4083
      %v4085 = vrot.slane %v4080, 4
      %v4087 = vshrl.u32 %v3949, 16
      %v4089 = vrot.slane %v4087, 7
      %v4090 = vshll.u32 %v3949, 16
      %v4092 = vor.u32 %v4089, %v4090
      %v4093 = vrot.slane %v4089, 4
      %v4095 = vshrl.u32 %v3950, 16
      %v4097 = vrot.slane %v4095, 7
      %v4098 = vshll.u32 %v3950, 16
      %v4100 = vor.u32 %v4097, %v4098
      %v4101 = vsel %vm314, %v4093, %v4100
      %v4102 = vrot.slane %v4097, 4
      %v4104 = vshrl.u32 %v3951, 16
      %v4106 = vrot.slane %v4104, 7
      %v4107 = vshll.u32 %v3951, 16
      %v4109 = vor.u32 %v4106, %v4107
      %v4110 = vrot.slane %v4106, 4
      %v4112 = vshrl.u32 %v3952, 16
      %v4114 = vrot.slane %v4112, 7
      %v4115 = vshll.u32 %v3952, 16
      %v4117 = vor.u32 %v4114, %v4115
      %v4118 = vsel %vm314, %v4110, %v4117
      %v4119 = vrot.slane %v4114, 4
      %v4121 = vshrl.u32 %v3953, 16
      %v4123 = vrot.slane %v4121, 7
      %v4124 = vshll.u32 %v3953, 16
      %v4126 = vor.u32 %v4123, %v4124
      %v4127 = vrot.slane %v4123, 4
      %v4129 = vshrl.u32 %v3954, 16
      %v4131 = vrot.slane %v4129, 7
      %v4132 = vshll.u32 %v3954, 16
      %v4134 = vor.u32 %v4131, %v4132
      %v4135 = vsel %vm314, %v4127, %v4134
      %v4136 = vrot.slane %v4131, 4
      %v4138 = vshrl.u32 %v3955, 16
      %v4140 = vrot.slane %v4138, 7
      %v4141 = vshll.u32 %v3955, 16
      %v4143 = vor.u32 %v4140, %v4141
      %v4144 = vrot.slane %v4140, 4
      %v4146 = vshrl.u32 %v3956, 16
      %v4148 = vrot.slane %v4146, 7
      %v4149 = vshll.u32 %v3956, 16
      %v4151 = vor.u32 %v4148, %v4149
      %v4152 = vsel %vm314, %v4144, %v4151
      %v4153 = vrot.slane %v4148, 4
      %v4155 = vshrl.u32 %v3957, 16
      %v4157 = vrot.slane %v4155, 7
      %v4158 = vshll.u32 %v3957, 16
      %v4160 = vor.u32 %v4157, %v4158
      %v4161 = vrot.slane %v4157, 4
      %v4163 = vshrl.u32 %v3958, 16
      %v4165 = vrot.slane %v4163, 7
      %v4166 = vshll.u32 %v3958, 16
      %v4168 = vor.u32 %v4165, %v4166
      %v4169 = vsel %vm314, %v4161, %v4168
      %v4170 = vrot.slane %v4165, 4
      %v4172 = vshrl.u32 %v3959, 16
      %v4174 = vrot.slane %v4172, 7
      %v4175 = vshll.u32 %v3959, 16
      %v4177 = vor.u32 %v4174, %v4175
      %v4178 = vrot.slane %v4174, 4
      %v4180 = vshrl.u32 %v3960, 16
      %v4182 = vrot.slane %v4180, 7
      %v4183 = vshll.u32 %v3960, 16
      %v4185 = vor.u32 %v4182, %v4183
      %v4186 = vsel %vm314, %v4178, %v4185
      %v4187 = vrot.slane %v4182, 4
      %v4189 = vshrl.u32 %v3961, 16
      %v4191 = vrot.slane %v4189, 7
      %v4192 = vshll.u32 %v3961, 16
      %v4194 = vor.u32 %v4191, %v4192
      %v4195 = vrot.slane %v4191, 4
      %v4197 = vshrl.u32 %v3962, 16
      %v4199 = vrot.slane %v4197, 7
      %v4200 = vshll.u32 %v3962, 16
      %v4202 = vor.u32 %v4199, %v4200
      %v4203 = vsel %vm314, %v4195, %v4202
      %v4204 = vrot.slane %v4199, 4
      %v4206 = vshrl.u32 %v3963, 16
      %v4208 = vrot.slane %v4206, 7
      %v4209 = vshll.u32 %v3963, 16
      %v4211 = vor.u32 %v4208, %v4209
      %v4212 = vrot.slane %v4208, 4
      %v4214 = vshrl.u32 %v3964, 16
      %v4216 = vrot.slane %v4214, 7
      %v4217 = vshll.u32 %v3964, 16
      %v4219 = vor.u32 %v4216, %v4217
      %v4220 = vsel %vm314, %v4212, %v4219
      %v4221 = vrot.slane %v4216, 4
      %v4223 = vshrl.u32 %v3965, 16
      %v4225 = vrot.slane %v4223, 7
      %v4226 = vshll.u32 %v3965, 16
      %v4228 = vor.u32 %v4225, %v4226
      %v4229 = vrot.slane %v4225, 4
      %v4231 = vshrl.u32 %v3966, 16
      %v4233 = vrot.slane %v4231, 7
      %v4234 = vshll.u32 %v3966, 16
      %v4236 = vor.u32 %v4233, %v4234
      %v4237 = vsel %vm314, %v4229, %v4236
      %v4238 = vrot.slane %v4233, 4
      %vm4287 = vcmask 60416
      %vm4288 = vmand %vm4287, %vm637
      %v4289 = vld [vmem:[%s635] sm:$0xf]
      %v4290 = vsel %vm4288, %v3973, %v4289
      %4291 = vst [vmem:[%s635] sm:$0xf] %v4290
      %vm4292 = vcmask 60416
      %4293 = vst.msk [vmem:[%s635 + $0x4] sm:$0xf] %vm4292, %v3982
      %vm4294 = vcmask 57344
      %vm4295 = vmand %vm4294, %vm312
      %v4296 = vld [vmem:[%s635 + $0x8] sm:$0x1]
      %v4297 = vsel %vm4295, %v3983, %v4296
      %4298 = vst [vmem:[%s635 + $0x8] sm:$0x1] %v4297
      %v4299 = vld [vmem:[%s635 + $0xc] sm:$0xf]
      %v4300 = vsel %vm4288, %v3990, %v4299
      %4301 = vst [vmem:[%s635 + $0xc] sm:$0xf] %v4300
      %4302 = vst.msk [vmem:[%s635 + $0x10] sm:$0xf] %vm4292, %v3999
      %v4303 = vld [vmem:[%s635 + $0x14] sm:$0x1]
      %v4304 = vsel %vm4295, %v4000, %v4303
      %4305 = vst [vmem:[%s635 + $0x14] sm:$0x1] %v4304
      %v4306 = vld [vmem:[%s635 + $0x18] sm:$0xf]
      %v4307 = vsel %vm4288, %v4007, %v4306
      %4308 = vst [vmem:[%s635 + $0x18] sm:$0xf] %v4307
      %4309 = vst.msk [vmem:[%s635 + $0x1c] sm:$0xf] %vm4292, %v4016
      %v4310 = vld [vmem:[%s635 + $0x20] sm:$0x1]
      %v4311 = vsel %vm4295, %v4017, %v4310
      %4312 = vst [vmem:[%s635 + $0x20] sm:$0x1] %v4311
      %v4313 = vld [vmem:[%s635 + $0x24] sm:$0xf]
      %v4314 = vsel %vm4288, %v4024, %v4313
      %4315 = vst [vmem:[%s635 + $0x24] sm:$0xf] %v4314
      %4316 = vst.msk [vmem:[%s635 + $0x28] sm:$0xf] %vm4292, %v4033
      %v4317 = vld [vmem:[%s635 + $0x2c] sm:$0x1]
      %v4318 = vsel %vm4295, %v4034, %v4317
      %4319 = vst [vmem:[%s635 + $0x2c] sm:$0x1] %v4318
      %v4320 = vld [vmem:[%s635 + $0x30] sm:$0xf]
      %v4321 = vsel %vm4288, %v4041, %v4320
      %4322 = vst [vmem:[%s635 + $0x30] sm:$0xf] %v4321
      %4323 = vst.msk [vmem:[%s635 + $0x34] sm:$0xf] %vm4292, %v4050
      %v4324 = vld [vmem:[%s635 + $0x38] sm:$0x1]
      %v4325 = vsel %vm4295, %v4051, %v4324
      %4326 = vst [vmem:[%s635 + $0x38] sm:$0x1] %v4325
      %v4327 = vld [vmem:[%s635 + $0x3c] sm:$0xf]
      %v4328 = vsel %vm4288, %v4058, %v4327
      %4329 = vst [vmem:[%s635 + $0x3c] sm:$0xf] %v4328
      %4330 = vst.msk [vmem:[%s635 + $0x40] sm:$0xf] %vm4292, %v4067
      %v4331 = vld [vmem:[%s635 + $0x44] sm:$0x1]
      %v4332 = vsel %vm4295, %v4068, %v4331
      %4333 = vst [vmem:[%s635 + $0x44] sm:$0x1] %v4332
      %v4334 = vld [vmem:[%s635 + $0x48] sm:$0xf]
      %v4335 = vsel %vm4288, %v4075, %v4334
      %4336 = vst [vmem:[%s635 + $0x48] sm:$0xf] %v4335
      %4337 = vst.msk [vmem:[%s635 + $0x4c] sm:$0xf] %vm4292, %v4084
      %v4338 = vld [vmem:[%s635 + $0x50] sm:$0x1]
      %v4339 = vsel %vm4295, %v4085, %v4338
      %4340 = vst [vmem:[%s635 + $0x50] sm:$0x1] %v4339
      %v4341 = vld [vmem:[%s635 + $0x54] sm:$0xf]
      %v4342 = vsel %vm4288, %v4092, %v4341
      %4343 = vst [vmem:[%s635 + $0x54] sm:$0xf] %v4342
      %4344 = vst.msk [vmem:[%s635 + $0x58] sm:$0xf] %vm4292, %v4101
      %v4345 = vld [vmem:[%s635 + $0x5c] sm:$0x1]
      %v4346 = vsel %vm4295, %v4102, %v4345
      %4347 = vst [vmem:[%s635 + $0x5c] sm:$0x1] %v4346
      %v4348 = vld [vmem:[%s635 + $0x60] sm:$0xf]
      %v4349 = vsel %vm4288, %v4109, %v4348
      %4350 = vst [vmem:[%s635 + $0x60] sm:$0xf] %v4349
      %4351 = vst.msk [vmem:[%s635 + $0x64] sm:$0xf] %vm4292, %v4118
      %v4352 = vld [vmem:[%s635 + $0x68] sm:$0x1]
      %v4353 = vsel %vm4295, %v4119, %v4352
      %4354 = vst [vmem:[%s635 + $0x68] sm:$0x1] %v4353
      %v4355 = vld [vmem:[%s635 + $0x6c] sm:$0xf]
      %v4356 = vsel %vm4288, %v4126, %v4355
      %4357 = vst [vmem:[%s635 + $0x6c] sm:$0xf] %v4356
      %4358 = vst.msk [vmem:[%s635 + $0x70] sm:$0xf] %vm4292, %v4135
      %v4359 = vld [vmem:[%s635 + $0x74] sm:$0x1]
      %v4360 = vsel %vm4295, %v4136, %v4359
      %4361 = vst [vmem:[%s635 + $0x74] sm:$0x1] %v4360
      %v4362 = vld [vmem:[%s635 + $0x78] sm:$0xf]
      %v4363 = vsel %vm4288, %v4143, %v4362
      %4364 = vst [vmem:[%s635 + $0x78] sm:$0xf] %v4363
      %4365 = vst.msk [vmem:[%s635 + $0x7c] sm:$0xf] %vm4292, %v4152
      %v4366 = vld [vmem:[%s635 + $0x80] sm:$0x1]
      %v4367 = vsel %vm4295, %v4153, %v4366
      %4368 = vst [vmem:[%s635 + $0x80] sm:$0x1] %v4367
      %v4369 = vld [vmem:[%s635 + $0x84] sm:$0xf]
      %v4370 = vsel %vm4288, %v4160, %v4369
      %4371 = vst [vmem:[%s635 + $0x84] sm:$0xf] %v4370
      %4372 = vst.msk [vmem:[%s635 + $0x88] sm:$0xf] %vm4292, %v4169
      %v4373 = vld [vmem:[%s635 + $0x8c] sm:$0x1]
      %v4374 = vsel %vm4295, %v4170, %v4373
      %4375 = vst [vmem:[%s635 + $0x8c] sm:$0x1] %v4374
      %v4376 = vld [vmem:[%s635 + $0x90] sm:$0xf]
      %v4377 = vsel %vm4288, %v4177, %v4376
      %4378 = vst [vmem:[%s635 + $0x90] sm:$0xf] %v4377
      %4379 = vst.msk [vmem:[%s635 + $0x94] sm:$0xf] %vm4292, %v4186
      %v4380 = vld [vmem:[%s635 + $0x98] sm:$0x1]
      %v4381 = vsel %vm4295, %v4187, %v4380
      %4382 = vst [vmem:[%s635 + $0x98] sm:$0x1] %v4381
      %v4383 = vld [vmem:[%s635 + $0x9c] sm:$0xf]
      %v4384 = vsel %vm4288, %v4194, %v4383
      %4385 = vst [vmem:[%s635 + $0x9c] sm:$0xf] %v4384
      %4386 = vst.msk [vmem:[%s635 + $0xa0] sm:$0xf] %vm4292, %v4203
      %v4387 = vld [vmem:[%s635 + $0xa4] sm:$0x1]
      %v4388 = vsel %vm4295, %v4204, %v4387
      %4389 = vst [vmem:[%s635 + $0xa4] sm:$0x1] %v4388
      %v4390 = vld [vmem:[%s635 + $0xa8] sm:$0xf]
      %v4391 = vsel %vm4288, %v4211, %v4390
      %4392 = vst [vmem:[%s635 + $0xa8] sm:$0xf] %v4391
      %4393 = vst.msk [vmem:[%s635 + $0xac] sm:$0xf] %vm4292, %v4220
      %v4394 = vld [vmem:[%s635 + $0xb0] sm:$0x1]
      %v4395 = vsel %vm4295, %v4221, %v4394
      %4396 = vst [vmem:[%s635 + $0xb0] sm:$0x1] %v4395
      %v4397 = vld [vmem:[%s635 + $0xb4] sm:$0xf]
      %v4398 = vsel %vm4288, %v4228, %v4397
      %4399 = vst [vmem:[%s635 + $0xb4] sm:$0xf] %v4398
      %4400 = vst.msk [vmem:[%s635 + $0xb8] sm:$0xf] %vm4292, %v4237
      %v4401 = vld [vmem:[%s635 + $0xbc] sm:$0x1]
      %v4402 = vsel %vm4295, %v4238, %v4401
      %4403 = vst [vmem:[%s635 + $0xbc] sm:$0x1] %v4402
      %v4404 = vld [vmem:[#allocation2] sm:$0xf]
      %v4405 = vsel %vm4288, %v3990, %v4404
      %4406 = vst [vmem:[#allocation2] sm:$0xf] %v4405
      %4407 = vst.msk [vmem:[#allocation2 + $0x4] sm:$0xf] %vm4292, %v3999
      %v4408 = vld [vmem:[#allocation2 + $0x8] sm:$0x1]
      %v4409 = vsel %vm4295, %v4000, %v4408
      %4410 = vst [vmem:[#allocation2 + $0x8] sm:$0x1] %v4409
      %v4411 = vld [vmem:[%s761] sm:$0xf]
      %v4412 = vsel %vm4288, %v4211, %v4411
      %4413 = vst [vmem:[%s761] sm:$0xf] %v4412
      %4414 = vst.msk [vmem:[%s761 + $0x4] sm:$0xf] %vm4292, %v4220
      %v4415 = vld [vmem:[%s761 + $0x8] sm:$0x1]
      %v4416 = vsel %vm4295, %v4221, %v4415
      %4417 = vst [vmem:[%s761 + $0x8] sm:$0x1] %v4416
      %v4418 = vld [vmem:[#allocation2] sm:$0x2]
      %v4419 = vld [vmem:[#allocation2 + $0xc] sm:$0x2]
      %v4420 = vld [vmem:[#allocation2 + $0x18] sm:$0x2]
      %v4421 = vld [vmem:[#allocation2 + $0x24] sm:$0x2]
      %v4422 = vld [vmem:[#allocation2 + $0x30] sm:$0x2]
      %v4423 = vld [vmem:[#allocation2 + $0x3c] sm:$0x2]
      %v4424 = vld [vmem:[#allocation2 + $0x48] sm:$0x2]
      %v4425 = vld [vmem:[#allocation2 + $0x54] sm:$0x2]
      %v4426 = vld [vmem:[#allocation2 + $0x60] sm:$0x2]
      %v4427 = vld [vmem:[#allocation2 + $0x6c] sm:$0x2]
      %v4428 = vld [vmem:[#allocation2 + $0x78] sm:$0x2]
      %v4429 = vld [vmem:[#allocation2 + $0x84] sm:$0x2]
      %v4430 = vld [vmem:[#allocation2 + $0x90] sm:$0x2]
      %v4431 = vld [vmem:[#allocation2 + $0x9c] sm:$0x2]
      %v4432 = vld [vmem:[#allocation2 + $0xa8] sm:$0x2]
      %v4433 = vld [vmem:[#allocation2 + $0xb4] sm:$0x2]
      %v4434 = vld [vmem:[#allocation2 + $0xc0] sm:$0x2]
      %v4435 = vld [vmem:[#allocation2 + $0xcc] sm:$0x2]
      %v4454 = vrot.slane %v4418, 5
      %v4455 = vrot.slane %v4454, 4
      %v4456 = vrot.slane %v4419, 5
      %v4457 = vrot.slane %v4456, 4
      %v4458 = vrot.slane %v4420, 5
      %v4459 = vrot.slane %v4458, 4
      %v4460 = vrot.slane %v4421, 5
      %v4461 = vrot.slane %v4460, 4
      %v4462 = vrot.slane %v4422, 5
      %v4463 = vrot.slane %v4462, 4
      %v4464 = vrot.slane %v4423, 5
      %v4465 = vrot.slane %v4464, 4
      %v4466 = vrot.slane %v4424, 5
      %v4467 = vrot.slane %v4466, 4
      %v4468 = vrot.slane %v4425, 5
      %v4469 = vrot.slane %v4468, 4
      %v4470 = vrot.slane %v4426, 5
      %v4471 = vrot.slane %v4470, 4
      %v4472 = vrot.slane %v4427, 5
      %v4473 = vrot.slane %v4472, 4
      %v4474 = vrot.slane %v4428, 5
      %v4475 = vrot.slane %v4474, 4
      %v4476 = vrot.slane %v4429, 5
      %v4477 = vrot.slane %v4476, 4
      %v4478 = vrot.slane %v4430, 5
      %v4479 = vrot.slane %v4478, 4
      %v4480 = vrot.slane %v4431, 5
      %v4481 = vrot.slane %v4480, 4
      %v4482 = vrot.slane %v4432, 5
      %v4483 = vrot.slane %v4482, 4
      %v4484 = vrot.slane %v4433, 5
      %v4485 = vrot.slane %v4484, 4
      %v4486 = vrot.slane %v4434, 5
      %v4487 = vrot.slane %v4486, 4
      %v4488 = vrot.slane %v4435, 5
      %v4489 = vrot.slane %v4488, 4
      %v4508 = vld [vmem:[#allocation2] sm:$0x1]
      %v4509 = vsel %vm4295, %v4455, %v4508
      %4510 = vst [vmem:[#allocation2] sm:$0x1] %v4509
      %v4511 = vld [vmem:[#allocation2 + $0xc] sm:$0x1]
      %v4512 = vsel %vm4295, %v4457, %v4511
      %4513 = vst [vmem:[#allocation2 + $0xc] sm:$0x1] %v4512
      %v4514 = vld [vmem:[#allocation2 + $0x18] sm:$0x1]
      %v4515 = vsel %vm4295, %v4459, %v4514
      %4516 = vst [vmem:[#allocation2 + $0x18] sm:$0x1] %v4515
      %v4517 = vld [vmem:[#allocation2 + $0x24] sm:$0x1]
      %v4518 = vsel %vm4295, %v4461, %v4517
      %4519 = vst [vmem:[#allocation2 + $0x24] sm:$0x1] %v4518
      %v4520 = vld [vmem:[#allocation2 + $0x30] sm:$0x1]
      %v4521 = vsel %vm4295, %v4463, %v4520
      %4522 = vst [vmem:[#allocation2 + $0x30] sm:$0x1] %v4521
      %v4523 = vld [vmem:[#allocation2 + $0x3c] sm:$0x1]
      %v4524 = vsel %vm4295, %v4465, %v4523
      %4525 = vst [vmem:[#allocation2 + $0x3c] sm:$0x1] %v4524
      %v4526 = vld [vmem:[#allocation2 + $0x48] sm:$0x1]
      %v4527 = vsel %vm4295, %v4467, %v4526
      %4528 = vst [vmem:[#allocation2 + $0x48] sm:$0x1] %v4527
      %v4529 = vld [vmem:[#allocation2 + $0x54] sm:$0x1]
      %v4530 = vsel %vm4295, %v4469, %v4529
      %4531 = vst [vmem:[#allocation2 + $0x54] sm:$0x1] %v4530
      %v4532 = vld [vmem:[#allocation2 + $0x60] sm:$0x1]
      %v4533 = vsel %vm4295, %v4471, %v4532
      %4534 = vst [vmem:[#allocation2 + $0x60] sm:$0x1] %v4533
      %v4535 = vld [vmem:[#allocation2 + $0x6c] sm:$0x1]
      %v4536 = vsel %vm4295, %v4473, %v4535
      %4537 = vst [vmem:[#allocation2 + $0x6c] sm:$0x1] %v4536
      %v4538 = vld [vmem:[#allocation2 + $0x78] sm:$0x1]
      %v4539 = vsel %vm4295, %v4475, %v4538
      %4540 = vst [vmem:[#allocation2 + $0x78] sm:$0x1] %v4539
      %v4541 = vld [vmem:[#allocation2 + $0x84] sm:$0x1]
      %v4542 = vsel %vm4295, %v4477, %v4541
      %4543 = vst [vmem:[#allocation2 + $0x84] sm:$0x1] %v4542
      %v4544 = vld [vmem:[#allocation2 + $0x90] sm:$0x1]
      %v4545 = vsel %vm4295, %v4479, %v4544
      %4546 = vst [vmem:[#allocation2 + $0x90] sm:$0x1] %v4545
      %v4547 = vld [vmem:[#allocation2 + $0x9c] sm:$0x1]
      %v4548 = vsel %vm4295, %v4481, %v4547
      %4549 = vst [vmem:[#allocation2 + $0x9c] sm:$0x1] %v4548
      %v4550 = vld [vmem:[#allocation2 + $0xa8] sm:$0x1]
      %v4551 = vsel %vm4295, %v4483, %v4550
      %4552 = vst [vmem:[#allocation2 + $0xa8] sm:$0x1] %v4551
      %v4553 = vld [vmem:[#allocation2 + $0xb4] sm:$0x1]
      %v4554 = vsel %vm4295, %v4485, %v4553
      %4555 = vst [vmem:[#allocation2 + $0xb4] sm:$0x1] %v4554
      %v4556 = vld [vmem:[#allocation2 + $0xc0] sm:$0x1]
      %v4557 = vsel %vm4295, %v4487, %v4556
      %4558 = vst [vmem:[#allocation2 + $0xc0] sm:$0x1] %v4557
      %v4559 = vld [vmem:[#allocation2 + $0xcc] sm:$0x1]
      %v4560 = vsel %vm4295, %v4489, %v4559
      %4561 = vst [vmem:[#allocation2 + $0xcc] sm:$0x1] %v4560
      %v4562 = vld [vmem:[#allocation2 + $0x4] sm:$0x8]
      %v4563 = vld [vmem:[#allocation2 + $0x10] sm:$0x8]
      %v4564 = vld [vmem:[#allocation2 + $0x1c] sm:$0x8]
      %v4565 = vld [vmem:[#allocation2 + $0x28] sm:$0x8]
      %v4566 = vld [vmem:[#allocation2 + $0x34] sm:$0x8]
      %v4567 = vld [vmem:[#allocation2 + $0x40] sm:$0x8]
      %v4568 = vld [vmem:[#allocation2 + $0x4c] sm:$0x8]
      %v4569 = vld [vmem:[#allocation2 + $0x58] sm:$0x8]
      %v4570 = vld [vmem:[#allocation2 + $0x64] sm:$0x8]
      %v4571 = vld [vmem:[#allocation2 + $0x70] sm:$0x8]
      %v4572 = vld [vmem:[#allocation2 + $0x7c] sm:$0x8]
      %v4573 = vld [vmem:[#allocation2 + $0x88] sm:$0x8]
      %v4574 = vld [vmem:[#allocation2 + $0x94] sm:$0x8]
      %v4575 = vld [vmem:[#allocation2 + $0xa0] sm:$0x8]
      %v4576 = vld [vmem:[#allocation2 + $0xac] sm:$0x8]
      %v4577 = vld [vmem:[#allocation2 + $0xb8] sm:$0x8]
      %v4578 = vld [vmem:[#allocation2 + $0xc4] sm:$0x8]
      %v4579 = vld [vmem:[#allocation2 + $0xd0] sm:$0x8]
      %v4598 = vrot.slane %v4562, 7
      %v4599 = vrot.slane %v4598, 4
      %v4600 = vrot.slane %v4563, 7
      %v4601 = vrot.slane %v4600, 4
      %v4602 = vrot.slane %v4564, 7
      %v4603 = vrot.slane %v4602, 4
      %v4604 = vrot.slane %v4565, 7
      %v4605 = vrot.slane %v4604, 4
      %v4606 = vrot.slane %v4566, 7
      %v4607 = vrot.slane %v4606, 4
      %v4608 = vrot.slane %v4567, 7
      %v4609 = vrot.slane %v4608, 4
      %v4610 = vrot.slane %v4568, 7
      %v4611 = vrot.slane %v4610, 4
      %v4612 = vrot.slane %v4569, 7
      %v4613 = vrot.slane %v4612, 4
      %v4614 = vrot.slane %v4570, 7
      %v4615 = vrot.slane %v4614, 4
      %v4616 = vrot.slane %v4571, 7
      %v4617 = vrot.slane %v4616, 4
      %v4618 = vrot.slane %v4572, 7
      %v4619 = vrot.slane %v4618, 4
      %v4620 = vrot.slane %v4573, 7
      %v4621 = vrot.slane %v4620, 4
      %v4622 = vrot.slane %v4574, 7
      %v4623 = vrot.slane %v4622, 4
      %v4624 = vrot.slane %v4575, 7
      %v4625 = vrot.slane %v4624, 4
      %v4626 = vrot.slane %v4576, 7
      %v4627 = vrot.slane %v4626, 4
      %v4628 = vrot.slane %v4577, 7
      %v4629 = vrot.slane %v4628, 4
      %v4630 = vrot.slane %v4578, 7
      %v4631 = vrot.slane %v4630, 4
      %v4632 = vrot.slane %v4579, 7
      %v4633 = vrot.slane %v4632, 4
      %vm4652 = vmand %vm4294, %vm637
      %v4653 = vld [vmem:[#allocation2 + $0x8] sm:$0x1]
      %v4654 = vsel %vm4652, %v4599, %v4653
      %4655 = vst [vmem:[#allocation2 + $0x8] sm:$0x1] %v4654
      %v4656 = vld [vmem:[#allocation2 + $0x14] sm:$0x1]
      %v4657 = vsel %vm4652, %v4601, %v4656
      %4658 = vst [vmem:[#allocation2 + $0x14] sm:$0x1] %v4657
      %v4659 = vld [vmem:[#allocation2 + $0x20] sm:$0x1]
      %v4660 = vsel %vm4652, %v4603, %v4659
      %4661 = vst [vmem:[#allocation2 + $0x20] sm:$0x1] %v4660
      %v4662 = vld [vmem:[#allocation2 + $0x2c] sm:$0x1]
      %v4663 = vsel %vm4652, %v4605, %v4662
      %4664 = vst [vmem:[#allocation2 + $0x2c] sm:$0x1] %v4663
      %v4665 = vld [vmem:[#allocation2 + $0x38] sm:$0x1]
      %v4666 = vsel %vm4652, %v4607, %v4665
      %4667 = vst [vmem:[#allocation2 + $0x38] sm:$0x1] %v4666
      %v4668 = vld [vmem:[#allocation2 + $0x44] sm:$0x1]
      %v4669 = vsel %vm4652, %v4609, %v4668
      %4670 = vst [vmem:[#allocation2 + $0x44] sm:$0x1] %v4669
      %v4671 = vld [vmem:[#allocation2 + $0x50] sm:$0x1]
      %v4672 = vsel %vm4652, %v4611, %v4671
      %4673 = vst [vmem:[#allocation2 + $0x50] sm:$0x1] %v4672
      %v4674 = vld [vmem:[#allocation2 + $0x5c] sm:$0x1]
      %v4675 = vsel %vm4652, %v4613, %v4674
      %4676 = vst [vmem:[#allocation2 + $0x5c] sm:$0x1] %v4675
      %v4677 = vld [vmem:[#allocation2 + $0x68] sm:$0x1]
      %v4678 = vsel %vm4652, %v4615, %v4677
      %4679 = vst [vmem:[#allocation2 + $0x68] sm:$0x1] %v4678
      %v4680 = vld [vmem:[#allocation2 + $0x74] sm:$0x1]
      %v4681 = vsel %vm4652, %v4617, %v4680
      %4682 = vst [vmem:[#allocation2 + $0x74] sm:$0x1] %v4681
      %v4683 = vld [vmem:[#allocation2 + $0x80] sm:$0x1]
      %v4684 = vsel %vm4652, %v4619, %v4683
      %4685 = vst [vmem:[#allocation2 + $0x80] sm:$0x1] %v4684
      %v4686 = vld [vmem:[#allocation2 + $0x8c] sm:$0x1]
      %v4687 = vsel %vm4652, %v4621, %v4686
      %4688 = vst [vmem:[#allocation2 + $0x8c] sm:$0x1] %v4687
      %v4689 = vld [vmem:[#allocation2 + $0x98] sm:$0x1]
      %v4690 = vsel %vm4652, %v4623, %v4689
      %4691 = vst [vmem:[#allocation2 + $0x98] sm:$0x1] %v4690
      %v4692 = vld [vmem:[#allocation2 + $0xa4] sm:$0x1]
      %v4693 = vsel %vm4652, %v4625, %v4692
      %4694 = vst [vmem:[#allocation2 + $0xa4] sm:$0x1] %v4693
      %v4695 = vld [vmem:[#allocation2 + $0xb0] sm:$0x1]
      %v4696 = vsel %vm4652, %v4627, %v4695
      %4697 = vst [vmem:[#allocation2 + $0xb0] sm:$0x1] %v4696
      %v4698 = vld [vmem:[#allocation2 + $0xbc] sm:$0x1]
      %v4699 = vsel %vm4652, %v4629, %v4698
      %4700 = vst [vmem:[#allocation2 + $0xbc] sm:$0x1] %v4699
      %v4701 = vld [vmem:[#allocation2 + $0xc8] sm:$0x1]
      %v4702 = vsel %vm4652, %v4631, %v4701
      %4703 = vst [vmem:[#allocation2 + $0xc8] sm:$0x1] %v4702
      %v4704 = vld [vmem:[#allocation2 + $0xd4] sm:$0x1]
      %v4705 = vsel %vm4652, %v4633, %v4704
      %4706 = vst [vmem:[#allocation2 + $0xd4] sm:$0x1] %v4705
      %v4707 = vld [vmem:[#allocation2] sm:$0xf]
      %v4708 = vld [vmem:[#allocation2 + $0x4] sm:$0xf]
      %v4709 = vld [vmem:[#allocation2 + $0xc] sm:$0xf]
      %v4710 = vld [vmem:[#allocation2 + $0x10] sm:$0xf]
      %v4711 = vld [vmem:[#allocation2 + $0x18] sm:$0xf]
      %v4712 = vld [vmem:[#allocation2 + $0x1c] sm:$0xf]
      %v4713 = vld [vmem:[#allocation2 + $0x24] sm:$0xf]
      %v4714 = vld [vmem:[#allocation2 + $0x28] sm:$0xf]
      %v4715 = vld [vmem:[#allocation2 + $0x30] sm:$0xf]
      %v4716 = vld [vmem:[#allocation2 + $0x34] sm:$0xf]
      %v4717 = vld [vmem:[#allocation2 + $0x3c] sm:$0xf]
      %v4718 = vld [vmem:[#allocation2 + $0x40] sm:$0xf]
      %v4719 = vld [vmem:[#allocation2 + $0x48] sm:$0xf]
      %v4720 = vld [vmem:[#allocation2 + $0x4c] sm:$0xf]
      %v4721 = vld [vmem:[#allocation2 + $0x54] sm:$0xf]
      %v4722 = vld [vmem:[#allocation2 + $0x58] sm:$0xf]
      %v4723 = vld [vmem:[#allocation2 + $0x60] sm:$0xf]
      %v4724 = vld [vmem:[#allocation2 + $0x64] sm:$0xf]
      %v4725 = vld [vmem:[#allocation2 + $0x6c] sm:$0xf]
      %v4726 = vld [vmem:[#allocation2 + $0x70] sm:$0xf]
      %v4727 = vld [vmem:[#allocation2 + $0x78] sm:$0xf]
      %v4728 = vld [vmem:[#allocation2 + $0x7c] sm:$0xf]
      %v4729 = vld [vmem:[#allocation2 + $0x84] sm:$0xf]
      %v4730 = vld [vmem:[#allocation2 + $0x88] sm:$0xf]
      %v4731 = vld [vmem:[#allocation2 + $0x90] sm:$0xf]
      %v4732 = vld [vmem:[#allocation2 + $0x94] sm:$0xf]
      %v4733 = vld [vmem:[#allocation2 + $0x9c] sm:$0xf]
      %v4734 = vld [vmem:[#allocation2 + $0xa0] sm:$0xf]
      %v4735 = vld [vmem:[#allocation2 + $0xa8] sm:$0xf]
      %v4736 = vld [vmem:[#allocation2 + $0xac] sm:$0xf]
      %v4737 = vld [vmem:[#allocation2 + $0xb4] sm:$0xf]
      %v4738 = vld [vmem:[#allocation2 + $0xb8] sm:$0xf]
      %v4739 = vld [vmem:[#allocation2 + $0xc0] sm:$0xf]
      %v4740 = vld [vmem:[#allocation2 + $0xc4] sm:$0xf]
      %v4741 = vld [vmem:[#allocation2 + $0xcc] sm:$0xf]
      %v4742 = vld [vmem:[#allocation2 + $0xd0] sm:$0xf]
      %4743 = vst.msk [vmem:[#allocation3] sm:$0xf] %vm4292, %v4707
      %4744 = vst.msk [vmem:[#allocation3 + $0x4] sm:$0xf] %vm4292, %v4708
      %4745 = vst.msk [vmem:[#allocation3 + $0x8] sm:$0xf] %vm4292, %v4709
      %4746 = vst.msk [vmem:[#allocation3 + $0xc] sm:$0xf] %vm4292, %v4710
      %4747 = vst.msk [vmem:[#allocation3 + $0x10] sm:$0xf] %vm4292, %v4711
      %4748 = vst.msk [vmem:[#allocation3 + $0x14] sm:$0xf] %vm4292, %v4712
      %4749 = vst.msk [vmem:[#allocation3 + $0x18] sm:$0xf] %vm4292, %v4713
      %4750 = vst.msk [vmem:[#allocation3 + $0x1c] sm:$0xf] %vm4292, %v4714
      %4751 = vst.msk [vmem:[#allocation3 + $0x20] sm:$0xf] %vm4292, %v4715
      %4752 = vst.msk [vmem:[#allocation3 + $0x24] sm:$0xf] %vm4292, %v4716
      %4753 = vst.msk [vmem:[#allocation3 + $0x28] sm:$0xf] %vm4292, %v4717
      %4754 = vst.msk [vmem:[#allocation3 + $0x2c] sm:$0xf] %vm4292, %v4718
      %4755 = vst.msk [vmem:[#allocation3 + $0x30] sm:$0xf] %vm4292, %v4719
      %4756 = vst.msk [vmem:[#allocation3 + $0x34] sm:$0xf] %vm4292, %v4720
      %4757 = vst.msk [vmem:[#allocation3 + $0x38] sm:$0xf] %vm4292, %v4721
      %4758 = vst.msk [vmem:[#allocation3 + $0x3c] sm:$0xf] %vm4292, %v4722
      %4759 = vst.msk [vmem:[#allocation3 + $0x40] sm:$0xf] %vm4292, %v4723
      %4760 = vst.msk [vmem:[#allocation3 + $0x44] sm:$0xf] %vm4292, %v4724
      %4761 = vst.msk [vmem:[#allocation3 + $0x48] sm:$0xf] %vm4292, %v4725
      %4762 = vst.msk [vmem:[#allocation3 + $0x4c] sm:$0xf] %vm4292, %v4726
      %4763 = vst.msk [vmem:[#allocation3 + $0x50] sm:$0xf] %vm4292, %v4727
      %4764 = vst.msk [vmem:[#allocation3 + $0x54] sm:$0xf] %vm4292, %v4728
      %4765 = vst.msk [vmem:[#allocation3 + $0x58] sm:$0xf] %vm4292, %v4729
      %4766 = vst.msk [vmem:[#allocation3 + $0x5c] sm:$0xf] %vm4292, %v4730
      %4767 = vst.msk [vmem:[#allocation3 + $0x60] sm:$0xf] %vm4292, %v4731
      %4768 = vst.msk [vmem:[#allocation3 + $0x64] sm:$0xf] %vm4292, %v4732
      %4769 = vst.msk [vmem:[#allocation3 + $0x68] sm:$0xf] %vm4292, %v4733
      %4770 = vst.msk [vmem:[#allocation3 + $0x6c] sm:$0xf] %vm4292, %v4734
      %4771 = vst.msk [vmem:[#allocation3 + $0x70] sm:$0xf] %vm4292, %v4735
      %4772 = vst.msk [vmem:[#allocation3 + $0x74] sm:$0xf] %vm4292, %v4736
      %4773 = vst.msk [vmem:[#allocation3 + $0x78] sm:$0xf] %vm4292, %v4737
      %4774 = vst.msk [vmem:[#allocation3 + $0x7c] sm:$0xf] %vm4292, %v4738
      %4775 = vst.msk [vmem:[#allocation3 + $0x80] sm:$0xf] %vm4292, %v4739
      %4776 = vst.msk [vmem:[#allocation3 + $0x84] sm:$0xf] %vm4292, %v4740
      %4777 = vst.msk [vmem:[#allocation3 + $0x88] sm:$0xf] %vm4292, %v4741
      %4778 = vst.msk [vmem:[#allocation3 + $0x8c] sm:$0xf] %vm4292, %v4742
      %v4779 = vld [vmem:[#allocation2] sm:$0xf]
      %v4780 = vld [vmem:[#allocation2 + $0x4] sm:$0xf]
      %v4781 = vld [vmem:[#allocation2 + $0x8] sm:$0x1]
      %v4782 = vld [vmem:[#allocation2 + $0xc] sm:$0xf]
      %v4783 = vld [vmem:[#allocation2 + $0x10] sm:$0xf]
      %v4784 = vld [vmem:[#allocation2 + $0x14] sm:$0x1]
      %v4785 = vld [vmem:[#allocation2 + $0x18] sm:$0xf]
      %v4786 = vld [vmem:[#allocation2 + $0x1c] sm:$0xf]
      %v4787 = vld [vmem:[#allocation2 + $0x20] sm:$0x1]
      %v4788 = vld [vmem:[#allocation2 + $0x24] sm:$0xf]
      %v4789 = vld [vmem:[#allocation2 + $0x28] sm:$0xf]
      %v4790 = vld [vmem:[#allocation2 + $0x2c] sm:$0x1]
      %v4791 = vld [vmem:[#allocation2 + $0x30] sm:$0xf]
      %v4792 = vld [vmem:[#allocation2 + $0x34] sm:$0xf]
      %v4793 = vld [vmem:[#allocation2 + $0x38] sm:$0x1]
      %v4794 = vld [vmem:[#allocation2 + $0x3c] sm:$0xf]
      %v4795 = vld [vmem:[#allocation2 + $0x40] sm:$0xf]
      %v4796 = vld [vmem:[#allocation2 + $0x44] sm:$0x1]
      %v4797 = vld [vmem:[#allocation2 + $0x48] sm:$0xf]
      %v4798 = vld [vmem:[#allocation2 + $0x4c] sm:$0xf]
      %v4799 = vld [vmem:[#allocation2 + $0x50] sm:$0x1]
      %v4800 = vld [vmem:[#allocation2 + $0x54] sm:$0xf]
      %v4801 = vld [vmem:[#allocation2 + $0x58] sm:$0xf]
      %v4802 = vld [vmem:[#allocation2 + $0x5c] sm:$0x1]
      %v4803 = vld [vmem:[#allocation2 + $0x60] sm:$0xf]
      %v4804 = vld [vmem:[#allocation2 + $0x64] sm:$0xf]
      %v4805 = vld [vmem:[#allocation2 + $0x68] sm:$0x1]
      %v4806 = vld [vmem:[#allocation2 + $0x6c] sm:$0xf]
      %v4807 = vld [vmem:[#allocation2 + $0x70] sm:$0xf]
      %v4808 = vld [vmem:[#allocation2 + $0x74] sm:$0x1]
      %v4809 = vld [vmem:[#allocation2 + $0x78] sm:$0xf]
      %v4810 = vld [vmem:[#allocation2 + $0x7c] sm:$0xf]
      %v4811 = vld [vmem:[#allocation2 + $0x80] sm:$0x1]
      %v4812 = vld [vmem:[#allocation2 + $0x84] sm:$0xf]
      %v4813 = vld [vmem:[#allocation2 + $0x88] sm:$0xf]
      %v4814 = vld [vmem:[#allocation2 + $0x8c] sm:$0x1]
      %v4815 = vld [vmem:[#allocation2 + $0x90] sm:$0xf]
      %v4816 = vld [vmem:[#allocation2 + $0x94] sm:$0xf]
      %v4817 = vld [vmem:[#allocation2 + $0x98] sm:$0x1]
      %v4818 = vld [vmem:[#allocation2 + $0x9c] sm:$0xf]
      %v4819 = vld [vmem:[#allocation2 + $0xa0] sm:$0xf]
      %v4820 = vld [vmem:[#allocation2 + $0xa4] sm:$0x1]
      %v4821 = vld [vmem:[#allocation2 + $0xa8] sm:$0xf]
      %v4822 = vld [vmem:[#allocation2 + $0xac] sm:$0xf]
      %v4823 = vld [vmem:[#allocation2 + $0xb0] sm:$0x1]
      %v4824 = vld [vmem:[#allocation2 + $0xb4] sm:$0xf]
      %v4825 = vld [vmem:[#allocation2 + $0xb8] sm:$0xf]
      %v4826 = vld [vmem:[#allocation2 + $0xbc] sm:$0x1]
      %v4827 = vld [vmem:[#allocation2 + $0xc0] sm:$0xf]
      %v4828 = vld [vmem:[#allocation2 + $0xc4] sm:$0xf]
      %v4829 = vld [vmem:[#allocation2 + $0xc8] sm:$0x1]
      %v4830 = vld [vmem:[#allocation2 + $0xcc] sm:$0xf]
      %v4831 = vld [vmem:[#allocation2 + $0xd0] sm:$0xf]
      %v4832 = vld [vmem:[#allocation2 + $0xd4] sm:$0x1]
      %v4834 = vshrl.u32 %v4779, 16
      %v4836 = vrot.slane %v4834, 4
      %v4837 = vshll.u32 %v4779, 16
      %v4839 = vrot.slane %v4837, 5
      %v4840 = vor.u32 %v4836, %v4839
      %v4841 = vrot.slane %v4840, 4
      %v4843 = vshll.u32 %v4780, 16
      %v4845 = vrot.slane %v4843, 5
      %v4846 = vsel %vm1186, %v4841, %v4845
      %v4847 = vshrl.u32 %v4780, 16
      %v4849 = vrot.slane %v4847, 4
      %v4850 = vor.u32 %v4849, %v4845
      %v4851 = vrot.slane %v4850, 4
      %v4853 = vshll.u32 %v4781, 16
      %v4855 = vrot.slane %v4853, 5
      %v4856 = vsel %vm1186, %v4851, %v4855
      %v4858 = vshrl.u32 %v4782, 16
      %v4860 = vrot.slane %v4858, 4
      %v4861 = vshll.u32 %v4782, 16
      %v4863 = vrot.slane %v4861, 5
      %v4864 = vor.u32 %v4860, %v4863
      %v4865 = vrot.slane %v4864, 4
      %v4867 = vshll.u32 %v4783, 16
      %v4869 = vrot.slane %v4867, 5
      %v4870 = vsel %vm1186, %v4865, %v4869
      %v4871 = vshrl.u32 %v4783, 16
      %v4873 = vrot.slane %v4871, 4
      %v4874 = vor.u32 %v4873, %v4869
      %v4875 = vrot.slane %v4874, 4
      %v4877 = vshll.u32 %v4784, 16
      %v4879 = vrot.slane %v4877, 5
      %v4880 = vsel %vm1186, %v4875, %v4879
      %v4882 = vshrl.u32 %v4785, 16
      %v4884 = vrot.slane %v4882, 4
      %v4885 = vshll.u32 %v4785, 16
      %v4887 = vrot.slane %v4885, 5
      %v4888 = vor.u32 %v4884, %v4887
      %v4889 = vrot.slane %v4888, 4
      %v4891 = vshll.u32 %v4786, 16
      %v4893 = vrot.slane %v4891, 5
      %v4894 = vsel %vm1186, %v4889, %v4893
      %v4895 = vshrl.u32 %v4786, 16
      %v4897 = vrot.slane %v4895, 4
      %v4898 = vor.u32 %v4897, %v4893
      %v4899 = vrot.slane %v4898, 4
      %v4901 = vshll.u32 %v4787, 16
      %v4903 = vrot.slane %v4901, 5
      %v4904 = vsel %vm1186, %v4899, %v4903
      %v4906 = vshrl.u32 %v4788, 16
      %v4908 = vrot.slane %v4906, 4
      %v4909 = vshll.u32 %v4788, 16
      %v4911 = vrot.slane %v4909, 5
      %v4912 = vor.u32 %v4908, %v4911
      %v4913 = vrot.slane %v4912, 4
      %v4915 = vshll.u32 %v4789, 16
      %v4917 = vrot.slane %v4915, 5
      %v4918 = vsel %vm1186, %v4913, %v4917
      %v4919 = vshrl.u32 %v4789, 16
      %v4921 = vrot.slane %v4919, 4
      %v4922 = vor.u32 %v4921, %v4917
      %v4923 = vrot.slane %v4922, 4
      %v4925 = vshll.u32 %v4790, 16
      %v4927 = vrot.slane %v4925, 5
      %v4928 = vsel %vm1186, %v4923, %v4927
      %v4930 = vshrl.u32 %v4791, 16
      %v4932 = vrot.slane %v4930, 4
      %v4933 = vshll.u32 %v4791, 16
      %v4935 = vrot.slane %v4933, 5
      %v4936 = vor.u32 %v4932, %v4935
      %v4937 = vrot.slane %v4936, 4
      %v4939 = vshll.u32 %v4792, 16
      %v4941 = vrot.slane %v4939, 5
      %v4942 = vsel %vm1186, %v4937, %v4941
      %v4943 = vshrl.u32 %v4792, 16
      %v4945 = vrot.slane %v4943, 4
      %v4946 = vor.u32 %v4945, %v4941
      %v4947 = vrot.slane %v4946, 4
      %v4949 = vshll.u32 %v4793, 16
      %v4951 = vrot.slane %v4949, 5
      %v4952 = vsel %vm1186, %v4947, %v4951
      %v4954 = vshrl.u32 %v4794, 16
      %v4956 = vrot.slane %v4954, 4
      %v4957 = vshll.u32 %v4794, 16
      %v4959 = vrot.slane %v4957, 5
      %v4960 = vor.u32 %v4956, %v4959
      %v4961 = vrot.slane %v4960, 4
      %v4963 = vshll.u32 %v4795, 16
      %v4965 = vrot.slane %v4963, 5
      %v4966 = vsel %vm1186, %v4961, %v4965
      %v4967 = vshrl.u32 %v4795, 16
      %v4969 = vrot.slane %v4967, 4
      %v4970 = vor.u32 %v4969, %v4965
      %v4971 = vrot.slane %v4970, 4
      %v4973 = vshll.u32 %v4796, 16
      %v4975 = vrot.slane %v4973, 5
      %v4976 = vsel %vm1186, %v4971, %v4975
      %v4978 = vshrl.u32 %v4797, 16
      %v4980 = vrot.slane %v4978, 4
      %v4981 = vshll.u32 %v4797, 16
      %v4983 = vrot.slane %v4981, 5
      %v4984 = vor.u32 %v4980, %v4983
      %v4985 = vrot.slane %v4984, 4
      %v4987 = vshll.u32 %v4798, 16
      %v4989 = vrot.slane %v4987, 5
      %v4990 = vsel %vm1186, %v4985, %v4989
      %v4991 = vshrl.u32 %v4798, 16
      %v4993 = vrot.slane %v4991, 4
      %v4994 = vor.u32 %v4993, %v4989
      %v4995 = vrot.slane %v4994, 4
      %v4997 = vshll.u32 %v4799, 16
      %v4999 = vrot.slane %v4997, 5
      %v5000 = vsel %vm1186, %v4995, %v4999
      %v5002 = vshrl.u32 %v4800, 16
      %v5004 = vrot.slane %v5002, 4
      %v5005 = vshll.u32 %v4800, 16
      %v5007 = vrot.slane %v5005, 5
      %v5008 = vor.u32 %v5004, %v5007
      %v5009 = vrot.slane %v5008, 4
      %v5011 = vshll.u32 %v4801, 16
      %v5013 = vrot.slane %v5011, 5
      %v5014 = vsel %vm1186, %v5009, %v5013
      %v5015 = vshrl.u32 %v4801, 16
      %v5017 = vrot.slane %v5015, 4
      %v5018 = vor.u32 %v5017, %v5013
      %v5019 = vrot.slane %v5018, 4
      %v5021 = vshll.u32 %v4802, 16
      %v5023 = vrot.slane %v5021, 5
      %v5024 = vsel %vm1186, %v5019, %v5023
      %v5026 = vshrl.u32 %v4803, 16
      %v5028 = vrot.slane %v5026, 4
      %v5029 = vshll.u32 %v4803, 16
      %v5031 = vrot.slane %v5029, 5
      %v5032 = vor.u32 %v5028, %v5031
      %v5033 = vrot.slane %v5032, 4
      %v5035 = vshll.u32 %v4804, 16
      %v5037 = vrot.slane %v5035, 5
      %v5038 = vsel %vm1186, %v5033, %v5037
      %v5039 = vshrl.u32 %v4804, 16
      %v5041 = vrot.slane %v5039, 4
      %v5042 = vor.u32 %v5041, %v5037
      %v5043 = vrot.slane %v5042, 4
      %v5045 = vshll.u32 %v4805, 16
      %v5047 = vrot.slane %v5045, 5
      %v5048 = vsel %vm1186, %v5043, %v5047
      %v5050 = vshrl.u32 %v4806, 16
      %v5052 = vrot.slane %v5050, 4
      %v5053 = vshll.u32 %v4806, 16
      %v5055 = vrot.slane %v5053, 5
      %v5056 = vor.u32 %v5052, %v5055
      %v5057 = vrot.slane %v5056, 4
      %v5059 = vshll.u32 %v4807, 16
      %v5061 = vrot.slane %v5059, 5
      %v5062 = vsel %vm1186, %v5057, %v5061
      %v5063 = vshrl.u32 %v4807, 16
      %v5065 = vrot.slane %v5063, 4
      %v5066 = vor.u32 %v5065, %v5061
      %v5067 = vrot.slane %v5066, 4
      %v5069 = vshll.u32 %v4808, 16
      %v5071 = vrot.slane %v5069, 5
      %v5072 = vsel %vm1186, %v5067, %v5071
      %v5074 = vshrl.u32 %v4809, 16
      %v5076 = vrot.slane %v5074, 4
      %v5077 = vshll.u32 %v4809, 16
      %v5079 = vrot.slane %v5077, 5
      %v5080 = vor.u32 %v5076, %v5079
      %v5081 = vrot.slane %v5080, 4
      %v5083 = vshll.u32 %v4810, 16
      %v5085 = vrot.slane %v5083, 5
      %v5086 = vsel %vm1186, %v5081, %v5085
      %v5087 = vshrl.u32 %v4810, 16
      %v5089 = vrot.slane %v5087, 4
      %v5090 = vor.u32 %v5089, %v5085
      %v5091 = vrot.slane %v5090, 4
      %v5093 = vshll.u32 %v4811, 16
      %v5095 = vrot.slane %v5093, 5
      %v5096 = vsel %vm1186, %v5091, %v5095
      %v5098 = vshrl.u32 %v4812, 16
      %v5100 = vrot.slane %v5098, 4
      %v5101 = vshll.u32 %v4812, 16
      %v5103 = vrot.slane %v5101, 5
      %v5104 = vor.u32 %v5100, %v5103
      %v5105 = vrot.slane %v5104, 4
      %v5107 = vshll.u32 %v4813, 16
      %v5109 = vrot.slane %v5107, 5
      %v5110 = vsel %vm1186, %v5105, %v5109
      %v5111 = vshrl.u32 %v4813, 16
      %v5113 = vrot.slane %v5111, 4
      %v5114 = vor.u32 %v5113, %v5109
      %v5115 = vrot.slane %v5114, 4
      %v5117 = vshll.u32 %v4814, 16
      %v5119 = vrot.slane %v5117, 5
      %v5120 = vsel %vm1186, %v5115, %v5119
      %v5122 = vshrl.u32 %v4815, 16
      %v5124 = vrot.slane %v5122, 4
      %v5125 = vshll.u32 %v4815, 16
      %v5127 = vrot.slane %v5125, 5
      %v5128 = vor.u32 %v5124, %v5127
      %v5129 = vrot.slane %v5128, 4
      %v5131 = vshll.u32 %v4816, 16
      %v5133 = vrot.slane %v5131, 5
      %v5134 = vsel %vm1186, %v5129, %v5133
      %v5135 = vshrl.u32 %v4816, 16
      %v5137 = vrot.slane %v5135, 4
      %v5138 = vor.u32 %v5137, %v5133
      %v5139 = vrot.slane %v5138, 4
      %v5141 = vshll.u32 %v4817, 16
      %v5143 = vrot.slane %v5141, 5
      %v5144 = vsel %vm1186, %v5139, %v5143
      %v5146 = vshrl.u32 %v4818, 16
      %v5148 = vrot.slane %v5146, 4
      %v5149 = vshll.u32 %v4818, 16
      %v5151 = vrot.slane %v5149, 5
      %v5152 = vor.u32 %v5148, %v5151
      %v5153 = vrot.slane %v5152, 4
      %v5155 = vshll.u32 %v4819, 16
      %v5157 = vrot.slane %v5155, 5
      %v5158 = vsel %vm1186, %v5153, %v5157
      %v5159 = vshrl.u32 %v4819, 16
      %v5161 = vrot.slane %v5159, 4
      %v5162 = vor.u32 %v5161, %v5157
      %v5163 = vrot.slane %v5162, 4
      %v5165 = vshll.u32 %v4820, 16
      %v5167 = vrot.slane %v5165, 5
      %v5168 = vsel %vm1186, %v5163, %v5167
      %v5170 = vshrl.u32 %v4821, 16
      %v5172 = vrot.slane %v5170, 4
      %v5173 = vshll.u32 %v4821, 16
      %v5175 = vrot.slane %v5173, 5
      %v5176 = vor.u32 %v5172, %v5175
      %v5177 = vrot.slane %v5176, 4
      %v5179 = vshll.u32 %v4822, 16
      %v5181 = vrot.slane %v5179, 5
      %v5182 = vsel %vm1186, %v5177, %v5181
      %v5183 = vshrl.u32 %v4822, 16
      %v5185 = vrot.slane %v5183, 4
      %v5186 = vor.u32 %v5185, %v5181
      %v5187 = vrot.slane %v5186, 4
      %v5189 = vshll.u32 %v4823, 16
      %v5191 = vrot.slane %v5189, 5
      %v5192 = vsel %vm1186, %v5187, %v5191
      %v5194 = vshrl.u32 %v4824, 16
      %v5196 = vrot.slane %v5194, 4
      %v5197 = vshll.u32 %v4824, 16
      %v5199 = vrot.slane %v5197, 5
      %v5200 = vor.u32 %v5196, %v5199
      %v5201 = vrot.slane %v5200, 4
      %v5203 = vshll.u32 %v4825, 16
      %v5205 = vrot.slane %v5203, 5
      %v5206 = vsel %vm1186, %v5201, %v5205
      %v5207 = vshrl.u32 %v4825, 16
      %v5209 = vrot.slane %v5207, 4
      %v5210 = vor.u32 %v5209, %v5205
      %v5211 = vrot.slane %v5210, 4
      %v5213 = vshll.u32 %v4826, 16
      %v5215 = vrot.slane %v5213, 5
      %v5216 = vsel %vm1186, %v5211, %v5215
      %v5218 = vshrl.u32 %v4827, 16
      %v5220 = vrot.slane %v5218, 4
      %v5221 = vshll.u32 %v4827, 16
      %v5223 = vrot.slane %v5221, 5
      %v5224 = vor.u32 %v5220, %v5223
      %v5225 = vrot.slane %v5224, 4
      %v5227 = vshll.u32 %v4828, 16
      %v5229 = vrot.slane %v5227, 5
      %v5230 = vsel %vm1186, %v5225, %v5229
      %v5231 = vshrl.u32 %v4828, 16
      %v5233 = vrot.slane %v5231, 4
      %v5234 = vor.u32 %v5233, %v5229
      %v5235 = vrot.slane %v5234, 4
      %v5237 = vshll.u32 %v4829, 16
      %v5239 = vrot.slane %v5237, 5
      %v5240 = vsel %vm1186, %v5235, %v5239
      %v5242 = vshrl.u32 %v4830, 16
      %v5244 = vrot.slane %v5242, 4
      %v5245 = vshll.u32 %v4830, 16
      %v5247 = vrot.slane %v5245, 5
      %v5248 = vor.u32 %v5244, %v5247
      %v5249 = vrot.slane %v5248, 4
      %v5251 = vshll.u32 %v4831, 16
      %v5253 = vrot.slane %v5251, 5
      %v5254 = vsel %vm1186, %v5249, %v5253
      %v5255 = vshrl.u32 %v4831, 16
      %v5257 = vrot.slane %v5255, 4
      %v5258 = vor.u32 %v5257, %v5253
      %v5259 = vrot.slane %v5258, 4
      %v5261 = vshll.u32 %v4832, 16
      %v5263 = vrot.slane %v5261, 5
      %v5264 = vsel %vm1186, %v5259, %v5263
      %5265 = vrot.lane.b32.xlu0 %v4846, 8
      %v5266 = vpop.permute.xlu0 %5265
      %5267 = vrot.lane.b32.xlu0 %v4856, 8
      %v5268 = vpop.permute.xlu0 %5267
      %5269 = vrot.lane.b32.xlu0 %v4870, 8
      %v5270 = vpop.permute.xlu0 %5269
      %5271 = vrot.lane.b32.xlu0 %v4880, 8
      %v5272 = vpop.permute.xlu0 %5271
      %5273 = vrot.lane.b32.xlu0 %v4894, 8
      %v5274 = vpop.permute.xlu0 %5273
      %5275 = vrot.lane.b32.xlu0 %v4904, 8
      %v5276 = vpop.permute.xlu0 %5275
      %5277 = vrot.lane.b32.xlu0 %v4918, 8
      %v5278 = vpop.permute.xlu0 %5277
      %5279 = vrot.lane.b32.xlu0 %v4928, 8
      %v5280 = vpop.permute.xlu0 %5279
      %5281 = vrot.lane.b32.xlu0 %v4942, 8
      %v5282 = vpop.permute.xlu0 %5281
      %5283 = vrot.lane.b32.xlu0 %v4952, 8
      %v5284 = vpop.permute.xlu0 %5283
      %5285 = vrot.lane.b32.xlu0 %v4966, 8
      %v5286 = vpop.permute.xlu0 %5285
      %5287 = vrot.lane.b32.xlu0 %v4976, 8
      %v5288 = vpop.permute.xlu0 %5287
      %5289 = vrot.lane.b32.xlu0 %v4990, 8
      %v5290 = vpop.permute.xlu0 %5289
      %5291 = vrot.lane.b32.xlu0 %v5000, 8
      %v5292 = vpop.permute.xlu0 %5291
      %5293 = vrot.lane.b32.xlu0 %v5014, 8
      %v5294 = vpop.permute.xlu0 %5293
      %5295 = vrot.lane.b32.xlu0 %v5024, 8
      %v5296 = vpop.permute.xlu0 %5295
      %5297 = vrot.lane.b32.xlu0 %v5038, 8
      %v5298 = vpop.permute.xlu0 %5297
      %5299 = vrot.lane.b32.xlu0 %v5048, 8
      %v5300 = vpop.permute.xlu0 %5299
      %5301 = vrot.lane.b32.xlu0 %v5062, 8
      %v5302 = vpop.permute.xlu0 %5301
      %5303 = vrot.lane.b32.xlu0 %v5072, 8
      %v5304 = vpop.permute.xlu0 %5303
      %5305 = vrot.lane.b32.xlu0 %v5086, 8
      %v5306 = vpop.permute.xlu0 %5305
      %5307 = vrot.lane.b32.xlu0 %v5096, 8
      %v5308 = vpop.permute.xlu0 %5307
      %5309 = vrot.lane.b32.xlu0 %v5110, 8
      %v5310 = vpop.permute.xlu0 %5309
      %5311 = vrot.lane.b32.xlu0 %v5120, 8
      %v5312 = vpop.permute.xlu0 %5311
      %5313 = vrot.lane.b32.xlu0 %v5134, 8
      %v5314 = vpop.permute.xlu0 %5313
      %5315 = vrot.lane.b32.xlu0 %v5144, 8
      %v5316 = vpop.permute.xlu0 %5315
      %5317 = vrot.lane.b32.xlu0 %v5158, 8
      %v5318 = vpop.permute.xlu0 %5317
      %5319 = vrot.lane.b32.xlu0 %v5168, 8
      %v5320 = vpop.permute.xlu0 %5319
      %5321 = vrot.lane.b32.xlu0 %v5182, 8
      %v5322 = vpop.permute.xlu0 %5321
      %5323 = vrot.lane.b32.xlu0 %v5192, 8
      %v5324 = vpop.permute.xlu0 %5323
      %5325 = vrot.lane.b32.xlu0 %v5206, 8
      %v5326 = vpop.permute.xlu0 %5325
      %5327 = vrot.lane.b32.xlu0 %v5216, 8
      %v5328 = vpop.permute.xlu0 %5327
      %5329 = vrot.lane.b32.xlu0 %v5230, 8
      %v5330 = vpop.permute.xlu0 %5329
      %5331 = vrot.lane.b32.xlu0 %v5240, 8
      %v5332 = vpop.permute.xlu0 %5331
      %5333 = vrot.lane.b32.xlu0 %v5254, 8
      %v5334 = vpop.permute.xlu0 %5333
      %5335 = vrot.lane.b32.xlu0 %v5264, 8
      %v5336 = vpop.permute.xlu0 %5335
      %vm5373 = vcmask 126016
      %5374 = vst.msk [vmem:[#allocation3] sm:$0xf] %vm5373, %v5266
      %5375 = vst.msk [vmem:[#allocation3 + $0x4] sm:$0xf] %vm5373, %v5268
      %5376 = vst.msk [vmem:[#allocation3 + $0x8] sm:$0xf] %vm5373, %v5270
      %5377 = vst.msk [vmem:[#allocation3 + $0xc] sm:$0xf] %vm5373, %v5272
      %5378 = vst.msk [vmem:[#allocation3 + $0x10] sm:$0xf] %vm5373, %v5274
      %5379 = vst.msk [vmem:[#allocation3 + $0x14] sm:$0xf] %vm5373, %v5276
      %5380 = vst.msk [vmem:[#allocation3 + $0x18] sm:$0xf] %vm5373, %v5278
      %5381 = vst.msk [vmem:[#allocation3 + $0x1c] sm:$0xf] %vm5373, %v5280
      %5382 = vst.msk [vmem:[#allocation3 + $0x20] sm:$0xf] %vm5373, %v5282
      %5383 = vst.msk [vmem:[#allocation3 + $0x24] sm:$0xf] %vm5373, %v5284
      %5384 = vst.msk [vmem:[#allocation3 + $0x28] sm:$0xf] %vm5373, %v5286
      %5385 = vst.msk [vmem:[#allocation3 + $0x2c] sm:$0xf] %vm5373, %v5288
      %5386 = vst.msk [vmem:[#allocation3 + $0x30] sm:$0xf] %vm5373, %v5290
      %5387 = vst.msk [vmem:[#allocation3 + $0x34] sm:$0xf] %vm5373, %v5292
      %5388 = vst.msk [vmem:[#allocation3 + $0x38] sm:$0xf] %vm5373, %v5294
      %5389 = vst.msk [vmem:[#allocation3 + $0x3c] sm:$0xf] %vm5373, %v5296
      %5390 = vst.msk [vmem:[#allocation3 + $0x40] sm:$0xf] %vm5373, %v5298
      %5391 = vst.msk [vmem:[#allocation3 + $0x44] sm:$0xf] %vm5373, %v5300
      %5392 = vst.msk [vmem:[#allocation3 + $0x48] sm:$0xf] %vm5373, %v5302
      %5393 = vst.msk [vmem:[#allocation3 + $0x4c] sm:$0xf] %vm5373, %v5304
      %5394 = vst.msk [vmem:[#allocation3 + $0x50] sm:$0xf] %vm5373, %v5306
      %5395 = vst.msk [vmem:[#allocation3 + $0x54] sm:$0xf] %vm5373, %v5308
      %5396 = vst.msk [vmem:[#allocation3 + $0x58] sm:$0xf] %vm5373, %v5310
      %5397 = vst.msk [vmem:[#allocation3 + $0x5c] sm:$0xf] %vm5373, %v5312
      %5398 = vst.msk [vmem:[#allocation3 + $0x60] sm:$0xf] %vm5373, %v5314
      %5399 = vst.msk [vmem:[#allocation3 + $0x64] sm:$0xf] %vm5373, %v5316
      %5400 = vst.msk [vmem:[#allocation3 + $0x68] sm:$0xf] %vm5373, %v5318
      %5401 = vst.msk [vmem:[#allocation3 + $0x6c] sm:$0xf] %vm5373, %v5320
      %5402 = vst.msk [vmem:[#allocation3 + $0x70] sm:$0xf] %vm5373, %v5322
      %5403 = vst.msk [vmem:[#allocation3 + $0x74] sm:$0xf] %vm5373, %v5324
      %5404 = vst.msk [vmem:[#allocation3 + $0x78] sm:$0xf] %vm5373, %v5326
      %5405 = vst.msk [vmem:[#allocation3 + $0x7c] sm:$0xf] %vm5373, %v5328
      %5406 = vst.msk [vmem:[#allocation3 + $0x80] sm:$0xf] %vm5373, %v5330
      %5407 = vst.msk [vmem:[#allocation3 + $0x84] sm:$0xf] %vm5373, %v5332
      %5408 = vst.msk [vmem:[#allocation3 + $0x88] sm:$0xf] %vm5373, %v5334
      %5409 = vst.msk [vmem:[#allocation3 + $0x8c] sm:$0xf] %vm5373, %v5336
      %v5410 = vld [vmem:[#allocation2] sm:$0xe]
      %v5411 = vld [vmem:[#allocation2 + $0x4] sm:$0xf]
      %v5412 = vld [vmem:[#allocation2 + $0x8] sm:$0x1]
      %v5413 = vld [vmem:[#allocation2 + $0xc] sm:$0xe]
      %v5414 = vld [vmem:[#allocation2 + $0x10] sm:$0xf]
      %v5415 = vld [vmem:[#allocation2 + $0x14] sm:$0x1]
      %v5416 = vld [vmem:[#allocation2 + $0x18] sm:$0xe]
      %v5417 = vld [vmem:[#allocation2 + $0x1c] sm:$0xf]
      %v5418 = vld [vmem:[#allocation2 + $0x20] sm:$0x1]
      %v5419 = vld [vmem:[#allocation2 + $0x24] sm:$0xe]
      %v5420 = vld [vmem:[#allocation2 + $0x28] sm:$0xf]
      %v5421 = vld [vmem:[#allocation2 + $0x2c] sm:$0x1]
      %v5422 = vld [vmem:[#allocation2 + $0x30] sm:$0xe]
      %v5423 = vld [vmem:[#allocation2 + $0x34] sm:$0xf]
      %v5424 = vld [vmem:[#allocation2 + $0x38] sm:$0x1]
      %v5425 = vld [vmem:[#allocation2 + $0x3c] sm:$0xe]
      %v5426 = vld [vmem:[#allocation2 + $0x40] sm:$0xf]
      %v5427 = vld [vmem:[#allocation2 + $0x44] sm:$0x1]
      %v5428 = vld [vmem:[#allocation2 + $0x48] sm:$0xe]
      %v5429 = vld [vmem:[#allocation2 + $0x4c] sm:$0xf]
      %v5430 = vld [vmem:[#allocation2 + $0x50] sm:$0x1]
      %v5431 = vld [vmem:[#allocation2 + $0x54] sm:$0xe]
      %v5432 = vld [vmem:[#allocation2 + $0x58] sm:$0xf]
      %v5433 = vld [vmem:[#allocation2 + $0x5c] sm:$0x1]
      %v5434 = vld [vmem:[#allocation2 + $0x60] sm:$0xe]
      %v5435 = vld [vmem:[#allocation2 + $0x64] sm:$0xf]
      %v5436 = vld [vmem:[#allocation2 + $0x68] sm:$0x1]
      %v5437 = vld [vmem:[#allocation2 + $0x6c] sm:$0xe]
      %v5438 = vld [vmem:[#allocation2 + $0x70] sm:$0xf]
      %v5439 = vld [vmem:[#allocation2 + $0x74] sm:$0x1]
      %v5440 = vld [vmem:[#allocation2 + $0x78] sm:$0xe]
      %v5441 = vld [vmem:[#allocation2 + $0x7c] sm:$0xf]
      %v5442 = vld [vmem:[#allocation2 + $0x80] sm:$0x1]
      %v5443 = vld [vmem:[#allocation2 + $0x84] sm:$0xe]
      %v5444 = vld [vmem:[#allocation2 + $0x88] sm:$0xf]
      %v5445 = vld [vmem:[#allocation2 + $0x8c] sm:$0x1]
      %v5446 = vld [vmem:[#allocation2 + $0x90] sm:$0xe]
      %v5447 = vld [vmem:[#allocation2 + $0x94] sm:$0xf]
      %v5448 = vld [vmem:[#allocation2 + $0x98] sm:$0x1]
      %v5449 = vld [vmem:[#allocation2 + $0x9c] sm:$0xe]
      %v5450 = vld [vmem:[#allocation2 + $0xa0] sm:$0xf]
      %v5451 = vld [vmem:[#allocation2 + $0xa4] sm:$0x1]
      %v5452 = vld [vmem:[#allocation2 + $0xa8] sm:$0xe]
      %v5453 = vld [vmem:[#allocation2 + $0xac] sm:$0xf]
      %v5454 = vld [vmem:[#allocation2 + $0xb0] sm:$0x1]
      %v5455 = vld [vmem:[#allocation2 + $0xb4] sm:$0xe]
      %v5456 = vld [vmem:[#allocation2 + $0xb8] sm:$0xf]
      %v5457 = vld [vmem:[#allocation2 + $0xbc] sm:$0x1]
      %v5458 = vld [vmem:[#allocation2 + $0xc0] sm:$0xe]
      %v5459 = vld [vmem:[#allocation2 + $0xc4] sm:$0xf]
      %v5460 = vld [vmem:[#allocation2 + $0xc8] sm:$0x1]
      %v5461 = vld [vmem:[#allocation2 + $0xcc] sm:$0xe]
      %v5462 = vld [vmem:[#allocation2 + $0xd0] sm:$0xf]
      %v5463 = vld [vmem:[#allocation2 + $0xd4] sm:$0x1]
      %v5518 = vrot.slane %v5410, 5
      %v5519 = vrot.slane %v5518, 4
      %v5520 = vrot.slane %v5411, 5
      %v5521 = vsel %vm1874, %v5519, %v5520
      %v5522 = vrot.slane %v5520, 4
      %v5523 = vrot.slane %v5412, 5
      %v5524 = vsel %vm1874, %v5522, %v5523
      %v5525 = vrot.slane %v5413, 5
      %v5526 = vrot.slane %v5525, 4
      %v5527 = vrot.slane %v5414, 5
      %v5528 = vsel %vm1874, %v5526, %v5527
      %v5529 = vrot.slane %v5527, 4
      %v5530 = vrot.slane %v5415, 5
      %v5531 = vsel %vm1874, %v5529, %v5530
      %v5532 = vrot.slane %v5416, 5
      %v5533 = vrot.slane %v5532, 4
      %v5534 = vrot.slane %v5417, 5
      %v5535 = vsel %vm1874, %v5533, %v5534
      %v5536 = vrot.slane %v5534, 4
      %v5537 = vrot.slane %v5418, 5
      %v5538 = vsel %vm1874, %v5536, %v5537
      %v5539 = vrot.slane %v5419, 5
      %v5540 = vrot.slane %v5539, 4
      %v5541 = vrot.slane %v5420, 5
      %v5542 = vsel %vm1874, %v5540, %v5541
      %v5543 = vrot.slane %v5541, 4
      %v5544 = vrot.slane %v5421, 5
      %v5545 = vsel %vm1874, %v5543, %v5544
      %v5546 = vrot.slane %v5422, 5
      %v5547 = vrot.slane %v5546, 4
      %v5548 = vrot.slane %v5423, 5
      %v5549 = vsel %vm1874, %v5547, %v5548
      %v5550 = vrot.slane %v5548, 4
      %v5551 = vrot.slane %v5424, 5
      %v5552 = vsel %vm1874, %v5550, %v5551
      %v5553 = vrot.slane %v5425, 5
      %v5554 = vrot.slane %v5553, 4
      %v5555 = vrot.slane %v5426, 5
      %v5556 = vsel %vm1874, %v5554, %v5555
      %v5557 = vrot.slane %v5555, 4
      %v5558 = vrot.slane %v5427, 5
      %v5559 = vsel %vm1874, %v5557, %v5558
      %v5560 = vrot.slane %v5428, 5
      %v5561 = vrot.slane %v5560, 4
      %v5562 = vrot.slane %v5429, 5
      %v5563 = vsel %vm1874, %v5561, %v5562
      %v5564 = vrot.slane %v5562, 4
      %v5565 = vrot.slane %v5430, 5
      %v5566 = vsel %vm1874, %v5564, %v5565
      %v5567 = vrot.slane %v5431, 5
      %v5568 = vrot.slane %v5567, 4
      %v5569 = vrot.slane %v5432, 5
      %v5570 = vsel %vm1874, %v5568, %v5569
      %v5571 = vrot.slane %v5569, 4
      %v5572 = vrot.slane %v5433, 5
      %v5573 = vsel %vm1874, %v5571, %v5572
      %v5574 = vrot.slane %v5434, 5
      %v5575 = vrot.slane %v5574, 4
      %v5576 = vrot.slane %v5435, 5
      %v5577 = vsel %vm1874, %v5575, %v5576
      %v5578 = vrot.slane %v5576, 4
      %v5579 = vrot.slane %v5436, 5
      %v5580 = vsel %vm1874, %v5578, %v5579
      %v5581 = vrot.slane %v5437, 5
      %v5582 = vrot.slane %v5581, 4
      %v5583 = vrot.slane %v5438, 5
      %v5584 = vsel %vm1874, %v5582, %v5583
      %v5585 = vrot.slane %v5583, 4
      %v5586 = vrot.slane %v5439, 5
      %v5587 = vsel %vm1874, %v5585, %v5586
      %v5588 = vrot.slane %v5440, 5
      %v5589 = vrot.slane %v5588, 4
      %v5590 = vrot.slane %v5441, 5
      %v5591 = vsel %vm1874, %v5589, %v5590
      %v5592 = vrot.slane %v5590, 4
      %v5593 = vrot.slane %v5442, 5
      %v5594 = vsel %vm1874, %v5592, %v5593
      %v5595 = vrot.slane %v5443, 5
      %v5596 = vrot.slane %v5595, 4
      %v5597 = vrot.slane %v5444, 5
      %v5598 = vsel %vm1874, %v5596, %v5597
      %v5599 = vrot.slane %v5597, 4
      %v5600 = vrot.slane %v5445, 5
      %v5601 = vsel %vm1874, %v5599, %v5600
      %v5602 = vrot.slane %v5446, 5
      %v5603 = vrot.slane %v5602, 4
      %v5604 = vrot.slane %v5447, 5
      %v5605 = vsel %vm1874, %v5603, %v5604
      %v5606 = vrot.slane %v5604, 4
      %v5607 = vrot.slane %v5448, 5
      %v5608 = vsel %vm1874, %v5606, %v5607
      %v5609 = vrot.slane %v5449, 5
      %v5610 = vrot.slane %v5609, 4
      %v5611 = vrot.slane %v5450, 5
      %v5612 = vsel %vm1874, %v5610, %v5611
      %v5613 = vrot.slane %v5611, 4
      %v5614 = vrot.slane %v5451, 5
      %v5615 = vsel %vm1874, %v5613, %v5614
      %v5616 = vrot.slane %v5452, 5
      %v5617 = vrot.slane %v5616, 4
      %v5618 = vrot.slane %v5453, 5
      %v5619 = vsel %vm1874, %v5617, %v5618
      %v5620 = vrot.slane %v5618, 4
      %v5621 = vrot.slane %v5454, 5
      %v5622 = vsel %vm1874, %v5620, %v5621
      %v5623 = vrot.slane %v5455, 5
      %v5624 = vrot.slane %v5623, 4
      %v5625 = vrot.slane %v5456, 5
      %v5626 = vsel %vm1874, %v5624, %v5625
      %v5627 = vrot.slane %v5625, 4
      %v5628 = vrot.slane %v5457, 5
      %v5629 = vsel %vm1874, %v5627, %v5628
      %v5630 = vrot.slane %v5458, 5
      %v5631 = vrot.slane %v5630, 4
      %v5632 = vrot.slane %v5459, 5
      %v5633 = vsel %vm1874, %v5631, %v5632
      %v5634 = vrot.slane %v5632, 4
      %v5635 = vrot.slane %v5460, 5
      %v5636 = vsel %vm1874, %v5634, %v5635
      %v5637 = vrot.slane %v5461, 5
      %v5638 = vrot.slane %v5637, 4
      %v5639 = vrot.slane %v5462, 5
      %v5640 = vsel %vm1874, %v5638, %v5639
      %v5641 = vrot.slane %v5639, 4
      %v5642 = vrot.slane %v5463, 5
      %v5643 = vsel %vm1874, %v5641, %v5642
      %5644 = vrot.lane.b32.xlu0 %v5521, 16
      %v5645 = vpop.permute.xlu0 %5644
      %5646 = vrot.lane.b32.xlu0 %v5524, 16
      %v5647 = vpop.permute.xlu0 %5646
      %5648 = vrot.lane.b32.xlu0 %v5528, 16
      %v5649 = vpop.permute.xlu0 %5648
      %5650 = vrot.lane.b32.xlu0 %v5531, 16
      %v5651 = vpop.permute.xlu0 %5650
      %5652 = vrot.lane.b32.xlu0 %v5535, 16
      %v5653 = vpop.permute.xlu0 %5652
      %5654 = vrot.lane.b32.xlu0 %v5538, 16
      %v5655 = vpop.permute.xlu0 %5654
      %5656 = vrot.lane.b32.xlu0 %v5542, 16
      %v5657 = vpop.permute.xlu0 %5656
      %5658 = vrot.lane.b32.xlu0 %v5545, 16
      %v5659 = vpop.permute.xlu0 %5658
      %5660 = vrot.lane.b32.xlu0 %v5549, 16
      %v5661 = vpop.permute.xlu0 %5660
      %5662 = vrot.lane.b32.xlu0 %v5552, 16
      %v5663 = vpop.permute.xlu0 %5662
      %5664 = vrot.lane.b32.xlu0 %v5556, 16
      %v5665 = vpop.permute.xlu0 %5664
      %5666 = vrot.lane.b32.xlu0 %v5559, 16
      %v5667 = vpop.permute.xlu0 %5666
      %5668 = vrot.lane.b32.xlu0 %v5563, 16
      %v5669 = vpop.permute.xlu0 %5668
      %5670 = vrot.lane.b32.xlu0 %v5566, 16
      %v5671 = vpop.permute.xlu0 %5670
      %5672 = vrot.lane.b32.xlu0 %v5570, 16
      %v5673 = vpop.permute.xlu0 %5672
      %5674 = vrot.lane.b32.xlu0 %v5573, 16
      %v5675 = vpop.permute.xlu0 %5674
      %5676 = vrot.lane.b32.xlu0 %v5577, 16
      %v5677 = vpop.permute.xlu0 %5676
      %5678 = vrot.lane.b32.xlu0 %v5580, 16
      %v5679 = vpop.permute.xlu0 %5678
      %5680 = vrot.lane.b32.xlu0 %v5584, 16
      %v5681 = vpop.permute.xlu0 %5680
      %5682 = vrot.lane.b32.xlu0 %v5587, 16
      %v5683 = vpop.permute.xlu0 %5682
      %5684 = vrot.lane.b32.xlu0 %v5591, 16
      %v5685 = vpop.permute.xlu0 %5684
      %5686 = vrot.lane.b32.xlu0 %v5594, 16
      %v5687 = vpop.permute.xlu0 %5686
      %5688 = vrot.lane.b32.xlu0 %v5598, 16
      %v5689 = vpop.permute.xlu0 %5688
      %5690 = vrot.lane.b32.xlu0 %v5601, 16
      %v5691 = vpop.permute.xlu0 %5690
      %5692 = vrot.lane.b32.xlu0 %v5605, 16
      %v5693 = vpop.permute.xlu0 %5692
      %5694 = vrot.lane.b32.xlu0 %v5608, 16
      %v5695 = vpop.permute.xlu0 %5694
      %5696 = vrot.lane.b32.xlu0 %v5612, 16
      %v5697 = vpop.permute.xlu0 %5696
      %5698 = vrot.lane.b32.xlu0 %v5615, 16
      %v5699 = vpop.permute.xlu0 %5698
      %5700 = vrot.lane.b32.xlu0 %v5619, 16
      %v5701 = vpop.permute.xlu0 %5700
      %5702 = vrot.lane.b32.xlu0 %v5622, 16
      %v5703 = vpop.permute.xlu0 %5702
      %5704 = vrot.lane.b32.xlu0 %v5626, 16
      %v5705 = vpop.permute.xlu0 %5704
      %5706 = vrot.lane.b32.xlu0 %v5629, 16
      %v5707 = vpop.permute.xlu0 %5706
      %5708 = vrot.lane.b32.xlu0 %v5633, 16
      %v5709 = vpop.permute.xlu0 %5708
      %5710 = vrot.lane.b32.xlu0 %v5636, 16
      %v5711 = vpop.permute.xlu0 %5710
      %5712 = vrot.lane.b32.xlu0 %v5640, 16
      %v5713 = vpop.permute.xlu0 %5712
      %5714 = vrot.lane.b32.xlu0 %v5643, 16
      %v5715 = vpop.permute.xlu0 %5714
      %vm5752 = vcmask 191616
      %5753 = vst.msk [vmem:[#allocation3] sm:$0xf] %vm5752, %v5645
      %5754 = vst.msk [vmem:[#allocation3 + $0x4] sm:$0xf] %vm5752, %v5647
      %5755 = vst.msk [vmem:[#allocation3 + $0x8] sm:$0xf] %vm5752, %v5649
      %5756 = vst.msk [vmem:[#allocation3 + $0xc] sm:$0xf] %vm5752, %v5651
      %5757 = vst.msk [vmem:[#allocation3 + $0x10] sm:$0xf] %vm5752, %v5653
      %5758 = vst.msk [vmem:[#allocation3 + $0x14] sm:$0xf] %vm5752, %v5655
      %5759 = vst.msk [vmem:[#allocation3 + $0x18] sm:$0xf] %vm5752, %v5657
      %5760 = vst.msk [vmem:[#allocation3 + $0x1c] sm:$0xf] %vm5752, %v5659
      %5761 = vst.msk [vmem:[#allocation3 + $0x20] sm:$0xf] %vm5752, %v5661
      %5762 = vst.msk [vmem:[#allocation3 + $0x24] sm:$0xf] %vm5752, %v5663
      %5763 = vst.msk [vmem:[#allocation3 + $0x28] sm:$0xf] %vm5752, %v5665
      %5764 = vst.msk [vmem:[#allocation3 + $0x2c] sm:$0xf] %vm5752, %v5667
      %5765 = vst.msk [vmem:[#allocation3 + $0x30] sm:$0xf] %vm5752, %v5669
      %5766 = vst.msk [vmem:[#allocation3 + $0x34] sm:$0xf] %vm5752, %v5671
      %5767 = vst.msk [vmem:[#allocation3 + $0x38] sm:$0xf] %vm5752, %v5673
      %5768 = vst.msk [vmem:[#allocation3 + $0x3c] sm:$0xf] %vm5752, %v5675
      %5769 = vst.msk [vmem:[#allocation3 + $0x40] sm:$0xf] %vm5752, %v5677
      %5770 = vst.msk [vmem:[#allocation3 + $0x44] sm:$0xf] %vm5752, %v5679
      %5771 = vst.msk [vmem:[#allocation3 + $0x48] sm:$0xf] %vm5752, %v5681
      %5772 = vst.msk [vmem:[#allocation3 + $0x4c] sm:$0xf] %vm5752, %v5683
      %5773 = vst.msk [vmem:[#allocation3 + $0x50] sm:$0xf] %vm5752, %v5685
      %5774 = vst.msk [vmem:[#allocation3 + $0x54] sm:$0xf] %vm5752, %v5687
      %5775 = vst.msk [vmem:[#allocation3 + $0x58] sm:$0xf] %vm5752, %v5689
      %5776 = vst.msk [vmem:[#allocation3 + $0x5c] sm:$0xf] %vm5752, %v5691
      %5777 = vst.msk [vmem:[#allocation3 + $0x60] sm:$0xf] %vm5752, %v5693
      %5778 = vst.msk [vmem:[#allocation3 + $0x64] sm:$0xf] %vm5752, %v5695
      %5779 = vst.msk [vmem:[#allocation3 + $0x68] sm:$0xf] %vm5752, %v5697
      %5780 = vst.msk [vmem:[#allocation3 + $0x6c] sm:$0xf] %vm5752, %v5699
      %5781 = vst.msk [vmem:[#allocation3 + $0x70] sm:$0xf] %vm5752, %v5701
      %5782 = vst.msk [vmem:[#allocation3 + $0x74] sm:$0xf] %vm5752, %v5703
      %5783 = vst.msk [vmem:[#allocation3 + $0x78] sm:$0xf] %vm5752, %v5705
      %5784 = vst.msk [vmem:[#allocation3 + $0x7c] sm:$0xf] %vm5752, %v5707
      %5785 = vst.msk [vmem:[#allocation3 + $0x80] sm:$0xf] %vm5752, %v5709
      %5786 = vst.msk [vmem:[#allocation3 + $0x84] sm:$0xf] %vm5752, %v5711
      %5787 = vst.msk [vmem:[#allocation3 + $0x88] sm:$0xf] %vm5752, %v5713
      %5788 = vst.msk [vmem:[#allocation3 + $0x8c] sm:$0xf] %vm5752, %v5715
      %v5789 = vld [vmem:[#allocation3] sm:$0xf]
      %v5790 = vld [vmem:[#allocation3 + $0x4] sm:$0xf]
      %v5791 = vld [vmem:[#allocation3 + $0x8] sm:$0xf]
      %v5792 = vld [vmem:[#allocation3 + $0xc] sm:$0xf]
      %v5793 = vld [vmem:[#allocation3 + $0x10] sm:$0xf]
      %v5794 = vld [vmem:[#allocation3 + $0x14] sm:$0xf]
      %v5795 = vld [vmem:[#allocation3 + $0x18] sm:$0xf]
      %v5796 = vld [vmem:[#allocation3 + $0x1c] sm:$0xf]
      %v5797 = vld [vmem:[#allocation3 + $0x20] sm:$0xf]
      %v5798 = vld [vmem:[#allocation3 + $0x24] sm:$0xf]
      %v5799 = vld [vmem:[#allocation3 + $0x28] sm:$0xf]
      %v5800 = vld [vmem:[#allocation3 + $0x2c] sm:$0xf]
      %v5801 = vld [vmem:[#allocation3 + $0x30] sm:$0xf]
      %v5802 = vld [vmem:[#allocation3 + $0x34] sm:$0xf]
      %v5803 = vld [vmem:[#allocation3 + $0x38] sm:$0xf]
      %v5804 = vld [vmem:[#allocation3 + $0x3c] sm:$0xf]
      %v5805 = vld [vmem:[#allocation3 + $0x40] sm:$0xf]
      %v5806 = vld [vmem:[#allocation3 + $0x44] sm:$0xf]
      %v5807 = vld [vmem:[#allocation3 + $0x48] sm:$0xf]
      %v5808 = vld [vmem:[#allocation3 + $0x4c] sm:$0xf]
      %v5809 = vld [vmem:[#allocation3 + $0x50] sm:$0xf]
      %v5810 = vld [vmem:[#allocation3 + $0x54] sm:$0xf]
      %v5811 = vld [vmem:[#allocation3 + $0x58] sm:$0xf]
      %v5812 = vld [vmem:[#allocation3 + $0x5c] sm:$0xf]
      %v5813 = vld [vmem:[#allocation3 + $0x60] sm:$0xf]
      %v5814 = vld [vmem:[#allocation3 + $0x64] sm:$0xf]
      %v5815 = vld [vmem:[#allocation3 + $0x68] sm:$0xf]
      %v5816 = vld [vmem:[#allocation3 + $0x6c] sm:$0xf]
      %v5817 = vld [vmem:[#allocation3 + $0x70] sm:$0xf]
      %v5818 = vld [vmem:[#allocation3 + $0x74] sm:$0xf]
      %v5819 = vld [vmem:[#allocation3 + $0x78] sm:$0xf]
      %v5820 = vld [vmem:[#allocation3 + $0x7c] sm:$0xf]
      %v5821 = vld [vmem:[%s4] sm:$0xf]
      %v5822 = vld [vmem:[%s4 + $0x4] sm:$0xf]
      %v5823 = vld [vmem:[%s4 + $0x8] sm:$0xf]
      %v5824 = vld [vmem:[%s2180] sm:$0xf]
      %v5825 = vld [vmem:[%s2180 + $0x4] sm:$0xf]
      %v5826 = vld [vmem:[%s2180 + $0x8] sm:$0xf]
      %v5827 = vld [vmem:[%s2180 + $0xc] sm:$0xf]
      %v5828 = vld [vmem:[%s2180 + $0x10] sm:$0xf]
      %v5829 = vld [vmem:[%s2180 + $0x14] sm:$0xf]
      %v5830 = vld [vmem:[%s2180 + $0x18] sm:$0xf]
      %v5831 = vld [vmem:[%s2180 + $0x1c] sm:$0xf]
      %v5832 = vld [vmem:[%s2180 + $0x20] sm:$0xf]
      %v5833 = vld [vmem:[%s2180 + $0x24] sm:$0xf]
      %v5834 = vld [vmem:[%s2180 + $0x28] sm:$0xf]
      %v5835 = vld [vmem:[%s2180 + $0x2c] sm:$0xf]
      %v5836 = vld [vmem:[%s2180 + $0x30] sm:$0xf]
      %v5837 = vld [vmem:[%s2180 + $0x34] sm:$0xf]
      %v5838 = vld [vmem:[%s2180 + $0x38] sm:$0xf]
      %v5839 = vld [vmem:[%s2180 + $0x3c] sm:$0xf]
      %v5840 = vld [vmem:[%s2180 + $0x40] sm:$0xf]
      %v5841 = vld [vmem:[%s2180 + $0x44] sm:$0xf]
      %v5842 = vld [vmem:[%s2180 + $0x48] sm:$0xf]
      %v5843 = vld [vmem:[%s2180 + $0x4c] sm:$0xf]
      %v5844 = vld [vmem:[%s2180 + $0x50] sm:$0xf]
      %v5845 = vld [vmem:[%s2180 + $0x54] sm:$0xf]
      %v5846 = vld [vmem:[%s2180 + $0x58] sm:$0xf]
      %v5847 = vld [vmem:[%s2180 + $0x5c] sm:$0xf]
      %v5848 = vld [vmem:[%s2180 + $0x60] sm:$0xf]
      %v5849 = vld [vmem:[%s2180 + $0x64] sm:$0xf]
      %v5850 = vld [vmem:[%s2180 + $0x68] sm:$0xf]
      %v5851 = vld [vmem:[%s2180 + $0x6c] sm:$0xf]
      %v5852 = vld [vmem:[%s2180 + $0x70] sm:$0xf]
      %v5853 = vld [vmem:[%s2180 + $0x74] sm:$0xf]
      %v5854 = vld [vmem:[%s2180 + $0x78] sm:$0xf]
      %v5855 = vld [vmem:[%s2180 + $0x7c] sm:$0xf]
      %v5856 = vld [vmem:[%s4 + $0xc] sm:$0xf]
      %v5857 = vld [vmem:[%s4 + $0x10] sm:$0xf]
      %v5858 = vld [vmem:[%s4 + $0x14] sm:$0xf]
      %v5891 = vunpack.c.l.b16 %v5824
      %v5892 = vunpack.c.l.b16 %v5825
      %v5893 = vunpack.c.l.b16 %v5826
      %v5894 = vunpack.c.l.b16 %v5827
      %v5895 = vunpack.c.l.b16 %v5828
      %v5896 = vunpack.c.l.b16 %v5829
      %v5897 = vunpack.c.l.b16 %v5830
      %v5898 = vunpack.c.l.b16 %v5831
      %v5899 = vunpack.c.l.b16 %v5832
      %v5900 = vunpack.c.l.b16 %v5833
      %v5901 = vunpack.c.l.b16 %v5834
      %v5902 = vunpack.c.l.b16 %v5835
      %v5903 = vunpack.c.l.b16 %v5836
      %v5904 = vunpack.c.l.b16 %v5837
      %v5905 = vunpack.c.l.b16 %v5838
      %v5906 = vunpack.c.l.b16 %v5839
      %v5907 = vunpack.c.l.b16 %v5840
      %v5908 = vunpack.c.l.b16 %v5841
      %v5909 = vunpack.c.l.b16 %v5842
      %v5910 = vunpack.c.l.b16 %v5843
      %v5911 = vunpack.c.l.b16 %v5844
      %v5912 = vunpack.c.l.b16 %v5845
      %v5913 = vunpack.c.l.b16 %v5846
      %v5914 = vunpack.c.l.b16 %v5847
      %v5915 = vunpack.c.l.b16 %v5848
      %v5916 = vunpack.c.l.b16 %v5849
      %v5917 = vunpack.c.l.b16 %v5850
      %v5918 = vunpack.c.l.b16 %v5851
      %v5919 = vunpack.c.l.b16 %v5852
      %v5920 = vunpack.c.l.b16 %v5853
      %v5921 = vunpack.c.l.b16 %v5854
      %v5922 = vunpack.c.l.b16 %v5855
      %v5923 = vpack.c.b16 %v5892, %v5891
      %v5924 = vpack.c.b16 %v5894, %v5893
      %v5925 = vpack.c.b16 %v5896, %v5895
      %v5926 = vpack.c.b16 %v5898, %v5897
      %v5927 = vpack.c.b16 %v5900, %v5899
      %v5928 = vpack.c.b16 %v5902, %v5901
      %v5929 = vpack.c.b16 %v5904, %v5903
      %v5930 = vpack.c.b16 %v5906, %v5905
      %v5931 = vpack.c.b16 %v5908, %v5907
      %v5932 = vpack.c.b16 %v5910, %v5909
      %v5933 = vpack.c.b16 %v5912, %v5911
      %v5934 = vpack.c.b16 %v5914, %v5913
      %v5935 = vpack.c.b16 %v5916, %v5915
      %v5936 = vpack.c.b16 %v5918, %v5917
      %v5937 = vpack.c.b16 %v5920, %v5919
      %v5938 = vpack.c.b16 %v5922, %v5921
      %v5942 = vunpack.c.l.b16 %v5856
      %v5943 = vunpack.c.l.b16 %v5857
      %v5944 = vunpack.c.l.b16 %v5858
      %v5945 = vpack.c.b16 %v5943, %v5942
      %v5946 = vpack.c.b16 %v5944, %v5944
      %vm5948 = vcmask 195584
      %v5950 = vsel %vm5948, %v5923, 0
      %v5953 = vsel %vm5948, %v5924, 0
      %v5956 = vsel %vm5948, %v5925, 0
      %v5959 = vsel %vm5948, %v5926, 0
      %v5962 = vsel %vm5948, %v5927, 0
      %v5965 = vsel %vm5948, %v5928, 0
      %v5968 = vsel %vm5948, %v5929, 0
      %v5971 = vsel %vm5948, %v5930, 0
      %v5974 = vsel %vm5948, %v5931, 0
      %v5977 = vsel %vm5948, %v5932, 0
      %v5980 = vsel %vm5948, %v5933, 0
      %v5983 = vsel %vm5948, %v5934, 0
      %v5986 = vsel %vm5948, %v5935, 0
      %v5989 = vsel %vm5948, %v5936, 0
      %v5992 = vsel %vm5948, %v5937, 0
      %v5995 = vsel %vm5948, %v5938, 0
      %vm5997 = vcmask 1043456
      %v5999 = vsel %vm5997, %v5946, 0
      %6001 = vmatprep.subr.bf16.mxu0 0
      %6002 = vmatpush1.bf16.msra.mxu0 0
      %6003 = vmatprep.subr.bf16.mxu0 0
      %6004 = vmatpush1.bf16.msra.mxu0 0
      %6005 = vmatprep.subr.bf16.mxu0 0
      %6006 = vmatpush1.bf16.msra.mxu0 0
      %6007 = vmatprep.subr.bf16.mxu0 0
      %6008 = vmatpush1.bf16.msra.mxu0 0
      %6009 = vmatprep.subr.bf16.mxu0 0
      %6010 = vmatpush1.bf16.msra.mxu0 0
      %6011 = vmatprep.subr.bf16.mxu0 0
      %6012 = vmatpush1.bf16.msra.mxu0 0
      %6013 = vmatprep.subr.bf16.mxu0 0
      %6014 = vmatpush1.bf16.msra.mxu0 %v5999
      %6015 = vmatprep.subr.bf16.mxu0 0
      %6016 = vmatpush1.bf16.msra.mxu0 %v5945
      %6017 = vmatprep.subr.bf16.mxu0 0
      %6018 = vmatpush2.bf16.msra.mxu0 0
      %6019 = vmatprep.subr.bf16.mxu0 0
      %6020 = vmatpush2.bf16.msra.mxu0 0
      %6021 = vmatprep.subr.bf16.mxu0 0
      %6022 = vmatpush2.bf16.msra.mxu0 0
      %6023 = vmatprep.subr.bf16.mxu0 0
      %6024 = vmatpush2.bf16.msra.mxu0 0
      %6025 = vmatprep.subr.bf16.mxu0 0
      %6026 = vmatpush2.bf16.msra.mxu0 0
      %6027 = vmatprep.subr.bf16.mxu0 0
      %6028 = vmatpush2.bf16.msra.mxu0 0
      %6029 = vmatprep.subr.bf16.mxu0 0
      %6030 = vmatpush2.bf16.msra.mxu0 0
      %6031 = vmatprep.subr.bf16.mxu0 0
      %6032 = vmatpush2.bf16.msra.mxu0 0
      %6033 = vmatprep.mubr.bf16.mxu0 0
      %6034 = vmatmul.mubr.bf16.gmra.mxu0 %v5950
      %v6035 = vpop.f32.mrf.mxu0
      %v6036 = vadd.f32 0.0, %v6035
      %v6037 = vpop.f32.mrf.mxu0
      %v6038 = vpop.f32.mrf.mxu0
      %v6039 = vadd.f32 0.0, %v6038
      %v6040 = vpop.f32.mrf.mxu0
      %6041 = vmatprep.mubr.bf16.mxu0 0
      %6042 = vmatmul.mubr.bf16.gmra.mxu0 %v5953
      %v6043 = vpop.f32.mrf.mxu0
      %v6044 = vadd.f32 0.0, %v6043
      %v6045 = vpop.f32.mrf.mxu0
      %v6046 = vpop.f32.mrf.mxu0
      %v6047 = vadd.f32 0.0, %v6046
      %v6048 = vpop.f32.mrf.mxu0
      %6049 = vmatprep.mubr.bf16.mxu0 0
      %6050 = vmatmul.mubr.bf16.gmra.mxu0 %v5956
      %v6051 = vpop.f32.mrf.mxu0
      %v6052 = vadd.f32 0.0, %v6051
      %v6053 = vpop.f32.mrf.mxu0
      %v6054 = vpop.f32.mrf.mxu0
      %v6055 = vadd.f32 0.0, %v6054
      %v6056 = vpop.f32.mrf.mxu0
      %6057 = vmatprep.mubr.bf16.mxu0 0
      %6058 = vmatmul.mubr.bf16.gmra.mxu0 %v5959
      %v6059 = vpop.f32.mrf.mxu0
      %v6060 = vadd.f32 0.0, %v6059
      %v6061 = vpop.f32.mrf.mxu0
      %v6062 = vpop.f32.mrf.mxu0
      %v6063 = vadd.f32 0.0, %v6062
      %v6064 = vpop.f32.mrf.mxu0
      %6065 = vmatprep.mubr.bf16.mxu0 0
      %6066 = vmatmul.mubr.bf16.gmra.mxu0 %v5962
      %v6067 = vpop.f32.mrf.mxu0
      %v6068 = vadd.f32 0.0, %v6067
      %v6069 = vpop.f32.mrf.mxu0
      %v6070 = vpop.f32.mrf.mxu0
      %v6071 = vadd.f32 0.0, %v6070
      %v6072 = vpop.f32.mrf.mxu0
      %6073 = vmatprep.mubr.bf16.mxu0 0
      %6074 = vmatmul.mubr.bf16.gmra.mxu0 %v5965
      %v6075 = vpop.f32.mrf.mxu0
      %v6076 = vadd.f32 0.0, %v6075
      %v6077 = vpop.f32.mrf.mxu0
      %v6078 = vpop.f32.mrf.mxu0
      %v6079 = vadd.f32 0.0, %v6078
      %v6080 = vpop.f32.mrf.mxu0
      %6081 = vmatprep.mubr.bf16.mxu0 0
      %6082 = vmatmul.mubr.bf16.gmra.mxu0 %v5968
      %v6083 = vpop.f32.mrf.mxu0
      %v6084 = vadd.f32 0.0, %v6083
      %v6085 = vpop.f32.mrf.mxu0
      %v6086 = vpop.f32.mrf.mxu0
      %v6087 = vadd.f32 0.0, %v6086
      %v6088 = vpop.f32.mrf.mxu0
      %6089 = vmatprep.mubr.bf16.mxu0 0
      %6090 = vmatmul.mubr.bf16.gmra.mxu0 %v5971
      %v6091 = vpop.f32.mrf.mxu0
      %v6092 = vadd.f32 0.0, %v6091
      %v6093 = vpop.f32.mrf.mxu0
      %v6094 = vpop.f32.mrf.mxu0
      %v6095 = vadd.f32 0.0, %v6094
      %v6096 = vpop.f32.mrf.mxu0
      %6097 = vmatprep.mubr.bf16.mxu0 0
      %6098 = vmatmul.mubr.bf16.gmra.mxu0 %v5974
      %v6099 = vpop.f32.mrf.mxu0
      %v6100 = vadd.f32 0.0, %v6099
      %v6101 = vpop.f32.mrf.mxu0
      %v6102 = vpop.f32.mrf.mxu0
      %v6103 = vadd.f32 0.0, %v6102
      %v6104 = vpop.f32.mrf.mxu0
      %6105 = vmatprep.mubr.bf16.mxu0 0
      %6106 = vmatmul.mubr.bf16.gmra.mxu0 %v5977
      %v6107 = vpop.f32.mrf.mxu0
      %v6108 = vadd.f32 0.0, %v6107
      %v6109 = vpop.f32.mrf.mxu0
      %v6110 = vpop.f32.mrf.mxu0
      %v6111 = vadd.f32 0.0, %v6110
      %v6112 = vpop.f32.mrf.mxu0
      %6113 = vmatprep.mubr.bf16.mxu0 0
      %6114 = vmatmul.mubr.bf16.gmra.mxu0 %v5980
      %v6115 = vpop.f32.mrf.mxu0
      %v6116 = vadd.f32 0.0, %v6115
      %v6117 = vpop.f32.mrf.mxu0
      %v6118 = vpop.f32.mrf.mxu0
      %v6119 = vadd.f32 0.0, %v6118
      %v6120 = vpop.f32.mrf.mxu0
      %6121 = vmatprep.mubr.bf16.mxu0 0
      %6122 = vmatmul.mubr.bf16.gmra.mxu0 %v5983
      %v6123 = vpop.f32.mrf.mxu0
      %v6124 = vadd.f32 0.0, %v6123
      %v6125 = vpop.f32.mrf.mxu0
      %v6126 = vpop.f32.mrf.mxu0
      %v6127 = vadd.f32 0.0, %v6126
      %v6128 = vpop.f32.mrf.mxu0
      %6129 = vmatprep.mubr.bf16.mxu0 0
      %6130 = vmatmul.mubr.bf16.gmra.mxu0 %v5986
      %v6131 = vpop.f32.mrf.mxu0
      %v6132 = vadd.f32 0.0, %v6131
      %v6133 = vpop.f32.mrf.mxu0
      %v6134 = vpop.f32.mrf.mxu0
      %v6135 = vadd.f32 0.0, %v6134
      %v6136 = vpop.f32.mrf.mxu0
      %6137 = vmatprep.mubr.bf16.mxu0 0
      %6138 = vmatmul.mubr.bf16.gmra.mxu0 %v5989
      %v6139 = vpop.f32.mrf.mxu0
      %v6140 = vadd.f32 0.0, %v6139
      %v6141 = vpop.f32.mrf.mxu0
      %v6142 = vpop.f32.mrf.mxu0
      %v6143 = vadd.f32 0.0, %v6142
      %v6144 = vpop.f32.mrf.mxu0
      %6145 = vmatprep.mubr.bf16.mxu0 0
      %6146 = vmatmul.mubr.bf16.gmra.mxu0 %v5992
      %v6147 = vpop.f32.mrf.mxu0
      %v6148 = vadd.f32 0.0, %v6147
      %v6149 = vpop.f32.mrf.mxu0
      %v6150 = vpop.f32.mrf.mxu0
      %v6151 = vadd.f32 0.0, %v6150
      %v6152 = vpop.f32.mrf.mxu0
      %6153 = vmatprep.mubr.bf16.mxu0 0
      %6154 = vmatmul.mubr.bf16.gmra.mxu0 %v5995
      %v6155 = vpop.f32.mrf.mxu0
      %v6156 = vadd.f32 0.0, %v6155
      %v6157 = vpop.f32.mrf.mxu0
      %v6158 = vpop.f32.mrf.mxu0
      %v6159 = vadd.f32 0.0, %v6158
      %v6160 = vpop.f32.mrf.mxu0
      %6161 = vdwg.mxu0
      %v6194 = vunpack.c.l.b16 %v5789
      %v6195 = vunpack.c.l.b16 %v5790
      %v6196 = vunpack.c.l.b16 %v5791
      %v6197 = vunpack.c.l.b16 %v5792
      %v6198 = vunpack.c.l.b16 %v5793
      %v6199 = vunpack.c.l.b16 %v5794
      %v6200 = vunpack.c.l.b16 %v5795
      %v6201 = vunpack.c.l.b16 %v5796
      %v6202 = vunpack.c.l.b16 %v5797
      %v6203 = vunpack.c.l.b16 %v5798
      %v6204 = vunpack.c.l.b16 %v5799
      %v6205 = vunpack.c.l.b16 %v5800
      %v6206 = vunpack.c.l.b16 %v5801
      %v6207 = vunpack.c.l.b16 %v5802
      %v6208 = vunpack.c.l.b16 %v5803
      %v6209 = vunpack.c.l.b16 %v5804
      %v6210 = vunpack.c.l.b16 %v5805
      %v6211 = vunpack.c.l.b16 %v5806
      %v6212 = vunpack.c.l.b16 %v5807
      %v6213 = vunpack.c.l.b16 %v5808
      %v6214 = vunpack.c.l.b16 %v5809
      %v6215 = vunpack.c.l.b16 %v5810
      %v6216 = vunpack.c.l.b16 %v5811
      %v6217 = vunpack.c.l.b16 %v5812
      %v6218 = vunpack.c.l.b16 %v5813
      %v6219 = vunpack.c.l.b16 %v5814
      %v6220 = vunpack.c.l.b16 %v5815
      %v6221 = vunpack.c.l.b16 %v5816
      %v6222 = vunpack.c.l.b16 %v5817
      %v6223 = vunpack.c.l.b16 %v5818
      %v6224 = vunpack.c.l.b16 %v5819
      %v6225 = vunpack.c.l.b16 %v5820
      %v6226 = vpack.c.b16 %v6195, %v6194
      %v6227 = vpack.c.b16 %v6197, %v6196
      %v6228 = vpack.c.b16 %v6199, %v6198
      %v6229 = vpack.c.b16 %v6201, %v6200
      %v6230 = vpack.c.b16 %v6203, %v6202
      %v6231 = vpack.c.b16 %v6205, %v6204
      %v6232 = vpack.c.b16 %v6207, %v6206
      %v6233 = vpack.c.b16 %v6209, %v6208
      %v6234 = vpack.c.b16 %v6211, %v6210
      %v6235 = vpack.c.b16 %v6213, %v6212
      %v6236 = vpack.c.b16 %v6215, %v6214
      %v6237 = vpack.c.b16 %v6217, %v6216
      %v6238 = vpack.c.b16 %v6219, %v6218
      %v6239 = vpack.c.b16 %v6221, %v6220
      %v6240 = vpack.c.b16 %v6223, %v6222
      %v6241 = vpack.c.b16 %v6225, %v6224
      %v6245 = vunpack.c.l.b16 %v5821
      %v6246 = vunpack.c.l.b16 %v5822
      %v6247 = vunpack.c.l.b16 %v5823
      %v6248 = vpack.c.b16 %v6246, %v6245
      %v6249 = vpack.c.b16 %v6247, %v6247
      %v6252 = vsel %vm5948, %v6226, 0
      %v6255 = vsel %vm5948, %v6227, 0
      %v6258 = vsel %vm5948, %v6228, 0
      %v6261 = vsel %vm5948, %v6229, 0
      %v6264 = vsel %vm5948, %v6230, 0
      %v6267 = vsel %vm5948, %v6231, 0
      %v6270 = vsel %vm5948, %v6232, 0
      %v6273 = vsel %vm5948, %v6233, 0
      %v6276 = vsel %vm5948, %v6234, 0
      %v6279 = vsel %vm5948, %v6235, 0
      %v6282 = vsel %vm5948, %v6236, 0
      %v6285 = vsel %vm5948, %v6237, 0
      %v6288 = vsel %vm5948, %v6238, 0
      %v6291 = vsel %vm5948, %v6239, 0
      %v6294 = vsel %vm5948, %v6240, 0
      %v6297 = vsel %vm5948, %v6241, 0
      %v6300 = vsel %vm5997, %v6249, 0
      %6302 = vmatprep.subr.bf16.mxu0 0
      %6303 = vmatpush1.bf16.msra.mxu0 0
      %6304 = vmatprep.subr.bf16.mxu0 0
      %6305 = vmatpush1.bf16.msra.mxu0 0
      %6306 = vmatprep.subr.bf16.mxu0 0
      %6307 = vmatpush1.bf16.msra.mxu0 0
      %6308 = vmatprep.subr.bf16.mxu0 0
      %6309 = vmatpush1.bf16.msra.mxu0 0
      %6310 = vmatprep.subr.bf16.mxu0 0
      %6311 = vmatpush1.bf16.msra.mxu0 0
      %6312 = vmatprep.subr.bf16.mxu0 0
      %6313 = vmatpush1.bf16.msra.mxu0 0
      %6314 = vmatprep.subr.bf16.mxu0 0
      %6315 = vmatpush1.bf16.msra.mxu0 %v6300
      %6316 = vmatprep.subr.bf16.mxu0 0
      %6317 = vmatpush1.bf16.msra.mxu0 %v6248
      %6318 = vmatprep.subr.bf16.mxu0 0
      %6319 = vmatpush2.bf16.msra.mxu0 0
      %6320 = vmatprep.subr.bf16.mxu0 0
      %6321 = vmatpush2.bf16.msra.mxu0 0
      %6322 = vmatprep.subr.bf16.mxu0 0
      %6323 = vmatpush2.bf16.msra.mxu0 0
      %6324 = vmatprep.subr.bf16.mxu0 0
      %6325 = vmatpush2.bf16.msra.mxu0 0
      %6326 = vmatprep.subr.bf16.mxu0 0
      %6327 = vmatpush2.bf16.msra.mxu0 0
      %6328 = vmatprep.subr.bf16.mxu0 0
      %6329 = vmatpush2.bf16.msra.mxu0 0
      %6330 = vmatprep.subr.bf16.mxu0 0
      %6331 = vmatpush2.bf16.msra.mxu0 0
      %6332 = vmatprep.subr.bf16.mxu0 0
      %6333 = vmatpush2.bf16.msra.mxu0 0
      %6334 = vmatprep.mubr.bf16.mxu0 0
      %6335 = vmatmul.mubr.bf16.gmra.mxu0 %v6252
      %v6336 = vpop.f32.mrf.mxu0
      %v6337 = vadd.f32 %v6036, %v6336
      %v6338 = vpop.f32.mrf.mxu0
      %v6339 = vpop.f32.mrf.mxu0
      %v6340 = vadd.f32 %v6039, %v6339
      %v6341 = vpop.f32.mrf.mxu0
      %6342 = vmatprep.mubr.bf16.mxu0 0
      %6343 = vmatmul.mubr.bf16.gmra.mxu0 %v6255
      %v6344 = vpop.f32.mrf.mxu0
      %v6345 = vadd.f32 %v6044, %v6344
      %v6346 = vpop.f32.mrf.mxu0
      %v6347 = vpop.f32.mrf.mxu0
      %v6348 = vadd.f32 %v6047, %v6347
      %v6349 = vpop.f32.mrf.mxu0
      %6350 = vmatprep.mubr.bf16.mxu0 0
      %6351 = vmatmul.mubr.bf16.gmra.mxu0 %v6258
      %v6352 = vpop.f32.mrf.mxu0
      %v6353 = vadd.f32 %v6052, %v6352
      %v6354 = vpop.f32.mrf.mxu0
      %v6355 = vpop.f32.mrf.mxu0
      %v6356 = vadd.f32 %v6055, %v6355
      %v6357 = vpop.f32.mrf.mxu0
      %6358 = vmatprep.mubr.bf16.mxu0 0
      %6359 = vmatmul.mubr.bf16.gmra.mxu0 %v6261
      %v6360 = vpop.f32.mrf.mxu0
      %v6361 = vadd.f32 %v6060, %v6360
      %v6362 = vpop.f32.mrf.mxu0
      %v6363 = vpop.f32.mrf.mxu0
      %v6364 = vadd.f32 %v6063, %v6363
      %v6365 = vpop.f32.mrf.mxu0
      %6366 = vmatprep.mubr.bf16.mxu0 0
      %6367 = vmatmul.mubr.bf16.gmra.mxu0 %v6264
      %v6368 = vpop.f32.mrf.mxu0
      %v6369 = vadd.f32 %v6068, %v6368
      %v6370 = vpop.f32.mrf.mxu0
      %v6371 = vpop.f32.mrf.mxu0
      %v6372 = vadd.f32 %v6071, %v6371
      %v6373 = vpop.f32.mrf.mxu0
      %6374 = vmatprep.mubr.bf16.mxu0 0
      %6375 = vmatmul.mubr.bf16.gmra.mxu0 %v6267
      %v6376 = vpop.f32.mrf.mxu0
      %v6377 = vadd.f32 %v6076, %v6376
      %v6378 = vpop.f32.mrf.mxu0
      %v6379 = vpop.f32.mrf.mxu0
      %v6380 = vadd.f32 %v6079, %v6379
      %v6381 = vpop.f32.mrf.mxu0
      %6382 = vmatprep.mubr.bf16.mxu0 0
      %6383 = vmatmul.mubr.bf16.gmra.mxu0 %v6270
      %v6384 = vpop.f32.mrf.mxu0
      %v6385 = vadd.f32 %v6084, %v6384
      %v6386 = vpop.f32.mrf.mxu0
      %v6387 = vpop.f32.mrf.mxu0
      %v6388 = vadd.f32 %v6087, %v6387
      %v6389 = vpop.f32.mrf.mxu0
      %6390 = vmatprep.mubr.bf16.mxu0 0
      %6391 = vmatmul.mubr.bf16.gmra.mxu0 %v6273
      %v6392 = vpop.f32.mrf.mxu0
      %v6393 = vadd.f32 %v6092, %v6392
      %v6394 = vpop.f32.mrf.mxu0
      %v6395 = vpop.f32.mrf.mxu0
      %v6396 = vadd.f32 %v6095, %v6395
      %v6397 = vpop.f32.mrf.mxu0
      %6398 = vmatprep.mubr.bf16.mxu0 0
      %6399 = vmatmul.mubr.bf16.gmra.mxu0 %v6276
      %v6400 = vpop.f32.mrf.mxu0
      %v6401 = vadd.f32 %v6100, %v6400
      %v6402 = vpop.f32.mrf.mxu0
      %v6403 = vpop.f32.mrf.mxu0
      %v6404 = vadd.f32 %v6103, %v6403
      %v6405 = vpop.f32.mrf.mxu0
      %6406 = vmatprep.mubr.bf16.mxu0 0
      %6407 = vmatmul.mubr.bf16.gmra.mxu0 %v6279
      %v6408 = vpop.f32.mrf.mxu0
      %v6409 = vadd.f32 %v6108, %v6408
      %v6410 = vpop.f32.mrf.mxu0
      %v6411 = vpop.f32.mrf.mxu0
      %v6412 = vadd.f32 %v6111, %v6411
      %v6413 = vpop.f32.mrf.mxu0
      %6414 = vmatprep.mubr.bf16.mxu0 0
      %6415 = vmatmul.mubr.bf16.gmra.mxu0 %v6282
      %v6416 = vpop.f32.mrf.mxu0
      %v6417 = vadd.f32 %v6116, %v6416
      %v6418 = vpop.f32.mrf.mxu0
      %v6419 = vpop.f32.mrf.mxu0
      %v6420 = vadd.f32 %v6119, %v6419
      %v6421 = vpop.f32.mrf.mxu0
      %6422 = vmatprep.mubr.bf16.mxu0 0
      %6423 = vmatmul.mubr.bf16.gmra.mxu0 %v6285
      %v6424 = vpop.f32.mrf.mxu0
      %v6425 = vadd.f32 %v6124, %v6424
      %v6426 = vpop.f32.mrf.mxu0
      %v6427 = vpop.f32.mrf.mxu0
      %v6428 = vadd.f32 %v6127, %v6427
      %v6429 = vpop.f32.mrf.mxu0
      %6430 = vmatprep.mubr.bf16.mxu0 0
      %6431 = vmatmul.mubr.bf16.gmra.mxu0 %v6288
      %v6432 = vpop.f32.mrf.mxu0
      %v6433 = vadd.f32 %v6132, %v6432
      %v6434 = vpop.f32.mrf.mxu0
      %v6435 = vpop.f32.mrf.mxu0
      %v6436 = vadd.f32 %v6135, %v6435
      %v6437 = vpop.f32.mrf.mxu0
      %6438 = vmatprep.mubr.bf16.mxu0 0
      %6439 = vmatmul.mubr.bf16.gmra.mxu0 %v6291
      %v6440 = vpop.f32.mrf.mxu0
      %v6441 = vadd.f32 %v6140, %v6440
      %v6442 = vpop.f32.mrf.mxu0
      %v6443 = vpop.f32.mrf.mxu0
      %v6444 = vadd.f32 %v6143, %v6443
      %v6445 = vpop.f32.mrf.mxu0
      %6446 = vmatprep.mubr.bf16.mxu0 0
      %6447 = vmatmul.mubr.bf16.gmra.mxu0 %v6294
      %v6448 = vpop.f32.mrf.mxu0
      %v6449 = vadd.f32 %v6148, %v6448
      %v6450 = vpop.f32.mrf.mxu0
      %v6451 = vpop.f32.mrf.mxu0
      %v6452 = vadd.f32 %v6151, %v6451
      %v6453 = vpop.f32.mrf.mxu0
      %6454 = vmatprep.mubr.bf16.mxu0 0
      %6455 = vmatmul.mubr.bf16.gmra.mxu0 %v6297
      %v6456 = vpop.f32.mrf.mxu0
      %v6457 = vadd.f32 %v6156, %v6456
      %v6458 = vpop.f32.mrf.mxu0
      %v6459 = vpop.f32.mrf.mxu0
      %v6460 = vadd.f32 %v6159, %v6459
      %v6461 = vpop.f32.mrf.mxu0
      %6462 = vdwg.mxu0
      %v6463 = vld [vmem:[%s2812] sm:$0xf]
      %v6464 = vld [vmem:[%s2812 + $0x4] sm:$0xf]
      %v6465 = vld [vmem:[%s2812 + $0x8] sm:$0xf]
      %v6466 = vld [vmem:[%s2812 + $0xc] sm:$0xf]
      %v6467 = vld [vmem:[%s2812 + $0x10] sm:$0xf]
      %v6468 = vld [vmem:[%s2812 + $0x14] sm:$0xf]
      %v6469 = vld [vmem:[%s2812 + $0x18] sm:$0xf]
      %v6470 = vld [vmem:[%s2812 + $0x1c] sm:$0xf]
      %v6471 = vld [vmem:[%s2812 + $0x20] sm:$0xf]
      %v6472 = vld [vmem:[%s2812 + $0x24] sm:$0xf]
      %v6473 = vld [vmem:[%s2812 + $0x28] sm:$0xf]
      %v6474 = vld [vmem:[%s2812 + $0x2c] sm:$0xf]
      %v6475 = vld [vmem:[%s2812 + $0x30] sm:$0xf]
      %v6476 = vld [vmem:[%s2812 + $0x34] sm:$0xf]
      %v6477 = vld [vmem:[%s2812 + $0x38] sm:$0xf]
      %v6478 = vld [vmem:[%s2812 + $0x3c] sm:$0xf]
      %v6479 = vld [vmem:[%s2812 + $0x40] sm:$0xf]
      %v6480 = vld [vmem:[%s2812 + $0x44] sm:$0xf]
      %v6481 = vld [vmem:[%s2812 + $0x48] sm:$0xf]
      %v6482 = vld [vmem:[%s2812 + $0x4c] sm:$0xf]
      %v6483 = vld [vmem:[%s2812 + $0x50] sm:$0xf]
      %v6484 = vld [vmem:[%s2812 + $0x54] sm:$0xf]
      %v6485 = vld [vmem:[%s2812 + $0x58] sm:$0xf]
      %v6486 = vld [vmem:[%s2812 + $0x5c] sm:$0xf]
      %v6487 = vld [vmem:[%s2812 + $0x60] sm:$0xf]
      %v6488 = vld [vmem:[%s2812 + $0x64] sm:$0xf]
      %v6489 = vld [vmem:[%s2812 + $0x68] sm:$0xf]
      %v6490 = vld [vmem:[%s2812 + $0x6c] sm:$0xf]
      %v6491 = vld [vmem:[%s2812 + $0x70] sm:$0xf]
      %v6492 = vld [vmem:[%s2812 + $0x74] sm:$0xf]
      %v6493 = vld [vmem:[%s2812 + $0x78] sm:$0xf]
      %v6494 = vld [vmem:[%s2812 + $0x7c] sm:$0xf]
      %v6495 = vld [vmem:[%s4 + $0x18] sm:$0xf]
      %v6496 = vld [vmem:[%s4 + $0x1c] sm:$0xf]
      %v6497 = vld [vmem:[%s4 + $0x20] sm:$0xf]
      %v6530 = vunpack.c.l.b16 %v6463
      %v6531 = vunpack.c.l.b16 %v6464
      %v6532 = vunpack.c.l.b16 %v6465
      %v6533 = vunpack.c.l.b16 %v6466
      %v6534 = vunpack.c.l.b16 %v6467
      %v6535 = vunpack.c.l.b16 %v6468
      %v6536 = vunpack.c.l.b16 %v6469
      %v6537 = vunpack.c.l.b16 %v6470
      %v6538 = vunpack.c.l.b16 %v6471
      %v6539 = vunpack.c.l.b16 %v6472
      %v6540 = vunpack.c.l.b16 %v6473
      %v6541 = vunpack.c.l.b16 %v6474
      %v6542 = vunpack.c.l.b16 %v6475
      %v6543 = vunpack.c.l.b16 %v6476
      %v6544 = vunpack.c.l.b16 %v6477
      %v6545 = vunpack.c.l.b16 %v6478
      %v6546 = vunpack.c.l.b16 %v6479
      %v6547 = vunpack.c.l.b16 %v6480
      %v6548 = vunpack.c.l.b16 %v6481
      %v6549 = vunpack.c.l.b16 %v6482
      %v6550 = vunpack.c.l.b16 %v6483
      %v6551 = vunpack.c.l.b16 %v6484
      %v6552 = vunpack.c.l.b16 %v6485
      %v6553 = vunpack.c.l.b16 %v6486
      %v6554 = vunpack.c.l.b16 %v6487
      %v6555 = vunpack.c.l.b16 %v6488
      %v6556 = vunpack.c.l.b16 %v6489
      %v6557 = vunpack.c.l.b16 %v6490
      %v6558 = vunpack.c.l.b16 %v6491
      %v6559 = vunpack.c.l.b16 %v6492
      %v6560 = vunpack.c.l.b16 %v6493
      %v6561 = vunpack.c.l.b16 %v6494
      %v6562 = vpack.c.b16 %v6531, %v6530
      %v6563 = vpack.c.b16 %v6533, %v6532
      %v6564 = vpack.c.b16 %v6535, %v6534
      %v6565 = vpack.c.b16 %v6537, %v6536
      %v6566 = vpack.c.b16 %v6539, %v6538
      %v6567 = vpack.c.b16 %v6541, %v6540
      %v6568 = vpack.c.b16 %v6543, %v6542
      %v6569 = vpack.c.b16 %v6545, %v6544
      %v6570 = vpack.c.b16 %v6547, %v6546
      %v6571 = vpack.c.b16 %v6549, %v6548
      %v6572 = vpack.c.b16 %v6551, %v6550
      %v6573 = vpack.c.b16 %v6553, %v6552
      %v6574 = vpack.c.b16 %v6555, %v6554
      %v6575 = vpack.c.b16 %v6557, %v6556
      %v6576 = vpack.c.b16 %v6559, %v6558
      %v6577 = vpack.c.b16 %v6561, %v6560
      %v6581 = vunpack.c.l.b16 %v6495
      %v6582 = vunpack.c.l.b16 %v6496
      %v6583 = vunpack.c.l.b16 %v6497
      %v6584 = vpack.c.b16 %v6582, %v6581
      %v6585 = vpack.c.b16 %v6583, %v6583
      %v6588 = vsel %vm5948, %v6562, 0
      %v6591 = vsel %vm5948, %v6563, 0
      %v6594 = vsel %vm5948, %v6564, 0
      %v6597 = vsel %vm5948, %v6565, 0
      %v6600 = vsel %vm5948, %v6566, 0
      %v6603 = vsel %vm5948, %v6567, 0
      %v6606 = vsel %vm5948, %v6568, 0
      %v6609 = vsel %vm5948, %v6569, 0
      %v6612 = vsel %vm5948, %v6570, 0
      %v6615 = vsel %vm5948, %v6571, 0
      %v6618 = vsel %vm5948, %v6572, 0
      %v6621 = vsel %vm5948, %v6573, 0
      %v6624 = vsel %vm5948, %v6574, 0
      %v6627 = vsel %vm5948, %v6575, 0
      %v6630 = vsel %vm5948, %v6576, 0
      %v6633 = vsel %vm5948, %v6577, 0
      %v6636 = vsel %vm5997, %v6585, 0
      %6638 = vmatprep.subr.bf16.mxu0 0
      %6639 = vmatpush1.bf16.msra.mxu0 0
      %6640 = vmatprep.subr.bf16.mxu0 0
      %6641 = vmatpush1.bf16.msra.mxu0 0
      %6642 = vmatprep.subr.bf16.mxu0 0
      %6643 = vmatpush1.bf16.msra.mxu0 0
      %6644 = vmatprep.subr.bf16.mxu0 0
      %6645 = vmatpush1.bf16.msra.mxu0 0
      %6646 = vmatprep.subr.bf16.mxu0 0
      %6647 = vmatpush1.bf16.msra.mxu0 0
      %6648 = vmatprep.subr.bf16.mxu0 0
      %6649 = vmatpush1.bf16.msra.mxu0 0
      %6650 = vmatprep.subr.bf16.mxu0 0
      %6651 = vmatpush1.bf16.msra.mxu0 %v6636
      %6652 = vmatprep.subr.bf16.mxu0 0
      %6653 = vmatpush1.bf16.msra.mxu0 %v6584
      %6654 = vmatprep.subr.bf16.mxu0 0
      %6655 = vmatpush2.bf16.msra.mxu0 0
      %6656 = vmatprep.subr.bf16.mxu0 0
      %6657 = vmatpush2.bf16.msra.mxu0 0
      %6658 = vmatprep.subr.bf16.mxu0 0
      %6659 = vmatpush2.bf16.msra.mxu0 0
      %6660 = vmatprep.subr.bf16.mxu0 0
      %6661 = vmatpush2.bf16.msra.mxu0 0
      %6662 = vmatprep.subr.bf16.mxu0 0
      %6663 = vmatpush2.bf16.msra.mxu0 0
      %6664 = vmatprep.subr.bf16.mxu0 0
      %6665 = vmatpush2.bf16.msra.mxu0 0
      %6666 = vmatprep.subr.bf16.mxu0 0
      %6667 = vmatpush2.bf16.msra.mxu0 0
      %6668 = vmatprep.subr.bf16.mxu0 0
      %6669 = vmatpush2.bf16.msra.mxu0 0
      %6670 = vmatprep.mubr.bf16.mxu0 0
      %6671 = vmatmul.mubr.bf16.gmra.mxu0 %v6588
      %v6672 = vpop.f32.mrf.mxu0
      %v6673 = vadd.f32 0.0, %v6672
      %v6674 = vpop.f32.mrf.mxu0
      %v6675 = vpop.f32.mrf.mxu0
      %v6676 = vadd.f32 0.0, %v6675
      %v6677 = vpop.f32.mrf.mxu0
      %6678 = vmatprep.mubr.bf16.mxu0 0
      %6679 = vmatmul.mubr.bf16.gmra.mxu0 %v6591
      %v6680 = vpop.f32.mrf.mxu0
      %v6681 = vadd.f32 0.0, %v6680
      %v6682 = vpop.f32.mrf.mxu0
      %v6683 = vpop.f32.mrf.mxu0
      %v6684 = vadd.f32 0.0, %v6683
      %v6685 = vpop.f32.mrf.mxu0
      %6686 = vmatprep.mubr.bf16.mxu0 0
      %6687 = vmatmul.mubr.bf16.gmra.mxu0 %v6594
      %v6688 = vpop.f32.mrf.mxu0
      %v6689 = vadd.f32 0.0, %v6688
      %v6690 = vpop.f32.mrf.mxu0
      %v6691 = vpop.f32.mrf.mxu0
      %v6692 = vadd.f32 0.0, %v6691
      %v6693 = vpop.f32.mrf.mxu0
      %6694 = vmatprep.mubr.bf16.mxu0 0
      %6695 = vmatmul.mubr.bf16.gmra.mxu0 %v6597
      %v6696 = vpop.f32.mrf.mxu0
      %v6697 = vadd.f32 0.0, %v6696
      %v6698 = vpop.f32.mrf.mxu0
      %v6699 = vpop.f32.mrf.mxu0
      %v6700 = vadd.f32 0.0, %v6699
      %v6701 = vpop.f32.mrf.mxu0
      %6702 = vmatprep.mubr.bf16.mxu0 0
      %6703 = vmatmul.mubr.bf16.gmra.mxu0 %v6600
      %v6704 = vpop.f32.mrf.mxu0
      %v6705 = vadd.f32 0.0, %v6704
      %v6706 = vpop.f32.mrf.mxu0
      %v6707 = vpop.f32.mrf.mxu0
      %v6708 = vadd.f32 0.0, %v6707
      %v6709 = vpop.f32.mrf.mxu0
      %6710 = vmatprep.mubr.bf16.mxu0 0
      %6711 = vmatmul.mubr.bf16.gmra.mxu0 %v6603
      %v6712 = vpop.f32.mrf.mxu0
      %v6713 = vadd.f32 0.0, %v6712
      %v6714 = vpop.f32.mrf.mxu0
      %v6715 = vpop.f32.mrf.mxu0
      %v6716 = vadd.f32 0.0, %v6715
      %v6717 = vpop.f32.mrf.mxu0
      %6718 = vmatprep.mubr.bf16.mxu0 0
      %6719 = vmatmul.mubr.bf16.gmra.mxu0 %v6606
      %v6720 = vpop.f32.mrf.mxu0
      %v6721 = vadd.f32 0.0, %v6720
      %v6722 = vpop.f32.mrf.mxu0
      %v6723 = vpop.f32.mrf.mxu0
      %v6724 = vadd.f32 0.0, %v6723
      %v6725 = vpop.f32.mrf.mxu0
      %6726 = vmatprep.mubr.bf16.mxu0 0
      %6727 = vmatmul.mubr.bf16.gmra.mxu0 %v6609
      %v6728 = vpop.f32.mrf.mxu0
      %v6729 = vadd.f32 0.0, %v6728
      %v6730 = vpop.f32.mrf.mxu0
      %v6731 = vpop.f32.mrf.mxu0
      %v6732 = vadd.f32 0.0, %v6731
      %v6733 = vpop.f32.mrf.mxu0
      %6734 = vmatprep.mubr.bf16.mxu0 0
      %6735 = vmatmul.mubr.bf16.gmra.mxu0 %v6612
      %v6736 = vpop.f32.mrf.mxu0
      %v6737 = vadd.f32 0.0, %v6736
      %v6738 = vpop.f32.mrf.mxu0
      %v6739 = vpop.f32.mrf.mxu0
      %v6740 = vadd.f32 0.0, %v6739
      %v6741 = vpop.f32.mrf.mxu0
      %6742 = vmatprep.mubr.bf16.mxu0 0
      %6743 = vmatmul.mubr.bf16.gmra.mxu0 %v6615
      %v6744 = vpop.f32.mrf.mxu0
      %v6745 = vadd.f32 0.0, %v6744
      %v6746 = vpop.f32.mrf.mxu0
      %v6747 = vpop.f32.mrf.mxu0
      %v6748 = vadd.f32 0.0, %v6747
      %v6749 = vpop.f32.mrf.mxu0
      %6750 = vmatprep.mubr.bf16.mxu0 0
      %6751 = vmatmul.mubr.bf16.gmra.mxu0 %v6618
      %v6752 = vpop.f32.mrf.mxu0
      %v6753 = vadd.f32 0.0, %v6752
      %v6754 = vpop.f32.mrf.mxu0
      %v6755 = vpop.f32.mrf.mxu0
      %v6756 = vadd.f32 0.0, %v6755
      %v6757 = vpop.f32.mrf.mxu0
      %6758 = vmatprep.mubr.bf16.mxu0 0
      %6759 = vmatmul.mubr.bf16.gmra.mxu0 %v6621
      %v6760 = vpop.f32.mrf.mxu0
      %v6761 = vadd.f32 0.0, %v6760
      %v6762 = vpop.f32.mrf.mxu0
      %v6763 = vpop.f32.mrf.mxu0
      %v6764 = vadd.f32 0.0, %v6763
      %v6765 = vpop.f32.mrf.mxu0
      %6766 = vmatprep.mubr.bf16.mxu0 0
      %6767 = vmatmul.mubr.bf16.gmra.mxu0 %v6624
      %v6768 = vpop.f32.mrf.mxu0
      %v6769 = vadd.f32 0.0, %v6768
      %v6770 = vpop.f32.mrf.mxu0
      %v6771 = vpop.f32.mrf.mxu0
      %v6772 = vadd.f32 0.0, %v6771
      %v6773 = vpop.f32.mrf.mxu0
      %6774 = vmatprep.mubr.bf16.mxu0 0
      %6775 = vmatmul.mubr.bf16.gmra.mxu0 %v6627
      %v6776 = vpop.f32.mrf.mxu0
      %v6777 = vadd.f32 0.0, %v6776
      %v6778 = vpop.f32.mrf.mxu0
      %v6779 = vpop.f32.mrf.mxu0
      %v6780 = vadd.f32 0.0, %v6779
      %v6781 = vpop.f32.mrf.mxu0
      %6782 = vmatprep.mubr.bf16.mxu0 0
      %6783 = vmatmul.mubr.bf16.gmra.mxu0 %v6630
      %v6784 = vpop.f32.mrf.mxu0
      %v6785 = vadd.f32 0.0, %v6784
      %v6786 = vpop.f32.mrf.mxu0
      %v6787 = vpop.f32.mrf.mxu0
      %v6788 = vadd.f32 0.0, %v6787
      %v6789 = vpop.f32.mrf.mxu0
      %6790 = vmatprep.mubr.bf16.mxu0 0
      %6791 = vmatmul.mubr.bf16.gmra.mxu0 %v6633
      %v6792 = vpop.f32.mrf.mxu0
      %v6793 = vadd.f32 0.0, %v6792
      %v6794 = vpop.f32.mrf.mxu0
      %v6795 = vpop.f32.mrf.mxu0
      %v6796 = vadd.f32 0.0, %v6795
      %v6797 = vpop.f32.mrf.mxu0
      %6798 = vdwg.mxu0
      %v6799 = vadd.f32 %v6337, %v6673
      %v6800 = vadd.f32 %v6340, %v6676
      %v6801 = vadd.f32 %v6345, %v6681
      %v6802 = vadd.f32 %v6348, %v6684
      %v6803 = vadd.f32 %v6353, %v6689
      %v6804 = vadd.f32 %v6356, %v6692
      %v6805 = vadd.f32 %v6361, %v6697
      %v6806 = vadd.f32 %v6364, %v6700
      %v6807 = vadd.f32 %v6369, %v6705
      %v6808 = vadd.f32 %v6372, %v6708
      %v6809 = vadd.f32 %v6377, %v6713
      %v6810 = vadd.f32 %v6380, %v6716
      %v6811 = vadd.f32 %v6385, %v6721
      %v6812 = vadd.f32 %v6388, %v6724
      %v6813 = vadd.f32 %v6393, %v6729
      %v6814 = vadd.f32 %v6396, %v6732
      %v6815 = vadd.f32 %v6401, %v6737
      %v6816 = vadd.f32 %v6404, %v6740
      %v6817 = vadd.f32 %v6409, %v6745
      %v6818 = vadd.f32 %v6412, %v6748
      %v6819 = vadd.f32 %v6417, %v6753
      %v6820 = vadd.f32 %v6420, %v6756
      %v6821 = vadd.f32 %v6425, %v6761
      %v6822 = vadd.f32 %v6428, %v6764
      %v6823 = vadd.f32 %v6433, %v6769
      %v6824 = vadd.f32 %v6436, %v6772
      %v6825 = vadd.f32 %v6441, %v6777
      %v6826 = vadd.f32 %v6444, %v6780
      %v6827 = vadd.f32 %v6449, %v6785
      %v6828 = vadd.f32 %v6452, %v6788
      %v6829 = vadd.f32 %v6457, %v6793
      %v6830 = vadd.f32 %v6460, %v6796
      %v6831 = vld [vmem:[%s5] sm:$0x1]
      %v6832 = vlaneseq
      %v6833 = vshrl.u32 %v6832, 7
      %v6834 = vsub.s32 0, %v6833
      %v6835 = vrot.slane %v6831, %v6834
      %v6836 = vadd.f32 %v6799, %v6835
      %v6837 = vadd.f32 %v6800, %v6835
      %v6838 = vadd.f32 %v6801, %v6835
      %v6839 = vadd.f32 %v6802, %v6835
      %v6840 = vadd.f32 %v6803, %v6835
      %v6841 = vadd.f32 %v6804, %v6835
      %v6842 = vadd.f32 %v6805, %v6835
      %v6843 = vadd.f32 %v6806, %v6835
      %v6844 = vadd.f32 %v6807, %v6835
      %v6845 = vadd.f32 %v6808, %v6835
      %v6846 = vadd.f32 %v6809, %v6835
      %v6847 = vadd.f32 %v6810, %v6835
      %v6848 = vadd.f32 %v6811, %v6835
      %v6849 = vadd.f32 %v6812, %v6835
      %v6850 = vadd.f32 %v6813, %v6835
      %v6851 = vadd.f32 %v6814, %v6835
      %v6852 = vadd.f32 %v6815, %v6835
      %v6853 = vadd.f32 %v6816, %v6835
      %v6854 = vadd.f32 %v6817, %v6835
      %v6855 = vadd.f32 %v6818, %v6835
      %v6856 = vadd.f32 %v6819, %v6835
      %v6857 = vadd.f32 %v6820, %v6835
      %v6858 = vadd.f32 %v6821, %v6835
      %v6859 = vadd.f32 %v6822, %v6835
      %v6860 = vadd.f32 %v6823, %v6835
      %v6861 = vadd.f32 %v6824, %v6835
      %v6862 = vadd.f32 %v6825, %v6835
      %v6863 = vadd.f32 %v6826, %v6835
      %v6864 = vadd.f32 %v6827, %v6835
      %v6865 = vadd.f32 %v6828, %v6835
      %v6866 = vadd.f32 %v6829, %v6835
      %v6867 = vadd.f32 %v6830, %v6835
      %v6868 = vxor.u32 %v6836, 2147483648
      %v6869 = vxor.u32 %v6837, 2147483648
      %v6870 = vxor.u32 %v6838, 2147483648
      %v6871 = vxor.u32 %v6839, 2147483648
      %v6872 = vxor.u32 %v6840, 2147483648
      %v6873 = vxor.u32 %v6841, 2147483648
      %v6874 = vxor.u32 %v6842, 2147483648
      %v6875 = vxor.u32 %v6843, 2147483648
      %v6876 = vxor.u32 %v6844, 2147483648
      %v6877 = vxor.u32 %v6845, 2147483648
      %v6878 = vxor.u32 %v6846, 2147483648
      %v6879 = vxor.u32 %v6847, 2147483648
      %v6880 = vxor.u32 %v6848, 2147483648
      %v6881 = vxor.u32 %v6849, 2147483648
      %v6882 = vxor.u32 %v6850, 2147483648
      %v6883 = vxor.u32 %v6851, 2147483648
      %v6884 = vxor.u32 %v6852, 2147483648
      %v6885 = vxor.u32 %v6853, 2147483648
      %v6886 = vxor.u32 %v6854, 2147483648
      %v6887 = vxor.u32 %v6855, 2147483648
      %v6888 = vxor.u32 %v6856, 2147483648
      %v6889 = vxor.u32 %v6857, 2147483648
      %v6890 = vxor.u32 %v6858, 2147483648
      %v6891 = vxor.u32 %v6859, 2147483648
      %v6892 = vxor.u32 %v6860, 2147483648
      %v6893 = vxor.u32 %v6861, 2147483648
      %v6894 = vxor.u32 %v6862, 2147483648
      %v6895 = vxor.u32 %v6863, 2147483648
      %v6896 = vxor.u32 %v6864, 2147483648
      %v6897 = vxor.u32 %v6865, 2147483648
      %v6898 = vxor.u32 %v6866, 2147483648
      %v6899 = vxor.u32 %v6867, 2147483648
      %v6900 = vmul.f32 %v6868, 1.442695
      %v6901 = vpow.pop %v6900
      %v6902 = vmul.f32 %v6869, 1.442695
      %v6903 = vpow.pop %v6902
      %v6904 = vmul.f32 %v6870, 1.442695
      %v6905 = vpow.pop %v6904
      %v6906 = vmul.f32 %v6871, 1.442695
      %v6907 = vpow.pop %v6906
      %v6908 = vmul.f32 %v6872, 1.442695
      %v6909 = vpow.pop %v6908
      %v6910 = vmul.f32 %v6873, 1.442695
      %v6911 = vpow.pop %v6910
      %v6912 = vmul.f32 %v6874, 1.442695
      %v6913 = vpow.pop %v6912
      %v6914 = vmul.f32 %v6875, 1.442695
      %v6915 = vpow.pop %v6914
      %v6916 = vmul.f32 %v6876, 1.442695
      %v6917 = vpow.pop %v6916
      %v6918 = vmul.f32 %v6877, 1.442695
      %v6919 = vpow.pop %v6918
      %v6920 = vmul.f32 %v6878, 1.442695
      %v6921 = vpow.pop %v6920
      %v6922 = vmul.f32 %v6879, 1.442695
      %v6923 = vpow.pop %v6922
      %v6924 = vmul.f32 %v6880, 1.442695
      %v6925 = vpow.pop %v6924
      %v6926 = vmul.f32 %v6881, 1.442695
      %v6927 = vpow.pop %v6926
      %v6928 = vmul.f32 %v6882, 1.442695
      %v6929 = vpow.pop %v6928
      %v6930 = vmul.f32 %v6883, 1.442695
      %v6931 = vpow.pop %v6930
      %v6932 = vmul.f32 %v6884, 1.442695
      %v6933 = vpow.pop %v6932
      %v6934 = vmul.f32 %v6885, 1.442695
      %v6935 = vpow.pop %v6934
      %v6936 = vmul.f32 %v6886, 1.442695
      %v6937 = vpow.pop %v6936
      %v6938 = vmul.f32 %v6887, 1.442695
      %v6939 = vpow.pop %v6938
      %v6940 = vmul.f32 %v6888, 1.442695
      %v6941 = vpow.pop %v6940
      %v6942 = vmul.f32 %v6889, 1.442695
      %v6943 = vpow.pop %v6942
      %v6944 = vmul.f32 %v6890, 1.442695
      %v6945 = vpow.pop %v6944
      %v6946 = vmul.f32 %v6891, 1.442695
      %v6947 = vpow.pop %v6946
      %v6948 = vmul.f32 %v6892, 1.442695
      %v6949 = vpow.pop %v6948
      %v6950 = vmul.f32 %v6893, 1.442695
      %v6951 = vpow.pop %v6950
      %v6952 = vmul.f32 %v6894, 1.442695
      %v6953 = vpow.pop %v6952
      %v6954 = vmul.f32 %v6895, 1.442695
      %v6955 = vpow.pop %v6954
      %v6956 = vmul.f32 %v6896, 1.442695
      %v6957 = vpow.pop %v6956
      %v6958 = vmul.f32 %v6897, 1.442695
      %v6959 = vpow.pop %v6958
      %v6960 = vmul.f32 %v6898, 1.442695
      %v6961 = vpow.pop %v6960
      %v6962 = vmul.f32 %v6899, 1.442695
      %v6963 = vpow.pop %v6962
      %v6964 = vadd.f32 %v6901, 1.0
      %v6965 = vadd.f32 %v6903, 1.0
      %v6966 = vadd.f32 %v6905, 1.0
      %v6967 = vadd.f32 %v6907, 1.0
      %v6968 = vadd.f32 %v6909, 1.0
      %v6969 = vadd.f32 %v6911, 1.0
      %v6970 = vadd.f32 %v6913, 1.0
      %v6971 = vadd.f32 %v6915, 1.0
      %v6972 = vadd.f32 %v6917, 1.0
      %v6973 = vadd.f32 %v6919, 1.0
      %v6974 = vadd.f32 %v6921, 1.0
      %v6975 = vadd.f32 %v6923, 1.0
      %v6976 = vadd.f32 %v6925, 1.0
      %v6977 = vadd.f32 %v6927, 1.0
      %v6978 = vadd.f32 %v6929, 1.0
      %v6979 = vadd.f32 %v6931, 1.0
      %v6980 = vadd.f32 %v6933, 1.0
      %v6981 = vadd.f32 %v6935, 1.0
      %v6982 = vadd.f32 %v6937, 1.0
      %v6983 = vadd.f32 %v6939, 1.0
      %v6984 = vadd.f32 %v6941, 1.0
      %v6985 = vadd.f32 %v6943, 1.0
      %v6986 = vadd.f32 %v6945, 1.0
      %v6987 = vadd.f32 %v6947, 1.0
      %v6988 = vadd.f32 %v6949, 1.0
      %v6989 = vadd.f32 %v6951, 1.0
      %v6990 = vadd.f32 %v6953, 1.0
      %v6991 = vadd.f32 %v6955, 1.0
      %v6992 = vadd.f32 %v6957, 1.0
      %v6993 = vadd.f32 %v6959, 1.0
      %v6994 = vadd.f32 %v6961, 1.0
      %v6995 = vadd.f32 %v6963, 1.0
      %v6996 = vrcp.pop %v6964
      %v6997 = vmul.f32 1.0, %v6996
      %v6998 = vrcp.pop %v6965
      %v6999 = vmul.f32 1.0, %v6998
      %v7000 = vrcp.pop %v6966
      %v7001 = vmul.f32 1.0, %v7000
      %v7002 = vrcp.pop %v6967
      %v7003 = vmul.f32 1.0, %v7002
      %v7004 = vrcp.pop %v6968
      %v7005 = vmul.f32 1.0, %v7004
      %v7006 = vrcp.pop %v6969
      %v7007 = vmul.f32 1.0, %v7006
      %v7008 = vrcp.pop %v6970
      %v7009 = vmul.f32 1.0, %v7008
      %v7010 = vrcp.pop %v6971
      %v7011 = vmul.f32 1.0, %v7010
      %v7012 = vrcp.pop %v6972
      %v7013 = vmul.f32 1.0, %v7012
      %v7014 = vrcp.pop %v6973
      %v7015 = vmul.f32 1.0, %v7014
      %v7016 = vrcp.pop %v6974
      %v7017 = vmul.f32 1.0, %v7016
      %v7018 = vrcp.pop %v6975
      %v7019 = vmul.f32 1.0, %v7018
      %v7020 = vrcp.pop %v6976
      %v7021 = vmul.f32 1.0, %v7020
      %v7022 = vrcp.pop %v6977
      %v7023 = vmul.f32 1.0, %v7022
      %v7024 = vrcp.pop %v6978
      %v7025 = vmul.f32 1.0, %v7024
      %v7026 = vrcp.pop %v6979
      %v7027 = vmul.f32 1.0, %v7026
      %v7028 = vrcp.pop %v6980
      %v7029 = vmul.f32 1.0, %v7028
      %v7030 = vrcp.pop %v6981
      %v7031 = vmul.f32 1.0, %v7030
      %v7032 = vrcp.pop %v6982
      %v7033 = vmul.f32 1.0, %v7032
      %v7034 = vrcp.pop %v6983
      %v7035 = vmul.f32 1.0, %v7034
      %v7036 = vrcp.pop %v6984
      %v7037 = vmul.f32 1.0, %v7036
      %v7038 = vrcp.pop %v6985
      %v7039 = vmul.f32 1.0, %v7038
      %v7040 = vrcp.pop %v6986
      %v7041 = vmul.f32 1.0, %v7040
      %v7042 = vrcp.pop %v6987
      %v7043 = vmul.f32 1.0, %v7042
      %v7044 = vrcp.pop %v6988
      %v7045 = vmul.f32 1.0, %v7044
      %v7046 = vrcp.pop %v6989
      %v7047 = vmul.f32 1.0, %v7046
      %v7048 = vrcp.pop %v6990
      %v7049 = vmul.f32 1.0, %v7048
      %v7050 = vrcp.pop %v6991
      %v7051 = vmul.f32 1.0, %v7050
      %v7052 = vrcp.pop %v6992
      %v7053 = vmul.f32 1.0, %v7052
      %v7054 = vrcp.pop %v6993
      %v7055 = vmul.f32 1.0, %v7054
      %v7056 = vrcp.pop %v6994
      %v7057 = vmul.f32 1.0, %v7056
      %v7058 = vrcp.pop %v6995
      %v7059 = vmul.f32 1.0, %v7058
      %v7060 = vmul.f32 %v6836, %v6997
      %v7061 = vmul.f32 %v6837, %v6999
      %v7062 = vmul.f32 %v6838, %v7001
      %v7063 = vmul.f32 %v6839, %v7003
      %v7064 = vmul.f32 %v6840, %v7005
      %v7065 = vmul.f32 %v6841, %v7007
      %v7066 = vmul.f32 %v6842, %v7009
      %v7067 = vmul.f32 %v6843, %v7011
      %v7068 = vmul.f32 %v6844, %v7013
      %v7069 = vmul.f32 %v6845, %v7015
      %v7070 = vmul.f32 %v6846, %v7017
      %v7071 = vmul.f32 %v6847, %v7019
      %v7072 = vmul.f32 %v6848, %v7021
      %v7073 = vmul.f32 %v6849, %v7023
      %v7074 = vmul.f32 %v6850, %v7025
      %v7075 = vmul.f32 %v6851, %v7027
      %v7076 = vmul.f32 %v6852, %v7029
      %v7077 = vmul.f32 %v6853, %v7031
      %v7078 = vmul.f32 %v6854, %v7033
      %v7079 = vmul.f32 %v6855, %v7035
      %v7080 = vmul.f32 %v6856, %v7037
      %v7081 = vmul.f32 %v6857, %v7039
      %v7082 = vmul.f32 %v6858, %v7041
      %v7083 = vmul.f32 %v6859, %v7043
      %v7084 = vmul.f32 %v6860, %v7045
      %v7085 = vmul.f32 %v6861, %v7047
      %v7086 = vmul.f32 %v6862, %v7049
      %v7087 = vmul.f32 %v6863, %v7051
      %v7088 = vmul.f32 %v6864, %v7053
      %v7089 = vmul.f32 %v6865, %v7055
      %v7090 = vmul.f32 %v6866, %v7057
      %v7091 = vmul.f32 %v6867, %v7059
      %v7092 = vsel %vm3437, %v7060, 0.0
      %v7093 = vsel %vm3437, %v7061, 0.0
      %v7094 = vadd.f32 %v7092, %v7093
      %v7095 = vsel %vm3437, %v7062, 0.0
      %v7096 = vadd.f32 %v7094, %v7095
      %v7097 = vsel %vm3437, %v7063, 0.0
      %v7098 = vadd.f32 %v7096, %v7097
      %v7099 = vsel %vm3437, %v7064, 0.0
      %v7100 = vadd.f32 %v7098, %v7099
      %v7101 = vsel %vm3437, %v7065, 0.0
      %v7102 = vadd.f32 %v7100, %v7101
      %v7103 = vsel %vm3437, %v7066, 0.0
      %v7104 = vadd.f32 %v7102, %v7103
      %v7105 = vsel %vm3437, %v7067, 0.0
      %v7106 = vadd.f32 %v7104, %v7105
      %v7107 = vsel %vm3437, %v7068, 0.0
      %v7108 = vadd.f32 %v7106, %v7107
      %v7109 = vsel %vm3437, %v7069, 0.0
      %v7110 = vadd.f32 %v7108, %v7109
      %v7111 = vsel %vm3437, %v7070, 0.0
      %v7112 = vadd.f32 %v7110, %v7111
      %v7113 = vsel %vm3437, %v7071, 0.0
      %v7114 = vadd.f32 %v7112, %v7113
      %v7115 = vsel %vm3437, %v7072, 0.0
      %v7116 = vadd.f32 %v7114, %v7115
      %v7117 = vsel %vm3437, %v7073, 0.0
      %v7118 = vadd.f32 %v7116, %v7117
      %v7119 = vsel %vm3437, %v7074, 0.0
      %v7120 = vadd.f32 %v7118, %v7119
      %v7121 = vsel %vm3437, %v7075, 0.0
      %v7122 = vadd.f32 %v7120, %v7121
      %v7123 = vsel %vm3437, %v7076, 0.0
      %v7124 = vadd.f32 %v7122, %v7123
      %v7125 = vsel %vm3437, %v7077, 0.0
      %v7126 = vadd.f32 %v7124, %v7125
      %v7127 = vsel %vm3437, %v7078, 0.0
      %v7128 = vadd.f32 %v7126, %v7127
      %v7129 = vsel %vm3437, %v7079, 0.0
      %v7130 = vadd.f32 %v7128, %v7129
      %v7131 = vsel %vm3437, %v7080, 0.0
      %v7132 = vadd.f32 %v7130, %v7131
      %v7133 = vsel %vm3437, %v7081, 0.0
      %v7134 = vadd.f32 %v7132, %v7133
      %v7135 = vsel %vm3437, %v7082, 0.0
      %v7136 = vadd.f32 %v7134, %v7135
      %v7137 = vsel %vm3437, %v7083, 0.0
      %v7138 = vadd.f32 %v7136, %v7137
      %v7139 = vsel %vm3437, %v7084, 0.0
      %v7140 = vadd.f32 %v7138, %v7139
      %v7141 = vsel %vm3437, %v7085, 0.0
      %v7142 = vadd.f32 %v7140, %v7141
      %v7143 = vsel %vm3437, %v7086, 0.0
      %v7144 = vadd.f32 %v7142, %v7143
      %v7145 = vsel %vm3437, %v7087, 0.0
      %v7146 = vadd.f32 %v7144, %v7145
      %v7147 = vsel %vm3437, %v7088, 0.0
      %v7148 = vadd.f32 %v7146, %v7147
      %v7149 = vsel %vm3437, %v7089, 0.0
      %v7150 = vadd.f32 %v7148, %v7149
      %v7151 = vsel %vm3437, %v7090, 0.0
      %v7152 = vadd.f32 %v7150, %v7151
      %v7153 = vsel %vm3437, %v7091, 0.0
      %v7154 = vadd.f32 %v7152, %v7153
      %v7155 = vrot.slane %v7154, 4
      %v7156 = vadd.f32 %v7154, %v7155
      %v7157 = vrot.slane %v7156, 2
      %v7158 = vadd.f32 %v7156, %v7157
      %v7159 = vrot.slane %v7158, 1
      %v7160 = vadd.f32 %v7158, %v7159
      %v7161 = vmul.f32 %v7060, %v7060
      %v7162 = vmul.f32 %v7061, %v7061
      %v7163 = vmul.f32 %v7062, %v7062
      %v7164 = vmul.f32 %v7063, %v7063
      %v7165 = vmul.f32 %v7064, %v7064
      %v7166 = vmul.f32 %v7065, %v7065
      %v7167 = vmul.f32 %v7066, %v7066
      %v7168 = vmul.f32 %v7067, %v7067
      %v7169 = vmul.f32 %v7068, %v7068
      %v7170 = vmul.f32 %v7069, %v7069
      %v7171 = vmul.f32 %v7070, %v7070
      %v7172 = vmul.f32 %v7071, %v7071
      %v7173 = vmul.f32 %v7072, %v7072
      %v7174 = vmul.f32 %v7073, %v7073
      %v7175 = vmul.f32 %v7074, %v7074
      %v7176 = vmul.f32 %v7075, %v7075
      %v7177 = vmul.f32 %v7076, %v7076
      %v7178 = vmul.f32 %v7077, %v7077
      %v7179 = vmul.f32 %v7078, %v7078
      %v7180 = vmul.f32 %v7079, %v7079
      %v7181 = vmul.f32 %v7080, %v7080
      %v7182 = vmul.f32 %v7081, %v7081
      %v7183 = vmul.f32 %v7082, %v7082
      %v7184 = vmul.f32 %v7083, %v7083
      %v7185 = vmul.f32 %v7084, %v7084
      %v7186 = vmul.f32 %v7085, %v7085
      %v7187 = vmul.f32 %v7086, %v7086
      %v7188 = vmul.f32 %v7087, %v7087
      %v7189 = vmul.f32 %v7088, %v7088
      %v7190 = vmul.f32 %v7089, %v7089
      %v7191 = vmul.f32 %v7090, %v7090
      %v7192 = vmul.f32 %v7091, %v7091
      %v7193 = vsel %vm3437, %v7161, 0.0
      %v7194 = vsel %vm3437, %v7162, 0.0
      %v7195 = vadd.f32 %v7193, %v7194
      %v7196 = vsel %vm3437, %v7163, 0.0
      %v7197 = vadd.f32 %v7195, %v7196
      %v7198 = vsel %vm3437, %v7164, 0.0
      %v7199 = vadd.f32 %v7197, %v7198
      %v7200 = vsel %vm3437, %v7165, 0.0
      %v7201 = vadd.f32 %v7199, %v7200
      %v7202 = vsel %vm3437, %v7166, 0.0
      %v7203 = vadd.f32 %v7201, %v7202
      %v7204 = vsel %vm3437, %v7167, 0.0
      %v7205 = vadd.f32 %v7203, %v7204
      %v7206 = vsel %vm3437, %v7168, 0.0
      %v7207 = vadd.f32 %v7205, %v7206
      %v7208 = vsel %vm3437, %v7169, 0.0
      %v7209 = vadd.f32 %v7207, %v7208
      %v7210 = vsel %vm3437, %v7170, 0.0
      %v7211 = vadd.f32 %v7209, %v7210
      %v7212 = vsel %vm3437, %v7171, 0.0
      %v7213 = vadd.f32 %v7211, %v7212
      %v7214 = vsel %vm3437, %v7172, 0.0
      %v7215 = vadd.f32 %v7213, %v7214
      %v7216 = vsel %vm3437, %v7173, 0.0
      %v7217 = vadd.f32 %v7215, %v7216
      %v7218 = vsel %vm3437, %v7174, 0.0
      %v7219 = vadd.f32 %v7217, %v7218
      %v7220 = vsel %vm3437, %v7175, 0.0
      %v7221 = vadd.f32 %v7219, %v7220
      %v7222 = vsel %vm3437, %v7176, 0.0
      %v7223 = vadd.f32 %v7221, %v7222
      %v7224 = vsel %vm3437, %v7177, 0.0
      %v7225 = vadd.f32 %v7223, %v7224
      %v7226 = vsel %vm3437, %v7178, 0.0
      %v7227 = vadd.f32 %v7225, %v7226
      %v7228 = vsel %vm3437, %v7179, 0.0
      %v7229 = vadd.f32 %v7227, %v7228
      %v7230 = vsel %vm3437, %v7180, 0.0
      %v7231 = vadd.f32 %v7229, %v7230
      %v7232 = vsel %vm3437, %v7181, 0.0
      %v7233 = vadd.f32 %v7231, %v7232
      %v7234 = vsel %vm3437, %v7182, 0.0
      %v7235 = vadd.f32 %v7233, %v7234
      %v7236 = vsel %vm3437, %v7183, 0.0
      %v7237 = vadd.f32 %v7235, %v7236
      %v7238 = vsel %vm3437, %v7184, 0.0
      %v7239 = vadd.f32 %v7237, %v7238
      %v7240 = vsel %vm3437, %v7185, 0.0
      %v7241 = vadd.f32 %v7239, %v7240
      %v7242 = vsel %vm3437, %v7186, 0.0
      %v7243 = vadd.f32 %v7241, %v7242
      %v7244 = vsel %vm3437, %v7187, 0.0
      %v7245 = vadd.f32 %v7243, %v7244
      %v7246 = vsel %vm3437, %v7188, 0.0
      %v7247 = vadd.f32 %v7245, %v7246
      %v7248 = vsel %vm3437, %v7189, 0.0
      %v7249 = vadd.f32 %v7247, %v7248
      %v7250 = vsel %vm3437, %v7190, 0.0
      %v7251 = vadd.f32 %v7249, %v7250
      %v7252 = vsel %vm3437, %v7191, 0.0
      %v7253 = vadd.f32 %v7251, %v7252
      %v7254 = vsel %vm3437, %v7192, 0.0
      %v7255 = vadd.f32 %v7253, %v7254
      %v7256 = vrot.slane %v7255, 4
      %v7257 = vadd.f32 %v7255, %v7256
      %v7258 = vrot.slane %v7257, 2
      %v7259 = vadd.f32 %v7257, %v7258
      %v7260 = vrot.slane %v7259, 1
      %v7261 = vadd.f32 %v7259, %v7260
      %v7262 = vld [vmem:[%s6] sm:$0xff]
      %v7264 = vsel %vm3437, %v7160, 0
      %7266 = vmatprep.subr.mxu0 0.0
      %7267 = vmatpush1.msra.mxu0 0.0
      %7268 = vmatprep.subr.mxu0 0.0
      %7269 = vmatpush1.msra.mxu0 0.0
      %7270 = vmatprep.subr.mxu0 0.0
      %7271 = vmatpush1.msra.mxu0 0.0
      %7272 = vmatprep.subr.mxu0 0.0
      %7273 = vmatpush1.msra.mxu0 0.0
      %7274 = vmatprep.subr.mxu0 0.0
      %7275 = vmatpush1.msra.mxu0 0.0
      %7276 = vmatprep.subr.mxu0 0.0
      %7277 = vmatpush1.msra.mxu0 0.0
      %7278 = vmatprep.subr.mxu0 0.0
      %7279 = vmatpush1.msra.mxu0 0.0
      %7280 = vmatprep.subr.mxu0 0.0
      %7281 = vmatpush1.msra.mxu0 0.0
      %7282 = vmatprep.subr.mxu0 0.0
      %7283 = vmatpush1.msra.mxu0 0.0
      %7284 = vmatprep.subr.mxu0 0.0
      %7285 = vmatpush1.msra.mxu0 0.0
      %7286 = vmatprep.subr.mxu0 0.0
      %7287 = vmatpush1.msra.mxu0 0.0
      %7288 = vmatprep.subr.mxu0 0.0
      %7289 = vmatpush1.msra.mxu0 0.0
      %7290 = vmatprep.subr.mxu0 0.0
      %7291 = vmatpush1.msra.mxu0 0.0
      %7292 = vmatprep.subr.mxu0 0.0
      %7293 = vmatpush1.msra.mxu0 0.0
      %7294 = vmatprep.subr.mxu0 0.0
      %7295 = vmatpush1.msra.mxu0 0.0
      %7296 = vmatprep.subr.mxu0 0.0
      %7297 = vmatpush1.msra.mxu0 %v7262
      %7298 = vmatprep.subr.mxu0 0.0
      %7299 = vmatpush2.msra.mxu0 0.0
      %7300 = vmatprep.subr.mxu0 0.0
      %7301 = vmatpush2.msra.mxu0 0.0
      %7302 = vmatprep.subr.mxu0 0.0
      %7303 = vmatpush2.msra.mxu0 0.0
      %7304 = vmatprep.subr.mxu0 0.0
      %7305 = vmatpush2.msra.mxu0 0.0
      %7306 = vmatprep.subr.mxu0 0.0
      %7307 = vmatpush2.msra.mxu0 0.0
      %7308 = vmatprep.subr.mxu0 0.0
      %7309 = vmatpush2.msra.mxu0 0.0
      %7310 = vmatprep.subr.mxu0 0.0
      %7311 = vmatpush2.msra.mxu0 0.0
      %7312 = vmatprep.subr.mxu0 0.0
      %7313 = vmatpush2.msra.mxu0 0.0
      %7314 = vmatprep.subr.mxu0 0.0
      %7315 = vmatpush2.msra.mxu0 0.0
      %7316 = vmatprep.subr.mxu0 0.0
      %7317 = vmatpush2.msra.mxu0 0.0
      %7318 = vmatprep.subr.mxu0 0.0
      %7319 = vmatpush2.msra.mxu0 0.0
      %7320 = vmatprep.subr.mxu0 0.0
      %7321 = vmatpush2.msra.mxu0 0.0
      %7322 = vmatprep.subr.mxu0 0.0
      %7323 = vmatpush2.msra.mxu0 0.0
      %7324 = vmatprep.subr.mxu0 0.0
      %7325 = vmatpush2.msra.mxu0 0.0
      %7326 = vmatprep.subr.mxu0 0.0
      %7327 = vmatpush2.msra.mxu0 0.0
      %7328 = vmatprep.subr.mxu0 0.0
      %7329 = vmatpush2.msra.mxu0 0.0
      %7330 = vmatprep.mubr.f32.mxu0 0.0
      %7331 = vmatmul.mubr.f32.gmra.mxu0 %v7264
      %v7332 = vpop.f32.mrf.mxu0
      %v7333 = vadd.f32 0.0, %v7332
      %v7334 = vpop.f32.mrf.mxu0
      %7335 = vdwg.mxu0
      %v7337 = vsel %vm3437, %v7261, 0
      %7339 = vmatprep.subr.mxu0 0.0
      %7340 = vmatpush1.msra.mxu0 0.0
      %7341 = vmatprep.subr.mxu0 0.0
      %7342 = vmatpush1.msra.mxu0 0.0
      %7343 = vmatprep.subr.mxu0 0.0
      %7344 = vmatpush1.msra.mxu0 0.0
      %7345 = vmatprep.subr.mxu0 0.0
      %7346 = vmatpush1.msra.mxu0 0.0
      %7347 = vmatprep.subr.mxu0 0.0
      %7348 = vmatpush1.msra.mxu0 0.0
      %7349 = vmatprep.subr.mxu0 0.0
      %7350 = vmatpush1.msra.mxu0 0.0
      %7351 = vmatprep.subr.mxu0 0.0
      %7352 = vmatpush1.msra.mxu0 0.0
      %7353 = vmatprep.subr.mxu0 0.0
      %7354 = vmatpush1.msra.mxu0 0.0
      %7355 = vmatprep.subr.mxu0 0.0
      %7356 = vmatpush1.msra.mxu0 0.0
      %7357 = vmatprep.subr.mxu0 0.0
      %7358 = vmatpush1.msra.mxu0 0.0
      %7359 = vmatprep.subr.mxu0 0.0
      %7360 = vmatpush1.msra.mxu0 0.0
      %7361 = vmatprep.subr.mxu0 0.0
      %7362 = vmatpush1.msra.mxu0 0.0
      %7363 = vmatprep.subr.mxu0 0.0
      %7364 = vmatpush1.msra.mxu0 0.0
      %7365 = vmatprep.subr.mxu0 0.0
      %7366 = vmatpush1.msra.mxu0 0.0
      %7367 = vmatprep.subr.mxu0 0.0
      %7368 = vmatpush1.msra.mxu0 0.0
      %7369 = vmatprep.subr.mxu0 0.0
      %7370 = vmatpush1.msra.mxu0 %v7262
      %7371 = vmatprep.subr.mxu0 0.0
      %7372 = vmatpush2.msra.mxu0 0.0
      %7373 = vmatprep.subr.mxu0 0.0
      %7374 = vmatpush2.msra.mxu0 0.0
      %7375 = vmatprep.subr.mxu0 0.0
      %7376 = vmatpush2.msra.mxu0 0.0
      %7377 = vmatprep.subr.mxu0 0.0
      %7378 = vmatpush2.msra.mxu0 0.0
      %7379 = vmatprep.subr.mxu0 0.0
      %7380 = vmatpush2.msra.mxu0 0.0
      %7381 = vmatprep.subr.mxu0 0.0
      %7382 = vmatpush2.msra.mxu0 0.0
      %7383 = vmatprep.subr.mxu0 0.0
      %7384 = vmatpush2.msra.mxu0 0.0
      %7385 = vmatprep.subr.mxu0 0.0
      %7386 = vmatpush2.msra.mxu0 0.0
      %7387 = vmatprep.subr.mxu0 0.0
      %7388 = vmatpush2.msra.mxu0 0.0
      %7389 = vmatprep.subr.mxu0 0.0
      %7390 = vmatpush2.msra.mxu0 0.0
      %7391 = vmatprep.subr.mxu0 0.0
      %7392 = vmatpush2.msra.mxu0 0.0
      %7393 = vmatprep.subr.mxu0 0.0
      %7394 = vmatpush2.msra.mxu0 0.0
      %7395 = vmatprep.subr.mxu0 0.0
      %7396 = vmatpush2.msra.mxu0 0.0
      %7397 = vmatprep.subr.mxu0 0.0
      %7398 = vmatpush2.msra.mxu0 0.0
      %7399 = vmatprep.subr.mxu0 0.0
      %7400 = vmatpush2.msra.mxu0 0.0
      %7401 = vmatprep.subr.mxu0 0.0
      %7402 = vmatpush2.msra.mxu0 0.0
      %7403 = vmatprep.mubr.f32.mxu0 0.0
      %7404 = vmatmul.mubr.f32.gmra.mxu0 %v7337
      %v7405 = vpop.f32.mrf.mxu0
      %v7406 = vadd.f32 0.0, %v7405
      %v7407 = vpop.f32.mrf.mxu0
      %7408 = vdwg.mxu0
      %v7409 = vmul.f32 %v7333, %v7333
      %v7410 = vsub.f32 %v7406, %v7409
      %v7411 = vmax.f32 %v7410, 0.0
      %v7412 = vadd.f32 %v7411, 1e-05
      %v7413 = vrsqrt.pop %v7412
      %v7414 = vld [vmem:[%s5 + $0x1] sm:$0x1]
      %v7415 = vld [vmem:[%s5 + $0x2] sm:$0x1]
      %v7416 = vlaneseq
      %v7417 = vshrl.u32 %v7416, 7
      %v7418 = vsub.s32 0, %v7417
      %v7419 = vrot.slane %v7333, %v7418
      %v7420 = vsub.f32 %v7060, %v7419
      %v7421 = vsub.f32 %v7061, %v7419
      %v7422 = vsub.f32 %v7062, %v7419
      %v7423 = vsub.f32 %v7063, %v7419
      %v7424 = vsub.f32 %v7064, %v7419
      %v7425 = vsub.f32 %v7065, %v7419
      %v7426 = vsub.f32 %v7066, %v7419
      %v7427 = vsub.f32 %v7067, %v7419
      %v7428 = vsub.f32 %v7068, %v7419
      %v7429 = vsub.f32 %v7069, %v7419
      %v7430 = vsub.f32 %v7070, %v7419
      %v7431 = vsub.f32 %v7071, %v7419
      %v7432 = vsub.f32 %v7072, %v7419
      %v7433 = vsub.f32 %v7073, %v7419
      %v7434 = vsub.f32 %v7074, %v7419
      %v7435 = vsub.f32 %v7075, %v7419
      %v7436 = vsub.f32 %v7076, %v7419
      %v7437 = vsub.f32 %v7077, %v7419
      %v7438 = vsub.f32 %v7078, %v7419
      %v7439 = vsub.f32 %v7079, %v7419
      %v7440 = vsub.f32 %v7080, %v7419
      %v7441 = vsub.f32 %v7081, %v7419
      %v7442 = vsub.f32 %v7082, %v7419
      %v7443 = vsub.f32 %v7083, %v7419
      %v7444 = vsub.f32 %v7084, %v7419
      %v7445 = vsub.f32 %v7085, %v7419
      %v7446 = vsub.f32 %v7086, %v7419
      %v7447 = vsub.f32 %v7087, %v7419
      %v7448 = vsub.f32 %v7088, %v7419
      %v7449 = vsub.f32 %v7089, %v7419
      %v7450 = vsub.f32 %v7090, %v7419
      %v7451 = vsub.f32 %v7091, %v7419
      %v7452 = vmul.f32 %v7413, %v7414
      %v7453 = vlaneseq
      %v7454 = vshrl.u32 %v7453, 7
      %v7455 = vsub.s32 0, %v7454
      %v7456 = vrot.slane %v7452, %v7455
      %v7457 = vmul.f32 %v7420, %v7456
      %v7458 = vmul.f32 %v7421, %v7456
      %v7459 = vmul.f32 %v7422, %v7456
      %v7460 = vmul.f32 %v7423, %v7456
      %v7461 = vmul.f32 %v7424, %v7456
      %v7462 = vmul.f32 %v7425, %v7456
      %v7463 = vmul.f32 %v7426, %v7456
      %v7464 = vmul.f32 %v7427, %v7456
      %v7465 = vmul.f32 %v7428, %v7456
      %v7466 = vmul.f32 %v7429, %v7456
      %v7467 = vmul.f32 %v7430, %v7456
      %v7468 = vmul.f32 %v7431, %v7456
      %v7469 = vmul.f32 %v7432, %v7456
      %v7470 = vmul.f32 %v7433, %v7456
      %v7471 = vmul.f32 %v7434, %v7456
      %v7472 = vmul.f32 %v7435, %v7456
      %v7473 = vmul.f32 %v7436, %v7456
      %v7474 = vmul.f32 %v7437, %v7456
      %v7475 = vmul.f32 %v7438, %v7456
      %v7476 = vmul.f32 %v7439, %v7456
      %v7477 = vmul.f32 %v7440, %v7456
      %v7478 = vmul.f32 %v7441, %v7456
      %v7479 = vmul.f32 %v7442, %v7456
      %v7480 = vmul.f32 %v7443, %v7456
      %v7481 = vmul.f32 %v7444, %v7456
      %v7482 = vmul.f32 %v7445, %v7456
      %v7483 = vmul.f32 %v7446, %v7456
      %v7484 = vmul.f32 %v7447, %v7456
      %v7485 = vmul.f32 %v7448, %v7456
      %v7486 = vmul.f32 %v7449, %v7456
      %v7487 = vmul.f32 %v7450, %v7456
      %v7488 = vmul.f32 %v7451, %v7456
      %v7489 = vlaneseq
      %v7490 = vshrl.u32 %v7489, 7
      %v7491 = vsub.s32 0, %v7490
      %v7492 = vrot.slane %v7415, %v7491
      %v7493 = vadd.f32 %v7457, %v7492
      %v7494 = vadd.f32 %v7458, %v7492
      %v7495 = vadd.f32 %v7459, %v7492
      %v7496 = vadd.f32 %v7460, %v7492
      %v7497 = vadd.f32 %v7461, %v7492
      %v7498 = vadd.f32 %v7462, %v7492
      %v7499 = vadd.f32 %v7463, %v7492
      %v7500 = vadd.f32 %v7464, %v7492
      %v7501 = vadd.f32 %v7465, %v7492
      %v7502 = vadd.f32 %v7466, %v7492
      %v7503 = vadd.f32 %v7467, %v7492
      %v7504 = vadd.f32 %v7468, %v7492
      %v7505 = vadd.f32 %v7469, %v7492
      %v7506 = vadd.f32 %v7470, %v7492
      %v7507 = vadd.f32 %v7471, %v7492
      %v7508 = vadd.f32 %v7472, %v7492
      %v7509 = vadd.f32 %v7473, %v7492
      %v7510 = vadd.f32 %v7474, %v7492
      %v7511 = vadd.f32 %v7475, %v7492
      %v7512 = vadd.f32 %v7476, %v7492
      %v7513 = vadd.f32 %v7477, %v7492
      %v7514 = vadd.f32 %v7478, %v7492
      %v7515 = vadd.f32 %v7479, %v7492
      %v7516 = vadd.f32 %v7480, %v7492
      %v7517 = vadd.f32 %v7481, %v7492
      %v7518 = vadd.f32 %v7482, %v7492
      %v7519 = vadd.f32 %v7483, %v7492
      %v7520 = vadd.f32 %v7484, %v7492
      %v7521 = vadd.f32 %v7485, %v7492
      %v7522 = vadd.f32 %v7486, %v7492
      %v7523 = vadd.f32 %v7487, %v7492
      %v7524 = vadd.f32 %v7488, %v7492
      %7525 = vst.msk [vmem:[%s278] sm:$0xff] %vm3437, %v7493
      %7526 = vst.msk [vmem:[%s278 + $0x8] sm:$0xff] %vm3437, %v7494
      %7527 = vst.msk [vmem:[%s278 + $0x10] sm:$0xff] %vm3437, %v7495
      %7528 = vst.msk [vmem:[%s278 + $0x18] sm:$0xff] %vm3437, %v7496
      %7529 = vst.msk [vmem:[%s278 + $0x20] sm:$0xff] %vm3437, %v7497
      %7530 = vst.msk [vmem:[%s278 + $0x28] sm:$0xff] %vm3437, %v7498
      %7531 = vst.msk [vmem:[%s278 + $0x30] sm:$0xff] %vm3437, %v7499
      %7532 = vst.msk [vmem:[%s278 + $0x38] sm:$0xff] %vm3437, %v7500
      %7533 = vst.msk [vmem:[%s278 + $0x40] sm:$0xff] %vm3437, %v7501
      %7534 = vst.msk [vmem:[%s278 + $0x48] sm:$0xff] %vm3437, %v7502
      %7535 = vst.msk [vmem:[%s278 + $0x50] sm:$0xff] %vm3437, %v7503
      %7536 = vst.msk [vmem:[%s278 + $0x58] sm:$0xff] %vm3437, %v7504
      %7537 = vst.msk [vmem:[%s278 + $0x60] sm:$0xff] %vm3437, %v7505
      %7538 = vst.msk [vmem:[%s278 + $0x68] sm:$0xff] %vm3437, %v7506
      %7539 = vst.msk [vmem:[%s278 + $0x70] sm:$0xff] %vm3437, %v7507
      %7540 = vst.msk [vmem:[%s278 + $0x78] sm:$0xff] %vm3437, %v7508
      %7541 = vst.msk [vmem:[%s278 + $0x80] sm:$0xff] %vm3437, %v7509
      %7542 = vst.msk [vmem:[%s278 + $0x88] sm:$0xff] %vm3437, %v7510
      %7543 = vst.msk [vmem:[%s278 + $0x90] sm:$0xff] %vm3437, %v7511
      %7544 = vst.msk [vmem:[%s278 + $0x98] sm:$0xff] %vm3437, %v7512
      %7545 = vst.msk [vmem:[%s278 + $0xa0] sm:$0xff] %vm3437, %v7513
      %7546 = vst.msk [vmem:[%s278 + $0xa8] sm:$0xff] %vm3437, %v7514
      %7547 = vst.msk [vmem:[%s278 + $0xb0] sm:$0xff] %vm3437, %v7515
      %7548 = vst.msk [vmem:[%s278 + $0xb8] sm:$0xff] %vm3437, %v7516
      %7549 = vst.msk [vmem:[%s278 + $0xc0] sm:$0xff] %vm3437, %v7517
      %7550 = vst.msk [vmem:[%s278 + $0xc8] sm:$0xff] %vm3437, %v7518
      %7551 = vst.msk [vmem:[%s278 + $0xd0] sm:$0xff] %vm3437, %v7519
      %7552 = vst.msk [vmem:[%s278 + $0xd8] sm:$0xff] %vm3437, %v7520
      %7553 = vst.msk [vmem:[%s278 + $0xe0] sm:$0xff] %vm3437, %v7521
      %7554 = vst.msk [vmem:[%s278 + $0xe8] sm:$0xff] %vm3437, %v7522
      %7555 = vst.msk [vmem:[%s278 + $0xf0] sm:$0xff] %vm3437, %v7523
      %7556 = vst.msk [vmem:[%s278 + $0xf8] sm:$0xff] %vm3437, %v7524
      %p7557 = scmp.lt.s32.totalorder %s18, 1
      %s7558 = scalar_select %p7557, %s18, 1
      %s7559 = smul.addr %s7558, 32
      %s7560 = smul.addr %s7559, 8
      %s7561 = scalar_lea.vmem %s7, %s7560
      // Predicated region
      $region49: #{tpu_custom_call.1} parent=47 // pred_check
        %p7562 = pneg %p188
      $region50: #{tpu_custom_call.1} parent=47 // pred_check_branch
        %7564 = sbr.rel (%p7562) target = $region52
      $region51: #{tpu_custom_call.1} parent=47 // pred_region
        _
      $region52: #{tpu_custom_call.1} parent=47 // pred_fallthru
        _
    $region48: #{tpu_custom_call.1} parent=5 // pred_fallthru
      _
    %p7565 = scmp.le.s32.totalorder 2, %s13
    // Predicated region
    $region53: #{tpu_custom_call.1} parent=5 // pred_check
      %p7566 = pneg %p7565
    $region54: #{tpu_custom_call.1} parent=5 // pred_check_branch
      %7568 = sbr.rel (%p7566) target = $region56
    $region55: #{tpu_custom_call.1} parent=5 // pred_region
      %s7569 = ssub.s32 %s13, 2
      // Predicated region
      $region57: #{tpu_custom_call.1} parent=55 // pred_check
        %p7570 = pneg %p194
      $region58: #{tpu_custom_call.1} parent=55 // pred_check_branch
        %7572 = sbr.rel (%p7570) target = $region60
      $region59: #{tpu_custom_call.1} parent=55 // pred_region
        %p7573 = scmp.lt.s32.totalorder %s19, 1
        %s7574 = scalar_select %p7573, %s19, 1
        %s7575 = smul.addr %s7574, 32
        %s7576 = smul.addr %s7575, 8
        %s7577 = scalar_lea.vmem %s7, %s7576
      $region60: #{tpu_custom_call.1} parent=55 // pred_fallthru
        _
    $region56: #{tpu_custom_call.1} parent=5 // pred_fallthru
      _
  $region6: #{tpu_custom_call.1} parent=0 // loop_footer
    %s17 = sadd.s32 1, %s13
  $region7: #{tpu_custom_call.1} parent=0 // loop_footer_branch
    %12 = sbr.rel target = $region3
  $region8: #{tpu_custom_call.1} parent=0 // loop_exit
    _

</llo_original>
